<compile_context>
chip_gen: v5e
topology: v5e:2x2
jax: 0.10.0
libtpu: 0.0.40
codegen_flags: <defaults>
</compile_context>

<pallas_src>
import jax
import jax.numpy as jnp
from jax.experimental import pallas as pl
from jax.experimental.pallas import tpu as pltpu


_BN_EPS = 1e-3  # BasicConv2d uses BatchNorm2d(eps=0.001).


# ----------------------------------------------------------------------------
# Fused Mixed_4a kernel (one image per grid step).
# ----------------------------------------------------------------------------
def _make_mixed_4a_kernel(Hin, Win):
    Wc = Win + 6                 # flat row stride: W padded by (3, 3) for the 1x7
    Hout = Hin - 2
    R = Hin * Wc                 # flattened activation rows
    L17 = R - 6                  # 1x7 accumulation length (reads shifted by +kw)
    P3 = Hout * Wc - 5           # final 3x3 accumulation length (covers all valid outs)
    TAIL = Hout * Wc - P3        # = 5 never-valid rows of the output block

    def bn_relu(acc, sc_ref, bi_ref):
        return jnp.maximum(acc * sc_ref[...] + bi_ref[...], 0.0)

    def kernel(x_ref, mask_ref, w1_ref, sc1_ref, bi1_ref,
               w17_ref, sc17_ref, bi17_ref,
               w71_ref, sc71_ref, bi71_ref,
               w3b0_ref, w3b1_ref, sc3_ref, bi3_ref,
               o_ref, canvas_ref):
        f32 = jnp.float32

        # H-pad rows of the canvas must be zero when the 7x1 reads them.
        # Zeroed every step: only 2 * 3*Wc rows of bf16 (tiny), and correct
        # even when the "parallel" batch axis is split across TensorCores.
        canvas_ref[0:3 * Wc, :] = jnp.zeros((3 * Wc, 64), jnp.bfloat16)
        canvas_ref[(Hin + 3) * Wc:, :] = jnp.zeros((3 * Wc, 64), jnp.bfloat16)

        # ---- stage A: merged 1x1 convs (branch0[0] ++ branch1[0]), 160 -> 64||64.
        a = jnp.dot(x_ref[0], w1_ref[...], preferred_element_type=f32)
        a = bn_relu(a, sc1_ref, bi1_ref).astype(jnp.bfloat16)      # (R, 128) bf16
        b0s = a[:, :64]                                            # branch0 stem
        # branch1 stem: the BN bias makes the W-pad columns non-zero -> mask to 0
        b1s = a[:, 64:] * mask_ref[...]                            # (R, 64) bf16

        # ---- branch1, 1x7 same-pad (0,3): 7 shifted-slice matmuls, f32 accum.
        t = jnp.dot(b1s[0:L17], w17_ref[0], preferred_element_type=f32)
        for kw in range(1, 7):
            t = t + jnp.dot(b1s[kw:kw + L17], w17_ref[kw],
                            preferred_element_type=f32)
        t = bn_relu(t, sc17_ref, bi17_ref).astype(jnp.bfloat16)    # (L17, 64)

        # Drop t into the H-padded canvas interior (rows 3 .. Hin+2); the +3
        # element offset restores the column alignment of the shifted 1x7 range.
        canvas_ref[3 * Wc + 3: 3 * Wc + 3 + L17, :] = t

        # ---- branch1, 7x1 same-pad (3,0): 7 row-shifted canvas slices.
        u = jnp.dot(canvas_ref[0:R, :], w71_ref[0], preferred_element_type=f32)
        for kh in range(1, 7):
            u = u + jnp.dot(canvas_ref[kh * Wc: kh * Wc + R, :], w71_ref[kh],
                            preferred_element_type=f32)
        u = bn_relu(u, sc71_ref, bi71_ref).astype(jnp.bfloat16)    # (R, 64)

        # ---- fused final 3x3 convs (branch0[1] and branch1[3]):
        # per-tap weights zero-extended to (64, 192) so both branches
        # accumulate into ONE lane-dense 192-channel f32 accumulator
        # (already in b0 || b1 order) -> no cross-lane concat, single store.
        acc = jnp.dot(b0s[0:P3], w3b0_ref[0], preferred_element_type=f32)
        acc = acc + jnp.dot(u[0:P3], w3b1_ref[0], preferred_element_type=f32)
        for tap in range(1, 9):
            off = (tap // 3) * Wc + (tap % 3)
            acc = acc + jnp.dot(b0s[off:off + P3], w3b0_ref[tap],
                                preferred_element_type=f32)
            acc = acc + jnp.dot(u[off:off + P3], w3b1_ref[tap],
                                preferred_element_type=f32)
        y = bn_relu(acc, sc3_ref, bi3_ref)                         # (P3, 192) f32

        o_ref[0, 0:P3, :] = y
        # The last 5 rows of the block are never valid output (flat-stride
        # slack); keep the writeback deterministic.
        o_ref[0, P3:, :] = jnp.zeros((TAIL, 192), f32)

    return kernel


# ----------------------------------------------------------------------------
# Parameter construction (deterministic, synthetic) and BN folding.
# ----------------------------------------------------------------------------
def _basic_conv2d_params(key, cin, cout, kh, kw):
    kw_, kb1, kb2, kb3 = jax.random.split(key, 4)
    return {
        "w": jax.random.normal(kw_, (kh, kw, cin, cout), jnp.float32) * 0.05,  # HWIO
        "gamma": 1.0 + 0.01 * jax.random.normal(kb1, (cout,), jnp.float32),
        "beta": 0.01 * jax.random.normal(kb2, (cout,), jnp.float32),
        "mean": 0.01 * jax.random.normal(kb3, (cout,), jnp.float32),
        "var": jnp.ones((cout,), jnp.float32),
    }


def make_mixed_4a_params(key):
    keys = jax.random.split(key, 6)
    return {
        "b0_0": _basic_conv2d_params(keys[0], 160, 64, 1, 1),
        "b0_1": _basic_conv2d_params(keys[1], 64, 96, 3, 3),
        "b1_0": _basic_conv2d_params(keys[2], 160, 64, 1, 1),
        "b1_1": _basic_conv2d_params(keys[3], 64, 64, 1, 7),
        "b1_2": _basic_conv2d_params(keys[4], 64, 64, 7, 1),
        "b1_3": _basic_conv2d_params(keys[5], 64, 96, 3, 3),
    }


def _fold_bn(p, eps=_BN_EPS):
    scale = (p["gamma"] / jnp.sqrt(p["var"] + eps)).astype(jnp.float32)
    bias = (p["beta"] - p["mean"] * scale).astype(jnp.float32)
    return scale, bias


def _taps(p):
    """HWIO (KH, KW, Cin, Cout) -> (KH*KW, Cin, Cout) bf16, tap index = kh*KW + kw."""
    kh, kw, cin, cout = p["w"].shape
    return p["w"].reshape(kh * kw, cin, cout).astype(jnp.bfloat16)


# ----------------------------------------------------------------------------
# Public forward (NCHW in / NCHW out), one fused pallas_call.
# ----------------------------------------------------------------------------
@jax.jit
def mixed_4a_forward(params, x_nchw):
    N, Cin, Hin, Win = x_nchw.shape
    assert Cin == 160 and Hin >= 3 and Win >= 3
    Hout, Wout = Hin - 2, Win - 2
    Wc, Hc = Win + 6, Hin + 6
    R = Hin * Wc
    L17, P3 = R - 6, Hout * Wc - 5

    # NCHW -> NHWC, pad W by the 1x7's (3, 3) so every stage shares one flat
    # row-stride-Wc layout, flatten spatial, bf16 halves input DMA bytes.
    x = jnp.transpose(x_nchw, (0, 2, 3, 1))
    x = jnp.pad(x, ((0, 0), (0, 0), (3, 3), (0, 0)))
    x = x.reshape(N, R, 160).astype(jnp.bfloat16)

    # 0/1 mask of valid (non-pad) columns in the flat layout.
    col = jnp.arange(R, dtype=jnp.int32) % Wc
    colmask = ((col >= 3) & (col < Win + 3)).astype(jnp.bfloat16).reshape(R, 1)

    # Merged 1x1 weights (branch0[0] ++ branch1[0]) -> one 128-lane matmul.
    sc00, bi00 = _fold_bn(params["b0_0"])
    sc10, bi10 = _fold_bn(params["b1_0"])
    w1 = jnp.concatenate([_taps(params["b0_0"])[0], _taps(params["b1_0"])[0]], axis=-1)
    sc1 = jnp.concatenate([sc00, sc10]).reshape(1, 128)
    bi1 = jnp.concatenate([bi00, bi10]).reshape(1, 128)

    w17 = _taps(params["b1_1"]); sc17, bi17 = _fold_bn(params["b1_1"])
    w71 = _taps(params["b1_2"]); sc71, bi71 = _fold_bn(params["b1_2"])
    sc17, bi17 = sc17.reshape(1, 64), bi17.reshape(1, 64)
    sc71, bi71 = sc71.reshape(1, 64), bi71.reshape(1, 64)

    # Final 3x3s: per-tap (64, 96) weights zero-extended to (64, 192) so both
    # branches accumulate into one lane-dense 192-channel output (b0 || b1).
    z96 = jnp.zeros((9, 64, 96), jnp.bfloat16)
    w3b0 = jnp.concatenate([_taps(params["b0_1"]), z96], axis=-1)
    w3b1 = jnp.concatenate([z96, _taps(params["b1_3"])], axis=-1)
    scb0, bib0 = _fold_bn(params["b0_1"])
    scb1, bib1 = _fold_bn(params["b1_3"])
    sc3 = jnp.concatenate([scb0, scb1]).reshape(1, 192)
    bi3 = jnp.concatenate([bib0, bib1]).reshape(1, 192)

    operands = (x, colmask, w1, sc1, bi1, w17, sc17, bi17,
                w71, sc71, bi71, w3b0, w3b1, sc3, bi3)

    def _resident(arr):  # full-array, grid-invariant block (stays resident in VMEM)
        nd = arr.ndim
        return pl.BlockSpec(arr.shape, lambda n, _nd=nd: (0,) * _nd)

    in_specs = [pl.BlockSpec((1, R, 160), lambda n: (n, 0, 0))]
    in_specs += [_resident(op) for op in operands[1:]]

    flops = 2 * N * (R * 160 * 128 + 7 * L17 * 64 * 64 + 7 * R * 64 * 64
                     + 18 * P3 * 64 * 192)
    bytes_accessed = int(sum(op.size * op.dtype.itemsize for op in operands)
                         + N * Hout * Wc * 192 * 4)

    out_flat = pl.pallas_call(
        _make_mixed_4a_kernel(Hin, Win),
        out_shape=jax.ShapeDtypeStruct((N, Hout * Wc, 192), jnp.float32),
        grid=(N,),  # one image per step; "parallel" lets v7x's two TCs split the batch.
        in_specs=in_specs,
        out_specs=pl.BlockSpec((1, Hout * Wc, 192), lambda n: (n, 0, 0)),
        scratch_shapes=[pltpu.VMEM((Hc * Wc, 64), jnp.bfloat16)],   # H-padded canvas
        compiler_params=pltpu.CompilerParams(
            dimension_semantics=("parallel",),
            vmem_limit_bytes=64 * 1024 * 1024),
        cost_estimate=pl.CostEstimate(flops=flops, transcendentals=0,
                                      bytes_accessed=bytes_accessed),
    )(*operands)

    # Flat (stride-Wc) -> NCHW: valid output sits at flat position oh*Wc + (ow + 3).
    out = out_flat.reshape(N, Hout, Wc, 192)[:, :, 3:3 + Wout, :]
    return jnp.transpose(out, (0, 3, 1, 2))


# ----------------------------------------------------------------------------
# Pure-JAX reference (eval-mode BN; mirrors the kernel's bf16-input / f32-accum
# matmul precision so the comparison is apples-to-apples).
# ----------------------------------------------------------------------------
def _ref_basic_conv(p, x_nchw, padding=(0, 0), eps=_BN_EPS):
    w_oihw = jnp.transpose(p["w"], (3, 2, 0, 1)).astype(jnp.bfloat16)
    y = jax.lax.conv_general_dilated(
        x_nchw.astype(jnp.bfloat16), w_oihw, window_strides=(1, 1),
        padding=[(padding[0], padding[0]), (padding[1], padding[1])],
        dimension_numbers=("NCHW", "OIHW", "NCHW"),
        preferred_element_type=jnp.float32)
    scale, bias = _fold_bn(p, eps)
    y = y * scale.reshape(1, -1, 1, 1) + bias.reshape(1, -1, 1, 1)
    return jnp.maximum(y, 0.0)


def mixed_4a_reference(params, x_nchw):
    b0 = _ref_basic_conv(params["b0_0"], x_nchw)
    b0 = _ref_basic_conv(params["b0_1"], b0)
    b1 = _ref_basic_conv(params["b1_0"], x_nchw)
    b1 = _ref_basic_conv(params["b1_1"], b1, padding=(0, 3))
    b1 = _ref_basic_conv(params["b1_2"], b1, padding=(3, 0))
    b1 = _ref_basic_conv(params["b1_3"], b1)
    return jnp.concatenate([b0, b1], axis=1)


if __name__ == "__main__":
    key = jax.random.PRNGKey(0)
    kx, kp = jax.random.split(key)

    # 160 input channels are fixed by the module; small batch / spatial dims.
    x = jax.random.normal(kx, (2, 160, 10, 10), jnp.float32)   # NCHW
    params = make_mixed_4a_params(kp)

    out = jax.block_until_ready(mixed_4a_forward(params, x))
    assert out.shape == (2, 192, 8, 8), out.shape

    ref = jax.block_until_ready(mixed_4a_reference(params, x))
    max_err = float(jnp.max(jnp.abs(out - ref)))
    assert jnp.allclose(out, ref, rtol=5e-3, atol=5e-3), max_err

    print("KERNEL_OK")
</pallas_src>

<mosaic_0001>
module attributes {stable_mosaic.version = 11 : i64} {
  func.func @kernel(%arg0: i32, %arg1: memref<1x160x160xbf16, #tpu.memory_space<vmem>>, %arg2: memref<160x1xbf16, #tpu.memory_space<vmem>>, %arg3: memref<160x128xbf16, #tpu.memory_space<vmem>>, %arg4: memref<1x128xf32, #tpu.memory_space<vmem>>, %arg5: memref<1x128xf32, #tpu.memory_space<vmem>>, %arg6: memref<7x64x64xbf16, #tpu.memory_space<vmem>>, %arg7: memref<1x64xf32, #tpu.memory_space<vmem>>, %arg8: memref<1x64xf32, #tpu.memory_space<vmem>>, %arg9: memref<7x64x64xbf16, #tpu.memory_space<vmem>>, %arg10: memref<1x64xf32, #tpu.memory_space<vmem>>, %arg11: memref<1x64xf32, #tpu.memory_space<vmem>>, %arg12: memref<9x64x192xbf16, #tpu.memory_space<vmem>>, %arg13: memref<9x64x192xbf16, #tpu.memory_space<vmem>>, %arg14: memref<1x192xf32, #tpu.memory_space<vmem>>, %arg15: memref<1x192xf32, #tpu.memory_space<vmem>>, %arg16: memref<1x128x192xf32, #tpu.memory_space<vmem>>, %arg17: memref<256x64xbf16, #tpu.memory_space<vmem>>) attributes {dimension_semantics = [#tpu.dimension_semantics<parallel>], iteration_bounds = array<i64: 2>, scalar_prefetch = 0 : i64, scratch_operands = 1 : i64, tpu.core_type = #tpu.core_type<tc>, window_params = [{transform_indices = @transform_0, window_bounds = array<i64: 1, 160, 160>}, {pipeline_mode = #tpu.pipeline_mode<synchronous>, transform_indices = @transform_1, window_bounds = array<i64: 160, 1>}, {pipeline_mode = #tpu.pipeline_mode<synchronous>, transform_indices = @transform_2, window_bounds = array<i64: 160, 128>}, {pipeline_mode = #tpu.pipeline_mode<synchronous>, transform_indices = @transform_3, window_bounds = array<i64: 1, 128>}, {pipeline_mode = #tpu.pipeline_mode<synchronous>, transform_indices = @transform_4, window_bounds = array<i64: 1, 128>}, {pipeline_mode = #tpu.pipeline_mode<synchronous>, transform_indices = @transform_5, window_bounds = array<i64: 7, 64, 64>}, {pipeline_mode = #tpu.pipeline_mode<synchronous>, transform_indices = @transform_6, window_bounds = array<i64: 1, 64>}, {pipeline_mode = #tpu.pipeline_mode<synchronous>, transform_indices = @transform_7, window_bounds = array<i64: 1, 64>}, {pipeline_mode = #tpu.pipeline_mode<synchronous>, transform_indices = @transform_8, window_bounds = array<i64: 7, 64, 64>}, {pipeline_mode = #tpu.pipeline_mode<synchronous>, transform_indices = @transform_9, window_bounds = array<i64: 1, 64>}, {pipeline_mode = #tpu.pipeline_mode<synchronous>, transform_indices = @transform_10, window_bounds = array<i64: 1, 64>}, {pipeline_mode = #tpu.pipeline_mode<synchronous>, transform_indices = @transform_11, window_bounds = array<i64: 9, 64, 192>}, {pipeline_mode = #tpu.pipeline_mode<synchronous>, transform_indices = @transform_12, window_bounds = array<i64: 9, 64, 192>}, {pipeline_mode = #tpu.pipeline_mode<synchronous>, transform_indices = @transform_13, window_bounds = array<i64: 1, 192>}, {pipeline_mode = #tpu.pipeline_mode<synchronous>, transform_indices = @transform_14, window_bounds = array<i64: 1, 192>}, {transform_indices = @transform_15, window_bounds = array<i64: 1, 128, 192>}]} {
    %cst = arith.constant 0.000000e+00 : bf16
    %0 = vector.broadcast %cst : bf16 to vector<48x64xbf16>
    %c0 = arith.constant 0 : index
    %c0_0 = arith.constant 0 : index
    %1 = vector.load %arg17[%c0, %c0_0] : memref<256x64xbf16, #tpu.memory_space<vmem>>, vector<48x64xbf16>
    tpu.vector_store %arg17[%c0, %c0_0], %0 {strides = array<i32>} : memref<256x64xbf16, #tpu.memory_space<vmem>>, vector<48x64xbf16>,
    %cst_1 = arith.constant 0.000000e+00 : bf16
    %2 = vector.broadcast %cst_1 : bf16 to vector<48x64xbf16>
    %c208 = arith.constant 208 : index
    %c0_2 = arith.constant 0 : index
    %3 = vector.load %arg17[%c208, %c0_2] : memref<256x64xbf16, #tpu.memory_space<vmem>>, vector<48x64xbf16>
    tpu.vector_store %arg17[%c208, %c0_2], %2 {strides = array<i32>} : memref<256x64xbf16, #tpu.memory_space<vmem>>, vector<48x64xbf16>,
    %c0_3 = arith.constant 0 : index
    %c0_4 = arith.constant 0 : index
    %c0_5 = arith.constant 0 : index
    %4 = vector.load %arg1[%c0_3, %c0_4, %c0_5] : memref<1x160x160xbf16, #tpu.memory_space<vmem>>, vector<1x160x160xbf16>
    %5 = vector.shape_cast %4 : vector<1x160x160xbf16> to vector<160x160xbf16>
    %c0_6 = arith.constant 0 : index
    %c0_7 = arith.constant 0 : index
    %6 = vector.load %arg3[%c0_6, %c0_7] : memref<160x128xbf16, #tpu.memory_space<vmem>>, vector<160x128xbf16>
    %cst_8 = arith.constant dense<0.000000e+00> : vector<160x128xf32>
    %7 = tpu.matmul %5, %6, %cst_8 {dimension_numbers = #tpu.dot_dimension_numbers<[1], [0], [0], [1], [0, 0, 1, 1], [], []>} : vector<160x160xbf16>, vector<160x128xbf16>, vector<160x128xf32> -> vector<160x128xf32>
    %c0_9 = arith.constant 0 : index
    %c0_10 = arith.constant 0 : index
    %8 = vector.load %arg4[%c0_9, %c0_10] : memref<1x128xf32, #tpu.memory_space<vmem>>, vector<1x128xf32>
    %9 = vector.broadcast %8 : vector<1x128xf32> to vector<160x128xf32>
    %10 = arith.mulf %7, %9 : vector<160x128xf32>
    %c0_11 = arith.constant 0 : index
    %c0_12 = arith.constant 0 : index
    %11 = vector.load %arg5[%c0_11, %c0_12] : memref<1x128xf32, #tpu.memory_space<vmem>>, vector<1x128xf32>
    %12 = vector.broadcast %11 : vector<1x128xf32> to vector<160x128xf32>
    %13 = arith.addf %10, %12 : vector<160x128xf32>
    %cst_13 = arith.constant 0.000000e+00 : f32
    %14 = vector.broadcast %cst_13 : f32 to vector<160x128xf32>
    %15 = arith.maximumf %13, %14 : vector<160x128xf32>
    %16 = arith.truncf %15 : vector<160x128xf32> to vector<160x128xbf16>
    %17 = vector.extract_strided_slice %16 {offsets = [0, 0], sizes = [160, 64], strides = [1, 1]} : vector<160x128xbf16> to vector<160x64xbf16>
    %18 = vector.extract_strided_slice %16 {offsets = [0, 64], sizes = [160, 64], strides = [1, 1]} : vector<160x128xbf16> to vector<160x64xbf16>
    %c0_14 = arith.constant 0 : index
    %c0_15 = arith.constant 0 : index
    %19 = vector.load %arg2[%c0_14, %c0_15] : memref<160x1xbf16, #tpu.memory_space<vmem>>, vector<160x1xbf16>
    %20 = vector.broadcast %19 : vector<160x1xbf16> to vector<160x64xbf16>
    %21 = arith.mulf %18, %20 : vector<160x64xbf16>
    %22 = vector.extract_strided_slice %21 {offsets = [0, 0], sizes = [154, 64], strides = [1, 1]} : vector<160x64xbf16> to vector<154x64xbf16>
    %c0_16 = arith.constant 0 : index
    %c0_17 = arith.constant 0 : index
    %c0_18 = arith.constant 0 : index
    %23 = vector.load %arg6[%c0_16, %c0_17, %c0_18] : memref<7x64x64xbf16, #tpu.memory_space<vmem>>, vector<1x64x64xbf16>
    %24 = vector.shape_cast %23 : vector<1x64x64xbf16> to vector<64x64xbf16>
    %cst_19 = arith.constant dense<0.000000e+00> : vector<154x64xf32>
    %25 = tpu.matmul %22, %24, %cst_19 {dimension_numbers = #tpu.dot_dimension_numbers<[1], [0], [0], [1], [0, 0, 1, 1], [], []>} : vector<154x64xbf16>, vector<64x64xbf16>, vector<154x64xf32> -> vector<154x64xf32>
    %26 = vector.extract_strided_slice %21 {offsets = [1, 0], sizes = [154, 64], strides = [1, 1]} : vector<160x64xbf16> to vector<154x64xbf16>
    %c1 = arith.constant 1 : index
    %c0_20 = arith.constant 0 : index
    %c0_21 = arith.constant 0 : index
    %27 = vector.load %arg6[%c1, %c0_20, %c0_21] : memref<7x64x64xbf16, #tpu.memory_space<vmem>>, vector<1x64x64xbf16>
    %28 = vector.shape_cast %27 : vector<1x64x64xbf16> to vector<64x64xbf16>
    %cst_22 = arith.constant dense<0.000000e+00> : vector<154x64xf32>
    %29 = tpu.matmul %26, %28, %cst_22 {dimension_numbers = #tpu.dot_dimension_numbers<[1], [0], [0], [1], [0, 0, 1, 1], [], []>} : vector<154x64xbf16>, vector<64x64xbf16>, vector<154x64xf32> -> vector<154x64xf32>
    %30 = arith.addf %25, %29 : vector<154x64xf32>
    %31 = vector.extract_strided_slice %21 {offsets = [2, 0], sizes = [154, 64], strides = [1, 1]} : vector<160x64xbf16> to vector<154x64xbf16>
    %c2 = arith.constant 2 : index
    %c0_23 = arith.constant 0 : index
    %c0_24 = arith.constant 0 : index
    %32 = vector.load %arg6[%c2, %c0_23, %c0_24] : memref<7x64x64xbf16, #tpu.memory_space<vmem>>, vector<1x64x64xbf16>
    %33 = vector.shape_cast %32 : vector<1x64x64xbf16> to vector<64x64xbf16>
    %cst_25 = arith.constant dense<0.000000e+00> : vector<154x64xf32>
    %34 = tpu.matmul %31, %33, %cst_25 {dimension_numbers = #tpu.dot_dimension_numbers<[1], [0], [0], [1], [0, 0, 1, 1], [], []>} : vector<154x64xbf16>, vector<64x64xbf16>, vector<154x64xf32> -> vector<154x64xf32>
    %35 = arith.addf %30, %34 : vector<154x64xf32>
    %36 = vector.extract_strided_slice %21 {offsets = [3, 0], sizes = [154, 64], strides = [1, 1]} : vector<160x64xbf16> to vector<154x64xbf16>
    %c3 = arith.constant 3 : index
    %c0_26 = arith.constant 0 : index
    %c0_27 = arith.constant 0 : index
    %37 = vector.load %arg6[%c3, %c0_26, %c0_27] : memref<7x64x64xbf16, #tpu.memory_space<vmem>>, vector<1x64x64xbf16>
    %38 = vector.shape_cast %37 : vector<1x64x64xbf16> to vector<64x64xbf16>
    %cst_28 = arith.constant dense<0.000000e+00> : vector<154x64xf32>
    %39 = tpu.matmul %36, %38, %cst_28 {dimension_numbers = #tpu.dot_dimension_numbers<[1], [0], [0], [1], [0, 0, 1, 1], [], []>} : vector<154x64xbf16>, vector<64x64xbf16>, vector<154x64xf32> -> vector<154x64xf32>
    %40 = arith.addf %35, %39 : vector<154x64xf32>
    %41 = vector.extract_strided_slice %21 {offsets = [4, 0], sizes = [154, 64], strides = [1, 1]} : vector<160x64xbf16> to vector<154x64xbf16>
    %c4 = arith.constant 4 : index
    %c0_29 = arith.constant 0 : index
    %c0_30 = arith.constant 0 : index
    %42 = vector.load %arg6[%c4, %c0_29, %c0_30] : memref<7x64x64xbf16, #tpu.memory_space<vmem>>, vector<1x64x64xbf16>
    %43 = vector.shape_cast %42 : vector<1x64x64xbf16> to vector<64x64xbf16>
    %cst_31 = arith.constant dense<0.000000e+00> : vector<154x64xf32>
    %44 = tpu.matmul %41, %43, %cst_31 {dimension_numbers = #tpu.dot_dimension_numbers<[1], [0], [0], [1], [0, 0, 1, 1], [], []>} : vector<154x64xbf16>, vector<64x64xbf16>, vector<154x64xf32> -> vector<154x64xf32>
    %45 = arith.addf %40, %44 : vector<154x64xf32>
    %46 = vector.extract_strided_slice %21 {offsets = [5, 0], sizes = [154, 64], strides = [1, 1]} : vector<160x64xbf16> to vector<154x64xbf16>
    %c5 = arith.constant 5 : index
    %c0_32 = arith.constant 0 : index
    %c0_33 = arith.constant 0 : index
    %47 = vector.load %arg6[%c5, %c0_32, %c0_33] : memref<7x64x64xbf16, #tpu.memory_space<vmem>>, vector<1x64x64xbf16>
    %48 = vector.shape_cast %47 : vector<1x64x64xbf16> to vector<64x64xbf16>
    %cst_34 = arith.constant dense<0.000000e+00> : vector<154x64xf32>
    %49 = tpu.matmul %46, %48, %cst_34 {dimension_numbers = #tpu.dot_dimension_numbers<[1], [0], [0], [1], [0, 0, 1, 1], [], []>} : vector<154x64xbf16>, vector<64x64xbf16>, vector<154x64xf32> -> vector<154x64xf32>
    %50 = arith.addf %45, %49 : vector<154x64xf32>
    %51 = vector.extract_strided_slice %21 {offsets = [6, 0], sizes = [154, 64], strides = [1, 1]} : vector<160x64xbf16> to vector<154x64xbf16>
    %c6 = arith.constant 6 : index
    %c0_35 = arith.constant 0 : index
    %c0_36 = arith.constant 0 : index
    %52 = vector.load %arg6[%c6, %c0_35, %c0_36] : memref<7x64x64xbf16, #tpu.memory_space<vmem>>, vector<1x64x64xbf16>
    %53 = vector.shape_cast %52 : vector<1x64x64xbf16> to vector<64x64xbf16>
    %cst_37 = arith.constant dense<0.000000e+00> : vector<154x64xf32>
    %54 = tpu.matmul %51, %53, %cst_37 {dimension_numbers = #tpu.dot_dimension_numbers<[1], [0], [0], [1], [0, 0, 1, 1], [], []>} : vector<154x64xbf16>, vector<64x64xbf16>, vector<154x64xf32> -> vector<154x64xf32>
    %55 = arith.addf %50, %54 : vector<154x64xf32>
    %c0_38 = arith.constant 0 : index
    %c0_39 = arith.constant 0 : index
    %56 = vector.load %arg7[%c0_38, %c0_39] : memref<1x64xf32, #tpu.memory_space<vmem>>, vector<1x64xf32>
    %57 = vector.broadcast %56 : vector<1x64xf32> to vector<154x64xf32>
    %58 = arith.mulf %55, %57 : vector<154x64xf32>
    %c0_40 = arith.constant 0 : index
    %c0_41 = arith.constant 0 : index
    %59 = vector.load %arg8[%c0_40, %c0_41] : memref<1x64xf32, #tpu.memory_space<vmem>>, vector<1x64xf32>
    %60 = vector.broadcast %59 : vector<1x64xf32> to vector<154x64xf32>
    %61 = arith.addf %58, %60 : vector<154x64xf32>
    %cst_42 = arith.constant 0.000000e+00 : f32
    %62 = vector.broadcast %cst_42 : f32 to vector<154x64xf32>
    %63 = arith.maximumf %61, %62 : vector<154x64xf32>
    %64 = arith.truncf %63 : vector<154x64xf32> to vector<154x64xbf16>
    %c51 = arith.constant 51 : index
    %c0_43 = arith.constant 0 : index
    %65 = vector.load %arg17[%c51, %c0_43] : memref<256x64xbf16, #tpu.memory_space<vmem>>, vector<154x64xbf16>
    tpu.vector_store %arg17[%c51, %c0_43], %64 {strides = array<i32>} : memref<256x64xbf16, #tpu.memory_space<vmem>>, vector<154x64xbf16>,
    %c0_44 = arith.constant 0 : index
    %c0_45 = arith.constant 0 : index
    %66 = vector.load %arg17[%c0_44, %c0_45] : memref<256x64xbf16, #tpu.memory_space<vmem>>, vector<160x64xbf16>
    %c0_46 = arith.constant 0 : index
    %c0_47 = arith.constant 0 : index
    %c0_48 = arith.constant 0 : index
    %67 = vector.load %arg9[%c0_46, %c0_47, %c0_48] : memref<7x64x64xbf16, #tpu.memory_space<vmem>>, vector<1x64x64xbf16>
    %68 = vector.shape_cast %67 : vector<1x64x64xbf16> to vector<64x64xbf16>
    %cst_49 = arith.constant dense<0.000000e+00> : vector<160x64xf32>
    %69 = tpu.matmul %66, %68, %cst_49 {dimension_numbers = #tpu.dot_dimension_numbers<[1], [0], [0], [1], [0, 0, 1, 1], [], []>} : vector<160x64xbf16>, vector<64x64xbf16>, vector<160x64xf32> -> vector<160x64xf32>
    %c16 = arith.constant 16 : index
    %c0_50 = arith.constant 0 : index
    %70 = vector.load %arg17[%c16, %c0_50] : memref<256x64xbf16, #tpu.memory_space<vmem>>, vector<160x64xbf16>
    %c1_51 = arith.constant 1 : index
    %c0_52 = arith.constant 0 : index
    %c0_53 = arith.constant 0 : index
    %71 = vector.load %arg9[%c1_51, %c0_52, %c0_53] : memref<7x64x64xbf16, #tpu.memory_space<vmem>>, vector<1x64x64xbf16>
    %72 = vector.shape_cast %71 : vector<1x64x64xbf16> to vector<64x64xbf16>
    %cst_54 = arith.constant dense<0.000000e+00> : vector<160x64xf32>
    %73 = tpu.matmul %70, %72, %cst_54 {dimension_numbers = #tpu.dot_dimension_numbers<[1], [0], [0], [1], [0, 0, 1, 1], [], []>} : vector<160x64xbf16>, vector<64x64xbf16>, vector<160x64xf32> -> vector<160x64xf32>
    %74 = arith.addf %69, %73 : vector<160x64xf32>
    %c32 = arith.constant 32 : index
    %c0_55 = arith.constant 0 : index
    %75 = vector.load %arg17[%c32, %c0_55] : memref<256x64xbf16, #tpu.memory_space<vmem>>, vector<160x64xbf16>
    %c2_56 = arith.constant 2 : index
    %c0_57 = arith.constant 0 : index
    %c0_58 = arith.constant 0 : index
    %76 = vector.load %arg9[%c2_56, %c0_57, %c0_58] : memref<7x64x64xbf16, #tpu.memory_space<vmem>>, vector<1x64x64xbf16>
    %77 = vector.shape_cast %76 : vector<1x64x64xbf16> to vector<64x64xbf16>
    %cst_59 = arith.constant dense<0.000000e+00> : vector<160x64xf32>
    %78 = tpu.matmul %75, %77, %cst_59 {dimension_numbers = #tpu.dot_dimension_numbers<[1], [0], [0], [1], [0, 0, 1, 1], [], []>} : vector<160x64xbf16>, vector<64x64xbf16>, vector<160x64xf32> -> vector<160x64xf32>
    %79 = arith.addf %74, %78 : vector<160x64xf32>
    %c48 = arith.constant 48 : index
    %c0_60 = arith.constant 0 : index
    %80 = vector.load %arg17[%c48, %c0_60] : memref<256x64xbf16, #tpu.memory_space<vmem>>, vector<160x64xbf16>
    %c3_61 = arith.constant 3 : index
    %c0_62 = arith.constant 0 : index
    %c0_63 = arith.constant 0 : index
    %81 = vector.load %arg9[%c3_61, %c0_62, %c0_63] : memref<7x64x64xbf16, #tpu.memory_space<vmem>>, vector<1x64x64xbf16>
    %82 = vector.shape_cast %81 : vector<1x64x64xbf16> to vector<64x64xbf16>
    %cst_64 = arith.constant dense<0.000000e+00> : vector<160x64xf32>
    %83 = tpu.matmul %80, %82, %cst_64 {dimension_numbers = #tpu.dot_dimension_numbers<[1], [0], [0], [1], [0, 0, 1, 1], [], []>} : vector<160x64xbf16>, vector<64x64xbf16>, vector<160x64xf32> -> vector<160x64xf32>
    %84 = arith.addf %79, %83 : vector<160x64xf32>
    %c64 = arith.constant 64 : index
    %c0_65 = arith.constant 0 : index
    %85 = vector.load %arg17[%c64, %c0_65] : memref<256x64xbf16, #tpu.memory_space<vmem>>, vector<160x64xbf16>
    %c4_66 = arith.constant 4 : index
    %c0_67 = arith.constant 0 : index
    %c0_68 = arith.constant 0 : index
    %86 = vector.load %arg9[%c4_66, %c0_67, %c0_68] : memref<7x64x64xbf16, #tpu.memory_space<vmem>>, vector<1x64x64xbf16>
    %87 = vector.shape_cast %86 : vector<1x64x64xbf16> to vector<64x64xbf16>
    %cst_69 = arith.constant dense<0.000000e+00> : vector<160x64xf32>
    %88 = tpu.matmul %85, %87, %cst_69 {dimension_numbers = #tpu.dot_dimension_numbers<[1], [0], [0], [1], [0, 0, 1, 1], [], []>} : vector<160x64xbf16>, vector<64x64xbf16>, vector<160x64xf32> -> vector<160x64xf32>
    %89 = arith.addf %84, %88 : vector<160x64xf32>
    %c80 = arith.constant 80 : index
    %c0_70 = arith.constant 0 : index
    %90 = vector.load %arg17[%c80, %c0_70] : memref<256x64xbf16, #tpu.memory_space<vmem>>, vector<160x64xbf16>
    %c5_71 = arith.constant 5 : index
    %c0_72 = arith.constant 0 : index
    %c0_73 = arith.constant 0 : index
    %91 = vector.load %arg9[%c5_71, %c0_72, %c0_73] : memref<7x64x64xbf16, #tpu.memory_space<vmem>>, vector<1x64x64xbf16>
    %92 = vector.shape_cast %91 : vector<1x64x64xbf16> to vector<64x64xbf16>
    %cst_74 = arith.constant dense<0.000000e+00> : vector<160x64xf32>
    %93 = tpu.matmul %90, %92, %cst_74 {dimension_numbers = #tpu.dot_dimension_numbers<[1], [0], [0], [1], [0, 0, 1, 1], [], []>} : vector<160x64xbf16>, vector<64x64xbf16>, vector<160x64xf32> -> vector<160x64xf32>
    %94 = arith.addf %89, %93 : vector<160x64xf32>
    %c96 = arith.constant 96 : index
    %c0_75 = arith.constant 0 : index
    %95 = vector.load %arg17[%c96, %c0_75] : memref<256x64xbf16, #tpu.memory_space<vmem>>, vector<160x64xbf16>
    %c6_76 = arith.constant 6 : index
    %c0_77 = arith.constant 0 : index
    %c0_78 = arith.constant 0 : index
    %96 = vector.load %arg9[%c6_76, %c0_77, %c0_78] : memref<7x64x64xbf16, #tpu.memory_space<vmem>>, vector<1x64x64xbf16>
    %97 = vector.shape_cast %96 : vector<1x64x64xbf16> to vector<64x64xbf16>
    %cst_79 = arith.constant dense<0.000000e+00> : vector<160x64xf32>
    %98 = tpu.matmul %95, %97, %cst_79 {dimension_numbers = #tpu.dot_dimension_numbers<[1], [0], [0], [1], [0, 0, 1, 1], [], []>} : vector<160x64xbf16>, vector<64x64xbf16>, vector<160x64xf32> -> vector<160x64xf32>
    %99 = arith.addf %94, %98 : vector<160x64xf32>
    %c0_80 = arith.constant 0 : index
    %c0_81 = arith.constant 0 : index
    %100 = vector.load %arg10[%c0_80, %c0_81] : memref<1x64xf32, #tpu.memory_space<vmem>>, vector<1x64xf32>
    %101 = vector.broadcast %100 : vector<1x64xf32> to vector<160x64xf32>
    %102 = arith.mulf %99, %101 : vector<160x64xf32>
    %c0_82 = arith.constant 0 : index
    %c0_83 = arith.constant 0 : index
    %103 = vector.load %arg11[%c0_82, %c0_83] : memref<1x64xf32, #tpu.memory_space<vmem>>, vector<1x64xf32>
    %104 = vector.broadcast %103 : vector<1x64xf32> to vector<160x64xf32>
    %105 = arith.addf %102, %104 : vector<160x64xf32>
    %cst_84 = arith.constant 0.000000e+00 : f32
    %106 = vector.broadcast %cst_84 : f32 to vector<160x64xf32>
    %107 = arith.maximumf %105, %106 : vector<160x64xf32>
    %108 = arith.truncf %107 : vector<160x64xf32> to vector<160x64xbf16>
    %109 = vector.extract_strided_slice %17 {offsets = [0, 0], sizes = [123, 64], strides = [1, 1]} : vector<160x64xbf16> to vector<123x64xbf16>
    %c0_85 = arith.constant 0 : index
    %c0_86 = arith.constant 0 : index
    %c0_87 = arith.constant 0 : index
    %110 = vector.load %arg12[%c0_85, %c0_86, %c0_87] : memref<9x64x192xbf16, #tpu.memory_space<vmem>>, vector<1x64x192xbf16>
    %111 = vector.shape_cast %110 : vector<1x64x192xbf16> to vector<64x192xbf16>
    %cst_88 = arith.constant dense<0.000000e+00> : vector<123x192xf32>
    %112 = tpu.matmul %109, %111, %cst_88 {dimension_numbers = #tpu.dot_dimension_numbers<[1], [0], [0], [1], [0, 0, 1, 1], [], []>} : vector<123x64xbf16>, vector<64x192xbf16>, vector<123x192xf32> -> vector<123x192xf32>
    %113 = vector.extract_strided_slice %108 {offsets = [0, 0], sizes = [123, 64], strides = [1, 1]} : vector<160x64xbf16> to vector<123x64xbf16>
    %c0_89 = arith.constant 0 : index
    %c0_90 = arith.constant 0 : index
    %c0_91 = arith.constant 0 : index
    %114 = vector.load %arg13[%c0_89, %c0_90, %c0_91] : memref<9x64x192xbf16, #tpu.memory_space<vmem>>, vector<1x64x192xbf16>
    %115 = vector.shape_cast %114 : vector<1x64x192xbf16> to vector<64x192xbf16>
    %cst_92 = arith.constant dense<0.000000e+00> : vector<123x192xf32>
    %116 = tpu.matmul %113, %115, %cst_92 {dimension_numbers = #tpu.dot_dimension_numbers<[1], [0], [0], [1], [0, 0, 1, 1], [], []>} : vector<123x64xbf16>, vector<64x192xbf16>, vector<123x192xf32> -> vector<123x192xf32>
    %117 = arith.addf %112, %116 : vector<123x192xf32>
    %118 = vector.extract_strided_slice %17 {offsets = [1, 0], sizes = [123, 64], strides = [1, 1]} : vector<160x64xbf16> to vector<123x64xbf16>
    %c1_93 = arith.constant 1 : index
    %c0_94 = arith.constant 0 : index
    %c0_95 = arith.constant 0 : index
    %119 = vector.load %arg12[%c1_93, %c0_94, %c0_95] : memref<9x64x192xbf16, #tpu.memory_space<vmem>>, vector<1x64x192xbf16>
    %120 = vector.shape_cast %119 : vector<1x64x192xbf16> to vector<64x192xbf16>
    %cst_96 = arith.constant dense<0.000000e+00> : vector<123x192xf32>
    %121 = tpu.matmul %118, %120, %cst_96 {dimension_numbers = #tpu.dot_dimension_numbers<[1], [0], [0], [1], [0, 0, 1, 1], [], []>} : vector<123x64xbf16>, vector<64x192xbf16>, vector<123x192xf32> -> vector<123x192xf32>
    %122 = arith.addf %117, %121 : vector<123x192xf32>
    %123 = vector.extract_strided_slice %108 {offsets = [1, 0], sizes = [123, 64], strides = [1, 1]} : vector<160x64xbf16> to vector<123x64xbf16>
    %c1_97 = arith.constant 1 : index
    %c0_98 = arith.constant 0 : index
    %c0_99 = arith.constant 0 : index
    %124 = vector.load %arg13[%c1_97, %c0_98, %c0_99] : memref<9x64x192xbf16, #tpu.memory_space<vmem>>, vector<1x64x192xbf16>
    %125 = vector.shape_cast %124 : vector<1x64x192xbf16> to vector<64x192xbf16>
    %cst_100 = arith.constant dense<0.000000e+00> : vector<123x192xf32>
    %126 = tpu.matmul %123, %125, %cst_100 {dimension_numbers = #tpu.dot_dimension_numbers<[1], [0], [0], [1], [0, 0, 1, 1], [], []>} : vector<123x64xbf16>, vector<64x192xbf16>, vector<123x192xf32> -> vector<123x192xf32>
    %127 = arith.addf %122, %126 : vector<123x192xf32>
    %128 = vector.extract_strided_slice %17 {offsets = [2, 0], sizes = [123, 64], strides = [1, 1]} : vector<160x64xbf16> to vector<123x64xbf16>
    %c2_101 = arith.constant 2 : index
    %c0_102 = arith.constant 0 : index
    %c0_103 = arith.constant 0 : index
    %129 = vector.load %arg12[%c2_101, %c0_102, %c0_103] : memref<9x64x192xbf16, #tpu.memory_space<vmem>>, vector<1x64x192xbf16>
    %130 = vector.shape_cast %129 : vector<1x64x192xbf16> to vector<64x192xbf16>
    %cst_104 = arith.constant dense<0.000000e+00> : vector<123x192xf32>
    %131 = tpu.matmul %128, %130, %cst_104 {dimension_numbers = #tpu.dot_dimension_numbers<[1], [0], [0], [1], [0, 0, 1, 1], [], []>} : vector<123x64xbf16>, vector<64x192xbf16>, vector<123x192xf32> -> vector<123x192xf32>
    %132 = arith.addf %127, %131 : vector<123x192xf32>
    %133 = vector.extract_strided_slice %108 {offsets = [2, 0], sizes = [123, 64], strides = [1, 1]} : vector<160x64xbf16> to vector<123x64xbf16>
    %c2_105 = arith.constant 2 : index
    %c0_106 = arith.constant 0 : index
    %c0_107 = arith.constant 0 : index
    %134 = vector.load %arg13[%c2_105, %c0_106, %c0_107] : memref<9x64x192xbf16, #tpu.memory_space<vmem>>, vector<1x64x192xbf16>
    %135 = vector.shape_cast %134 : vector<1x64x192xbf16> to vector<64x192xbf16>
    %cst_108 = arith.constant dense<0.000000e+00> : vector<123x192xf32>
    %136 = tpu.matmul %133, %135, %cst_108 {dimension_numbers = #tpu.dot_dimension_numbers<[1], [0], [0], [1], [0, 0, 1, 1], [], []>} : vector<123x64xbf16>, vector<64x192xbf16>, vector<123x192xf32> -> vector<123x192xf32>
    %137 = arith.addf %132, %136 : vector<123x192xf32>
    %138 = vector.extract_strided_slice %17 {offsets = [16, 0], sizes = [123, 64], strides = [1, 1]} : vector<160x64xbf16> to vector<123x64xbf16>
    %c3_109 = arith.constant 3 : index
    %c0_110 = arith.constant 0 : index
    %c0_111 = arith.constant 0 : index
    %139 = vector.load %arg12[%c3_109, %c0_110, %c0_111] : memref<9x64x192xbf16, #tpu.memory_space<vmem>>, vector<1x64x192xbf16>
    %140 = vector.shape_cast %139 : vector<1x64x192xbf16> to vector<64x192xbf16>
    %cst_112 = arith.constant dense<0.000000e+00> : vector<123x192xf32>
    %141 = tpu.matmul %138, %140, %cst_112 {dimension_numbers = #tpu.dot_dimension_numbers<[1], [0], [0], [1], [0, 0, 1, 1], [], []>} : vector<123x64xbf16>, vector<64x192xbf16>, vector<123x192xf32> -> vector<123x192xf32>
    %142 = arith.addf %137, %141 : vector<123x192xf32>
    %143 = vector.extract_strided_slice %108 {offsets = [16, 0], sizes = [123, 64], strides = [1, 1]} : vector<160x64xbf16> to vector<123x64xbf16>
    %c3_113 = arith.constant 3 : index
    %c0_114 = arith.constant 0 : index
    %c0_115 = arith.constant 0 : index
    %144 = vector.load %arg13[%c3_113, %c0_114, %c0_115] : memref<9x64x192xbf16, #tpu.memory_space<vmem>>, vector<1x64x192xbf16>
    %145 = vector.shape_cast %144 : vector<1x64x192xbf16> to vector<64x192xbf16>
    %cst_116 = arith.constant dense<0.000000e+00> : vector<123x192xf32>
    %146 = tpu.matmul %143, %145, %cst_116 {dimension_numbers = #tpu.dot_dimension_numbers<[1], [0], [0], [1], [0, 0, 1, 1], [], []>} : vector<123x64xbf16>, vector<64x192xbf16>, vector<123x192xf32> -> vector<123x192xf32>
    %147 = arith.addf %142, %146 : vector<123x192xf32>
    %148 = vector.extract_strided_slice %17 {offsets = [17, 0], sizes = [123, 64], strides = [1, 1]} : vector<160x64xbf16> to vector<123x64xbf16>
    %c4_117 = arith.constant 4 : index
    %c0_118 = arith.constant 0 : index
    %c0_119 = arith.constant 0 : index
    %149 = vector.load %arg12[%c4_117, %c0_118, %c0_119] : memref<9x64x192xbf16, #tpu.memory_space<vmem>>, vector<1x64x192xbf16>
    %150 = vector.shape_cast %149 : vector<1x64x192xbf16> to vector<64x192xbf16>
    %cst_120 = arith.constant dense<0.000000e+00> : vector<123x192xf32>
    %151 = tpu.matmul %148, %150, %cst_120 {dimension_numbers = #tpu.dot_dimension_numbers<[1], [0], [0], [1], [0, 0, 1, 1], [], []>} : vector<123x64xbf16>, vector<64x192xbf16>, vector<123x192xf32> -> vector<123x192xf32>
    %152 = arith.addf %147, %151 : vector<123x192xf32>
    %153 = vector.extract_strided_slice %108 {offsets = [17, 0], sizes = [123, 64], strides = [1, 1]} : vector<160x64xbf16> to vector<123x64xbf16>
    %c4_121 = arith.constant 4 : index
    %c0_122 = arith.constant 0 : index
    %c0_123 = arith.constant 0 : index
    %154 = vector.load %arg13[%c4_121, %c0_122, %c0_123] : memref<9x64x192xbf16, #tpu.memory_space<vmem>>, vector<1x64x192xbf16>
    %155 = vector.shape_cast %154 : vector<1x64x192xbf16> to vector<64x192xbf16>
    %cst_124 = arith.constant dense<0.000000e+00> : vector<123x192xf32>
    %156 = tpu.matmul %153, %155, %cst_124 {dimension_numbers = #tpu.dot_dimension_numbers<[1], [0], [0], [1], [0, 0, 1, 1], [], []>} : vector<123x64xbf16>, vector<64x192xbf16>, vector<123x192xf32> -> vector<123x192xf32>
    %157 = arith.addf %152, %156 : vector<123x192xf32>
    %158 = vector.extract_strided_slice %17 {offsets = [18, 0], sizes = [123, 64], strides = [1, 1]} : vector<160x64xbf16> to vector<123x64xbf16>
    %c5_125 = arith.constant 5 : index
    %c0_126 = arith.constant 0 : index
    %c0_127 = arith.constant 0 : index
    %159 = vector.load %arg12[%c5_125, %c0_126, %c0_127] : memref<9x64x192xbf16, #tpu.memory_space<vmem>>, vector<1x64x192xbf16>
    %160 = vector.shape_cast %159 : vector<1x64x192xbf16> to vector<64x192xbf16>
    %cst_128 = arith.constant dense<0.000000e+00> : vector<123x192xf32>
    %161 = tpu.matmul %158, %160, %cst_128 {dimension_numbers = #tpu.dot_dimension_numbers<[1], [0], [0], [1], [0, 0, 1, 1], [], []>} : vector<123x64xbf16>, vector<64x192xbf16>, vector<123x192xf32> -> vector<123x192xf32>
    %162 = arith.addf %157, %161 : vector<123x192xf32>
    %163 = vector.extract_strided_slice %108 {offsets = [18, 0], sizes = [123, 64], strides = [1, 1]} : vector<160x64xbf16> to vector<123x64xbf16>
    %c5_129 = arith.constant 5 : index
    %c0_130 = arith.constant 0 : index
    %c0_131 = arith.constant 0 : index
    %164 = vector.load %arg13[%c5_129, %c0_130, %c0_131] : memref<9x64x192xbf16, #tpu.memory_space<vmem>>, vector<1x64x192xbf16>
    %165 = vector.shape_cast %164 : vector<1x64x192xbf16> to vector<64x192xbf16>
    %cst_132 = arith.constant dense<0.000000e+00> : vector<123x192xf32>
    %166 = tpu.matmul %163, %165, %cst_132 {dimension_numbers = #tpu.dot_dimension_numbers<[1], [0], [0], [1], [0, 0, 1, 1], [], []>} : vector<123x64xbf16>, vector<64x192xbf16>, vector<123x192xf32> -> vector<123x192xf32>
    %167 = arith.addf %162, %166 : vector<123x192xf32>
    %168 = vector.extract_strided_slice %17 {offsets = [32, 0], sizes = [123, 64], strides = [1, 1]} : vector<160x64xbf16> to vector<123x64xbf16>
    %c6_133 = arith.constant 6 : index
    %c0_134 = arith.constant 0 : index
    %c0_135 = arith.constant 0 : index
    %169 = vector.load %arg12[%c6_133, %c0_134, %c0_135] : memref<9x64x192xbf16, #tpu.memory_space<vmem>>, vector<1x64x192xbf16>
    %170 = vector.shape_cast %169 : vector<1x64x192xbf16> to vector<64x192xbf16>
    %cst_136 = arith.constant dense<0.000000e+00> : vector<123x192xf32>
    %171 = tpu.matmul %168, %170, %cst_136 {dimension_numbers = #tpu.dot_dimension_numbers<[1], [0], [0], [1], [0, 0, 1, 1], [], []>} : vector<123x64xbf16>, vector<64x192xbf16>, vector<123x192xf32> -> vector<123x192xf32>
    %172 = arith.addf %167, %171 : vector<123x192xf32>
    %173 = vector.extract_strided_slice %108 {offsets = [32, 0], sizes = [123, 64], strides = [1, 1]} : vector<160x64xbf16> to vector<123x64xbf16>
    %c6_137 = arith.constant 6 : index
    %c0_138 = arith.constant 0 : index
    %c0_139 = arith.constant 0 : index
    %174 = vector.load %arg13[%c6_137, %c0_138, %c0_139] : memref<9x64x192xbf16, #tpu.memory_space<vmem>>, vector<1x64x192xbf16>
    %175 = vector.shape_cast %174 : vector<1x64x192xbf16> to vector<64x192xbf16>
    %cst_140 = arith.constant dense<0.000000e+00> : vector<123x192xf32>
    %176 = tpu.matmul %173, %175, %cst_140 {dimension_numbers = #tpu.dot_dimension_numbers<[1], [0], [0], [1], [0, 0, 1, 1], [], []>} : vector<123x64xbf16>, vector<64x192xbf16>, vector<123x192xf32> -> vector<123x192xf32>
    %177 = arith.addf %172, %176 : vector<123x192xf32>
    %178 = vector.extract_strided_slice %17 {offsets = [33, 0], sizes = [123, 64], strides = [1, 1]} : vector<160x64xbf16> to vector<123x64xbf16>
    %c7 = arith.constant 7 : index
    %c0_141 = arith.constant 0 : index
    %c0_142 = arith.constant 0 : index
    %179 = vector.load %arg12[%c7, %c0_141, %c0_142] : memref<9x64x192xbf16, #tpu.memory_space<vmem>>, vector<1x64x192xbf16>
    %180 = vector.shape_cast %179 : vector<1x64x192xbf16> to vector<64x192xbf16>
    %cst_143 = arith.constant dense<0.000000e+00> : vector<123x192xf32>
    %181 = tpu.matmul %178, %180, %cst_143 {dimension_numbers = #tpu.dot_dimension_numbers<[1], [0], [0], [1], [0, 0, 1, 1], [], []>} : vector<123x64xbf16>, vector<64x192xbf16>, vector<123x192xf32> -> vector<123x192xf32>
    %182 = arith.addf %177, %181 : vector<123x192xf32>
    %183 = vector.extract_strided_slice %108 {offsets = [33, 0], sizes = [123, 64], strides = [1, 1]} : vector<160x64xbf16> to vector<123x64xbf16>
    %c7_144 = arith.constant 7 : index
    %c0_145 = arith.constant 0 : index
    %c0_146 = arith.constant 0 : index
    %184 = vector.load %arg13[%c7_144, %c0_145, %c0_146] : memref<9x64x192xbf16, #tpu.memory_space<vmem>>, vector<1x64x192xbf16>
    %185 = vector.shape_cast %184 : vector<1x64x192xbf16> to vector<64x192xbf16>
    %cst_147 = arith.constant dense<0.000000e+00> : vector<123x192xf32>
    %186 = tpu.matmul %183, %185, %cst_147 {dimension_numbers = #tpu.dot_dimension_numbers<[1], [0], [0], [1], [0, 0, 1, 1], [], []>} : vector<123x64xbf16>, vector<64x192xbf16>, vector<123x192xf32> -> vector<123x192xf32>
    %187 = arith.addf %182, %186 : vector<123x192xf32>
    %188 = vector.extract_strided_slice %17 {offsets = [34, 0], sizes = [123, 64], strides = [1, 1]} : vector<160x64xbf16> to vector<123x64xbf16>
    %c8 = arith.constant 8 : index
    %c0_148 = arith.constant 0 : index
    %c0_149 = arith.constant 0 : index
    %189 = vector.load %arg12[%c8, %c0_148, %c0_149] : memref<9x64x192xbf16, #tpu.memory_space<vmem>>, vector<1x64x192xbf16>
    %190 = vector.shape_cast %189 : vector<1x64x192xbf16> to vector<64x192xbf16>
    %cst_150 = arith.constant dense<0.000000e+00> : vector<123x192xf32>
    %191 = tpu.matmul %188, %190, %cst_150 {dimension_numbers = #tpu.dot_dimension_numbers<[1], [0], [0], [1], [0, 0, 1, 1], [], []>} : vector<123x64xbf16>, vector<64x192xbf16>, vector<123x192xf32> -> vector<123x192xf32>
    %192 = arith.addf %187, %191 : vector<123x192xf32>
    %193 = vector.extract_strided_slice %108 {offsets = [34, 0], sizes = [123, 64], strides = [1, 1]} : vector<160x64xbf16> to vector<123x64xbf16>
    %c8_151 = arith.constant 8 : index
    %c0_152 = arith.constant 0 : index
    %c0_153 = arith.constant 0 : index
    %194 = vector.load %arg13[%c8_151, %c0_152, %c0_153] : memref<9x64x192xbf16, #tpu.memory_space<vmem>>, vector<1x64x192xbf16>
    %195 = vector.shape_cast %194 : vector<1x64x192xbf16> to vector<64x192xbf16>
    %cst_154 = arith.constant dense<0.000000e+00> : vector<123x192xf32>
    %196 = tpu.matmul %193, %195, %cst_154 {dimension_numbers = #tpu.dot_dimension_numbers<[1], [0], [0], [1], [0, 0, 1, 1], [], []>} : vector<123x64xbf16>, vector<64x192xbf16>, vector<123x192xf32> -> vector<123x192xf32>
    %197 = arith.addf %192, %196 : vector<123x192xf32>
    %c0_155 = arith.constant 0 : index
    %c0_156 = arith.constant 0 : index
    %198 = vector.load %arg14[%c0_155, %c0_156] : memref<1x192xf32, #tpu.memory_space<vmem>>, vector<1x192xf32>
    %199 = vector.broadcast %198 : vector<1x192xf32> to vector<123x192xf32>
    %200 = arith.mulf %197, %199 : vector<123x192xf32>
    %c0_157 = arith.constant 0 : index
    %c0_158 = arith.constant 0 : index
    %201 = vector.load %arg15[%c0_157, %c0_158] : memref<1x192xf32, #tpu.memory_space<vmem>>, vector<1x192xf32>
    %202 = vector.broadcast %201 : vector<1x192xf32> to vector<123x192xf32>
    %203 = arith.addf %200, %202 : vector<123x192xf32>
    %cst_159 = arith.constant 0.000000e+00 : f32
    %204 = vector.broadcast %cst_159 : f32 to vector<123x192xf32>
    %205 = arith.maximumf %203, %204 : vector<123x192xf32>
    %c0_160 = arith.constant 0 : index
    %c0_161 = arith.constant 0 : index
    %c0_162 = arith.constant 0 : index
    %206 = vector.load %arg16[%c0_160, %c0_161, %c0_162] : memref<1x128x192xf32, #tpu.memory_space<vmem>>, vector<1x123x192xf32>
    %207 = vector.shape_cast %206 : vector<1x123x192xf32> to vector<123x192xf32>
    %208 = vector.shape_cast %205 : vector<123x192xf32> to vector<1x123x192xf32>
    tpu.vector_store %arg16[%c0_160, %c0_161, %c0_162], %208 {strides = array<i32>} : memref<1x128x192xf32, #tpu.memory_space<vmem>>, vector<1x123x192xf32>,
    %cst_163 = arith.constant 0.000000e+00 : f32
    %209 = vector.broadcast %cst_163 : f32 to vector<5x192xf32>
    %c0_164 = arith.constant 0 : index
    %c123 = arith.constant 123 : index
    %c0_165 = arith.constant 0 : index
    %210 = vector.load %arg16[%c0_164, %c123, %c0_165] : memref<1x128x192xf32, #tpu.memory_space<vmem>>, vector<1x5x192xf32>
    %211 = vector.shape_cast %210 : vector<1x5x192xf32> to vector<5x192xf32>
    %212 = vector.shape_cast %209 : vector<5x192xf32> to vector<1x5x192xf32>
    tpu.vector_store %arg16[%c0_164, %c123, %c0_165], %212 {strides = array<i32>} : memref<1x128x192xf32, #tpu.memory_space<vmem>>, vector<1x5x192xf32>,
    return
  }
  func.func @transform_0(%arg0: i32) -> (i32, i32, i32) {
    %c0_i32 = arith.constant 0 : i32
    %c0_i32_0 = arith.constant 0 : i32
    %c0_i32_1 = arith.constant 0 : i32
    return %arg0, %c0_i32, %c0_i32_0 : i32, i32, i32
  }
  func.func @transform_1(%arg0: i32) -> (i32, i32) {
    %c0_i32 = arith.constant 0 : i32
    %c0_i32_0 = arith.constant 0 : i32
    %c0_i32_1 = arith.constant 0 : i32
    return %c0_i32, %c0_i32_0 : i32, i32
  }
  func.func @transform_2(%arg0: i32) -> (i32, i32) {
    %c0_i32 = arith.constant 0 : i32
    %c0_i32_0 = arith.constant 0 : i32
    %c0_i32_1 = arith.constant 0 : i32
    return %c0_i32, %c0_i32_0 : i32, i32
  }
  func.func @transform_3(%arg0: i32) -> (i32, i32) {
    %c0_i32 = arith.constant 0 : i32
    %c0_i32_0 = arith.constant 0 : i32
    %c0_i32_1 = arith.constant 0 : i32
    return %c0_i32, %c0_i32_0 : i32, i32
  }
  func.func @transform_4(%arg0: i32) -> (i32, i32) {
    %c0_i32 = arith.constant 0 : i32
    %c0_i32_0 = arith.constant 0 : i32
    %c0_i32_1 = arith.constant 0 : i32
    return %c0_i32, %c0_i32_0 : i32, i32
  }
  func.func @transform_5(%arg0: i32) -> (i32, i32, i32) {
    %c0_i32 = arith.constant 0 : i32
    %c0_i32_0 = arith.constant 0 : i32
    %c0_i32_1 = arith.constant 0 : i32
    %c0_i32_2 = arith.constant 0 : i32
    return %c0_i32, %c0_i32_0, %c0_i32_1 : i32, i32, i32
  }
  func.func @transform_6(%arg0: i32) -> (i32, i32) {
    %c0_i32 = arith.constant 0 : i32
    %c0_i32_0 = arith.constant 0 : i32
    %c0_i32_1 = arith.constant 0 : i32
    return %c0_i32, %c0_i32_0 : i32, i32
  }
  func.func @transform_7(%arg0: i32) -> (i32, i32) {
    %c0_i32 = arith.constant 0 : i32
    %c0_i32_0 = arith.constant 0 : i32
    %c0_i32_1 = arith.constant 0 : i32
    return %c0_i32, %c0_i32_0 : i32, i32
  }
  func.func @transform_8(%arg0: i32) -> (i32, i32, i32) {
    %c0_i32 = arith.constant 0 : i32
    %c0_i32_0 = arith.constant 0 : i32
    %c0_i32_1 = arith.constant 0 : i32
    %c0_i32_2 = arith.constant 0 : i32
    return %c0_i32, %c0_i32_0, %c0_i32_1 : i32, i32, i32
  }
  func.func @transform_9(%arg0: i32) -> (i32, i32) {
    %c0_i32 = arith.constant 0 : i32
    %c0_i32_0 = arith.constant 0 : i32
    %c0_i32_1 = arith.constant 0 : i32
    return %c0_i32, %c0_i32_0 : i32, i32
  }
  func.func @transform_10(%arg0: i32) -> (i32, i32) {
    %c0_i32 = arith.constant 0 : i32
    %c0_i32_0 = arith.constant 0 : i32
    %c0_i32_1 = arith.constant 0 : i32
    return %c0_i32, %c0_i32_0 : i32, i32
  }
  func.func @transform_11(%arg0: i32) -> (i32, i32, i32) {
    %c0_i32 = arith.constant 0 : i32
    %c0_i32_0 = arith.constant 0 : i32
    %c0_i32_1 = arith.constant 0 : i32
    %c0_i32_2 = arith.constant 0 : i32
    return %c0_i32, %c0_i32_0, %c0_i32_1 : i32, i32, i32
  }
  func.func @transform_12(%arg0: i32) -> (i32, i32, i32) {
    %c0_i32 = arith.constant 0 : i32
    %c0_i32_0 = arith.constant 0 : i32
    %c0_i32_1 = arith.constant 0 : i32
    %c0_i32_2 = arith.constant 0 : i32
    return %c0_i32, %c0_i32_0, %c0_i32_1 : i32, i32, i32
  }
  func.func @transform_13(%arg0: i32) -> (i32, i32) {
    %c0_i32 = arith.constant 0 : i32
    %c0_i32_0 = arith.constant 0 : i32
    %c0_i32_1 = arith.constant 0 : i32
    return %c0_i32, %c0_i32_0 : i32, i32
  }
  func.func @transform_14(%arg0: i32) -> (i32, i32) {
    %c0_i32 = arith.constant 0 : i32
    %c0_i32_0 = arith.constant 0 : i32
    %c0_i32_1 = arith.constant 0 : i32
    return %c0_i32, %c0_i32_0 : i32, i32
  }
  func.func @transform_15(%arg0: i32) -> (i32, i32, i32) {
    %c0_i32 = arith.constant 0 : i32
    %c0_i32_0 = arith.constant 0 : i32
    %c0_i32_1 = arith.constant 0 : i32
    return %arg0, %c0_i32, %c0_i32_0 : i32, i32, i32
  }
}

</mosaic_0001>

<llo_original>
// kernel: mixed_4a_forward.1
$region0: #{mixed_4a_forward.1}
  #allocation0 [shape = 'u32[]', space=smem, size = 0x4, offset = 0x4, fixed_abs, tag = 'smem constant byte address 0x4 - core index']
  #allocation1 [shape = 'u32[72,128]{1,0:T(1,128)}', space=vmem, size = 0x9000, scoped, tag = 'internal scratch']
  #allocation2 [shape = 'bf16[256,64]{1,0:T(8,128)(2,1)}', space=vmem, size = 0x10000, scoped, tag = 'scratch operand']
  %s0 = inlined_call_operand.vmem [shape: bf16[2,160,160], index: 0, kind: input, shape index: {}]
  %s1 = inlined_call_operand.vmem [shape: bf16[160,1], index: 1, kind: input, shape index: {}]
  %s2 = inlined_call_operand.vmem [shape: bf16[160,128], index: 2, kind: input, shape index: {}]
  %s3 = inlined_call_operand.vmem [shape: f32[1,128], index: 3, kind: input, shape index: {}]
  %s4 = inlined_call_operand.vmem [shape: f32[1,128], index: 4, kind: input, shape index: {}]
  %s5 = inlined_call_operand.vmem [shape: bf16[7,64,64], index: 5, kind: input, shape index: {}]
  %s6 = inlined_call_operand.vmem [shape: f32[1,64], index: 6, kind: input, shape index: {}]
  %s7 = inlined_call_operand.vmem [shape: f32[1,64], index: 7, kind: input, shape index: {}]
  %s8 = inlined_call_operand.vmem [shape: bf16[7,64,64], index: 8, kind: input, shape index: {}]
  %s9 = inlined_call_operand.vmem [shape: f32[1,64], index: 9, kind: input, shape index: {}]
  %s10 = inlined_call_operand.vmem [shape: f32[1,64], index: 10, kind: input, shape index: {}]
  %s11 = inlined_call_operand.vmem [shape: bf16[9,64,192], index: 11, kind: input, shape index: {}]
  %s12 = inlined_call_operand.vmem [shape: bf16[9,64,192], index: 12, kind: input, shape index: {}]
  %s13 = inlined_call_operand.vmem [shape: f32[1,192], index: 13, kind: input, shape index: {}]
  %s14 = inlined_call_operand.vmem [shape: f32[1,192], index: 14, kind: input, shape index: {}]
  %s15 = inlined_call_operand.vmem [shape: f32[2,128,192], index: 15, kind: output, shape index: {}]
  %s16 = sld [smem:[#allocation0]]
  $region93: #{mixed_4a_forward.1} parent=0
    _
  %s18 = ssub.s32 1, %s16
  %s19 = scalar_select 0, %s18, %s16
  loop: start=0, step=1, limit=4
  $region2: #{mixed_4a_forward.1} parent=0 // loop_pre_header
    _
  $region3: #{mixed_4a_forward.1} parent=0 // loop_header
    %s21 = sphi 0, %s25
    %p22 = scmp.ge.s32.totalorder %s21, 4
    %s31 = sphi 0, %s33
    %s34 = sphi 0, %s31
    %s35 = sphi 0, %s34
    %s51 = sphi 0, %s35
    %s55 = sphi 0, %s55
    %s57 = sphi 0, %s55
    %s58 = sphi 0, %s57
    %s72 = sphi 0, %s58
    %s76 = sphi 0, %s76
    %s78 = sphi 0, %s76
    %s79 = sphi 0, %s78
    %s93 = sphi 0, %s79
    %s97 = sphi 0, %s97
    %s99 = sphi 0, %s97
    %s100 = sphi 0, %s99
    %s114 = sphi 0, %s100
    %s118 = sphi 0, %s118
    %s120 = sphi 0, %s118
    %s121 = sphi 0, %s120
    %s135 = sphi 0, %s121
    %s139 = sphi 0, %s139
    %s141 = sphi 0, %s139
    %s142 = sphi 0, %s141
    %s156 = sphi 0, %s142
    %s160 = sphi 0, %s160
    %s162 = sphi 0, %s160
    %s163 = sphi 0, %s162
    %s177 = sphi 0, %s163
    %s181 = sphi 0, %s181
    %s183 = sphi 0, %s181
    %s184 = sphi 0, %s183
    %s198 = sphi 0, %s184
    %s202 = sphi 0, %s202
    %s204 = sphi 0, %s202
    %s205 = sphi 0, %s204
    %s219 = sphi 0, %s205
    %s223 = sphi 0, %s223
    %s225 = sphi 0, %s223
    %s226 = sphi 0, %s225
    %s240 = sphi 0, %s226
    %s244 = sphi 0, %s244
    %s246 = sphi 0, %s244
    %s247 = sphi 0, %s246
    %s261 = sphi 0, %s247
    %s265 = sphi 0, %s265
    %s267 = sphi 0, %s265
    %s268 = sphi 0, %s267
    %s282 = sphi 0, %s268
    %s286 = sphi 0, %s286
    %s288 = sphi 0, %s286
    %s289 = sphi 0, %s288
    %s303 = sphi 0, %s289
    %s307 = sphi 0, %s307
    %s309 = sphi 0, %s307
    %s310 = sphi 0, %s309
    %s324 = sphi 0, %s310
    %s328 = sphi 0, %s328
    %s330 = sphi 0, %s328
    %s331 = sphi 0, %s330
    %s345 = sphi 0, %s331
    %s351 = sphi 0, %s353
    %s354 = sphi 0, %s351
    %s355 = sphi 0, %s354
    %s371 = sphi 0, %s355
  $region4: #{mixed_4a_forward.1} parent=0 // loop_header_branch
    %24 = sbr.rel (%p22) target = $region8
  $region5: #{mixed_4a_forward.1} parent=0 // loop_body
    %s26 = ssub.s32 %s21, 1
    %s27 = ssub.s32 %s21, 2
    %s28 = sadd.s32 %s21, 1
    %s29 = ssub.s32 %s21, %s28
    %p30 = scmp.eq.s32.totalorder %s29, 0
    %s32 = sadd.s32 %s31, 1
    %s33 = scalar_select %p30, %s31, %s32
    %p36 = pneg %p30
    %p37 = scmp.eq.s32.totalorder %s21, 1
    %p38 = por %p36, %p37
    %p39 = scmp.ne.s32.totalorder %s31, %s34
    %p40 = scmp.eq.s32.totalorder %s21, 0
    %p41 = por %p39, %p40
    %p42 = scmp.ne.s32.totalorder %s31, %s34
    %p43 = scmp.eq.s32.totalorder %s26, 1
    %p44 = por %p42, %p43
    %p45 = scmp.ne.s32.totalorder %s34, %s35
    %p46 = scmp.eq.s32.totalorder %s26, 0
    %p47 = por %p45, %p46
    %p48 = scmp.ne.s32.totalorder %s34, %s35
    %p49 = scmp.eq.s32.totalorder %s27, 1
    %p50 = por %p48, %p49
    %p52 = scmp.ne.s32.totalorder %s35, %s51
    %p53 = scmp.eq.s32.totalorder %s27, 0
    %p54 = por %p52, %p53
    %s56 = sadd.s32 %s55, 1
    %p59 = scmp.eq.s32.totalorder %s21, 1
    %p60 = scmp.ne.s32.totalorder %s55, %s57
    %p61 = scmp.eq.s32.totalorder %s21, 0
    %p62 = por %p60, %p61
    %p63 = scmp.ne.s32.totalorder %s55, %s57
    %p64 = scmp.eq.s32.totalorder %s26, 1
    %p65 = por %p63, %p64
    %p66 = scmp.ne.s32.totalorder %s57, %s58
    %p67 = scmp.eq.s32.totalorder %s26, 0
    %p68 = por %p66, %p67
    %p69 = scmp.ne.s32.totalorder %s57, %s58
    %p70 = scmp.eq.s32.totalorder %s27, 1
    %p71 = por %p69, %p70
    %p73 = scmp.ne.s32.totalorder %s58, %s72
    %p74 = scmp.eq.s32.totalorder %s27, 0
    %p75 = por %p73, %p74
    %s77 = sadd.s32 %s76, 1
    %p80 = scmp.eq.s32.totalorder %s21, 1
    %p81 = scmp.ne.s32.totalorder %s76, %s78
    %p82 = scmp.eq.s32.totalorder %s21, 0
    %p83 = por %p81, %p82
    %p84 = scmp.ne.s32.totalorder %s76, %s78
    %p85 = scmp.eq.s32.totalorder %s26, 1
    %p86 = por %p84, %p85
    %p87 = scmp.ne.s32.totalorder %s78, %s79
    %p88 = scmp.eq.s32.totalorder %s26, 0
    %p89 = por %p87, %p88
    %p90 = scmp.ne.s32.totalorder %s78, %s79
    %p91 = scmp.eq.s32.totalorder %s27, 1
    %p92 = por %p90, %p91
    %p94 = scmp.ne.s32.totalorder %s79, %s93
    %p95 = scmp.eq.s32.totalorder %s27, 0
    %p96 = por %p94, %p95
    %s98 = sadd.s32 %s97, 1
    %p101 = scmp.eq.s32.totalorder %s21, 1
    %p102 = scmp.ne.s32.totalorder %s97, %s99
    %p103 = scmp.eq.s32.totalorder %s21, 0
    %p104 = por %p102, %p103
    %p105 = scmp.ne.s32.totalorder %s97, %s99
    %p106 = scmp.eq.s32.totalorder %s26, 1
    %p107 = por %p105, %p106
    %p108 = scmp.ne.s32.totalorder %s99, %s100
    %p109 = scmp.eq.s32.totalorder %s26, 0
    %p110 = por %p108, %p109
    %p111 = scmp.ne.s32.totalorder %s99, %s100
    %p112 = scmp.eq.s32.totalorder %s27, 1
    %p113 = por %p111, %p112
    %p115 = scmp.ne.s32.totalorder %s100, %s114
    %p116 = scmp.eq.s32.totalorder %s27, 0
    %p117 = por %p115, %p116
    %s119 = sadd.s32 %s118, 1
    %p122 = scmp.eq.s32.totalorder %s21, 1
    %p123 = scmp.ne.s32.totalorder %s118, %s120
    %p124 = scmp.eq.s32.totalorder %s21, 0
    %p125 = por %p123, %p124
    %p126 = scmp.ne.s32.totalorder %s118, %s120
    %p127 = scmp.eq.s32.totalorder %s26, 1
    %p128 = por %p126, %p127
    %p129 = scmp.ne.s32.totalorder %s120, %s121
    %p130 = scmp.eq.s32.totalorder %s26, 0
    %p131 = por %p129, %p130
    %p132 = scmp.ne.s32.totalorder %s120, %s121
    %p133 = scmp.eq.s32.totalorder %s27, 1
    %p134 = por %p132, %p133
    %p136 = scmp.ne.s32.totalorder %s121, %s135
    %p137 = scmp.eq.s32.totalorder %s27, 0
    %p138 = por %p136, %p137
    %s140 = sadd.s32 %s139, 1
    %p143 = scmp.eq.s32.totalorder %s21, 1
    %p144 = scmp.ne.s32.totalorder %s139, %s141
    %p145 = scmp.eq.s32.totalorder %s21, 0
    %p146 = por %p144, %p145
    %p147 = scmp.ne.s32.totalorder %s139, %s141
    %p148 = scmp.eq.s32.totalorder %s26, 1
    %p149 = por %p147, %p148
    %p150 = scmp.ne.s32.totalorder %s141, %s142
    %p151 = scmp.eq.s32.totalorder %s26, 0
    %p152 = por %p150, %p151
    %p153 = scmp.ne.s32.totalorder %s141, %s142
    %p154 = scmp.eq.s32.totalorder %s27, 1
    %p155 = por %p153, %p154
    %p157 = scmp.ne.s32.totalorder %s142, %s156
    %p158 = scmp.eq.s32.totalorder %s27, 0
    %p159 = por %p157, %p158
    %s161 = sadd.s32 %s160, 1
    %p164 = scmp.eq.s32.totalorder %s21, 1
    %p165 = scmp.ne.s32.totalorder %s160, %s162
    %p166 = scmp.eq.s32.totalorder %s21, 0
    %p167 = por %p165, %p166
    %p168 = scmp.ne.s32.totalorder %s160, %s162
    %p169 = scmp.eq.s32.totalorder %s26, 1
    %p170 = por %p168, %p169
    %p171 = scmp.ne.s32.totalorder %s162, %s163
    %p172 = scmp.eq.s32.totalorder %s26, 0
    %p173 = por %p171, %p172
    %p174 = scmp.ne.s32.totalorder %s162, %s163
    %p175 = scmp.eq.s32.totalorder %s27, 1
    %p176 = por %p174, %p175
    %p178 = scmp.ne.s32.totalorder %s163, %s177
    %p179 = scmp.eq.s32.totalorder %s27, 0
    %p180 = por %p178, %p179
    %s182 = sadd.s32 %s181, 1
    %p185 = scmp.eq.s32.totalorder %s21, 1
    %p186 = scmp.ne.s32.totalorder %s181, %s183
    %p187 = scmp.eq.s32.totalorder %s21, 0
    %p188 = por %p186, %p187
    %p189 = scmp.ne.s32.totalorder %s181, %s183
    %p190 = scmp.eq.s32.totalorder %s26, 1
    %p191 = por %p189, %p190
    %p192 = scmp.ne.s32.totalorder %s183, %s184
    %p193 = scmp.eq.s32.totalorder %s26, 0
    %p194 = por %p192, %p193
    %p195 = scmp.ne.s32.totalorder %s183, %s184
    %p196 = scmp.eq.s32.totalorder %s27, 1
    %p197 = por %p195, %p196
    %p199 = scmp.ne.s32.totalorder %s184, %s198
    %p200 = scmp.eq.s32.totalorder %s27, 0
    %p201 = por %p199, %p200
    %s203 = sadd.s32 %s202, 1
    %p206 = scmp.eq.s32.totalorder %s21, 1
    %p207 = scmp.ne.s32.totalorder %s202, %s204
    %p208 = scmp.eq.s32.totalorder %s21, 0
    %p209 = por %p207, %p208
    %p210 = scmp.ne.s32.totalorder %s202, %s204
    %p211 = scmp.eq.s32.totalorder %s26, 1
    %p212 = por %p210, %p211
    %p213 = scmp.ne.s32.totalorder %s204, %s205
    %p214 = scmp.eq.s32.totalorder %s26, 0
    %p215 = por %p213, %p214
    %p216 = scmp.ne.s32.totalorder %s204, %s205
    %p217 = scmp.eq.s32.totalorder %s27, 1
    %p218 = por %p216, %p217
    %p220 = scmp.ne.s32.totalorder %s205, %s219
    %p221 = scmp.eq.s32.totalorder %s27, 0
    %p222 = por %p220, %p221
    %s224 = sadd.s32 %s223, 1
    %p227 = scmp.eq.s32.totalorder %s21, 1
    %p228 = scmp.ne.s32.totalorder %s223, %s225
    %p229 = scmp.eq.s32.totalorder %s21, 0
    %p230 = por %p228, %p229
    %p231 = scmp.ne.s32.totalorder %s223, %s225
    %p232 = scmp.eq.s32.totalorder %s26, 1
    %p233 = por %p231, %p232
    %p234 = scmp.ne.s32.totalorder %s225, %s226
    %p235 = scmp.eq.s32.totalorder %s26, 0
    %p236 = por %p234, %p235
    %p237 = scmp.ne.s32.totalorder %s225, %s226
    %p238 = scmp.eq.s32.totalorder %s27, 1
    %p239 = por %p237, %p238
    %p241 = scmp.ne.s32.totalorder %s226, %s240
    %p242 = scmp.eq.s32.totalorder %s27, 0
    %p243 = por %p241, %p242
    %s245 = sadd.s32 %s244, 1
    %p248 = scmp.eq.s32.totalorder %s21, 1
    %p249 = scmp.ne.s32.totalorder %s244, %s246
    %p250 = scmp.eq.s32.totalorder %s21, 0
    %p251 = por %p249, %p250
    %p252 = scmp.ne.s32.totalorder %s244, %s246
    %p253 = scmp.eq.s32.totalorder %s26, 1
    %p254 = por %p252, %p253
    %p255 = scmp.ne.s32.totalorder %s246, %s247
    %p256 = scmp.eq.s32.totalorder %s26, 0
    %p257 = por %p255, %p256
    %p258 = scmp.ne.s32.totalorder %s246, %s247
    %p259 = scmp.eq.s32.totalorder %s27, 1
    %p260 = por %p258, %p259
    %p262 = scmp.ne.s32.totalorder %s247, %s261
    %p263 = scmp.eq.s32.totalorder %s27, 0
    %p264 = por %p262, %p263
    %s266 = sadd.s32 %s265, 1
    %p269 = scmp.eq.s32.totalorder %s21, 1
    %p270 = scmp.ne.s32.totalorder %s265, %s267
    %p271 = scmp.eq.s32.totalorder %s21, 0
    %p272 = por %p270, %p271
    %p273 = scmp.ne.s32.totalorder %s265, %s267
    %p274 = scmp.eq.s32.totalorder %s26, 1
    %p275 = por %p273, %p274
    %p276 = scmp.ne.s32.totalorder %s267, %s268
    %p277 = scmp.eq.s32.totalorder %s26, 0
    %p278 = por %p276, %p277
    %p279 = scmp.ne.s32.totalorder %s267, %s268
    %p280 = scmp.eq.s32.totalorder %s27, 1
    %p281 = por %p279, %p280
    %p283 = scmp.ne.s32.totalorder %s268, %s282
    %p284 = scmp.eq.s32.totalorder %s27, 0
    %p285 = por %p283, %p284
    %s287 = sadd.s32 %s286, 1
    %p290 = scmp.eq.s32.totalorder %s21, 1
    %p291 = scmp.ne.s32.totalorder %s286, %s288
    %p292 = scmp.eq.s32.totalorder %s21, 0
    %p293 = por %p291, %p292
    %p294 = scmp.ne.s32.totalorder %s286, %s288
    %p295 = scmp.eq.s32.totalorder %s26, 1
    %p296 = por %p294, %p295
    %p297 = scmp.ne.s32.totalorder %s288, %s289
    %p298 = scmp.eq.s32.totalorder %s26, 0
    %p299 = por %p297, %p298
    %p300 = scmp.ne.s32.totalorder %s288, %s289
    %p301 = scmp.eq.s32.totalorder %s27, 1
    %p302 = por %p300, %p301
    %p304 = scmp.ne.s32.totalorder %s289, %s303
    %p305 = scmp.eq.s32.totalorder %s27, 0
    %p306 = por %p304, %p305
    %s308 = sadd.s32 %s307, 1
    %p311 = scmp.eq.s32.totalorder %s21, 1
    %p312 = scmp.ne.s32.totalorder %s307, %s309
    %p313 = scmp.eq.s32.totalorder %s21, 0
    %p314 = por %p312, %p313
    %p315 = scmp.ne.s32.totalorder %s307, %s309
    %p316 = scmp.eq.s32.totalorder %s26, 1
    %p317 = por %p315, %p316
    %p318 = scmp.ne.s32.totalorder %s309, %s310
    %p319 = scmp.eq.s32.totalorder %s26, 0
    %p320 = por %p318, %p319
    %p321 = scmp.ne.s32.totalorder %s309, %s310
    %p322 = scmp.eq.s32.totalorder %s27, 1
    %p323 = por %p321, %p322
    %p325 = scmp.ne.s32.totalorder %s310, %s324
    %p326 = scmp.eq.s32.totalorder %s27, 0
    %p327 = por %p325, %p326
    %s329 = sadd.s32 %s328, 1
    %p332 = scmp.eq.s32.totalorder %s21, 1
    %p333 = scmp.ne.s32.totalorder %s328, %s330
    %p334 = scmp.eq.s32.totalorder %s21, 0
    %p335 = por %p333, %p334
    %p336 = scmp.ne.s32.totalorder %s328, %s330
    %p337 = scmp.eq.s32.totalorder %s26, 1
    %p338 = por %p336, %p337
    %p339 = scmp.ne.s32.totalorder %s330, %s331
    %p340 = scmp.eq.s32.totalorder %s26, 0
    %p341 = por %p339, %p340
    %p342 = scmp.ne.s32.totalorder %s330, %s331
    %p343 = scmp.eq.s32.totalorder %s27, 1
    %p344 = por %p342, %p343
    %p346 = scmp.ne.s32.totalorder %s331, %s345
    %p347 = scmp.eq.s32.totalorder %s27, 0
    %p348 = por %p346, %p347
    %s349 = ssub.s32 %s21, %s28
    %p350 = scmp.eq.s32.totalorder %s349, 0
    %s352 = sadd.s32 %s351, 1
    %s353 = scalar_select %p350, %s351, %s352
    %p356 = pneg %p350
    %p357 = scmp.eq.s32.totalorder %s21, 1
    %p358 = por %p356, %p357
    %p359 = scmp.ne.s32.totalorder %s351, %s354
    %p360 = scmp.eq.s32.totalorder %s21, 0
    %p361 = por %p359, %p360
    %p362 = scmp.ne.s32.totalorder %s351, %s354
    %p363 = scmp.eq.s32.totalorder %s26, 1
    %p364 = por %p362, %p363
    %p365 = scmp.ne.s32.totalorder %s354, %s355
    %p366 = scmp.eq.s32.totalorder %s26, 0
    %p367 = por %p365, %p366
    %p368 = scmp.ne.s32.totalorder %s354, %s355
    %p369 = scmp.eq.s32.totalorder %s27, 1
    %p370 = por %p368, %p369
    %p372 = scmp.ne.s32.totalorder %s355, %s371
    %p373 = scmp.eq.s32.totalorder %s27, 0
    %p374 = por %p372, %p373
    %p375 = scmp.le.s32.totalorder 1, %s21
    %p376 = scmp.lt.s32.totalorder %s21, 3
    %p377 = pnand %p375, %p376
    %p378 = pneg %p377
    // Predicated region
    $region9: #{mixed_4a_forward.1} parent=5 // pred_check
      _
    $region10: #{mixed_4a_forward.1} parent=5 // pred_check_branch
      %380 = sbr.rel (%p377) target = $region12
    $region11: #{mixed_4a_forward.1} parent=5 // pred_region
      %s381 = ssub.s32 %s21, 1
      // Predicated region
      $region13: #{mixed_4a_forward.1} parent=11 // pred_check
        %p382 = pneg %p68
      $region14: #{mixed_4a_forward.1} parent=11 // pred_check_branch
        %384 = sbr.rel (%p382) target = $region16
      $region15: #{mixed_4a_forward.1} parent=11 // pred_region
        _
      $region16: #{mixed_4a_forward.1} parent=11 // pred_fallthru
        _
      // Predicated region
      $region17: #{mixed_4a_forward.1} parent=11 // pred_check
        %p385 = pneg %p89
      $region18: #{mixed_4a_forward.1} parent=11 // pred_check_branch
        %387 = sbr.rel (%p385) target = $region20
      $region19: #{mixed_4a_forward.1} parent=11 // pred_region
        _
      $region20: #{mixed_4a_forward.1} parent=11 // pred_fallthru
        _
      // Predicated region
      $region21: #{mixed_4a_forward.1} parent=11 // pred_check
        %p388 = pneg %p110
      $region22: #{mixed_4a_forward.1} parent=11 // pred_check_branch
        %390 = sbr.rel (%p388) target = $region24
      $region23: #{mixed_4a_forward.1} parent=11 // pred_region
        _
      $region24: #{mixed_4a_forward.1} parent=11 // pred_fallthru
        _
      // Predicated region
      $region25: #{mixed_4a_forward.1} parent=11 // pred_check
        %p391 = pneg %p131
      $region26: #{mixed_4a_forward.1} parent=11 // pred_check_branch
        %393 = sbr.rel (%p391) target = $region28
      $region27: #{mixed_4a_forward.1} parent=11 // pred_region
        _
      $region28: #{mixed_4a_forward.1} parent=11 // pred_fallthru
        _
      // Predicated region
      $region29: #{mixed_4a_forward.1} parent=11 // pred_check
        %p394 = pneg %p152
      $region30: #{mixed_4a_forward.1} parent=11 // pred_check_branch
        %396 = sbr.rel (%p394) target = $region32
      $region31: #{mixed_4a_forward.1} parent=11 // pred_region
        _
      $region32: #{mixed_4a_forward.1} parent=11 // pred_fallthru
        _
      // Predicated region
      $region33: #{mixed_4a_forward.1} parent=11 // pred_check
        %p397 = pneg %p173
      $region34: #{mixed_4a_forward.1} parent=11 // pred_check_branch
        %399 = sbr.rel (%p397) target = $region36
      $region35: #{mixed_4a_forward.1} parent=11 // pred_region
        _
      $region36: #{mixed_4a_forward.1} parent=11 // pred_fallthru
        _
      // Predicated region
      $region37: #{mixed_4a_forward.1} parent=11 // pred_check
        %p400 = pneg %p194
      $region38: #{mixed_4a_forward.1} parent=11 // pred_check_branch
        %402 = sbr.rel (%p400) target = $region40
      $region39: #{mixed_4a_forward.1} parent=11 // pred_region
        _
      $region40: #{mixed_4a_forward.1} parent=11 // pred_fallthru
        _
      // Predicated region
      $region41: #{mixed_4a_forward.1} parent=11 // pred_check
        %p403 = pneg %p215
      $region42: #{mixed_4a_forward.1} parent=11 // pred_check_branch
        %405 = sbr.rel (%p403) target = $region44
      $region43: #{mixed_4a_forward.1} parent=11 // pred_region
        _
      $region44: #{mixed_4a_forward.1} parent=11 // pred_fallthru
        _
      // Predicated region
      $region45: #{mixed_4a_forward.1} parent=11 // pred_check
        %p406 = pneg %p236
      $region46: #{mixed_4a_forward.1} parent=11 // pred_check_branch
        %408 = sbr.rel (%p406) target = $region48
      $region47: #{mixed_4a_forward.1} parent=11 // pred_region
        _
      $region48: #{mixed_4a_forward.1} parent=11 // pred_fallthru
        _
      // Predicated region
      $region49: #{mixed_4a_forward.1} parent=11 // pred_check
        %p409 = pneg %p257
      $region50: #{mixed_4a_forward.1} parent=11 // pred_check_branch
        %411 = sbr.rel (%p409) target = $region52
      $region51: #{mixed_4a_forward.1} parent=11 // pred_region
        _
      $region52: #{mixed_4a_forward.1} parent=11 // pred_fallthru
        _
      // Predicated region
      $region53: #{mixed_4a_forward.1} parent=11 // pred_check
        %p412 = pneg %p278
      $region54: #{mixed_4a_forward.1} parent=11 // pred_check_branch
        %414 = sbr.rel (%p412) target = $region56
      $region55: #{mixed_4a_forward.1} parent=11 // pred_region
        _
      $region56: #{mixed_4a_forward.1} parent=11 // pred_fallthru
        _
      // Predicated region
      $region57: #{mixed_4a_forward.1} parent=11 // pred_check
        %p415 = pneg %p299
      $region58: #{mixed_4a_forward.1} parent=11 // pred_check_branch
        %417 = sbr.rel (%p415) target = $region60
      $region59: #{mixed_4a_forward.1} parent=11 // pred_region
        _
      $region60: #{mixed_4a_forward.1} parent=11 // pred_fallthru
        _
      // Predicated region
      $region61: #{mixed_4a_forward.1} parent=11 // pred_check
        %p418 = pneg %p320
      $region62: #{mixed_4a_forward.1} parent=11 // pred_check_branch
        %420 = sbr.rel (%p418) target = $region64
      $region63: #{mixed_4a_forward.1} parent=11 // pred_region
        _
      $region64: #{mixed_4a_forward.1} parent=11 // pred_fallthru
        _
      // Predicated region
      $region65: #{mixed_4a_forward.1} parent=11 // pred_check
        %p421 = pneg %p341
      $region66: #{mixed_4a_forward.1} parent=11 // pred_check_branch
        %423 = sbr.rel (%p421) target = $region68
      $region67: #{mixed_4a_forward.1} parent=11 // pred_region
        _
      $region68: #{mixed_4a_forward.1} parent=11 // pred_fallthru
        _
    $region12: #{mixed_4a_forward.1} parent=5 // pred_fallthru
      _
    %p424 = scmp.lt.s32.totalorder %s21, 2
    // Predicated region
    $region69: #{mixed_4a_forward.1} parent=5 // pred_check
      %p425 = pneg %p424
    $region70: #{mixed_4a_forward.1} parent=5 // pred_check_branch
      %427 = sbr.rel (%p425) target = $region72
    $region71: #{mixed_4a_forward.1} parent=5 // pred_region
      // Predicated region
      $region73: #{mixed_4a_forward.1} parent=71 // pred_check
        %p428 = pneg %p41
      $region74: #{mixed_4a_forward.1} parent=71 // pred_check_branch
        %430 = sbr.rel (%p428) target = $region76
      $region75: #{mixed_4a_forward.1} parent=71 // pred_region
        %p431 = scmp.lt.s32.totalorder %s21, 1
        %s432 = scalar_select %p431, %s21, 1
        %s433 = smul.addr %s432, 40
        %s434 = smul.addr %s433, 4
        %s435 = scalar_lea.vmem %s0, %s434
      $region76: #{mixed_4a_forward.1} parent=71 // pred_fallthru
        _
    $region72: #{mixed_4a_forward.1} parent=5 // pred_fallthru
      _
    %p436 = scmp.le.s32.totalorder 1, %s21
    %p437 = scmp.lt.s32.totalorder %s21, 3
    %p438 = pnand %p436, %p437
    %p439 = pneg %p438
    // Predicated region
    $region77: #{mixed_4a_forward.1} parent=5 // pred_check
      _
    $region78: #{mixed_4a_forward.1} parent=5 // pred_check_branch
      %441 = sbr.rel (%p438) target = $region80
    $region79: #{mixed_4a_forward.1} parent=5 // pred_region
      %s442 = ssub.s32 %s21, 1
      %p443 = scmp.lt.s32.totalorder %s26, 1
      %s444 = scalar_select %p443, %s26, 1
      %s445 = smul.addr %s444, 40
      %s446 = smul.addr %s445, 4
      %s447 = scalar_lea.vmem %s0, %s446
      %p448 = pneg %p47
      %p449 = pneg %p44
      %p450 = pneg %p68
      %p451 = pneg %p65
      %p452 = pneg %p89
      %p453 = pneg %p86
      %p454 = pneg %p110
      %p455 = pneg %p107
      %p456 = pneg %p131
      %p457 = pneg %p128
      %p458 = pneg %p152
      %p459 = pneg %p149
      %p460 = pneg %p173
      %p461 = pneg %p170
      %p462 = pneg %p194
      %p463 = pneg %p191
      %p464 = pneg %p215
      %p465 = pneg %p212
      %p466 = pneg %p236
      %p467 = pneg %p233
      %p468 = pneg %p257
      %p469 = pneg %p254
      %p470 = pneg %p278
      %p471 = pneg %p275
      %p472 = pneg %p299
      %p473 = pneg %p296
      %p474 = pneg %p320
      %p475 = pneg %p317
      %p476 = pneg %p341
      %p477 = pneg %p338
      %p478 = pneg %p367
      %p479 = pneg %p364
      %p480 = scmp.lt.s32.totalorder %s26, 1
      %s481 = scalar_select %p480, %s26, 1
      %s482 = smul.addr %s481, 32
      %s483 = smul.addr %s482, 8
      %s484 = scalar_lea.vmem %s15, %s483
      %p485 = scmp.lt.s32.totalorder %s26, 1
      %s486 = scalar_select %p485, %s26, 1
      %s487 = smul.addr %s486, 40
      %s488 = smul.addr %s487, 4
      %s489 = scalar_lea.vmem %s0, %s488
      %p490 = scmp.lt.s32.totalorder %s26, 1
      %s491 = scalar_select %p490, %s26, 1
      %s492 = smul.addr %s491, 32
      %s493 = smul.addr %s492, 8
      %s494 = scalar_lea.vmem %s15, %s493
      %vm496 = vcmask 519168
      %497 = vst.msk [vmem:[#allocation2] sm:$0xf] %vm496, 0
      %498 = vst.msk [vmem:[#allocation2 + $0x4] sm:$0xf] %vm496, 0
      %499 = vst.msk [vmem:[#allocation2 + $0x8] sm:$0xf] %vm496, 0
      %500 = vst.msk [vmem:[#allocation2 + $0xc] sm:$0xf] %vm496, 0
      %501 = vst.msk [vmem:[#allocation2 + $0x10] sm:$0xf] %vm496, 0
      %502 = vst.msk [vmem:[#allocation2 + $0x14] sm:$0xf] %vm496, 0
      %503 = vst.msk [vmem:[#allocation2 + $0x68] sm:$0xf] %vm496, 0
      %504 = vst.msk [vmem:[#allocation2 + $0x6c] sm:$0xf] %vm496, 0
      %505 = vst.msk [vmem:[#allocation2 + $0x70] sm:$0xf] %vm496, 0
      %506 = vst.msk [vmem:[#allocation2 + $0x74] sm:$0xf] %vm496, 0
      %507 = vst.msk [vmem:[#allocation2 + $0x78] sm:$0xf] %vm496, 0
      %508 = vst.msk [vmem:[#allocation2 + $0x7c] sm:$0xf] %vm496, 0
      %v509 = vld [vmem:[%s489] sm:$0xff]
      %v510 = vld [vmem:[%s489 + $0x8] sm:$0xff]
      %v511 = vld [vmem:[%s489 + $0x10] sm:$0xff]
      %v512 = vld [vmem:[%s489 + $0x18] sm:$0xff]
      %v513 = vld [vmem:[%s489 + $0x20] sm:$0xff]
      %v514 = vld [vmem:[%s489 + $0x28] sm:$0xff]
      %v515 = vld [vmem:[%s489 + $0x30] sm:$0xff]
      %v516 = vld [vmem:[%s489 + $0x38] sm:$0xff]
      %v517 = vld [vmem:[%s489 + $0x40] sm:$0xff]
      %v518 = vld [vmem:[%s489 + $0x48] sm:$0xff]
      %v519 = vld [vmem:[%s489 + $0x50] sm:$0xff]
      %v520 = vld [vmem:[%s489 + $0x58] sm:$0xff]
      %v521 = vld [vmem:[%s489 + $0x60] sm:$0xff]
      %v522 = vld [vmem:[%s489 + $0x68] sm:$0xff]
      %v523 = vld [vmem:[%s489 + $0x70] sm:$0xff]
      %v524 = vld [vmem:[%s489 + $0x78] sm:$0xff]
      %v525 = vld [vmem:[%s489 + $0x80] sm:$0xff]
      %v526 = vld [vmem:[%s489 + $0x88] sm:$0xff]
      %v527 = vld [vmem:[%s489 + $0x90] sm:$0xff]
      %v528 = vld [vmem:[%s489 + $0x98] sm:$0xff]
      %v529 = vld [vmem:[%s2] sm:$0xf]
      %v530 = vld [vmem:[%s2 + $0x4] sm:$0xf]
      %v531 = vld [vmem:[%s2 + $0x8] sm:$0xf]
      %v532 = vld [vmem:[%s2 + $0xc] sm:$0xf]
      %v533 = vld [vmem:[%s2 + $0x10] sm:$0xf]
      %v534 = vld [vmem:[%s2 + $0x14] sm:$0xf]
      %v535 = vld [vmem:[%s2 + $0x18] sm:$0xf]
      %v536 = vld [vmem:[%s2 + $0x1c] sm:$0xf]
      %v537 = vld [vmem:[%s2 + $0x20] sm:$0xf]
      %v538 = vld [vmem:[%s2 + $0x24] sm:$0xf]
      %v539 = vld [vmem:[%s2 + $0x28] sm:$0xf]
      %v540 = vld [vmem:[%s2 + $0x2c] sm:$0xf]
      %v541 = vld [vmem:[%s2 + $0x30] sm:$0xf]
      %v542 = vld [vmem:[%s2 + $0x34] sm:$0xf]
      %v543 = vld [vmem:[%s2 + $0x38] sm:$0xf]
      %v544 = vld [vmem:[%s2 + $0x3c] sm:$0xf]
      %v545 = vld [vmem:[%s2 + $0x40] sm:$0xf]
      %v546 = vld [vmem:[%s2 + $0x44] sm:$0xf]
      %v547 = vld [vmem:[%s2 + $0x48] sm:$0xf]
      %v548 = vld [vmem:[%s2 + $0x4c] sm:$0xf]
      %v569 = vunpack.c.l.b16 %v509
      %v570 = vunpack.c.h.b16 %v509
      %v571 = vunpack.c.l.b16 %v510
      %v572 = vunpack.c.h.b16 %v510
      %v573 = vunpack.c.l.b16 %v511
      %v574 = vunpack.c.h.b16 %v511
      %v575 = vunpack.c.l.b16 %v512
      %v576 = vunpack.c.h.b16 %v512
      %v577 = vunpack.c.l.b16 %v513
      %v578 = vunpack.c.h.b16 %v513
      %v579 = vunpack.c.l.b16 %v514
      %v580 = vunpack.c.h.b16 %v514
      %v581 = vunpack.c.l.b16 %v515
      %v582 = vunpack.c.h.b16 %v515
      %v583 = vunpack.c.l.b16 %v516
      %v584 = vunpack.c.h.b16 %v516
      %v585 = vunpack.c.l.b16 %v517
      %v586 = vunpack.c.h.b16 %v517
      %v587 = vunpack.c.l.b16 %v518
      %v588 = vunpack.c.h.b16 %v518
      %v589 = vunpack.c.l.b16 %v519
      %v590 = vunpack.c.h.b16 %v519
      %v591 = vunpack.c.l.b16 %v520
      %v592 = vunpack.c.h.b16 %v520
      %v593 = vunpack.c.l.b16 %v521
      %v594 = vunpack.c.h.b16 %v521
      %v595 = vunpack.c.l.b16 %v522
      %v596 = vunpack.c.h.b16 %v522
      %v597 = vunpack.c.l.b16 %v523
      %v598 = vunpack.c.h.b16 %v523
      %v599 = vunpack.c.l.b16 %v524
      %v600 = vunpack.c.h.b16 %v524
      %v601 = vunpack.c.l.b16 %v525
      %v602 = vunpack.c.h.b16 %v525
      %v603 = vunpack.c.l.b16 %v526
      %v604 = vunpack.c.h.b16 %v526
      %v605 = vunpack.c.l.b16 %v527
      %v606 = vunpack.c.h.b16 %v527
      %v607 = vunpack.c.l.b16 %v528
      %v608 = vunpack.c.h.b16 %v528
      %v609 = vpack.c.b16 %v571, %v569
      %v610 = vpack.c.b16 %v572, %v570
      %v611 = vpack.c.b16 %v575, %v573
      %v612 = vpack.c.b16 %v576, %v574
      %v613 = vpack.c.b16 %v579, %v577
      %v614 = vpack.c.b16 %v580, %v578
      %v615 = vpack.c.b16 %v583, %v581
      %v616 = vpack.c.b16 %v584, %v582
      %v617 = vpack.c.b16 %v587, %v585
      %v618 = vpack.c.b16 %v588, %v586
      %v619 = vpack.c.b16 %v591, %v589
      %v620 = vpack.c.b16 %v592, %v590
      %v621 = vpack.c.b16 %v595, %v593
      %v622 = vpack.c.b16 %v596, %v594
      %v623 = vpack.c.b16 %v599, %v597
      %v624 = vpack.c.b16 %v600, %v598
      %v625 = vpack.c.b16 %v603, %v601
      %v626 = vpack.c.b16 %v604, %v602
      %v627 = vpack.c.b16 %v607, %v605
      %v628 = vpack.c.b16 %v608, %v606
      %v659 = vunpack.c.l.b16 %v529
      %v660 = vunpack.c.l.b16 %v530
      %v661 = vunpack.c.l.b16 %v531
      %v662 = vunpack.c.l.b16 %v532
      %v663 = vunpack.c.l.b16 %v533
      %v664 = vunpack.c.l.b16 %v534
      %v665 = vunpack.c.l.b16 %v535
      %v666 = vunpack.c.l.b16 %v536
      %v667 = vunpack.c.l.b16 %v537
      %v668 = vunpack.c.l.b16 %v538
      %v669 = vunpack.c.l.b16 %v539
      %v670 = vunpack.c.l.b16 %v540
      %v671 = vunpack.c.l.b16 %v541
      %v672 = vunpack.c.l.b16 %v542
      %v673 = vunpack.c.l.b16 %v543
      %v674 = vunpack.c.l.b16 %v544
      %v675 = vunpack.c.l.b16 %v545
      %v676 = vunpack.c.l.b16 %v546
      %v677 = vunpack.c.l.b16 %v547
      %v678 = vunpack.c.l.b16 %v548
      %v679 = vpack.c.b16 %v660, %v659
      %v680 = vpack.c.b16 %v662, %v661
      %v681 = vpack.c.b16 %v664, %v663
      %v682 = vpack.c.b16 %v666, %v665
      %v683 = vpack.c.b16 %v668, %v667
      %v684 = vpack.c.b16 %v670, %v669
      %v685 = vpack.c.b16 %v672, %v671
      %v686 = vpack.c.b16 %v674, %v673
      %v687 = vpack.c.b16 %v676, %v675
      %v688 = vpack.c.b16 %v678, %v677
      %vm699 = vcmask 261120
      %v701 = vsel %vm699, %v610, 0
      %v704 = vsel %vm699, %v612, 0
      %v707 = vsel %vm699, %v614, 0
      %v710 = vsel %vm699, %v616, 0
      %v713 = vsel %vm699, %v618, 0
      %v716 = vsel %vm699, %v620, 0
      %v719 = vsel %vm699, %v622, 0
      %v722 = vsel %vm699, %v624, 0
      %v725 = vsel %vm699, %v626, 0
      %v728 = vsel %vm699, %v628, 0
      %730 = vmatpush.bf16.msra.mxu0 %v686
      %731 = vmatpush.bf16.msra.mxu0 %v685
      %732 = vmatpush.bf16.msra.mxu0 %v684
      %733 = vmatpush.bf16.msra.mxu0 %v683
      %734 = vmatpush.bf16.msra.mxu0 %v682
      %735 = vmatpush.bf16.msra.mxu0 %v681
      %736 = vmatpush.bf16.msra.mxu0 %v680
      %737 = vmatpush.bf16.msra.mxu0 %v679
      %738 = vmatmul.bf16.gmra.mxu0 %v609
      %v739 = vpop.f32.mrf.mxu0
      %v740 = vadd.f32 0.0, %v739
      %v741 = vpop.f32.mrf.mxu0
      %v742 = vadd.f32 0.0, %v741
      %743 = vmatmul.bf16.gmra.mxu0 %v611
      %v744 = vpop.f32.mrf.mxu0
      %v745 = vadd.f32 0.0, %v744
      %v746 = vpop.f32.mrf.mxu0
      %v747 = vadd.f32 0.0, %v746
      %748 = vmatmul.bf16.gmra.mxu0 %v613
      %v749 = vpop.f32.mrf.mxu0
      %v750 = vadd.f32 0.0, %v749
      %v751 = vpop.f32.mrf.mxu0
      %v752 = vadd.f32 0.0, %v751
      %753 = vmatmul.bf16.gmra.mxu0 %v615
      %v754 = vpop.f32.mrf.mxu0
      %v755 = vadd.f32 0.0, %v754
      %v756 = vpop.f32.mrf.mxu0
      %v757 = vadd.f32 0.0, %v756
      %758 = vmatmul.bf16.gmra.mxu0 %v617
      %v759 = vpop.f32.mrf.mxu0
      %v760 = vadd.f32 0.0, %v759
      %v761 = vpop.f32.mrf.mxu0
      %v762 = vadd.f32 0.0, %v761
      %763 = vmatmul.bf16.gmra.mxu0 %v619
      %v764 = vpop.f32.mrf.mxu0
      %v765 = vadd.f32 0.0, %v764
      %v766 = vpop.f32.mrf.mxu0
      %v767 = vadd.f32 0.0, %v766
      %768 = vmatmul.bf16.gmra.mxu0 %v621
      %v769 = vpop.f32.mrf.mxu0
      %v770 = vadd.f32 0.0, %v769
      %v771 = vpop.f32.mrf.mxu0
      %v772 = vadd.f32 0.0, %v771
      %773 = vmatmul.bf16.gmra.mxu0 %v623
      %v774 = vpop.f32.mrf.mxu0
      %v775 = vadd.f32 0.0, %v774
      %v776 = vpop.f32.mrf.mxu0
      %v777 = vadd.f32 0.0, %v776
      %778 = vmatmul.bf16.gmra.mxu0 %v625
      %v779 = vpop.f32.mrf.mxu0
      %v780 = vadd.f32 0.0, %v779
      %v781 = vpop.f32.mrf.mxu0
      %v782 = vadd.f32 0.0, %v781
      %783 = vmatmul.bf16.gmra.mxu0 %v627
      %v784 = vpop.f32.mrf.mxu0
      %v785 = vadd.f32 0.0, %v784
      %v786 = vpop.f32.mrf.mxu0
      %v787 = vadd.f32 0.0, %v786
      %788 = vdwg.mxu0
      %789 = vmatpush.bf16.msra.mxu0 0
      %790 = vmatpush.bf16.msra.mxu0 0
      %791 = vmatpush.bf16.msra.mxu0 0
      %792 = vmatpush.bf16.msra.mxu0 0
      %793 = vmatpush.bf16.msra.mxu0 0
      %794 = vmatpush.bf16.msra.mxu0 0
      %795 = vmatpush.bf16.msra.mxu0 %v688
      %796 = vmatpush.bf16.msra.mxu0 %v687
      %797 = vmatmul.bf16.gmra.mxu0 %v701
      %v798 = vpop.f32.mrf.mxu0
      %v799 = vadd.f32 %v740, %v798
      %v800 = vpop.f32.mrf.mxu0
      %v801 = vadd.f32 %v742, %v800
      %802 = vmatmul.bf16.gmra.mxu0 %v704
      %v803 = vpop.f32.mrf.mxu0
      %v804 = vadd.f32 %v745, %v803
      %v805 = vpop.f32.mrf.mxu0
      %v806 = vadd.f32 %v747, %v805
      %807 = vmatmul.bf16.gmra.mxu0 %v707
      %v808 = vpop.f32.mrf.mxu0
      %v809 = vadd.f32 %v750, %v808
      %v810 = vpop.f32.mrf.mxu0
      %v811 = vadd.f32 %v752, %v810
      %812 = vmatmul.bf16.gmra.mxu0 %v710
      %v813 = vpop.f32.mrf.mxu0
      %v814 = vadd.f32 %v755, %v813
      %v815 = vpop.f32.mrf.mxu0
      %v816 = vadd.f32 %v757, %v815
      %817 = vmatmul.bf16.gmra.mxu0 %v713
      %v818 = vpop.f32.mrf.mxu0
      %v819 = vadd.f32 %v760, %v818
      %v820 = vpop.f32.mrf.mxu0
      %v821 = vadd.f32 %v762, %v820
      %822 = vmatmul.bf16.gmra.mxu0 %v716
      %v823 = vpop.f32.mrf.mxu0
      %v824 = vadd.f32 %v765, %v823
      %v825 = vpop.f32.mrf.mxu0
      %v826 = vadd.f32 %v767, %v825
      %827 = vmatmul.bf16.gmra.mxu0 %v719
      %v828 = vpop.f32.mrf.mxu0
      %v829 = vadd.f32 %v770, %v828
      %v830 = vpop.f32.mrf.mxu0
      %v831 = vadd.f32 %v772, %v830
      %832 = vmatmul.bf16.gmra.mxu0 %v722
      %v833 = vpop.f32.mrf.mxu0
      %v834 = vadd.f32 %v775, %v833
      %v835 = vpop.f32.mrf.mxu0
      %v836 = vadd.f32 %v777, %v835
      %837 = vmatmul.bf16.gmra.mxu0 %v725
      %v838 = vpop.f32.mrf.mxu0
      %v839 = vadd.f32 %v780, %v838
      %v840 = vpop.f32.mrf.mxu0
      %v841 = vadd.f32 %v782, %v840
      %842 = vmatmul.bf16.gmra.mxu0 %v728
      %v843 = vpop.f32.mrf.mxu0
      %v844 = vadd.f32 %v785, %v843
      %v845 = vpop.f32.mrf.mxu0
      %v846 = vadd.f32 %v787, %v845
      %847 = vdwg.mxu0
      %v848 = vld [vmem:[%s3] sm:$0x1]
      %v850 = vperm.slane %v848, 0
      %v852 = vmul.f32 %v799, %v850
      %v853 = vmul.f32 %v801, %v850
      %v854 = vmul.f32 %v804, %v850
      %v855 = vmul.f32 %v806, %v850
      %v856 = vmul.f32 %v809, %v850
      %v857 = vmul.f32 %v811, %v850
      %v858 = vmul.f32 %v814, %v850
      %v859 = vmul.f32 %v816, %v850
      %v860 = vmul.f32 %v819, %v850
      %v861 = vmul.f32 %v821, %v850
      %v862 = vmul.f32 %v824, %v850
      %v863 = vmul.f32 %v826, %v850
      %v864 = vmul.f32 %v829, %v850
      %v865 = vmul.f32 %v831, %v850
      %v866 = vmul.f32 %v834, %v850
      %v867 = vmul.f32 %v836, %v850
      %v868 = vmul.f32 %v839, %v850
      %v869 = vmul.f32 %v841, %v850
      %v870 = vmul.f32 %v844, %v850
      %v871 = vmul.f32 %v846, %v850
      %v872 = vld [vmem:[%s4] sm:$0x1]
      %v874 = vperm.slane %v872, 0
      %v876 = vadd.f32 %v852, %v874
      %v877 = vadd.f32 %v853, %v874
      %v878 = vadd.f32 %v854, %v874
      %v879 = vadd.f32 %v855, %v874
      %v880 = vadd.f32 %v856, %v874
      %v881 = vadd.f32 %v857, %v874
      %v882 = vadd.f32 %v858, %v874
      %v883 = vadd.f32 %v859, %v874
      %v884 = vadd.f32 %v860, %v874
      %v885 = vadd.f32 %v861, %v874
      %v886 = vadd.f32 %v862, %v874
      %v887 = vadd.f32 %v863, %v874
      %v888 = vadd.f32 %v864, %v874
      %v889 = vadd.f32 %v865, %v874
      %v890 = vadd.f32 %v866, %v874
      %v891 = vadd.f32 %v867, %v874
      %v892 = vadd.f32 %v868, %v874
      %v893 = vadd.f32 %v869, %v874
      %v894 = vadd.f32 %v870, %v874
      %v895 = vadd.f32 %v871, %v874
      %v896 = vmax.f32 %v876, 0.0
      %v897 = vmax.f32 %v877, 0.0
      %v898 = vmax.f32 %v878, 0.0
      %v899 = vmax.f32 %v879, 0.0
      %v900 = vmax.f32 %v880, 0.0
      %v901 = vmax.f32 %v881, 0.0
      %v902 = vmax.f32 %v882, 0.0
      %v903 = vmax.f32 %v883, 0.0
      %v904 = vmax.f32 %v884, 0.0
      %v905 = vmax.f32 %v885, 0.0
      %v906 = vmax.f32 %v886, 0.0
      %v907 = vmax.f32 %v887, 0.0
      %v908 = vmax.f32 %v888, 0.0
      %v909 = vmax.f32 %v889, 0.0
      %v910 = vmax.f32 %v890, 0.0
      %v911 = vmax.f32 %v891, 0.0
      %v912 = vmax.f32 %v892, 0.0
      %v913 = vmax.f32 %v893, 0.0
      %v914 = vmax.f32 %v894, 0.0
      %v915 = vmax.f32 %v895, 0.0
      %v916 = vpack.c.bf16 %v896, %v896
      %v917 = vpack.c.bf16 %v897, %v897
      %v918 = vpack.c.bf16 %v898, %v898
      %v919 = vpack.c.bf16 %v899, %v899
      %v920 = vpack.c.bf16 %v900, %v900
      %v921 = vpack.c.bf16 %v901, %v901
      %v922 = vpack.c.bf16 %v902, %v902
      %v923 = vpack.c.bf16 %v903, %v903
      %v924 = vpack.c.bf16 %v904, %v904
      %v925 = vpack.c.bf16 %v905, %v905
      %v926 = vpack.c.bf16 %v906, %v906
      %v927 = vpack.c.bf16 %v907, %v907
      %v928 = vpack.c.bf16 %v908, %v908
      %v929 = vpack.c.bf16 %v909, %v909
      %v930 = vpack.c.bf16 %v910, %v910
      %v931 = vpack.c.bf16 %v911, %v911
      %v932 = vpack.c.bf16 %v912, %v912
      %v933 = vpack.c.bf16 %v913, %v913
      %v934 = vpack.c.bf16 %v914, %v914
      %v935 = vpack.c.bf16 %v915, %v915
      %v936 = vld [vmem:[%s1] sm:$0xf]
      %v937 = vld [vmem:[%s1 + $0x4] sm:$0xf]
      %v938 = vld [vmem:[%s1 + $0x8] sm:$0xf]
      %v939 = vld [vmem:[%s1 + $0xc] sm:$0xf]
      %v940 = vld [vmem:[%s1 + $0x10] sm:$0xf]
      %v941 = vld [vmem:[%s1 + $0x14] sm:$0xf]
      %v942 = vld [vmem:[%s1 + $0x18] sm:$0xf]
      %v943 = vld [vmem:[%s1 + $0x1c] sm:$0xf]
      %v944 = vld [vmem:[%s1 + $0x20] sm:$0xf]
      %v945 = vld [vmem:[%s1 + $0x24] sm:$0xf]
      %v946 = vld [vmem:[%s1 + $0x28] sm:$0xf]
      %v947 = vld [vmem:[%s1 + $0x2c] sm:$0xf]
      %v948 = vld [vmem:[%s1 + $0x30] sm:$0xf]
      %v949 = vld [vmem:[%s1 + $0x34] sm:$0xf]
      %v950 = vld [vmem:[%s1 + $0x38] sm:$0xf]
      %v951 = vld [vmem:[%s1 + $0x3c] sm:$0xf]
      %v952 = vld [vmem:[%s1 + $0x40] sm:$0xf]
      %v953 = vld [vmem:[%s1 + $0x44] sm:$0xf]
      %v954 = vld [vmem:[%s1 + $0x48] sm:$0xf]
      %v955 = vld [vmem:[%s1 + $0x4c] sm:$0xf]
      %957 = vset.pattern.permute.xlu0 0
      %958 = vperm.xlu0 %957, %v936
      %v959 = vpop.permute.xlu0 %958
      %v962 = vunpack.c.l.s4 839922192
      %v963 = vunpack.c.0.s8 %v962
      %v964 = vperm.slane %v959, %v963
      %966 = vset.pattern.permute.xlu0 0
      %967 = vperm.xlu0 %966, %v937
      %v968 = vpop.permute.xlu0 %967
      %v971 = vunpack.c.l.s4 839922192
      %v972 = vunpack.c.0.s8 %v971
      %v973 = vperm.slane %v968, %v972
      %975 = vset.pattern.permute.xlu0 0
      %976 = vperm.xlu0 %975, %v938
      %v977 = vpop.permute.xlu0 %976
      %v980 = vunpack.c.l.s4 839922192
      %v981 = vunpack.c.0.s8 %v980
      %v982 = vperm.slane %v977, %v981
      %984 = vset.pattern.permute.xlu0 0
      %985 = vperm.xlu0 %984, %v939
      %v986 = vpop.permute.xlu0 %985
      %v989 = vunpack.c.l.s4 839922192
      %v990 = vunpack.c.0.s8 %v989
      %v991 = vperm.slane %v986, %v990
      %993 = vset.pattern.permute.xlu0 0
      %994 = vperm.xlu0 %993, %v940
      %v995 = vpop.permute.xlu0 %994
      %v998 = vunpack.c.l.s4 839922192
      %v999 = vunpack.c.0.s8 %v998
      %v1000 = vperm.slane %v995, %v999
      %1002 = vset.pattern.permute.xlu0 0
      %1003 = vperm.xlu0 %1002, %v941
      %v1004 = vpop.permute.xlu0 %1003
      %v1007 = vunpack.c.l.s4 839922192
      %v1008 = vunpack.c.0.s8 %v1007
      %v1009 = vperm.slane %v1004, %v1008
      %1011 = vset.pattern.permute.xlu0 0
      %1012 = vperm.xlu0 %1011, %v942
      %v1013 = vpop.permute.xlu0 %1012
      %v1016 = vunpack.c.l.s4 839922192
      %v1017 = vunpack.c.0.s8 %v1016
      %v1018 = vperm.slane %v1013, %v1017
      %1020 = vset.pattern.permute.xlu0 0
      %1021 = vperm.xlu0 %1020, %v943
      %v1022 = vpop.permute.xlu0 %1021
      %v1025 = vunpack.c.l.s4 839922192
      %v1026 = vunpack.c.0.s8 %v1025
      %v1027 = vperm.slane %v1022, %v1026
      %1029 = vset.pattern.permute.xlu0 0
      %1030 = vperm.xlu0 %1029, %v944
      %v1031 = vpop.permute.xlu0 %1030
      %v1034 = vunpack.c.l.s4 839922192
      %v1035 = vunpack.c.0.s8 %v1034
      %v1036 = vperm.slane %v1031, %v1035
      %1038 = vset.pattern.permute.xlu0 0
      %1039 = vperm.xlu0 %1038, %v945
      %v1040 = vpop.permute.xlu0 %1039
      %v1043 = vunpack.c.l.s4 839922192
      %v1044 = vunpack.c.0.s8 %v1043
      %v1045 = vperm.slane %v1040, %v1044
      %1047 = vset.pattern.permute.xlu0 0
      %1048 = vperm.xlu0 %1047, %v946
      %v1049 = vpop.permute.xlu0 %1048
      %v1052 = vunpack.c.l.s4 839922192
      %v1053 = vunpack.c.0.s8 %v1052
      %v1054 = vperm.slane %v1049, %v1053
      %1056 = vset.pattern.permute.xlu0 0
      %1057 = vperm.xlu0 %1056, %v947
      %v1058 = vpop.permute.xlu0 %1057
      %v1061 = vunpack.c.l.s4 839922192
      %v1062 = vunpack.c.0.s8 %v1061
      %v1063 = vperm.slane %v1058, %v1062
      %1065 = vset.pattern.permute.xlu0 0
      %1066 = vperm.xlu0 %1065, %v948
      %v1067 = vpop.permute.xlu0 %1066
      %v1070 = vunpack.c.l.s4 839922192
      %v1071 = vunpack.c.0.s8 %v1070
      %v1072 = vperm.slane %v1067, %v1071
      %1074 = vset.pattern.permute.xlu0 0
      %1075 = vperm.xlu0 %1074, %v949
      %v1076 = vpop.permute.xlu0 %1075
      %v1079 = vunpack.c.l.s4 839922192
      %v1080 = vunpack.c.0.s8 %v1079
      %v1081 = vperm.slane %v1076, %v1080
      %1083 = vset.pattern.permute.xlu0 0
      %1084 = vperm.xlu0 %1083, %v950
      %v1085 = vpop.permute.xlu0 %1084
      %v1088 = vunpack.c.l.s4 839922192
      %v1089 = vunpack.c.0.s8 %v1088
      %v1090 = vperm.slane %v1085, %v1089
      %1092 = vset.pattern.permute.xlu0 0
      %1093 = vperm.xlu0 %1092, %v951
      %v1094 = vpop.permute.xlu0 %1093
      %v1097 = vunpack.c.l.s4 839922192
      %v1098 = vunpack.c.0.s8 %v1097
      %v1099 = vperm.slane %v1094, %v1098
      %1101 = vset.pattern.permute.xlu0 0
      %1102 = vperm.xlu0 %1101, %v952
      %v1103 = vpop.permute.xlu0 %1102
      %v1106 = vunpack.c.l.s4 839922192
      %v1107 = vunpack.c.0.s8 %v1106
      %v1108 = vperm.slane %v1103, %v1107
      %1110 = vset.pattern.permute.xlu0 0
      %1111 = vperm.xlu0 %1110, %v953
      %v1112 = vpop.permute.xlu0 %1111
      %v1115 = vunpack.c.l.s4 839922192
      %v1116 = vunpack.c.0.s8 %v1115
      %v1117 = vperm.slane %v1112, %v1116
      %1119 = vset.pattern.permute.xlu0 0
      %1120 = vperm.xlu0 %1119, %v954
      %v1121 = vpop.permute.xlu0 %1120
      %v1124 = vunpack.c.l.s4 839922192
      %v1125 = vunpack.c.0.s8 %v1124
      %v1126 = vperm.slane %v1121, %v1125
      %1128 = vset.pattern.permute.xlu0 0
      %1129 = vperm.xlu0 %1128, %v955
      %v1130 = vpop.permute.xlu0 %1129
      %v1133 = vunpack.c.l.s4 839922192
      %v1134 = vunpack.c.0.s8 %v1133
      %v1135 = vperm.slane %v1130, %v1134
      %v1136 = vunpack.c.l.bf16 %v916
      %v1137 = vunpack.c.l.bf16 %v917
      %v1138 = vunpack.c.l.bf16 %v918
      %v1139 = vunpack.c.l.bf16 %v919
      %v1140 = vunpack.c.l.bf16 %v920
      %v1141 = vunpack.c.l.bf16 %v921
      %v1142 = vunpack.c.l.bf16 %v922
      %v1143 = vunpack.c.l.bf16 %v923
      %v1144 = vunpack.c.l.bf16 %v924
      %v1145 = vunpack.c.l.bf16 %v925
      %v1146 = vunpack.c.l.bf16 %v926
      %v1147 = vunpack.c.l.bf16 %v927
      %v1148 = vunpack.c.l.bf16 %v928
      %v1149 = vunpack.c.l.bf16 %v929
      %v1150 = vunpack.c.l.bf16 %v930
      %v1151 = vunpack.c.l.bf16 %v931
      %v1152 = vunpack.c.l.bf16 %v932
      %v1153 = vunpack.c.l.bf16 %v933
      %v1154 = vunpack.c.l.bf16 %v934
      %v1155 = vunpack.c.l.bf16 %v935
      %v1156 = vunpack.c.l.bf16 %v964
      %v1157 = vunpack.c.l.bf16 %v973
      %v1158 = vunpack.c.l.bf16 %v982
      %v1159 = vunpack.c.l.bf16 %v991
      %v1160 = vunpack.c.l.bf16 %v1000
      %v1161 = vunpack.c.l.bf16 %v1009
      %v1162 = vunpack.c.l.bf16 %v1018
      %v1163 = vunpack.c.l.bf16 %v1027
      %v1164 = vunpack.c.l.bf16 %v1036
      %v1165 = vunpack.c.l.bf16 %v1045
      %v1166 = vunpack.c.l.bf16 %v1054
      %v1167 = vunpack.c.l.bf16 %v1063
      %v1168 = vunpack.c.l.bf16 %v1072
      %v1169 = vunpack.c.l.bf16 %v1081
      %v1170 = vunpack.c.l.bf16 %v1090
      %v1171 = vunpack.c.l.bf16 %v1099
      %v1172 = vunpack.c.l.bf16 %v1108
      %v1173 = vunpack.c.l.bf16 %v1117
      %v1174 = vunpack.c.l.bf16 %v1126
      %v1175 = vunpack.c.l.bf16 %v1135
      %v1176 = vmul.f32 %v1136, %v1156
      %v1177 = vmul.f32 %v1137, %v1157
      %v1178 = vmul.f32 %v1138, %v1158
      %v1179 = vmul.f32 %v1139, %v1159
      %v1180 = vmul.f32 %v1140, %v1160
      %v1181 = vmul.f32 %v1141, %v1161
      %v1182 = vmul.f32 %v1142, %v1162
      %v1183 = vmul.f32 %v1143, %v1163
      %v1184 = vmul.f32 %v1144, %v1164
      %v1185 = vmul.f32 %v1145, %v1165
      %v1186 = vmul.f32 %v1146, %v1166
      %v1187 = vmul.f32 %v1147, %v1167
      %v1188 = vmul.f32 %v1148, %v1168
      %v1189 = vmul.f32 %v1149, %v1169
      %v1190 = vmul.f32 %v1150, %v1170
      %v1191 = vmul.f32 %v1151, %v1171
      %v1192 = vmul.f32 %v1152, %v1172
      %v1193 = vmul.f32 %v1153, %v1173
      %v1194 = vmul.f32 %v1154, %v1174
      %v1195 = vmul.f32 %v1155, %v1175
      %v1196 = vpack.c.bf16 %v1176, %v1176
      %v1197 = vpack.c.bf16 %v1177, %v1177
      %v1198 = vpack.c.bf16 %v1178, %v1178
      %v1199 = vpack.c.bf16 %v1179, %v1179
      %v1200 = vpack.c.bf16 %v1180, %v1180
      %v1201 = vpack.c.bf16 %v1181, %v1181
      %v1202 = vpack.c.bf16 %v1182, %v1182
      %v1203 = vpack.c.bf16 %v1183, %v1183
      %v1204 = vpack.c.bf16 %v1184, %v1184
      %v1205 = vpack.c.bf16 %v1185, %v1185
      %v1206 = vpack.c.bf16 %v1186, %v1186
      %v1207 = vpack.c.bf16 %v1187, %v1187
      %v1208 = vpack.c.bf16 %v1188, %v1188
      %v1209 = vpack.c.bf16 %v1189, %v1189
      %v1210 = vpack.c.bf16 %v1190, %v1190
      %v1211 = vpack.c.bf16 %v1191, %v1191
      %v1212 = vpack.c.bf16 %v1192, %v1192
      %v1213 = vpack.c.bf16 %v1193, %v1193
      %v1214 = vpack.c.bf16 %v1194, %v1194
      %v1215 = vpack.c.bf16 %v1195, %v1195
      %v1216 = vld [vmem:[%s5] sm:$0xf]
      %v1217 = vld [vmem:[%s5 + $0x4] sm:$0xf]
      %v1218 = vld [vmem:[%s5 + $0x8] sm:$0xf]
      %v1219 = vld [vmem:[%s5 + $0xc] sm:$0xf]
      %v1220 = vld [vmem:[%s5 + $0x10] sm:$0xf]
      %v1221 = vld [vmem:[%s5 + $0x14] sm:$0xf]
      %v1222 = vld [vmem:[%s5 + $0x18] sm:$0xf]
      %v1223 = vld [vmem:[%s5 + $0x1c] sm:$0xf]
      %s1224 = scalar_lea.vmem %s5, 32
      %v1225 = vld [vmem:[%s1224] sm:$0xf]
      %v1226 = vld [vmem:[%s1224 + $0x4] sm:$0xf]
      %v1227 = vld [vmem:[%s1224 + $0x8] sm:$0xf]
      %v1228 = vld [vmem:[%s1224 + $0xc] sm:$0xf]
      %v1229 = vld [vmem:[%s1224 + $0x10] sm:$0xf]
      %v1230 = vld [vmem:[%s1224 + $0x14] sm:$0xf]
      %v1231 = vld [vmem:[%s1224 + $0x18] sm:$0xf]
      %v1232 = vld [vmem:[%s1224 + $0x1c] sm:$0xf]
      %v1253 = vunpack.c.l.b16 %v1196
      %v1254 = vunpack.c.l.b16 %v1197
      %v1255 = vunpack.c.l.b16 %v1198
      %v1256 = vunpack.c.l.b16 %v1199
      %v1257 = vunpack.c.l.b16 %v1200
      %v1258 = vunpack.c.l.b16 %v1201
      %v1259 = vunpack.c.l.b16 %v1202
      %v1260 = vunpack.c.l.b16 %v1203
      %v1261 = vunpack.c.l.b16 %v1204
      %v1262 = vunpack.c.l.b16 %v1205
      %v1263 = vunpack.c.l.b16 %v1206
      %v1264 = vunpack.c.l.b16 %v1207
      %v1265 = vunpack.c.l.b16 %v1208
      %v1266 = vunpack.c.l.b16 %v1209
      %v1267 = vunpack.c.l.b16 %v1210
      %v1268 = vunpack.c.l.b16 %v1211
      %v1269 = vunpack.c.l.b16 %v1212
      %v1270 = vunpack.c.l.b16 %v1213
      %v1271 = vunpack.c.l.b16 %v1214
      %v1272 = vunpack.c.l.b16 %v1215
      %v1273 = vpack.c.b16 %v1254, %v1253
      %v1274 = vpack.c.b16 %v1256, %v1255
      %v1275 = vpack.c.b16 %v1258, %v1257
      %v1276 = vpack.c.b16 %v1260, %v1259
      %v1277 = vpack.c.b16 %v1262, %v1261
      %v1278 = vpack.c.b16 %v1264, %v1263
      %v1279 = vpack.c.b16 %v1266, %v1265
      %v1280 = vpack.c.b16 %v1268, %v1267
      %v1281 = vpack.c.b16 %v1270, %v1269
      %v1282 = vpack.c.b16 %v1272, %v1271
      %vm1283 = vsmask.f32 7424
      %v1285 = vshrl.u32 %v1273, 16
      %v1287 = vshll.u32 %v1273, 16
      %v1289 = vrot.slane %v1287, 1
      %v1290 = vor.u32 %v1285, %v1289
      %v1292 = vshll.u32 %v1274, 16
      %v1294 = vrot.slane %v1292, 1
      %v1295 = vsel %vm1283, %v1290, %v1294
      %v1296 = vshrl.u32 %v1274, 16
      %v1298 = vor.u32 %v1296, %v1294
      %v1300 = vshll.u32 %v1275, 16
      %v1302 = vrot.slane %v1300, 1
      %v1303 = vsel %vm1283, %v1298, %v1302
      %v1304 = vshrl.u32 %v1275, 16
      %v1306 = vor.u32 %v1304, %v1302
      %v1308 = vshll.u32 %v1276, 16
      %v1310 = vrot.slane %v1308, 1
      %v1311 = vsel %vm1283, %v1306, %v1310
      %v1312 = vshrl.u32 %v1276, 16
      %v1314 = vor.u32 %v1312, %v1310
      %v1316 = vshll.u32 %v1277, 16
      %v1318 = vrot.slane %v1316, 1
      %v1319 = vsel %vm1283, %v1314, %v1318
      %v1320 = vshrl.u32 %v1277, 16
      %v1322 = vor.u32 %v1320, %v1318
      %v1324 = vshll.u32 %v1278, 16
      %v1326 = vrot.slane %v1324, 1
      %v1327 = vsel %vm1283, %v1322, %v1326
      %v1328 = vshrl.u32 %v1278, 16
      %v1330 = vor.u32 %v1328, %v1326
      %v1332 = vshll.u32 %v1279, 16
      %v1334 = vrot.slane %v1332, 1
      %v1335 = vsel %vm1283, %v1330, %v1334
      %v1336 = vshrl.u32 %v1279, 16
      %v1338 = vor.u32 %v1336, %v1334
      %v1340 = vshll.u32 %v1280, 16
      %v1342 = vrot.slane %v1340, 1
      %v1343 = vsel %vm1283, %v1338, %v1342
      %v1344 = vshrl.u32 %v1280, 16
      %v1346 = vor.u32 %v1344, %v1342
      %v1348 = vshll.u32 %v1281, 16
      %v1350 = vrot.slane %v1348, 1
      %v1351 = vsel %vm1283, %v1346, %v1350
      %v1352 = vshrl.u32 %v1281, 16
      %v1354 = vor.u32 %v1352, %v1350
      %v1356 = vshll.u32 %v1282, 16
      %v1358 = vrot.slane %v1356, 1
      %v1359 = vsel %vm1283, %v1354, %v1358
      %v1360 = vshrl.u32 %v1282, 16
      %v1362 = vor.u32 %v1360, %v1358
      %1363 = vrot.lane.b32.xlu0 %v1295, 64
      %v1364 = vpop.permute.xlu0 %1363
      %1365 = vrot.lane.b32.xlu0 %v1303, 64
      %v1366 = vpop.permute.xlu0 %1365
      %1367 = vrot.lane.b32.xlu0 %v1311, 64
      %v1368 = vpop.permute.xlu0 %1367
      %1369 = vrot.lane.b32.xlu0 %v1319, 64
      %v1370 = vpop.permute.xlu0 %1369
      %1371 = vrot.lane.b32.xlu0 %v1327, 64
      %v1372 = vpop.permute.xlu0 %1371
      %1373 = vrot.lane.b32.xlu0 %v1335, 64
      %v1374 = vpop.permute.xlu0 %1373
      %1375 = vrot.lane.b32.xlu0 %v1343, 64
      %v1376 = vpop.permute.xlu0 %1375
      %1377 = vrot.lane.b32.xlu0 %v1351, 64
      %v1378 = vpop.permute.xlu0 %1377
      %1379 = vrot.lane.b32.xlu0 %v1359, 64
      %v1380 = vpop.permute.xlu0 %1379
      %1381 = vrot.lane.b32.xlu0 %v1362, 64
      %v1382 = vpop.permute.xlu0 %1381
      %v1391 = vunpack.c.l.b16 %v1225
      %v1392 = vunpack.c.l.b16 %v1226
      %v1393 = vunpack.c.l.b16 %v1227
      %v1394 = vunpack.c.l.b16 %v1228
      %v1395 = vunpack.c.l.b16 %v1229
      %v1396 = vunpack.c.l.b16 %v1230
      %v1397 = vunpack.c.l.b16 %v1231
      %v1398 = vunpack.c.l.b16 %v1232
      %v1399 = vpack.c.b16 %v1392, %v1391
      %v1400 = vpack.c.b16 %v1394, %v1393
      %v1401 = vpack.c.b16 %v1396, %v1395
      %v1402 = vpack.c.b16 %v1398, %v1397
      %vm1407 = vcmask 523264
      %v1409 = vsel %vm1407, %v1364, 0
      %v1412 = vsel %vm1407, %v1366, 0
      %v1415 = vsel %vm1407, %v1368, 0
      %v1418 = vsel %vm1407, %v1370, 0
      %v1421 = vsel %vm1407, %v1372, 0
      %v1424 = vsel %vm1407, %v1374, 0
      %v1427 = vsel %vm1407, %v1376, 0
      %v1430 = vsel %vm1407, %v1378, 0
      %v1433 = vsel %vm1407, %v1380, 0
      %v1436 = vsel %vm1407, %v1382, 0
      %1438 = vmatpush.bf16.msra.mxu0 0
      %1439 = vmatpush.bf16.msra.mxu0 0
      %1440 = vmatpush.bf16.msra.mxu0 0
      %1441 = vmatpush.bf16.msra.mxu0 0
      %1442 = vmatpush.bf16.msra.mxu0 %v1402
      %1443 = vmatpush.bf16.msra.mxu0 %v1401
      %1444 = vmatpush.bf16.msra.mxu0 %v1400
      %1445 = vmatpush.bf16.msra.mxu0 %v1399
      %1446 = vmatmul.bf16.gmra.mxu0 %v1409
      %v1447 = vpop.f32.mrf.mxu0
      %v1448 = vadd.f32 0.0, %v1447
      %v1449 = vpop.f32.mrf.mxu0
      %v1450 = vadd.f32 0.0, %v1449
      %1451 = vmatmul.bf16.gmra.mxu0 %v1412
      %v1452 = vpop.f32.mrf.mxu0
      %v1453 = vadd.f32 0.0, %v1452
      %v1454 = vpop.f32.mrf.mxu0
      %v1455 = vadd.f32 0.0, %v1454
      %1456 = vmatmul.bf16.gmra.mxu0 %v1415
      %v1457 = vpop.f32.mrf.mxu0
      %v1458 = vadd.f32 0.0, %v1457
      %v1459 = vpop.f32.mrf.mxu0
      %v1460 = vadd.f32 0.0, %v1459
      %1461 = vmatmul.bf16.gmra.mxu0 %v1418
      %v1462 = vpop.f32.mrf.mxu0
      %v1463 = vadd.f32 0.0, %v1462
      %v1464 = vpop.f32.mrf.mxu0
      %v1465 = vadd.f32 0.0, %v1464
      %1466 = vmatmul.bf16.gmra.mxu0 %v1421
      %v1467 = vpop.f32.mrf.mxu0
      %v1468 = vadd.f32 0.0, %v1467
      %v1469 = vpop.f32.mrf.mxu0
      %v1470 = vadd.f32 0.0, %v1469
      %1471 = vmatmul.bf16.gmra.mxu0 %v1424
      %v1472 = vpop.f32.mrf.mxu0
      %v1473 = vadd.f32 0.0, %v1472
      %v1474 = vpop.f32.mrf.mxu0
      %v1475 = vadd.f32 0.0, %v1474
      %1476 = vmatmul.bf16.gmra.mxu0 %v1427
      %v1477 = vpop.f32.mrf.mxu0
      %v1478 = vadd.f32 0.0, %v1477
      %v1479 = vpop.f32.mrf.mxu0
      %v1480 = vadd.f32 0.0, %v1479
      %1481 = vmatmul.bf16.gmra.mxu0 %v1430
      %v1482 = vpop.f32.mrf.mxu0
      %v1483 = vadd.f32 0.0, %v1482
      %v1484 = vpop.f32.mrf.mxu0
      %v1485 = vadd.f32 0.0, %v1484
      %1486 = vmatmul.bf16.gmra.mxu0 %v1433
      %v1487 = vpop.f32.mrf.mxu0
      %v1488 = vadd.f32 0.0, %v1487
      %v1489 = vpop.f32.mrf.mxu0
      %v1490 = vadd.f32 0.0, %v1489
      %1491 = vmatmul.bf16.gmra.mxu0 %v1436
      %v1492 = vpop.f32.mrf.mxu0
      %v1493 = vadd.f32 0.0, %v1492
      %v1494 = vpop.f32.mrf.mxu0
      %v1495 = vadd.f32 0.0, %v1494
      %1496 = vdwg.mxu0
      %1497 = vrot.lane.b32.xlu0 %v1273, 64
      %v1498 = vpop.permute.xlu0 %1497
      %1499 = vrot.lane.b32.xlu0 %v1274, 64
      %v1500 = vpop.permute.xlu0 %1499
      %1501 = vrot.lane.b32.xlu0 %v1275, 64
      %v1502 = vpop.permute.xlu0 %1501
      %1503 = vrot.lane.b32.xlu0 %v1276, 64
      %v1504 = vpop.permute.xlu0 %1503
      %1505 = vrot.lane.b32.xlu0 %v1277, 64
      %v1506 = vpop.permute.xlu0 %1505
      %1507 = vrot.lane.b32.xlu0 %v1278, 64
      %v1508 = vpop.permute.xlu0 %1507
      %1509 = vrot.lane.b32.xlu0 %v1279, 64
      %v1510 = vpop.permute.xlu0 %1509
      %1511 = vrot.lane.b32.xlu0 %v1280, 64
      %v1512 = vpop.permute.xlu0 %1511
      %1513 = vrot.lane.b32.xlu0 %v1281, 64
      %v1514 = vpop.permute.xlu0 %1513
      %1515 = vrot.lane.b32.xlu0 %v1282, 64
      %v1516 = vpop.permute.xlu0 %1515
      %v1525 = vunpack.c.l.b16 %v1216
      %v1526 = vunpack.c.l.b16 %v1217
      %v1527 = vunpack.c.l.b16 %v1218
      %v1528 = vunpack.c.l.b16 %v1219
      %v1529 = vunpack.c.l.b16 %v1220
      %v1530 = vunpack.c.l.b16 %v1221
      %v1531 = vunpack.c.l.b16 %v1222
      %v1532 = vunpack.c.l.b16 %v1223
      %v1533 = vpack.c.b16 %v1526, %v1525
      %v1534 = vpack.c.b16 %v1528, %v1527
      %v1535 = vpack.c.b16 %v1530, %v1529
      %v1536 = vpack.c.b16 %v1532, %v1531
      %v1542 = vsel %vm1407, %v1498, 0
      %v1545 = vsel %vm1407, %v1500, 0
      %v1548 = vsel %vm1407, %v1502, 0
      %v1551 = vsel %vm1407, %v1504, 0
      %v1554 = vsel %vm1407, %v1506, 0
      %v1557 = vsel %vm1407, %v1508, 0
      %v1560 = vsel %vm1407, %v1510, 0
      %v1563 = vsel %vm1407, %v1512, 0
      %v1566 = vsel %vm1407, %v1514, 0
      %v1569 = vsel %vm1407, %v1516, 0
      %1571 = vmatpush.bf16.msra.mxu0 0
      %1572 = vmatpush.bf16.msra.mxu0 0
      %1573 = vmatpush.bf16.msra.mxu0 0
      %1574 = vmatpush.bf16.msra.mxu0 0
      %1575 = vmatpush.bf16.msra.mxu0 %v1536
      %1576 = vmatpush.bf16.msra.mxu0 %v1535
      %1577 = vmatpush.bf16.msra.mxu0 %v1534
      %1578 = vmatpush.bf16.msra.mxu0 %v1533
      %1579 = vmatmul.bf16.gmra.mxu0 %v1542
      %v1580 = vpop.f32.mrf.mxu0
      %v1581 = vadd.f32 %v1448, %v1580
      %v1582 = vpop.f32.mrf.mxu0
      %v1583 = vadd.f32 %v1450, %v1582
      %1584 = vmatmul.bf16.gmra.mxu0 %v1545
      %v1585 = vpop.f32.mrf.mxu0
      %v1586 = vadd.f32 %v1453, %v1585
      %v1587 = vpop.f32.mrf.mxu0
      %v1588 = vadd.f32 %v1455, %v1587
      %1589 = vmatmul.bf16.gmra.mxu0 %v1548
      %v1590 = vpop.f32.mrf.mxu0
      %v1591 = vadd.f32 %v1458, %v1590
      %v1592 = vpop.f32.mrf.mxu0
      %v1593 = vadd.f32 %v1460, %v1592
      %1594 = vmatmul.bf16.gmra.mxu0 %v1551
      %v1595 = vpop.f32.mrf.mxu0
      %v1596 = vadd.f32 %v1463, %v1595
      %v1597 = vpop.f32.mrf.mxu0
      %v1598 = vadd.f32 %v1465, %v1597
      %1599 = vmatmul.bf16.gmra.mxu0 %v1554
      %v1600 = vpop.f32.mrf.mxu0
      %v1601 = vadd.f32 %v1468, %v1600
      %v1602 = vpop.f32.mrf.mxu0
      %v1603 = vadd.f32 %v1470, %v1602
      %1604 = vmatmul.bf16.gmra.mxu0 %v1557
      %v1605 = vpop.f32.mrf.mxu0
      %v1606 = vadd.f32 %v1473, %v1605
      %v1607 = vpop.f32.mrf.mxu0
      %v1608 = vadd.f32 %v1475, %v1607
      %1609 = vmatmul.bf16.gmra.mxu0 %v1560
      %v1610 = vpop.f32.mrf.mxu0
      %v1611 = vadd.f32 %v1478, %v1610
      %v1612 = vpop.f32.mrf.mxu0
      %v1613 = vadd.f32 %v1480, %v1612
      %1614 = vmatmul.bf16.gmra.mxu0 %v1563
      %v1615 = vpop.f32.mrf.mxu0
      %v1616 = vadd.f32 %v1483, %v1615
      %v1617 = vpop.f32.mrf.mxu0
      %v1618 = vadd.f32 %v1485, %v1617
      %1619 = vmatmul.bf16.gmra.mxu0 %v1566
      %v1620 = vpop.f32.mrf.mxu0
      %v1621 = vadd.f32 %v1488, %v1620
      %v1622 = vpop.f32.mrf.mxu0
      %v1623 = vadd.f32 %v1490, %v1622
      %1624 = vmatmul.bf16.gmra.mxu0 %v1569
      %v1625 = vpop.f32.mrf.mxu0
      %v1626 = vadd.f32 %v1493, %v1625
      %v1627 = vpop.f32.mrf.mxu0
      %v1628 = vadd.f32 %v1495, %v1627
      %1629 = vdwg.mxu0
      %s1630 = scalar_lea.vmem %s5, 64
      %v1631 = vld [vmem:[%s1630] sm:$0xf]
      %v1632 = vld [vmem:[%s1630 + $0x4] sm:$0xf]
      %v1633 = vld [vmem:[%s1630 + $0x8] sm:$0xf]
      %v1634 = vld [vmem:[%s1630 + $0xc] sm:$0xf]
      %v1635 = vld [vmem:[%s1630 + $0x10] sm:$0xf]
      %v1636 = vld [vmem:[%s1630 + $0x14] sm:$0xf]
      %v1637 = vld [vmem:[%s1630 + $0x18] sm:$0xf]
      %v1638 = vld [vmem:[%s1630 + $0x1c] sm:$0xf]
      %vm1639 = vcmask 1046528
      %v1640 = vrot.slane %v1273, 1
      %v1641 = vrot.slane %v1274, 1
      %v1642 = vsel %vm1639, %v1640, %v1641
      %v1643 = vrot.slane %v1275, 1
      %v1644 = vsel %vm1639, %v1641, %v1643
      %v1645 = vrot.slane %v1276, 1
      %v1646 = vsel %vm1639, %v1643, %v1645
      %v1647 = vrot.slane %v1277, 1
      %v1648 = vsel %vm1639, %v1645, %v1647
      %v1649 = vrot.slane %v1278, 1
      %v1650 = vsel %vm1639, %v1647, %v1649
      %v1651 = vrot.slane %v1279, 1
      %v1652 = vsel %vm1639, %v1649, %v1651
      %v1653 = vrot.slane %v1280, 1
      %v1654 = vsel %vm1639, %v1651, %v1653
      %v1655 = vrot.slane %v1281, 1
      %v1656 = vsel %vm1639, %v1653, %v1655
      %v1657 = vrot.slane %v1282, 1
      %v1658 = vsel %vm1639, %v1655, %v1657
      %1659 = vrot.lane.b32.xlu0 %v1642, 64
      %v1660 = vpop.permute.xlu0 %1659
      %1661 = vrot.lane.b32.xlu0 %v1644, 64
      %v1662 = vpop.permute.xlu0 %1661
      %1663 = vrot.lane.b32.xlu0 %v1646, 64
      %v1664 = vpop.permute.xlu0 %1663
      %1665 = vrot.lane.b32.xlu0 %v1648, 64
      %v1666 = vpop.permute.xlu0 %1665
      %1667 = vrot.lane.b32.xlu0 %v1650, 64
      %v1668 = vpop.permute.xlu0 %1667
      %1669 = vrot.lane.b32.xlu0 %v1652, 64
      %v1670 = vpop.permute.xlu0 %1669
      %1671 = vrot.lane.b32.xlu0 %v1654, 64
      %v1672 = vpop.permute.xlu0 %1671
      %1673 = vrot.lane.b32.xlu0 %v1656, 64
      %v1674 = vpop.permute.xlu0 %1673
      %1675 = vrot.lane.b32.xlu0 %v1658, 64
      %v1676 = vpop.permute.xlu0 %1675
      %1677 = vrot.lane.b32.xlu0 %v1657, 64
      %v1678 = vpop.permute.xlu0 %1677
      %v1687 = vunpack.c.l.b16 %v1631
      %v1688 = vunpack.c.l.b16 %v1632
      %v1689 = vunpack.c.l.b16 %v1633
      %v1690 = vunpack.c.l.b16 %v1634
      %v1691 = vunpack.c.l.b16 %v1635
      %v1692 = vunpack.c.l.b16 %v1636
      %v1693 = vunpack.c.l.b16 %v1637
      %v1694 = vunpack.c.l.b16 %v1638
      %v1695 = vpack.c.b16 %v1688, %v1687
      %v1696 = vpack.c.b16 %v1690, %v1689
      %v1697 = vpack.c.b16 %v1692, %v1691
      %v1698 = vpack.c.b16 %v1694, %v1693
      %v1704 = vsel %vm1407, %v1660, 0
      %v1707 = vsel %vm1407, %v1662, 0
      %v1710 = vsel %vm1407, %v1664, 0
      %v1713 = vsel %vm1407, %v1666, 0
      %v1716 = vsel %vm1407, %v1668, 0
      %v1719 = vsel %vm1407, %v1670, 0
      %v1722 = vsel %vm1407, %v1672, 0
      %v1725 = vsel %vm1407, %v1674, 0
      %v1728 = vsel %vm1407, %v1676, 0
      %v1731 = vsel %vm1407, %v1678, 0
      %1733 = vmatpush.bf16.msra.mxu0 0
      %1734 = vmatpush.bf16.msra.mxu0 0
      %1735 = vmatpush.bf16.msra.mxu0 0
      %1736 = vmatpush.bf16.msra.mxu0 0
      %1737 = vmatpush.bf16.msra.mxu0 %v1698
      %1738 = vmatpush.bf16.msra.mxu0 %v1697
      %1739 = vmatpush.bf16.msra.mxu0 %v1696
      %1740 = vmatpush.bf16.msra.mxu0 %v1695
      %1741 = vmatmul.bf16.gmra.mxu0 %v1704
      %v1742 = vpop.f32.mrf.mxu0
      %v1743 = vadd.f32 0.0, %v1742
      %v1744 = vpop.f32.mrf.mxu0
      %v1745 = vadd.f32 0.0, %v1744
      %1746 = vmatmul.bf16.gmra.mxu0 %v1707
      %v1747 = vpop.f32.mrf.mxu0
      %v1748 = vadd.f32 0.0, %v1747
      %v1749 = vpop.f32.mrf.mxu0
      %v1750 = vadd.f32 0.0, %v1749
      %1751 = vmatmul.bf16.gmra.mxu0 %v1710
      %v1752 = vpop.f32.mrf.mxu0
      %v1753 = vadd.f32 0.0, %v1752
      %v1754 = vpop.f32.mrf.mxu0
      %v1755 = vadd.f32 0.0, %v1754
      %1756 = vmatmul.bf16.gmra.mxu0 %v1713
      %v1757 = vpop.f32.mrf.mxu0
      %v1758 = vadd.f32 0.0, %v1757
      %v1759 = vpop.f32.mrf.mxu0
      %v1760 = vadd.f32 0.0, %v1759
      %1761 = vmatmul.bf16.gmra.mxu0 %v1716
      %v1762 = vpop.f32.mrf.mxu0
      %v1763 = vadd.f32 0.0, %v1762
      %v1764 = vpop.f32.mrf.mxu0
      %v1765 = vadd.f32 0.0, %v1764
      %1766 = vmatmul.bf16.gmra.mxu0 %v1719
      %v1767 = vpop.f32.mrf.mxu0
      %v1768 = vadd.f32 0.0, %v1767
      %v1769 = vpop.f32.mrf.mxu0
      %v1770 = vadd.f32 0.0, %v1769
      %1771 = vmatmul.bf16.gmra.mxu0 %v1722
      %v1772 = vpop.f32.mrf.mxu0
      %v1773 = vadd.f32 0.0, %v1772
      %v1774 = vpop.f32.mrf.mxu0
      %v1775 = vadd.f32 0.0, %v1774
      %1776 = vmatmul.bf16.gmra.mxu0 %v1725
      %v1777 = vpop.f32.mrf.mxu0
      %v1778 = vadd.f32 0.0, %v1777
      %v1779 = vpop.f32.mrf.mxu0
      %v1780 = vadd.f32 0.0, %v1779
      %1781 = vmatmul.bf16.gmra.mxu0 %v1728
      %v1782 = vpop.f32.mrf.mxu0
      %v1783 = vadd.f32 0.0, %v1782
      %v1784 = vpop.f32.mrf.mxu0
      %v1785 = vadd.f32 0.0, %v1784
      %1786 = vmatmul.bf16.gmra.mxu0 %v1731
      %v1787 = vpop.f32.mrf.mxu0
      %v1788 = vadd.f32 0.0, %v1787
      %v1789 = vpop.f32.mrf.mxu0
      %v1790 = vadd.f32 0.0, %v1789
      %1791 = vdwg.mxu0
      %v1792 = vadd.f32 %v1581, %v1743
      %v1793 = vadd.f32 %v1583, %v1745
      %v1794 = vadd.f32 %v1586, %v1748
      %v1795 = vadd.f32 %v1588, %v1750
      %v1796 = vadd.f32 %v1591, %v1753
      %v1797 = vadd.f32 %v1593, %v1755
      %v1798 = vadd.f32 %v1596, %v1758
      %v1799 = vadd.f32 %v1598, %v1760
      %v1800 = vadd.f32 %v1601, %v1763
      %v1801 = vadd.f32 %v1603, %v1765
      %v1802 = vadd.f32 %v1606, %v1768
      %v1803 = vadd.f32 %v1608, %v1770
      %v1804 = vadd.f32 %v1611, %v1773
      %v1805 = vadd.f32 %v1613, %v1775
      %v1806 = vadd.f32 %v1616, %v1778
      %v1807 = vadd.f32 %v1618, %v1780
      %v1808 = vadd.f32 %v1621, %v1783
      %v1809 = vadd.f32 %v1623, %v1785
      %v1810 = vadd.f32 %v1626, %v1788
      %v1811 = vadd.f32 %v1628, %v1790
      %s1812 = scalar_lea.vmem %s5, 96
      %v1813 = vld [vmem:[%s1812] sm:$0xf]
      %v1814 = vld [vmem:[%s1812 + $0x4] sm:$0xf]
      %v1815 = vld [vmem:[%s1812 + $0x8] sm:$0xf]
      %v1816 = vld [vmem:[%s1812 + $0xc] sm:$0xf]
      %v1817 = vld [vmem:[%s1812 + $0x10] sm:$0xf]
      %v1818 = vld [vmem:[%s1812 + $0x14] sm:$0xf]
      %v1819 = vld [vmem:[%s1812 + $0x18] sm:$0xf]
      %v1820 = vld [vmem:[%s1812 + $0x1c] sm:$0xf]
      %vm1821 = vsmask.f32 6400
      %v1822 = vrot.slane %v1285, 1
      %v1823 = vrot.slane %v1287, 2
      %v1824 = vor.u32 %v1822, %v1823
      %v1825 = vrot.slane %v1296, 1
      %v1826 = vrot.slane %v1292, 2
      %v1827 = vor.u32 %v1825, %v1826
      %v1828 = vsel %vm1821, %v1824, %v1827
      %v1829 = vrot.slane %v1304, 1
      %v1830 = vrot.slane %v1300, 2
      %v1831 = vor.u32 %v1829, %v1830
      %v1832 = vsel %vm1821, %v1827, %v1831
      %v1833 = vrot.slane %v1312, 1
      %v1834 = vrot.slane %v1308, 2
      %v1835 = vor.u32 %v1833, %v1834
      %v1836 = vsel %vm1821, %v1831, %v1835
      %v1837 = vrot.slane %v1320, 1
      %v1838 = vrot.slane %v1316, 2
      %v1839 = vor.u32 %v1837, %v1838
      %v1840 = vsel %vm1821, %v1835, %v1839
      %v1841 = vrot.slane %v1328, 1
      %v1842 = vrot.slane %v1324, 2
      %v1843 = vor.u32 %v1841, %v1842
      %v1844 = vsel %vm1821, %v1839, %v1843
      %v1845 = vrot.slane %v1336, 1
      %v1846 = vrot.slane %v1332, 2
      %v1847 = vor.u32 %v1845, %v1846
      %v1848 = vsel %vm1821, %v1843, %v1847
      %v1849 = vrot.slane %v1344, 1
      %v1850 = vrot.slane %v1340, 2
      %v1851 = vor.u32 %v1849, %v1850
      %v1852 = vsel %vm1821, %v1847, %v1851
      %v1853 = vrot.slane %v1352, 1
      %v1854 = vrot.slane %v1348, 2
      %v1855 = vor.u32 %v1853, %v1854
      %v1856 = vsel %vm1821, %v1851, %v1855
      %v1857 = vrot.slane %v1360, 1
      %v1858 = vrot.slane %v1356, 2
      %v1859 = vor.u32 %v1857, %v1858
      %v1860 = vsel %vm1821, %v1855, %v1859
      %1861 = vrot.lane.b32.xlu0 %v1828, 64
      %v1862 = vpop.permute.xlu0 %1861
      %1863 = vrot.lane.b32.xlu0 %v1832, 64
      %v1864 = vpop.permute.xlu0 %1863
      %1865 = vrot.lane.b32.xlu0 %v1836, 64
      %v1866 = vpop.permute.xlu0 %1865
      %1867 = vrot.lane.b32.xlu0 %v1840, 64
      %v1868 = vpop.permute.xlu0 %1867
      %1869 = vrot.lane.b32.xlu0 %v1844, 64
      %v1870 = vpop.permute.xlu0 %1869
      %1871 = vrot.lane.b32.xlu0 %v1848, 64
      %v1872 = vpop.permute.xlu0 %1871
      %1873 = vrot.lane.b32.xlu0 %v1852, 64
      %v1874 = vpop.permute.xlu0 %1873
      %1875 = vrot.lane.b32.xlu0 %v1856, 64
      %v1876 = vpop.permute.xlu0 %1875
      %1877 = vrot.lane.b32.xlu0 %v1860, 64
      %v1878 = vpop.permute.xlu0 %1877
      %1879 = vrot.lane.b32.xlu0 %v1859, 64
      %v1880 = vpop.permute.xlu0 %1879
      %v1889 = vunpack.c.l.b16 %v1813
      %v1890 = vunpack.c.l.b16 %v1814
      %v1891 = vunpack.c.l.b16 %v1815
      %v1892 = vunpack.c.l.b16 %v1816
      %v1893 = vunpack.c.l.b16 %v1817
      %v1894 = vunpack.c.l.b16 %v1818
      %v1895 = vunpack.c.l.b16 %v1819
      %v1896 = vunpack.c.l.b16 %v1820
      %v1897 = vpack.c.b16 %v1890, %v1889
      %v1898 = vpack.c.b16 %v1892, %v1891
      %v1899 = vpack.c.b16 %v1894, %v1893
      %v1900 = vpack.c.b16 %v1896, %v1895
      %v1906 = vsel %vm1407, %v1862, 0
      %v1909 = vsel %vm1407, %v1864, 0
      %v1912 = vsel %vm1407, %v1866, 0
      %v1915 = vsel %vm1407, %v1868, 0
      %v1918 = vsel %vm1407, %v1870, 0
      %v1921 = vsel %vm1407, %v1872, 0
      %v1924 = vsel %vm1407, %v1874, 0
      %v1927 = vsel %vm1407, %v1876, 0
      %v1930 = vsel %vm1407, %v1878, 0
      %v1933 = vsel %vm1407, %v1880, 0
      %1935 = vmatpush.bf16.msra.mxu0 0
      %1936 = vmatpush.bf16.msra.mxu0 0
      %1937 = vmatpush.bf16.msra.mxu0 0
      %1938 = vmatpush.bf16.msra.mxu0 0
      %1939 = vmatpush.bf16.msra.mxu0 %v1900
      %1940 = vmatpush.bf16.msra.mxu0 %v1899
      %1941 = vmatpush.bf16.msra.mxu0 %v1898
      %1942 = vmatpush.bf16.msra.mxu0 %v1897
      %1943 = vmatmul.bf16.gmra.mxu0 %v1906
      %v1944 = vpop.f32.mrf.mxu0
      %v1945 = vadd.f32 0.0, %v1944
      %v1946 = vpop.f32.mrf.mxu0
      %v1947 = vadd.f32 0.0, %v1946
      %1948 = vmatmul.bf16.gmra.mxu0 %v1909
      %v1949 = vpop.f32.mrf.mxu0
      %v1950 = vadd.f32 0.0, %v1949
      %v1951 = vpop.f32.mrf.mxu0
      %v1952 = vadd.f32 0.0, %v1951
      %1953 = vmatmul.bf16.gmra.mxu0 %v1912
      %v1954 = vpop.f32.mrf.mxu0
      %v1955 = vadd.f32 0.0, %v1954
      %v1956 = vpop.f32.mrf.mxu0
      %v1957 = vadd.f32 0.0, %v1956
      %1958 = vmatmul.bf16.gmra.mxu0 %v1915
      %v1959 = vpop.f32.mrf.mxu0
      %v1960 = vadd.f32 0.0, %v1959
      %v1961 = vpop.f32.mrf.mxu0
      %v1962 = vadd.f32 0.0, %v1961
      %1963 = vmatmul.bf16.gmra.mxu0 %v1918
      %v1964 = vpop.f32.mrf.mxu0
      %v1965 = vadd.f32 0.0, %v1964
      %v1966 = vpop.f32.mrf.mxu0
      %v1967 = vadd.f32 0.0, %v1966
      %1968 = vmatmul.bf16.gmra.mxu0 %v1921
      %v1969 = vpop.f32.mrf.mxu0
      %v1970 = vadd.f32 0.0, %v1969
      %v1971 = vpop.f32.mrf.mxu0
      %v1972 = vadd.f32 0.0, %v1971
      %1973 = vmatmul.bf16.gmra.mxu0 %v1924
      %v1974 = vpop.f32.mrf.mxu0
      %v1975 = vadd.f32 0.0, %v1974
      %v1976 = vpop.f32.mrf.mxu0
      %v1977 = vadd.f32 0.0, %v1976
      %1978 = vmatmul.bf16.gmra.mxu0 %v1927
      %v1979 = vpop.f32.mrf.mxu0
      %v1980 = vadd.f32 0.0, %v1979
      %v1981 = vpop.f32.mrf.mxu0
      %v1982 = vadd.f32 0.0, %v1981
      %1983 = vmatmul.bf16.gmra.mxu0 %v1930
      %v1984 = vpop.f32.mrf.mxu0
      %v1985 = vadd.f32 0.0, %v1984
      %v1986 = vpop.f32.mrf.mxu0
      %v1987 = vadd.f32 0.0, %v1986
      %1988 = vmatmul.bf16.gmra.mxu0 %v1933
      %v1989 = vpop.f32.mrf.mxu0
      %v1990 = vadd.f32 0.0, %v1989
      %v1991 = vpop.f32.mrf.mxu0
      %v1992 = vadd.f32 0.0, %v1991
      %1993 = vdwg.mxu0
      %v1994 = vadd.f32 %v1792, %v1945
      %v1995 = vadd.f32 %v1793, %v1947
      %v1996 = vadd.f32 %v1794, %v1950
      %v1997 = vadd.f32 %v1795, %v1952
      %v1998 = vadd.f32 %v1796, %v1955
      %v1999 = vadd.f32 %v1797, %v1957
      %v2000 = vadd.f32 %v1798, %v1960
      %v2001 = vadd.f32 %v1799, %v1962
      %v2002 = vadd.f32 %v1800, %v1965
      %v2003 = vadd.f32 %v1801, %v1967
      %v2004 = vadd.f32 %v1802, %v1970
      %v2005 = vadd.f32 %v1803, %v1972
      %v2006 = vadd.f32 %v1804, %v1975
      %v2007 = vadd.f32 %v1805, %v1977
      %v2008 = vadd.f32 %v1806, %v1980
      %v2009 = vadd.f32 %v1807, %v1982
      %v2010 = vadd.f32 %v1808, %v1985
      %v2011 = vadd.f32 %v1809, %v1987
      %v2012 = vadd.f32 %v1810, %v1990
      %v2013 = vadd.f32 %v1811, %v1992
      %s2014 = scalar_lea.vmem %s5, 128
      %v2015 = vld [vmem:[%s2014] sm:$0xf]
      %v2016 = vld [vmem:[%s2014 + $0x4] sm:$0xf]
      %v2017 = vld [vmem:[%s2014 + $0x8] sm:$0xf]
      %v2018 = vld [vmem:[%s2014 + $0xc] sm:$0xf]
      %v2019 = vld [vmem:[%s2014 + $0x10] sm:$0xf]
      %v2020 = vld [vmem:[%s2014 + $0x14] sm:$0xf]
      %v2021 = vld [vmem:[%s2014 + $0x18] sm:$0xf]
      %v2022 = vld [vmem:[%s2014 + $0x1c] sm:$0xf]
      %vm2023 = vcmask 1045504
      %v2024 = vrot.slane %v1273, 2
      %v2025 = vrot.slane %v1274, 2
      %v2026 = vsel %vm2023, %v2024, %v2025
      %v2027 = vrot.slane %v1275, 2
      %v2028 = vsel %vm2023, %v2025, %v2027
      %v2029 = vrot.slane %v1276, 2
      %v2030 = vsel %vm2023, %v2027, %v2029
      %v2031 = vrot.slane %v1277, 2
      %v2032 = vsel %vm2023, %v2029, %v2031
      %v2033 = vrot.slane %v1278, 2
      %v2034 = vsel %vm2023, %v2031, %v2033
      %v2035 = vrot.slane %v1279, 2
      %v2036 = vsel %vm2023, %v2033, %v2035
      %v2037 = vrot.slane %v1280, 2
      %v2038 = vsel %vm2023, %v2035, %v2037
      %v2039 = vrot.slane %v1281, 2
      %v2040 = vsel %vm2023, %v2037, %v2039
      %v2041 = vrot.slane %v1282, 2
      %v2042 = vsel %vm2023, %v2039, %v2041
      %2043 = vrot.lane.b32.xlu0 %v2026, 64
      %v2044 = vpop.permute.xlu0 %2043
      %2045 = vrot.lane.b32.xlu0 %v2028, 64
      %v2046 = vpop.permute.xlu0 %2045
      %2047 = vrot.lane.b32.xlu0 %v2030, 64
      %v2048 = vpop.permute.xlu0 %2047
      %2049 = vrot.lane.b32.xlu0 %v2032, 64
      %v2050 = vpop.permute.xlu0 %2049
      %2051 = vrot.lane.b32.xlu0 %v2034, 64
      %v2052 = vpop.permute.xlu0 %2051
      %2053 = vrot.lane.b32.xlu0 %v2036, 64
      %v2054 = vpop.permute.xlu0 %2053
      %2055 = vrot.lane.b32.xlu0 %v2038, 64
      %v2056 = vpop.permute.xlu0 %2055
      %2057 = vrot.lane.b32.xlu0 %v2040, 64
      %v2058 = vpop.permute.xlu0 %2057
      %2059 = vrot.lane.b32.xlu0 %v2042, 64
      %v2060 = vpop.permute.xlu0 %2059
      %2061 = vrot.lane.b32.xlu0 %v2041, 64
      %v2062 = vpop.permute.xlu0 %2061
      %v2071 = vunpack.c.l.b16 %v2015
      %v2072 = vunpack.c.l.b16 %v2016
      %v2073 = vunpack.c.l.b16 %v2017
      %v2074 = vunpack.c.l.b16 %v2018
      %v2075 = vunpack.c.l.b16 %v2019
      %v2076 = vunpack.c.l.b16 %v2020
      %v2077 = vunpack.c.l.b16 %v2021
      %v2078 = vunpack.c.l.b16 %v2022
      %v2079 = vpack.c.b16 %v2072, %v2071
      %v2080 = vpack.c.b16 %v2074, %v2073
      %v2081 = vpack.c.b16 %v2076, %v2075
      %v2082 = vpack.c.b16 %v2078, %v2077
      %v2088 = vsel %vm1407, %v2044, 0
      %v2091 = vsel %vm1407, %v2046, 0
      %v2094 = vsel %vm1407, %v2048, 0
      %v2097 = vsel %vm1407, %v2050, 0
      %v2100 = vsel %vm1407, %v2052, 0
      %v2103 = vsel %vm1407, %v2054, 0
      %v2106 = vsel %vm1407, %v2056, 0
      %v2109 = vsel %vm1407, %v2058, 0
      %v2112 = vsel %vm1407, %v2060, 0
      %v2115 = vsel %vm1407, %v2062, 0
      %2117 = vmatpush.bf16.msra.mxu0 0
      %2118 = vmatpush.bf16.msra.mxu0 0
      %2119 = vmatpush.bf16.msra.mxu0 0
      %2120 = vmatpush.bf16.msra.mxu0 0
      %2121 = vmatpush.bf16.msra.mxu0 %v2082
      %2122 = vmatpush.bf16.msra.mxu0 %v2081
      %2123 = vmatpush.bf16.msra.mxu0 %v2080
      %2124 = vmatpush.bf16.msra.mxu0 %v2079
      %2125 = vmatmul.bf16.gmra.mxu0 %v2088
      %v2126 = vpop.f32.mrf.mxu0
      %v2127 = vadd.f32 0.0, %v2126
      %v2128 = vpop.f32.mrf.mxu0
      %v2129 = vadd.f32 0.0, %v2128
      %2130 = vmatmul.bf16.gmra.mxu0 %v2091
      %v2131 = vpop.f32.mrf.mxu0
      %v2132 = vadd.f32 0.0, %v2131
      %v2133 = vpop.f32.mrf.mxu0
      %v2134 = vadd.f32 0.0, %v2133
      %2135 = vmatmul.bf16.gmra.mxu0 %v2094
      %v2136 = vpop.f32.mrf.mxu0
      %v2137 = vadd.f32 0.0, %v2136
      %v2138 = vpop.f32.mrf.mxu0
      %v2139 = vadd.f32 0.0, %v2138
      %2140 = vmatmul.bf16.gmra.mxu0 %v2097
      %v2141 = vpop.f32.mrf.mxu0
      %v2142 = vadd.f32 0.0, %v2141
      %v2143 = vpop.f32.mrf.mxu0
      %v2144 = vadd.f32 0.0, %v2143
      %2145 = vmatmul.bf16.gmra.mxu0 %v2100
      %v2146 = vpop.f32.mrf.mxu0
      %v2147 = vadd.f32 0.0, %v2146
      %v2148 = vpop.f32.mrf.mxu0
      %v2149 = vadd.f32 0.0, %v2148
      %2150 = vmatmul.bf16.gmra.mxu0 %v2103
      %v2151 = vpop.f32.mrf.mxu0
      %v2152 = vadd.f32 0.0, %v2151
      %v2153 = vpop.f32.mrf.mxu0
      %v2154 = vadd.f32 0.0, %v2153
      %2155 = vmatmul.bf16.gmra.mxu0 %v2106
      %v2156 = vpop.f32.mrf.mxu0
      %v2157 = vadd.f32 0.0, %v2156
      %v2158 = vpop.f32.mrf.mxu0
      %v2159 = vadd.f32 0.0, %v2158
      %2160 = vmatmul.bf16.gmra.mxu0 %v2109
      %v2161 = vpop.f32.mrf.mxu0
      %v2162 = vadd.f32 0.0, %v2161
      %v2163 = vpop.f32.mrf.mxu0
      %v2164 = vadd.f32 0.0, %v2163
      %2165 = vmatmul.bf16.gmra.mxu0 %v2112
      %v2166 = vpop.f32.mrf.mxu0
      %v2167 = vadd.f32 0.0, %v2166
      %v2168 = vpop.f32.mrf.mxu0
      %v2169 = vadd.f32 0.0, %v2168
      %2170 = vmatmul.bf16.gmra.mxu0 %v2115
      %v2171 = vpop.f32.mrf.mxu0
      %v2172 = vadd.f32 0.0, %v2171
      %v2173 = vpop.f32.mrf.mxu0
      %v2174 = vadd.f32 0.0, %v2173
      %2175 = vdwg.mxu0
      %v2176 = vadd.f32 %v1994, %v2127
      %v2177 = vadd.f32 %v1995, %v2129
      %v2178 = vadd.f32 %v1996, %v2132
      %v2179 = vadd.f32 %v1997, %v2134
      %v2180 = vadd.f32 %v1998, %v2137
      %v2181 = vadd.f32 %v1999, %v2139
      %v2182 = vadd.f32 %v2000, %v2142
      %v2183 = vadd.f32 %v2001, %v2144
      %v2184 = vadd.f32 %v2002, %v2147
      %v2185 = vadd.f32 %v2003, %v2149
      %v2186 = vadd.f32 %v2004, %v2152
      %v2187 = vadd.f32 %v2005, %v2154
      %v2188 = vadd.f32 %v2006, %v2157
      %v2189 = vadd.f32 %v2007, %v2159
      %v2190 = vadd.f32 %v2008, %v2162
      %v2191 = vadd.f32 %v2009, %v2164
      %v2192 = vadd.f32 %v2010, %v2167
      %v2193 = vadd.f32 %v2011, %v2169
      %v2194 = vadd.f32 %v2012, %v2172
      %v2195 = vadd.f32 %v2013, %v2174
      %s2196 = scalar_lea.vmem %s5, 160
      %v2197 = vld [vmem:[%s2196] sm:$0xf]
      %v2198 = vld [vmem:[%s2196 + $0x4] sm:$0xf]
      %v2199 = vld [vmem:[%s2196 + $0x8] sm:$0xf]
      %v2200 = vld [vmem:[%s2196 + $0xc] sm:$0xf]
      %v2201 = vld [vmem:[%s2196 + $0x10] sm:$0xf]
      %v2202 = vld [vmem:[%s2196 + $0x14] sm:$0xf]
      %v2203 = vld [vmem:[%s2196 + $0x18] sm:$0xf]
      %v2204 = vld [vmem:[%s2196 + $0x1c] sm:$0xf]
      %vm2205 = vsmask.f32 5376
      %v2206 = vrot.slane %v1285, 2
      %v2207 = vrot.slane %v1287, 3
      %v2208 = vor.u32 %v2206, %v2207
      %v2209 = vrot.slane %v1296, 2
      %v2210 = vrot.slane %v1292, 3
      %v2211 = vor.u32 %v2209, %v2210
      %v2212 = vsel %vm2205, %v2208, %v2211
      %v2213 = vrot.slane %v1304, 2
      %v2214 = vrot.slane %v1300, 3
      %v2215 = vor.u32 %v2213, %v2214
      %v2216 = vsel %vm2205, %v2211, %v2215
      %v2217 = vrot.slane %v1312, 2
      %v2218 = vrot.slane %v1308, 3
      %v2219 = vor.u32 %v2217, %v2218
      %v2220 = vsel %vm2205, %v2215, %v2219
      %v2221 = vrot.slane %v1320, 2
      %v2222 = vrot.slane %v1316, 3
      %v2223 = vor.u32 %v2221, %v2222
      %v2224 = vsel %vm2205, %v2219, %v2223
      %v2225 = vrot.slane %v1328, 2
      %v2226 = vrot.slane %v1324, 3
      %v2227 = vor.u32 %v2225, %v2226
      %v2228 = vsel %vm2205, %v2223, %v2227
      %v2229 = vrot.slane %v1336, 2
      %v2230 = vrot.slane %v1332, 3
      %v2231 = vor.u32 %v2229, %v2230
      %v2232 = vsel %vm2205, %v2227, %v2231
      %v2233 = vrot.slane %v1344, 2
      %v2234 = vrot.slane %v1340, 3
      %v2235 = vor.u32 %v2233, %v2234
      %v2236 = vsel %vm2205, %v2231, %v2235
      %v2237 = vrot.slane %v1352, 2
      %v2238 = vrot.slane %v1348, 3
      %v2239 = vor.u32 %v2237, %v2238
      %v2240 = vsel %vm2205, %v2235, %v2239
      %v2241 = vrot.slane %v1360, 2
      %v2242 = vrot.slane %v1356, 3
      %v2243 = vor.u32 %v2241, %v2242
      %v2244 = vsel %vm2205, %v2239, %v2243
      %2245 = vrot.lane.b32.xlu0 %v2212, 64
      %v2246 = vpop.permute.xlu0 %2245
      %2247 = vrot.lane.b32.xlu0 %v2216, 64
      %v2248 = vpop.permute.xlu0 %2247
      %2249 = vrot.lane.b32.xlu0 %v2220, 64
      %v2250 = vpop.permute.xlu0 %2249
      %2251 = vrot.lane.b32.xlu0 %v2224, 64
      %v2252 = vpop.permute.xlu0 %2251
      %2253 = vrot.lane.b32.xlu0 %v2228, 64
      %v2254 = vpop.permute.xlu0 %2253
      %2255 = vrot.lane.b32.xlu0 %v2232, 64
      %v2256 = vpop.permute.xlu0 %2255
      %2257 = vrot.lane.b32.xlu0 %v2236, 64
      %v2258 = vpop.permute.xlu0 %2257
      %2259 = vrot.lane.b32.xlu0 %v2240, 64
      %v2260 = vpop.permute.xlu0 %2259
      %2261 = vrot.lane.b32.xlu0 %v2244, 64
      %v2262 = vpop.permute.xlu0 %2261
      %2263 = vrot.lane.b32.xlu0 %v2243, 64
      %v2264 = vpop.permute.xlu0 %2263
      %v2273 = vunpack.c.l.b16 %v2197
      %v2274 = vunpack.c.l.b16 %v2198
      %v2275 = vunpack.c.l.b16 %v2199
      %v2276 = vunpack.c.l.b16 %v2200
      %v2277 = vunpack.c.l.b16 %v2201
      %v2278 = vunpack.c.l.b16 %v2202
      %v2279 = vunpack.c.l.b16 %v2203
      %v2280 = vunpack.c.l.b16 %v2204
      %v2281 = vpack.c.b16 %v2274, %v2273
      %v2282 = vpack.c.b16 %v2276, %v2275
      %v2283 = vpack.c.b16 %v2278, %v2277
      %v2284 = vpack.c.b16 %v2280, %v2279
      %v2290 = vsel %vm1407, %v2246, 0
      %v2293 = vsel %vm1407, %v2248, 0
      %v2296 = vsel %vm1407, %v2250, 0
      %v2299 = vsel %vm1407, %v2252, 0
      %v2302 = vsel %vm1407, %v2254, 0
      %v2305 = vsel %vm1407, %v2256, 0
      %v2308 = vsel %vm1407, %v2258, 0
      %v2311 = vsel %vm1407, %v2260, 0
      %v2314 = vsel %vm1407, %v2262, 0
      %v2317 = vsel %vm1407, %v2264, 0
      %2319 = vmatpush.bf16.msra.mxu0 0
      %2320 = vmatpush.bf16.msra.mxu0 0
      %2321 = vmatpush.bf16.msra.mxu0 0
      %2322 = vmatpush.bf16.msra.mxu0 0
      %2323 = vmatpush.bf16.msra.mxu0 %v2284
      %2324 = vmatpush.bf16.msra.mxu0 %v2283
      %2325 = vmatpush.bf16.msra.mxu0 %v2282
      %2326 = vmatpush.bf16.msra.mxu0 %v2281
      %2327 = vmatmul.bf16.gmra.mxu0 %v2290
      %v2328 = vpop.f32.mrf.mxu0
      %v2329 = vadd.f32 0.0, %v2328
      %v2330 = vpop.f32.mrf.mxu0
      %v2331 = vadd.f32 0.0, %v2330
      %2332 = vmatmul.bf16.gmra.mxu0 %v2293
      %v2333 = vpop.f32.mrf.mxu0
      %v2334 = vadd.f32 0.0, %v2333
      %v2335 = vpop.f32.mrf.mxu0
      %v2336 = vadd.f32 0.0, %v2335
      %2337 = vmatmul.bf16.gmra.mxu0 %v2296
      %v2338 = vpop.f32.mrf.mxu0
      %v2339 = vadd.f32 0.0, %v2338
      %v2340 = vpop.f32.mrf.mxu0
      %v2341 = vadd.f32 0.0, %v2340
      %2342 = vmatmul.bf16.gmra.mxu0 %v2299
      %v2343 = vpop.f32.mrf.mxu0
      %v2344 = vadd.f32 0.0, %v2343
      %v2345 = vpop.f32.mrf.mxu0
      %v2346 = vadd.f32 0.0, %v2345
      %2347 = vmatmul.bf16.gmra.mxu0 %v2302
      %v2348 = vpop.f32.mrf.mxu0
      %v2349 = vadd.f32 0.0, %v2348
      %v2350 = vpop.f32.mrf.mxu0
      %v2351 = vadd.f32 0.0, %v2350
      %2352 = vmatmul.bf16.gmra.mxu0 %v2305
      %v2353 = vpop.f32.mrf.mxu0
      %v2354 = vadd.f32 0.0, %v2353
      %v2355 = vpop.f32.mrf.mxu0
      %v2356 = vadd.f32 0.0, %v2355
      %2357 = vmatmul.bf16.gmra.mxu0 %v2308
      %v2358 = vpop.f32.mrf.mxu0
      %v2359 = vadd.f32 0.0, %v2358
      %v2360 = vpop.f32.mrf.mxu0
      %v2361 = vadd.f32 0.0, %v2360
      %2362 = vmatmul.bf16.gmra.mxu0 %v2311
      %v2363 = vpop.f32.mrf.mxu0
      %v2364 = vadd.f32 0.0, %v2363
      %v2365 = vpop.f32.mrf.mxu0
      %v2366 = vadd.f32 0.0, %v2365
      %2367 = vmatmul.bf16.gmra.mxu0 %v2314
      %v2368 = vpop.f32.mrf.mxu0
      %v2369 = vadd.f32 0.0, %v2368
      %v2370 = vpop.f32.mrf.mxu0
      %v2371 = vadd.f32 0.0, %v2370
      %2372 = vmatmul.bf16.gmra.mxu0 %v2317
      %v2373 = vpop.f32.mrf.mxu0
      %v2374 = vadd.f32 0.0, %v2373
      %v2375 = vpop.f32.mrf.mxu0
      %v2376 = vadd.f32 0.0, %v2375
      %2377 = vdwg.mxu0
      %v2378 = vadd.f32 %v2176, %v2329
      %v2379 = vadd.f32 %v2177, %v2331
      %v2380 = vadd.f32 %v2178, %v2334
      %v2381 = vadd.f32 %v2179, %v2336
      %v2382 = vadd.f32 %v2180, %v2339
      %v2383 = vadd.f32 %v2181, %v2341
      %v2384 = vadd.f32 %v2182, %v2344
      %v2385 = vadd.f32 %v2183, %v2346
      %v2386 = vadd.f32 %v2184, %v2349
      %v2387 = vadd.f32 %v2185, %v2351
      %v2388 = vadd.f32 %v2186, %v2354
      %v2389 = vadd.f32 %v2187, %v2356
      %v2390 = vadd.f32 %v2188, %v2359
      %v2391 = vadd.f32 %v2189, %v2361
      %v2392 = vadd.f32 %v2190, %v2364
      %v2393 = vadd.f32 %v2191, %v2366
      %v2394 = vadd.f32 %v2192, %v2369
      %v2395 = vadd.f32 %v2193, %v2371
      %v2396 = vadd.f32 %v2194, %v2374
      %v2397 = vadd.f32 %v2195, %v2376
      %s2398 = scalar_lea.vmem %s5, 192
      %v2399 = vld [vmem:[%s2398] sm:$0xf]
      %v2400 = vld [vmem:[%s2398 + $0x4] sm:$0xf]
      %v2401 = vld [vmem:[%s2398 + $0x8] sm:$0xf]
      %v2402 = vld [vmem:[%s2398 + $0xc] sm:$0xf]
      %v2403 = vld [vmem:[%s2398 + $0x10] sm:$0xf]
      %v2404 = vld [vmem:[%s2398 + $0x14] sm:$0xf]
      %v2405 = vld [vmem:[%s2398 + $0x18] sm:$0xf]
      %v2406 = vld [vmem:[%s2398 + $0x1c] sm:$0xf]
      %vm2407 = vcmask 1044480
      %v2408 = vrot.slane %v1273, 3
      %v2409 = vrot.slane %v1274, 3
      %v2410 = vsel %vm2407, %v2408, %v2409
      %v2411 = vrot.slane %v1275, 3
      %v2412 = vsel %vm2407, %v2409, %v2411
      %v2413 = vrot.slane %v1276, 3
      %v2414 = vsel %vm2407, %v2411, %v2413
      %v2415 = vrot.slane %v1277, 3
      %v2416 = vsel %vm2407, %v2413, %v2415
      %v2417 = vrot.slane %v1278, 3
      %v2418 = vsel %vm2407, %v2415, %v2417
      %v2419 = vrot.slane %v1279, 3
      %v2420 = vsel %vm2407, %v2417, %v2419
      %v2421 = vrot.slane %v1280, 3
      %v2422 = vsel %vm2407, %v2419, %v2421
      %v2423 = vrot.slane %v1281, 3
      %v2424 = vsel %vm2407, %v2421, %v2423
      %v2425 = vrot.slane %v1282, 3
      %v2426 = vsel %vm2407, %v2423, %v2425
      %2427 = vrot.lane.b32.xlu0 %v2410, 64
      %v2428 = vpop.permute.xlu0 %2427
      %2429 = vrot.lane.b32.xlu0 %v2412, 64
      %v2430 = vpop.permute.xlu0 %2429
      %2431 = vrot.lane.b32.xlu0 %v2414, 64
      %v2432 = vpop.permute.xlu0 %2431
      %2433 = vrot.lane.b32.xlu0 %v2416, 64
      %v2434 = vpop.permute.xlu0 %2433
      %2435 = vrot.lane.b32.xlu0 %v2418, 64
      %v2436 = vpop.permute.xlu0 %2435
      %2437 = vrot.lane.b32.xlu0 %v2420, 64
      %v2438 = vpop.permute.xlu0 %2437
      %2439 = vrot.lane.b32.xlu0 %v2422, 64
      %v2440 = vpop.permute.xlu0 %2439
      %2441 = vrot.lane.b32.xlu0 %v2424, 64
      %v2442 = vpop.permute.xlu0 %2441
      %2443 = vrot.lane.b32.xlu0 %v2426, 64
      %v2444 = vpop.permute.xlu0 %2443
      %2445 = vrot.lane.b32.xlu0 %v2425, 64
      %v2446 = vpop.permute.xlu0 %2445
      %v2455 = vunpack.c.l.b16 %v2399
      %v2456 = vunpack.c.l.b16 %v2400
      %v2457 = vunpack.c.l.b16 %v2401
      %v2458 = vunpack.c.l.b16 %v2402
      %v2459 = vunpack.c.l.b16 %v2403
      %v2460 = vunpack.c.l.b16 %v2404
      %v2461 = vunpack.c.l.b16 %v2405
      %v2462 = vunpack.c.l.b16 %v2406
      %v2463 = vpack.c.b16 %v2456, %v2455
      %v2464 = vpack.c.b16 %v2458, %v2457
      %v2465 = vpack.c.b16 %v2460, %v2459
      %v2466 = vpack.c.b16 %v2462, %v2461
      %v2472 = vsel %vm1407, %v2428, 0
      %v2475 = vsel %vm1407, %v2430, 0
      %v2478 = vsel %vm1407, %v2432, 0
      %v2481 = vsel %vm1407, %v2434, 0
      %v2484 = vsel %vm1407, %v2436, 0
      %v2487 = vsel %vm1407, %v2438, 0
      %v2490 = vsel %vm1407, %v2440, 0
      %v2493 = vsel %vm1407, %v2442, 0
      %v2496 = vsel %vm1407, %v2444, 0
      %v2499 = vsel %vm1407, %v2446, 0
      %2501 = vmatpush.bf16.msra.mxu0 0
      %2502 = vmatpush.bf16.msra.mxu0 0
      %2503 = vmatpush.bf16.msra.mxu0 0
      %2504 = vmatpush.bf16.msra.mxu0 0
      %2505 = vmatpush.bf16.msra.mxu0 %v2466
      %2506 = vmatpush.bf16.msra.mxu0 %v2465
      %2507 = vmatpush.bf16.msra.mxu0 %v2464
      %2508 = vmatpush.bf16.msra.mxu0 %v2463
      %2509 = vmatmul.bf16.gmra.mxu0 %v2472
      %v2510 = vpop.f32.mrf.mxu0
      %v2511 = vadd.f32 0.0, %v2510
      %v2512 = vpop.f32.mrf.mxu0
      %v2513 = vadd.f32 0.0, %v2512
      %2514 = vmatmul.bf16.gmra.mxu0 %v2475
      %v2515 = vpop.f32.mrf.mxu0
      %v2516 = vadd.f32 0.0, %v2515
      %v2517 = vpop.f32.mrf.mxu0
      %v2518 = vadd.f32 0.0, %v2517
      %2519 = vmatmul.bf16.gmra.mxu0 %v2478
      %v2520 = vpop.f32.mrf.mxu0
      %v2521 = vadd.f32 0.0, %v2520
      %v2522 = vpop.f32.mrf.mxu0
      %v2523 = vadd.f32 0.0, %v2522
      %2524 = vmatmul.bf16.gmra.mxu0 %v2481
      %v2525 = vpop.f32.mrf.mxu0
      %v2526 = vadd.f32 0.0, %v2525
      %v2527 = vpop.f32.mrf.mxu0
      %v2528 = vadd.f32 0.0, %v2527
      %2529 = vmatmul.bf16.gmra.mxu0 %v2484
      %v2530 = vpop.f32.mrf.mxu0
      %v2531 = vadd.f32 0.0, %v2530
      %v2532 = vpop.f32.mrf.mxu0
      %v2533 = vadd.f32 0.0, %v2532
      %2534 = vmatmul.bf16.gmra.mxu0 %v2487
      %v2535 = vpop.f32.mrf.mxu0
      %v2536 = vadd.f32 0.0, %v2535
      %v2537 = vpop.f32.mrf.mxu0
      %v2538 = vadd.f32 0.0, %v2537
      %2539 = vmatmul.bf16.gmra.mxu0 %v2490
      %v2540 = vpop.f32.mrf.mxu0
      %v2541 = vadd.f32 0.0, %v2540
      %v2542 = vpop.f32.mrf.mxu0
      %v2543 = vadd.f32 0.0, %v2542
      %2544 = vmatmul.bf16.gmra.mxu0 %v2493
      %v2545 = vpop.f32.mrf.mxu0
      %v2546 = vadd.f32 0.0, %v2545
      %v2547 = vpop.f32.mrf.mxu0
      %v2548 = vadd.f32 0.0, %v2547
      %2549 = vmatmul.bf16.gmra.mxu0 %v2496
      %v2550 = vpop.f32.mrf.mxu0
      %v2551 = vadd.f32 0.0, %v2550
      %v2552 = vpop.f32.mrf.mxu0
      %v2553 = vadd.f32 0.0, %v2552
      %2554 = vmatmul.bf16.gmra.mxu0 %v2499
      %v2555 = vpop.f32.mrf.mxu0
      %v2556 = vadd.f32 0.0, %v2555
      %v2557 = vpop.f32.mrf.mxu0
      %v2558 = vadd.f32 0.0, %v2557
      %2559 = vdwg.mxu0
      %v2560 = vadd.f32 %v2378, %v2511
      %v2561 = vadd.f32 %v2379, %v2513
      %v2562 = vadd.f32 %v2380, %v2516
      %v2563 = vadd.f32 %v2381, %v2518
      %v2564 = vadd.f32 %v2382, %v2521
      %v2565 = vadd.f32 %v2383, %v2523
      %v2566 = vadd.f32 %v2384, %v2526
      %v2567 = vadd.f32 %v2385, %v2528
      %v2568 = vadd.f32 %v2386, %v2531
      %v2569 = vadd.f32 %v2387, %v2533
      %v2570 = vadd.f32 %v2388, %v2536
      %v2571 = vadd.f32 %v2389, %v2538
      %v2572 = vadd.f32 %v2390, %v2541
      %v2573 = vadd.f32 %v2391, %v2543
      %v2574 = vadd.f32 %v2392, %v2546
      %v2575 = vadd.f32 %v2393, %v2548
      %v2576 = vadd.f32 %v2394, %v2551
      %v2577 = vadd.f32 %v2395, %v2553
      %v2578 = vadd.f32 %v2396, %v2556
      %v2579 = vadd.f32 %v2397, %v2558
      %v2580 = vld [vmem:[%s6] sm:$0x1]
      %v2582 = vperm.slane %v2580, 0
      %v2584 = vmul.f32 %v2560, %v2582
      %v2585 = vmul.f32 %v2561, %v2582
      %v2586 = vmul.f32 %v2562, %v2582
      %v2587 = vmul.f32 %v2563, %v2582
      %v2588 = vmul.f32 %v2564, %v2582
      %v2589 = vmul.f32 %v2565, %v2582
      %v2590 = vmul.f32 %v2566, %v2582
      %v2591 = vmul.f32 %v2567, %v2582
      %v2592 = vmul.f32 %v2568, %v2582
      %v2593 = vmul.f32 %v2569, %v2582
      %v2594 = vmul.f32 %v2570, %v2582
      %v2595 = vmul.f32 %v2571, %v2582
      %v2596 = vmul.f32 %v2572, %v2582
      %v2597 = vmul.f32 %v2573, %v2582
      %v2598 = vmul.f32 %v2574, %v2582
      %v2599 = vmul.f32 %v2575, %v2582
      %v2600 = vmul.f32 %v2576, %v2582
      %v2601 = vmul.f32 %v2577, %v2582
      %v2602 = vmul.f32 %v2578, %v2582
      %v2603 = vmul.f32 %v2579, %v2582
      %v2604 = vld [vmem:[%s7] sm:$0x1]
      %v2606 = vperm.slane %v2604, 0
      %v2608 = vadd.f32 %v2584, %v2606
      %v2609 = vadd.f32 %v2585, %v2606
      %v2610 = vadd.f32 %v2586, %v2606
      %v2611 = vadd.f32 %v2587, %v2606
      %v2612 = vadd.f32 %v2588, %v2606
      %v2613 = vadd.f32 %v2589, %v2606
      %v2614 = vadd.f32 %v2590, %v2606
      %v2615 = vadd.f32 %v2591, %v2606
      %v2616 = vadd.f32 %v2592, %v2606
      %v2617 = vadd.f32 %v2593, %v2606
      %v2618 = vadd.f32 %v2594, %v2606
      %v2619 = vadd.f32 %v2595, %v2606
      %v2620 = vadd.f32 %v2596, %v2606
      %v2621 = vadd.f32 %v2597, %v2606
      %v2622 = vadd.f32 %v2598, %v2606
      %v2623 = vadd.f32 %v2599, %v2606
      %v2624 = vadd.f32 %v2600, %v2606
      %v2625 = vadd.f32 %v2601, %v2606
      %v2626 = vadd.f32 %v2602, %v2606
      %v2627 = vadd.f32 %v2603, %v2606
      %v2628 = vmax.f32 %v2608, 0.0
      %v2629 = vmax.f32 %v2609, 0.0
      %v2630 = vmax.f32 %v2610, 0.0
      %v2631 = vmax.f32 %v2611, 0.0
      %v2632 = vmax.f32 %v2612, 0.0
      %v2633 = vmax.f32 %v2613, 0.0
      %v2634 = vmax.f32 %v2614, 0.0
      %v2635 = vmax.f32 %v2615, 0.0
      %v2636 = vmax.f32 %v2616, 0.0
      %v2637 = vmax.f32 %v2617, 0.0
      %v2638 = vmax.f32 %v2618, 0.0
      %v2639 = vmax.f32 %v2619, 0.0
      %v2640 = vmax.f32 %v2620, 0.0
      %v2641 = vmax.f32 %v2621, 0.0
      %v2642 = vmax.f32 %v2622, 0.0
      %v2643 = vmax.f32 %v2623, 0.0
      %v2644 = vmax.f32 %v2624, 0.0
      %v2645 = vmax.f32 %v2625, 0.0
      %v2646 = vmax.f32 %v2626, 0.0
      %v2647 = vmax.f32 %v2627, 0.0
      %v2648 = vpack.c.bf16 %v2628, %v2628
      %v2649 = vpack.c.bf16 %v2629, %v2629
      %v2650 = vpack.c.bf16 %v2630, %v2630
      %v2651 = vpack.c.bf16 %v2631, %v2631
      %v2652 = vpack.c.bf16 %v2632, %v2632
      %v2653 = vpack.c.bf16 %v2633, %v2633
      %v2654 = vpack.c.bf16 %v2634, %v2634
      %v2655 = vpack.c.bf16 %v2635, %v2635
      %v2656 = vpack.c.bf16 %v2636, %v2636
      %v2657 = vpack.c.bf16 %v2637, %v2637
      %v2658 = vpack.c.bf16 %v2638, %v2638
      %v2659 = vpack.c.bf16 %v2639, %v2639
      %v2660 = vpack.c.bf16 %v2640, %v2640
      %v2661 = vpack.c.bf16 %v2641, %v2641
      %v2662 = vpack.c.bf16 %v2642, %v2642
      %v2663 = vpack.c.bf16 %v2643, %v2643
      %v2664 = vpack.c.bf16 %v2644, %v2644
      %v2665 = vpack.c.bf16 %v2645, %v2645
      %v2666 = vpack.c.bf16 %v2646, %v2646
      %v2667 = vpack.c.bf16 %v2647, %v2647
      %vm2668 = vsmask.f32 1280
      %vm2669 = vsmask.f32 5392
      %vm2670 = vmor %vm2668, %vm2669
      %v2672 = vshrl.u32 %v2648, 16
      %v2674 = vrot.slane %v2672, 6
      %v2675 = vshll.u32 %v2648, 16
      %v2677 = vrot.slane %v2675, 7
      %v2678 = vor.u32 %v2674, %v2677
      %v2679 = vrot.slane %v2678, 4
      %v2681 = vshrl.u32 %v2649, 16
      %v2683 = vrot.slane %v2681, 6
      %v2684 = vshll.u32 %v2649, 16
      %v2686 = vrot.slane %v2684, 7
      %v2687 = vor.u32 %v2683, %v2686
      %v2688 = vsel %vm2670, %v2679, %v2687
      %v2689 = vrot.slane %v2687, 4
      %v2691 = vshrl.u32 %v2650, 16
      %v2693 = vrot.slane %v2691, 6
      %v2694 = vshll.u32 %v2650, 16
      %v2696 = vrot.slane %v2694, 7
      %v2697 = vor.u32 %v2693, %v2696
      %v2698 = vsel %vm2670, %v2689, %v2697
      %v2699 = vrot.slane %v2697, 4
      %v2701 = vshrl.u32 %v2651, 16
      %v2703 = vrot.slane %v2701, 6
      %v2704 = vshll.u32 %v2651, 16
      %v2706 = vrot.slane %v2704, 7
      %v2707 = vor.u32 %v2703, %v2706
      %v2708 = vsel %vm2670, %v2699, %v2707
      %v2709 = vrot.slane %v2707, 4
      %v2711 = vshrl.u32 %v2652, 16
      %v2713 = vrot.slane %v2711, 6
      %v2714 = vshll.u32 %v2652, 16
      %v2716 = vrot.slane %v2714, 7
      %v2717 = vor.u32 %v2713, %v2716
      %v2718 = vsel %vm2670, %v2709, %v2717
      %v2719 = vrot.slane %v2717, 4
      %v2721 = vshrl.u32 %v2653, 16
      %v2723 = vrot.slane %v2721, 6
      %v2724 = vshll.u32 %v2653, 16
      %v2726 = vrot.slane %v2724, 7
      %v2727 = vor.u32 %v2723, %v2726
      %v2728 = vsel %vm2670, %v2719, %v2727
      %v2729 = vrot.slane %v2727, 4
      %v2731 = vshrl.u32 %v2654, 16
      %v2733 = vrot.slane %v2731, 6
      %v2734 = vshll.u32 %v2654, 16
      %v2736 = vrot.slane %v2734, 7
      %v2737 = vor.u32 %v2733, %v2736
      %v2738 = vsel %vm2670, %v2729, %v2737
      %v2739 = vrot.slane %v2737, 4
      %v2741 = vshrl.u32 %v2655, 16
      %v2743 = vrot.slane %v2741, 6
      %v2744 = vshll.u32 %v2655, 16
      %v2746 = vrot.slane %v2744, 7
      %v2747 = vor.u32 %v2743, %v2746
      %v2748 = vsel %vm2670, %v2739, %v2747
      %v2749 = vrot.slane %v2747, 4
      %v2751 = vshrl.u32 %v2656, 16
      %v2753 = vrot.slane %v2751, 6
      %v2754 = vshll.u32 %v2656, 16
      %v2756 = vrot.slane %v2754, 7
      %v2757 = vor.u32 %v2753, %v2756
      %v2758 = vsel %vm2670, %v2749, %v2757
      %v2759 = vrot.slane %v2757, 4
      %v2761 = vshrl.u32 %v2657, 16
      %v2763 = vrot.slane %v2761, 6
      %v2764 = vshll.u32 %v2657, 16
      %v2766 = vrot.slane %v2764, 7
      %v2767 = vor.u32 %v2763, %v2766
      %v2768 = vsel %vm2670, %v2759, %v2767
      %v2769 = vrot.slane %v2767, 4
      %v2771 = vshrl.u32 %v2658, 16
      %v2773 = vrot.slane %v2771, 6
      %v2774 = vshll.u32 %v2658, 16
      %v2776 = vrot.slane %v2774, 7
      %v2777 = vor.u32 %v2773, %v2776
      %v2778 = vsel %vm2670, %v2769, %v2777
      %v2779 = vrot.slane %v2777, 4
      %v2781 = vshrl.u32 %v2659, 16
      %v2783 = vrot.slane %v2781, 6
      %v2784 = vshll.u32 %v2659, 16
      %v2786 = vrot.slane %v2784, 7
      %v2787 = vor.u32 %v2783, %v2786
      %v2788 = vsel %vm2670, %v2779, %v2787
      %v2789 = vrot.slane %v2787, 4
      %v2791 = vshrl.u32 %v2660, 16
      %v2793 = vrot.slane %v2791, 6
      %v2794 = vshll.u32 %v2660, 16
      %v2796 = vrot.slane %v2794, 7
      %v2797 = vor.u32 %v2793, %v2796
      %v2798 = vsel %vm2670, %v2789, %v2797
      %v2799 = vrot.slane %v2797, 4
      %v2801 = vshrl.u32 %v2661, 16
      %v2803 = vrot.slane %v2801, 6
      %v2804 = vshll.u32 %v2661, 16
      %v2806 = vrot.slane %v2804, 7
      %v2807 = vor.u32 %v2803, %v2806
      %v2808 = vsel %vm2670, %v2799, %v2807
      %v2809 = vrot.slane %v2807, 4
      %v2811 = vshrl.u32 %v2662, 16
      %v2813 = vrot.slane %v2811, 6
      %v2814 = vshll.u32 %v2662, 16
      %v2816 = vrot.slane %v2814, 7
      %v2817 = vor.u32 %v2813, %v2816
      %v2818 = vsel %vm2670, %v2809, %v2817
      %v2819 = vrot.slane %v2817, 4
      %v2821 = vshrl.u32 %v2663, 16
      %v2823 = vrot.slane %v2821, 6
      %v2824 = vshll.u32 %v2663, 16
      %v2826 = vrot.slane %v2824, 7
      %v2827 = vor.u32 %v2823, %v2826
      %v2828 = vsel %vm2670, %v2819, %v2827
      %v2829 = vrot.slane %v2827, 4
      %v2831 = vshrl.u32 %v2664, 16
      %v2833 = vrot.slane %v2831, 6
      %v2834 = vshll.u32 %v2664, 16
      %v2836 = vrot.slane %v2834, 7
      %v2837 = vor.u32 %v2833, %v2836
      %v2838 = vsel %vm2670, %v2829, %v2837
      %v2839 = vrot.slane %v2837, 4
      %v2841 = vshrl.u32 %v2665, 16
      %v2843 = vrot.slane %v2841, 6
      %v2844 = vshll.u32 %v2665, 16
      %v2846 = vrot.slane %v2844, 7
      %v2847 = vor.u32 %v2843, %v2846
      %v2848 = vsel %vm2670, %v2839, %v2847
      %v2849 = vrot.slane %v2847, 4
      %v2851 = vshrl.u32 %v2666, 16
      %v2853 = vrot.slane %v2851, 6
      %v2854 = vshll.u32 %v2666, 16
      %v2856 = vrot.slane %v2854, 7
      %v2857 = vor.u32 %v2853, %v2856
      %v2858 = vsel %vm2670, %v2849, %v2857
      %v2859 = vrot.slane %v2857, 4
      %v2861 = vshrl.u32 %v2667, 16
      %v2863 = vrot.slane %v2861, 6
      %v2864 = vshll.u32 %v2667, 16
      %v2866 = vrot.slane %v2864, 7
      %v2867 = vor.u32 %v2863, %v2866
      %v2868 = vsel %vm2670, %v2859, %v2867
      %vm2889 = vcmask 519169
      %vm2890 = vsmask.f32 7942
      %vm2891 = vmand %vm2889, %vm2890
      %v2892 = vld [vmem:[#allocation2 + $0x18] sm:$0xe]
      %v2893 = vsel %vm2891, %v2678, %v2892
      %2894 = vst [vmem:[#allocation2 + $0x18] sm:$0xe] %v2893
      %2895 = vst.msk [vmem:[#allocation2 + $0x1c] sm:$0xf] %vm496, %v2688
      %2896 = vst.msk [vmem:[#allocation2 + $0x20] sm:$0xf] %vm496, %v2698
      %2897 = vst.msk [vmem:[#allocation2 + $0x24] sm:$0xf] %vm496, %v2708
      %2898 = vst.msk [vmem:[#allocation2 + $0x28] sm:$0xf] %vm496, %v2718
      %2899 = vst.msk [vmem:[#allocation2 + $0x2c] sm:$0xf] %vm496, %v2728
      %2900 = vst.msk [vmem:[#allocation2 + $0x30] sm:$0xf] %vm496, %v2738
      %2901 = vst.msk [vmem:[#allocation2 + $0x34] sm:$0xf] %vm496, %v2748
      %2902 = vst.msk [vmem:[#allocation2 + $0x38] sm:$0xf] %vm496, %v2758
      %2903 = vst.msk [vmem:[#allocation2 + $0x3c] sm:$0xf] %vm496, %v2768
      %2904 = vst.msk [vmem:[#allocation2 + $0x40] sm:$0xf] %vm496, %v2778
      %2905 = vst.msk [vmem:[#allocation2 + $0x44] sm:$0xf] %vm496, %v2788
      %2906 = vst.msk [vmem:[#allocation2 + $0x48] sm:$0xf] %vm496, %v2798
      %2907 = vst.msk [vmem:[#allocation2 + $0x4c] sm:$0xf] %vm496, %v2808
      %2908 = vst.msk [vmem:[#allocation2 + $0x50] sm:$0xf] %vm496, %v2818
      %2909 = vst.msk [vmem:[#allocation2 + $0x54] sm:$0xf] %vm496, %v2828
      %2910 = vst.msk [vmem:[#allocation2 + $0x58] sm:$0xf] %vm496, %v2838
      %2911 = vst.msk [vmem:[#allocation2 + $0x5c] sm:$0xf] %vm496, %v2848
      %2912 = vst.msk [vmem:[#allocation2 + $0x60] sm:$0xf] %vm496, %v2858
      %vm2913 = vcmask 518144
      %vm2914 = vsmask.f32 2304
      %vm2915 = vmand %vm2913, %vm2914
      %v2916 = vld [vmem:[#allocation2 + $0x64] sm:$0x7]
      %v2917 = vsel %vm2915, %v2868, %v2916
      %2918 = vst [vmem:[#allocation2 + $0x64] sm:$0x7] %v2917
      %v2919 = vld [vmem:[#allocation2] sm:$0xf]
      %v2920 = vld [vmem:[#allocation2 + $0x4] sm:$0xf]
      %v2921 = vld [vmem:[#allocation2 + $0x8] sm:$0xf]
      %v2922 = vld [vmem:[#allocation2 + $0xc] sm:$0xf]
      %v2923 = vld [vmem:[#allocation2 + $0x10] sm:$0xf]
      %v2924 = vld [vmem:[#allocation2 + $0x14] sm:$0xf]
      %v2925 = vld [vmem:[#allocation2 + $0x18] sm:$0xf]
      %v2926 = vld [vmem:[#allocation2 + $0x1c] sm:$0xf]
      %v2927 = vld [vmem:[#allocation2 + $0x20] sm:$0xf]
      %v2928 = vld [vmem:[#allocation2 + $0x24] sm:$0xf]
      %v2929 = vld [vmem:[#allocation2 + $0x28] sm:$0xf]
      %v2930 = vld [vmem:[#allocation2 + $0x2c] sm:$0xf]
      %v2931 = vld [vmem:[#allocation2 + $0x30] sm:$0xf]
      %v2932 = vld [vmem:[#allocation2 + $0x34] sm:$0xf]
      %v2933 = vld [vmem:[#allocation2 + $0x38] sm:$0xf]
      %v2934 = vld [vmem:[#allocation2 + $0x3c] sm:$0xf]
      %v2935 = vld [vmem:[#allocation2 + $0x40] sm:$0xf]
      %v2936 = vld [vmem:[#allocation2 + $0x44] sm:$0xf]
      %v2937 = vld [vmem:[#allocation2 + $0x48] sm:$0xf]
      %v2938 = vld [vmem:[#allocation2 + $0x4c] sm:$0xf]
      %v2939 = vld [vmem:[%s8] sm:$0xf]
      %v2940 = vld [vmem:[%s8 + $0x4] sm:$0xf]
      %v2941 = vld [vmem:[%s8 + $0x8] sm:$0xf]
      %v2942 = vld [vmem:[%s8 + $0xc] sm:$0xf]
      %v2943 = vld [vmem:[%s8 + $0x10] sm:$0xf]
      %v2944 = vld [vmem:[%s8 + $0x14] sm:$0xf]
      %v2945 = vld [vmem:[%s8 + $0x18] sm:$0xf]
      %v2946 = vld [vmem:[%s8 + $0x1c] sm:$0xf]
      %v2947 = vld [vmem:[#allocation2 + $0x50] sm:$0xf]
      %v2948 = vld [vmem:[#allocation2 + $0x54] sm:$0xf]
      %s2949 = scalar_lea.vmem %s8, 32
      %v2950 = vld [vmem:[%s2949] sm:$0xf]
      %v2951 = vld [vmem:[%s2949 + $0x4] sm:$0xf]
      %v2952 = vld [vmem:[%s2949 + $0x8] sm:$0xf]
      %v2953 = vld [vmem:[%s2949 + $0xc] sm:$0xf]
      %v2954 = vld [vmem:[%s2949 + $0x10] sm:$0xf]
      %v2955 = vld [vmem:[%s2949 + $0x14] sm:$0xf]
      %v2956 = vld [vmem:[%s2949 + $0x18] sm:$0xf]
      %v2957 = vld [vmem:[%s2949 + $0x1c] sm:$0xf]
      %v2978 = vunpack.c.l.b16 %v2921
      %v2979 = vunpack.c.l.b16 %v2922
      %v2980 = vunpack.c.l.b16 %v2923
      %v2981 = vunpack.c.l.b16 %v2924
      %v2982 = vunpack.c.l.b16 %v2925
      %v2983 = vunpack.c.l.b16 %v2926
      %v2984 = vunpack.c.l.b16 %v2927
      %v2985 = vunpack.c.l.b16 %v2928
      %v2986 = vunpack.c.l.b16 %v2929
      %v2987 = vunpack.c.l.b16 %v2930
      %v2988 = vunpack.c.l.b16 %v2931
      %v2989 = vunpack.c.l.b16 %v2932
      %v2990 = vunpack.c.l.b16 %v2933
      %v2991 = vunpack.c.l.b16 %v2934
      %v2992 = vunpack.c.l.b16 %v2935
      %v2993 = vunpack.c.l.b16 %v2936
      %v2994 = vunpack.c.l.b16 %v2937
      %v2995 = vunpack.c.l.b16 %v2938
      %v2996 = vunpack.c.l.b16 %v2947
      %v2997 = vunpack.c.l.b16 %v2948
      %v2998 = vpack.c.b16 %v2979, %v2978
      %v2999 = vpack.c.b16 %v2981, %v2980
      %v3000 = vpack.c.b16 %v2983, %v2982
      %v3001 = vpack.c.b16 %v2985, %v2984
      %v3002 = vpack.c.b16 %v2987, %v2986
      %v3003 = vpack.c.b16 %v2989, %v2988
      %v3004 = vpack.c.b16 %v2991, %v2990
      %v3005 = vpack.c.b16 %v2993, %v2992
      %v3006 = vpack.c.b16 %v2995, %v2994
      %v3007 = vpack.c.b16 %v2997, %v2996
      %v3016 = vunpack.c.l.b16 %v2950
      %v3017 = vunpack.c.l.b16 %v2951
      %v3018 = vunpack.c.l.b16 %v2952
      %v3019 = vunpack.c.l.b16 %v2953
      %v3020 = vunpack.c.l.b16 %v2954
      %v3021 = vunpack.c.l.b16 %v2955
      %v3022 = vunpack.c.l.b16 %v2956
      %v3023 = vunpack.c.l.b16 %v2957
      %v3024 = vpack.c.b16 %v3017, %v3016
      %v3025 = vpack.c.b16 %v3019, %v3018
      %v3026 = vpack.c.b16 %v3021, %v3020
      %v3027 = vpack.c.b16 %v3023, %v3022
      %v3033 = vsel %vm1407, %v2998, 0
      %v3036 = vsel %vm1407, %v2999, 0
      %v3039 = vsel %vm1407, %v3000, 0
      %v3042 = vsel %vm1407, %v3001, 0
      %v3045 = vsel %vm1407, %v3002, 0
      %v3048 = vsel %vm1407, %v3003, 0
      %v3051 = vsel %vm1407, %v3004, 0
      %v3054 = vsel %vm1407, %v3005, 0
      %v3057 = vsel %vm1407, %v3006, 0
      %v3060 = vsel %vm1407, %v3007, 0
      %3062 = vmatpush.bf16.msra.mxu0 0
      %3063 = vmatpush.bf16.msra.mxu0 0
      %3064 = vmatpush.bf16.msra.mxu0 0
      %3065 = vmatpush.bf16.msra.mxu0 0
      %3066 = vmatpush.bf16.msra.mxu0 %v3027
      %3067 = vmatpush.bf16.msra.mxu0 %v3026
      %3068 = vmatpush.bf16.msra.mxu0 %v3025
      %3069 = vmatpush.bf16.msra.mxu0 %v3024
      %3070 = vmatmul.bf16.gmra.mxu0 %v3033
      %v3071 = vpop.f32.mrf.mxu0
      %v3072 = vadd.f32 0.0, %v3071
      %v3073 = vpop.f32.mrf.mxu0
      %v3074 = vadd.f32 0.0, %v3073
      %3075 = vmatmul.bf16.gmra.mxu0 %v3036
      %v3076 = vpop.f32.mrf.mxu0
      %v3077 = vadd.f32 0.0, %v3076
      %v3078 = vpop.f32.mrf.mxu0
      %v3079 = vadd.f32 0.0, %v3078
      %3080 = vmatmul.bf16.gmra.mxu0 %v3039
      %v3081 = vpop.f32.mrf.mxu0
      %v3082 = vadd.f32 0.0, %v3081
      %v3083 = vpop.f32.mrf.mxu0
      %v3084 = vadd.f32 0.0, %v3083
      %3085 = vmatmul.bf16.gmra.mxu0 %v3042
      %v3086 = vpop.f32.mrf.mxu0
      %v3087 = vadd.f32 0.0, %v3086
      %v3088 = vpop.f32.mrf.mxu0
      %v3089 = vadd.f32 0.0, %v3088
      %3090 = vmatmul.bf16.gmra.mxu0 %v3045
      %v3091 = vpop.f32.mrf.mxu0
      %v3092 = vadd.f32 0.0, %v3091
      %v3093 = vpop.f32.mrf.mxu0
      %v3094 = vadd.f32 0.0, %v3093
      %3095 = vmatmul.bf16.gmra.mxu0 %v3048
      %v3096 = vpop.f32.mrf.mxu0
      %v3097 = vadd.f32 0.0, %v3096
      %v3098 = vpop.f32.mrf.mxu0
      %v3099 = vadd.f32 0.0, %v3098
      %3100 = vmatmul.bf16.gmra.mxu0 %v3051
      %v3101 = vpop.f32.mrf.mxu0
      %v3102 = vadd.f32 0.0, %v3101
      %v3103 = vpop.f32.mrf.mxu0
      %v3104 = vadd.f32 0.0, %v3103
      %3105 = vmatmul.bf16.gmra.mxu0 %v3054
      %v3106 = vpop.f32.mrf.mxu0
      %v3107 = vadd.f32 0.0, %v3106
      %v3108 = vpop.f32.mrf.mxu0
      %v3109 = vadd.f32 0.0, %v3108
      %3110 = vmatmul.bf16.gmra.mxu0 %v3057
      %v3111 = vpop.f32.mrf.mxu0
      %v3112 = vadd.f32 0.0, %v3111
      %v3113 = vpop.f32.mrf.mxu0
      %v3114 = vadd.f32 0.0, %v3113
      %3115 = vmatmul.bf16.gmra.mxu0 %v3060
      %v3116 = vpop.f32.mrf.mxu0
      %v3117 = vadd.f32 0.0, %v3116
      %v3118 = vpop.f32.mrf.mxu0
      %v3119 = vadd.f32 0.0, %v3118
      %3120 = vdwg.mxu0
      %v3123 = vunpack.c.l.b16 %v2919
      %v3124 = vunpack.c.l.b16 %v2920
      %v3125 = vpack.c.b16 %v3124, %v3123
      %v3134 = vunpack.c.l.b16 %v2939
      %v3135 = vunpack.c.l.b16 %v2940
      %v3136 = vunpack.c.l.b16 %v2941
      %v3137 = vunpack.c.l.b16 %v2942
      %v3138 = vunpack.c.l.b16 %v2943
      %v3139 = vunpack.c.l.b16 %v2944
      %v3140 = vunpack.c.l.b16 %v2945
      %v3141 = vunpack.c.l.b16 %v2946
      %v3142 = vpack.c.b16 %v3135, %v3134
      %v3143 = vpack.c.b16 %v3137, %v3136
      %v3144 = vpack.c.b16 %v3139, %v3138
      %v3145 = vpack.c.b16 %v3141, %v3140
      %v3151 = vsel %vm1407, %v3125, 0
      %3153 = vmatpush.bf16.msra.mxu0 0
      %3154 = vmatpush.bf16.msra.mxu0 0
      %3155 = vmatpush.bf16.msra.mxu0 0
      %3156 = vmatpush.bf16.msra.mxu0 0
      %3157 = vmatpush.bf16.msra.mxu0 %v3145
      %3158 = vmatpush.bf16.msra.mxu0 %v3144
      %3159 = vmatpush.bf16.msra.mxu0 %v3143
      %3160 = vmatpush.bf16.msra.mxu0 %v3142
      %3161 = vmatmul.bf16.gmra.mxu0 %v3151
      %v3162 = vpop.f32.mrf.mxu0
      %v3163 = vadd.f32 %v3072, %v3162
      %v3164 = vpop.f32.mrf.mxu0
      %v3165 = vadd.f32 %v3074, %v3164
      %3166 = vmatmul.bf16.gmra.mxu0 %v3033
      %v3167 = vpop.f32.mrf.mxu0
      %v3168 = vadd.f32 %v3077, %v3167
      %v3169 = vpop.f32.mrf.mxu0
      %v3170 = vadd.f32 %v3079, %v3169
      %3171 = vmatmul.bf16.gmra.mxu0 %v3036
      %v3172 = vpop.f32.mrf.mxu0
      %v3173 = vadd.f32 %v3082, %v3172
      %v3174 = vpop.f32.mrf.mxu0
      %v3175 = vadd.f32 %v3084, %v3174
      %3176 = vmatmul.bf16.gmra.mxu0 %v3039
      %v3177 = vpop.f32.mrf.mxu0
      %v3178 = vadd.f32 %v3087, %v3177
      %v3179 = vpop.f32.mrf.mxu0
      %v3180 = vadd.f32 %v3089, %v3179
      %3181 = vmatmul.bf16.gmra.mxu0 %v3042
      %v3182 = vpop.f32.mrf.mxu0
      %v3183 = vadd.f32 %v3092, %v3182
      %v3184 = vpop.f32.mrf.mxu0
      %v3185 = vadd.f32 %v3094, %v3184
      %3186 = vmatmul.bf16.gmra.mxu0 %v3045
      %v3187 = vpop.f32.mrf.mxu0
      %v3188 = vadd.f32 %v3097, %v3187
      %v3189 = vpop.f32.mrf.mxu0
      %v3190 = vadd.f32 %v3099, %v3189
      %3191 = vmatmul.bf16.gmra.mxu0 %v3048
      %v3192 = vpop.f32.mrf.mxu0
      %v3193 = vadd.f32 %v3102, %v3192
      %v3194 = vpop.f32.mrf.mxu0
      %v3195 = vadd.f32 %v3104, %v3194
      %3196 = vmatmul.bf16.gmra.mxu0 %v3051
      %v3197 = vpop.f32.mrf.mxu0
      %v3198 = vadd.f32 %v3107, %v3197
      %v3199 = vpop.f32.mrf.mxu0
      %v3200 = vadd.f32 %v3109, %v3199
      %3201 = vmatmul.bf16.gmra.mxu0 %v3054
      %v3202 = vpop.f32.mrf.mxu0
      %v3203 = vadd.f32 %v3112, %v3202
      %v3204 = vpop.f32.mrf.mxu0
      %v3205 = vadd.f32 %v3114, %v3204
      %3206 = vmatmul.bf16.gmra.mxu0 %v3057
      %v3207 = vpop.f32.mrf.mxu0
      %v3208 = vadd.f32 %v3117, %v3207
      %v3209 = vpop.f32.mrf.mxu0
      %v3210 = vadd.f32 %v3119, %v3209
      %3211 = vdwg.mxu0
      %v3212 = vld [vmem:[#allocation2 + $0x10] sm:$0xf]
      %v3213 = vld [vmem:[#allocation2 + $0x14] sm:$0xf]
      %v3214 = vld [vmem:[#allocation2 + $0x18] sm:$0xf]
      %v3215 = vld [vmem:[#allocation2 + $0x1c] sm:$0xf]
      %v3216 = vld [vmem:[#allocation2 + $0x20] sm:$0xf]
      %v3217 = vld [vmem:[#allocation2 + $0x24] sm:$0xf]
      %v3218 = vld [vmem:[#allocation2 + $0x28] sm:$0xf]
      %v3219 = vld [vmem:[#allocation2 + $0x2c] sm:$0xf]
      %v3220 = vld [vmem:[#allocation2 + $0x30] sm:$0xf]
      %v3221 = vld [vmem:[#allocation2 + $0x34] sm:$0xf]
      %v3222 = vld [vmem:[#allocation2 + $0x38] sm:$0xf]
      %v3223 = vld [vmem:[#allocation2 + $0x3c] sm:$0xf]
      %v3224 = vld [vmem:[#allocation2 + $0x40] sm:$0xf]
      %v3225 = vld [vmem:[#allocation2 + $0x44] sm:$0xf]
      %v3226 = vld [vmem:[#allocation2 + $0x48] sm:$0xf]
      %v3227 = vld [vmem:[#allocation2 + $0x4c] sm:$0xf]
      %v3228 = vld [vmem:[#allocation2 + $0x50] sm:$0xf]
      %v3229 = vld [vmem:[#allocation2 + $0x54] sm:$0xf]
      %v3230 = vld [vmem:[#allocation2 + $0x58] sm:$0xf]
      %v3231 = vld [vmem:[#allocation2 + $0x5c] sm:$0xf]
      %s3232 = scalar_lea.vmem %s8, 64
      %v3233 = vld [vmem:[%s3232] sm:$0xf]
      %v3234 = vld [vmem:[%s3232 + $0x4] sm:$0xf]
      %v3235 = vld [vmem:[%s3232 + $0x8] sm:$0xf]
      %v3236 = vld [vmem:[%s3232 + $0xc] sm:$0xf]
      %v3237 = vld [vmem:[%s3232 + $0x10] sm:$0xf]
      %v3238 = vld [vmem:[%s3232 + $0x14] sm:$0xf]
      %v3239 = vld [vmem:[%s3232 + $0x18] sm:$0xf]
      %v3240 = vld [vmem:[%s3232 + $0x1c] sm:$0xf]
      %v3261 = vunpack.c.l.b16 %v3212
      %v3262 = vunpack.c.l.b16 %v3213
      %v3263 = vunpack.c.l.b16 %v3214
      %v3264 = vunpack.c.l.b16 %v3215
      %v3265 = vunpack.c.l.b16 %v3216
      %v3266 = vunpack.c.l.b16 %v3217
      %v3267 = vunpack.c.l.b16 %v3218
      %v3268 = vunpack.c.l.b16 %v3219
      %v3269 = vunpack.c.l.b16 %v3220
      %v3270 = vunpack.c.l.b16 %v3221
      %v3271 = vunpack.c.l.b16 %v3222
      %v3272 = vunpack.c.l.b16 %v3223
      %v3273 = vunpack.c.l.b16 %v3224
      %v3274 = vunpack.c.l.b16 %v3225
      %v3275 = vunpack.c.l.b16 %v3226
      %v3276 = vunpack.c.l.b16 %v3227
      %v3277 = vunpack.c.l.b16 %v3228
      %v3278 = vunpack.c.l.b16 %v3229
      %v3279 = vunpack.c.l.b16 %v3230
      %v3280 = vunpack.c.l.b16 %v3231
      %v3281 = vpack.c.b16 %v3262, %v3261
      %v3282 = vpack.c.b16 %v3264, %v3263
      %v3283 = vpack.c.b16 %v3266, %v3265
      %v3284 = vpack.c.b16 %v3268, %v3267
      %v3285 = vpack.c.b16 %v3270, %v3269
      %v3286 = vpack.c.b16 %v3272, %v3271
      %v3287 = vpack.c.b16 %v3274, %v3273
      %v3288 = vpack.c.b16 %v3276, %v3275
      %v3289 = vpack.c.b16 %v3278, %v3277
      %v3290 = vpack.c.b16 %v3280, %v3279
      %v3299 = vunpack.c.l.b16 %v3233
      %v3300 = vunpack.c.l.b16 %v3234
      %v3301 = vunpack.c.l.b16 %v3235
      %v3302 = vunpack.c.l.b16 %v3236
      %v3303 = vunpack.c.l.b16 %v3237
      %v3304 = vunpack.c.l.b16 %v3238
      %v3305 = vunpack.c.l.b16 %v3239
      %v3306 = vunpack.c.l.b16 %v3240
      %v3307 = vpack.c.b16 %v3300, %v3299
      %v3308 = vpack.c.b16 %v3302, %v3301
      %v3309 = vpack.c.b16 %v3304, %v3303
      %v3310 = vpack.c.b16 %v3306, %v3305
      %v3316 = vsel %vm1407, %v3281, 0
      %v3319 = vsel %vm1407, %v3282, 0
      %v3322 = vsel %vm1407, %v3283, 0
      %v3325 = vsel %vm1407, %v3284, 0
      %v3328 = vsel %vm1407, %v3285, 0
      %v3331 = vsel %vm1407, %v3286, 0
      %v3334 = vsel %vm1407, %v3287, 0
      %v3337 = vsel %vm1407, %v3288, 0
      %v3340 = vsel %vm1407, %v3289, 0
      %v3343 = vsel %vm1407, %v3290, 0
      %3345 = vmatpush.bf16.msra.mxu0 0
      %3346 = vmatpush.bf16.msra.mxu0 0
      %3347 = vmatpush.bf16.msra.mxu0 0
      %3348 = vmatpush.bf16.msra.mxu0 0
      %3349 = vmatpush.bf16.msra.mxu0 %v3310
      %3350 = vmatpush.bf16.msra.mxu0 %v3309
      %3351 = vmatpush.bf16.msra.mxu0 %v3308
      %3352 = vmatpush.bf16.msra.mxu0 %v3307
      %3353 = vmatmul.bf16.gmra.mxu0 %v3316
      %v3354 = vpop.f32.mrf.mxu0
      %v3355 = vadd.f32 0.0, %v3354
      %v3356 = vpop.f32.mrf.mxu0
      %v3357 = vadd.f32 0.0, %v3356
      %3358 = vmatmul.bf16.gmra.mxu0 %v3319
      %v3359 = vpop.f32.mrf.mxu0
      %v3360 = vadd.f32 0.0, %v3359
      %v3361 = vpop.f32.mrf.mxu0
      %v3362 = vadd.f32 0.0, %v3361
      %3363 = vmatmul.bf16.gmra.mxu0 %v3322
      %v3364 = vpop.f32.mrf.mxu0
      %v3365 = vadd.f32 0.0, %v3364
      %v3366 = vpop.f32.mrf.mxu0
      %v3367 = vadd.f32 0.0, %v3366
      %3368 = vmatmul.bf16.gmra.mxu0 %v3325
      %v3369 = vpop.f32.mrf.mxu0
      %v3370 = vadd.f32 0.0, %v3369
      %v3371 = vpop.f32.mrf.mxu0
      %v3372 = vadd.f32 0.0, %v3371
      %3373 = vmatmul.bf16.gmra.mxu0 %v3328
      %v3374 = vpop.f32.mrf.mxu0
      %v3375 = vadd.f32 0.0, %v3374
      %v3376 = vpop.f32.mrf.mxu0
      %v3377 = vadd.f32 0.0, %v3376
      %3378 = vmatmul.bf16.gmra.mxu0 %v3331
      %v3379 = vpop.f32.mrf.mxu0
      %v3380 = vadd.f32 0.0, %v3379
      %v3381 = vpop.f32.mrf.mxu0
      %v3382 = vadd.f32 0.0, %v3381
      %3383 = vmatmul.bf16.gmra.mxu0 %v3334
      %v3384 = vpop.f32.mrf.mxu0
      %v3385 = vadd.f32 0.0, %v3384
      %v3386 = vpop.f32.mrf.mxu0
      %v3387 = vadd.f32 0.0, %v3386
      %3388 = vmatmul.bf16.gmra.mxu0 %v3337
      %v3389 = vpop.f32.mrf.mxu0
      %v3390 = vadd.f32 0.0, %v3389
      %v3391 = vpop.f32.mrf.mxu0
      %v3392 = vadd.f32 0.0, %v3391
      %3393 = vmatmul.bf16.gmra.mxu0 %v3340
      %v3394 = vpop.f32.mrf.mxu0
      %v3395 = vadd.f32 0.0, %v3394
      %v3396 = vpop.f32.mrf.mxu0
      %v3397 = vadd.f32 0.0, %v3396
      %3398 = vmatmul.bf16.gmra.mxu0 %v3343
      %v3399 = vpop.f32.mrf.mxu0
      %v3400 = vadd.f32 0.0, %v3399
      %v3401 = vpop.f32.mrf.mxu0
      %v3402 = vadd.f32 0.0, %v3401
      %3403 = vdwg.mxu0
      %v3404 = vadd.f32 %v3163, %v3355
      %v3405 = vadd.f32 %v3165, %v3357
      %v3406 = vadd.f32 %v3168, %v3360
      %v3407 = vadd.f32 %v3170, %v3362
      %v3408 = vadd.f32 %v3173, %v3365
      %v3409 = vadd.f32 %v3175, %v3367
      %v3410 = vadd.f32 %v3178, %v3370
      %v3411 = vadd.f32 %v3180, %v3372
      %v3412 = vadd.f32 %v3183, %v3375
      %v3413 = vadd.f32 %v3185, %v3377
      %v3414 = vadd.f32 %v3188, %v3380
      %v3415 = vadd.f32 %v3190, %v3382
      %v3416 = vadd.f32 %v3193, %v3385
      %v3417 = vadd.f32 %v3195, %v3387
      %v3418 = vadd.f32 %v3198, %v3390
      %v3419 = vadd.f32 %v3200, %v3392
      %v3420 = vadd.f32 %v3203, %v3395
      %v3421 = vadd.f32 %v3205, %v3397
      %v3422 = vadd.f32 %v3208, %v3400
      %v3423 = vadd.f32 %v3210, %v3402
      %v3424 = vld [vmem:[#allocation2 + $0x18] sm:$0xf]
      %v3425 = vld [vmem:[#allocation2 + $0x1c] sm:$0xf]
      %v3426 = vld [vmem:[#allocation2 + $0x20] sm:$0xf]
      %v3427 = vld [vmem:[#allocation2 + $0x24] sm:$0xf]
      %v3428 = vld [vmem:[#allocation2 + $0x28] sm:$0xf]
      %v3429 = vld [vmem:[#allocation2 + $0x2c] sm:$0xf]
      %v3430 = vld [vmem:[#allocation2 + $0x30] sm:$0xf]
      %v3431 = vld [vmem:[#allocation2 + $0x34] sm:$0xf]
      %v3432 = vld [vmem:[#allocation2 + $0x38] sm:$0xf]
      %v3433 = vld [vmem:[#allocation2 + $0x3c] sm:$0xf]
      %v3434 = vld [vmem:[#allocation2 + $0x40] sm:$0xf]
      %v3435 = vld [vmem:[#allocation2 + $0x44] sm:$0xf]
      %v3436 = vld [vmem:[#allocation2 + $0x48] sm:$0xf]
      %v3437 = vld [vmem:[#allocation2 + $0x4c] sm:$0xf]
      %v3438 = vld [vmem:[#allocation2 + $0x50] sm:$0xf]
      %v3439 = vld [vmem:[#allocation2 + $0x54] sm:$0xf]
      %v3440 = vld [vmem:[#allocation2 + $0x58] sm:$0xf]
      %v3441 = vld [vmem:[#allocation2 + $0x5c] sm:$0xf]
      %v3442 = vld [vmem:[#allocation2 + $0x60] sm:$0xf]
      %v3443 = vld [vmem:[#allocation2 + $0x64] sm:$0xf]
      %s3444 = scalar_lea.vmem %s8, 96
      %v3445 = vld [vmem:[%s3444] sm:$0xf]
      %v3446 = vld [vmem:[%s3444 + $0x4] sm:$0xf]
      %v3447 = vld [vmem:[%s3444 + $0x8] sm:$0xf]
      %v3448 = vld [vmem:[%s3444 + $0xc] sm:$0xf]
      %v3449 = vld [vmem:[%s3444 + $0x10] sm:$0xf]
      %v3450 = vld [vmem:[%s3444 + $0x14] sm:$0xf]
      %v3451 = vld [vmem:[%s3444 + $0x18] sm:$0xf]
      %v3452 = vld [vmem:[%s3444 + $0x1c] sm:$0xf]
      %v3473 = vunpack.c.l.b16 %v3424
      %v3474 = vunpack.c.l.b16 %v3425
      %v3475 = vunpack.c.l.b16 %v3426
      %v3476 = vunpack.c.l.b16 %v3427
      %v3477 = vunpack.c.l.b16 %v3428
      %v3478 = vunpack.c.l.b16 %v3429
      %v3479 = vunpack.c.l.b16 %v3430
      %v3480 = vunpack.c.l.b16 %v3431
      %v3481 = vunpack.c.l.b16 %v3432
      %v3482 = vunpack.c.l.b16 %v3433
      %v3483 = vunpack.c.l.b16 %v3434
      %v3484 = vunpack.c.l.b16 %v3435
      %v3485 = vunpack.c.l.b16 %v3436
      %v3486 = vunpack.c.l.b16 %v3437
      %v3487 = vunpack.c.l.b16 %v3438
      %v3488 = vunpack.c.l.b16 %v3439
      %v3489 = vunpack.c.l.b16 %v3440
      %v3490 = vunpack.c.l.b16 %v3441
      %v3491 = vunpack.c.l.b16 %v3442
      %v3492 = vunpack.c.l.b16 %v3443
      %v3493 = vpack.c.b16 %v3474, %v3473
      %v3494 = vpack.c.b16 %v3476, %v3475
      %v3495 = vpack.c.b16 %v3478, %v3477
      %v3496 = vpack.c.b16 %v3480, %v3479
      %v3497 = vpack.c.b16 %v3482, %v3481
      %v3498 = vpack.c.b16 %v3484, %v3483
      %v3499 = vpack.c.b16 %v3486, %v3485
      %v3500 = vpack.c.b16 %v3488, %v3487
      %v3501 = vpack.c.b16 %v3490, %v3489
      %v3502 = vpack.c.b16 %v3492, %v3491
      %v3511 = vunpack.c.l.b16 %v3445
      %v3512 = vunpack.c.l.b16 %v3446
      %v3513 = vunpack.c.l.b16 %v3447
      %v3514 = vunpack.c.l.b16 %v3448
      %v3515 = vunpack.c.l.b16 %v3449
      %v3516 = vunpack.c.l.b16 %v3450
      %v3517 = vunpack.c.l.b16 %v3451
      %v3518 = vunpack.c.l.b16 %v3452
      %v3519 = vpack.c.b16 %v3512, %v3511
      %v3520 = vpack.c.b16 %v3514, %v3513
      %v3521 = vpack.c.b16 %v3516, %v3515
      %v3522 = vpack.c.b16 %v3518, %v3517
      %v3528 = vsel %vm1407, %v3493, 0
      %v3531 = vsel %vm1407, %v3494, 0
      %v3534 = vsel %vm1407, %v3495, 0
      %v3537 = vsel %vm1407, %v3496, 0
      %v3540 = vsel %vm1407, %v3497, 0
      %v3543 = vsel %vm1407, %v3498, 0
      %v3546 = vsel %vm1407, %v3499, 0
      %v3549 = vsel %vm1407, %v3500, 0
      %v3552 = vsel %vm1407, %v3501, 0
      %v3555 = vsel %vm1407, %v3502, 0
      %3557 = vmatpush.bf16.msra.mxu0 0
      %3558 = vmatpush.bf16.msra.mxu0 0
      %3559 = vmatpush.bf16.msra.mxu0 0
      %3560 = vmatpush.bf16.msra.mxu0 0
      %3561 = vmatpush.bf16.msra.mxu0 %v3522
      %3562 = vmatpush.bf16.msra.mxu0 %v3521
      %3563 = vmatpush.bf16.msra.mxu0 %v3520
      %3564 = vmatpush.bf16.msra.mxu0 %v3519
      %3565 = vmatmul.bf16.gmra.mxu0 %v3528
      %v3566 = vpop.f32.mrf.mxu0
      %v3567 = vadd.f32 0.0, %v3566
      %v3568 = vpop.f32.mrf.mxu0
      %v3569 = vadd.f32 0.0, %v3568
      %3570 = vmatmul.bf16.gmra.mxu0 %v3531
      %v3571 = vpop.f32.mrf.mxu0
      %v3572 = vadd.f32 0.0, %v3571
      %v3573 = vpop.f32.mrf.mxu0
      %v3574 = vadd.f32 0.0, %v3573
      %3575 = vmatmul.bf16.gmra.mxu0 %v3534
      %v3576 = vpop.f32.mrf.mxu0
      %v3577 = vadd.f32 0.0, %v3576
      %v3578 = vpop.f32.mrf.mxu0
      %v3579 = vadd.f32 0.0, %v3578
      %3580 = vmatmul.bf16.gmra.mxu0 %v3537
      %v3581 = vpop.f32.mrf.mxu0
      %v3582 = vadd.f32 0.0, %v3581
      %v3583 = vpop.f32.mrf.mxu0
      %v3584 = vadd.f32 0.0, %v3583
      %3585 = vmatmul.bf16.gmra.mxu0 %v3540
      %v3586 = vpop.f32.mrf.mxu0
      %v3587 = vadd.f32 0.0, %v3586
      %v3588 = vpop.f32.mrf.mxu0
      %v3589 = vadd.f32 0.0, %v3588
      %3590 = vmatmul.bf16.gmra.mxu0 %v3543
      %v3591 = vpop.f32.mrf.mxu0
      %v3592 = vadd.f32 0.0, %v3591
      %v3593 = vpop.f32.mrf.mxu0
      %v3594 = vadd.f32 0.0, %v3593
      %3595 = vmatmul.bf16.gmra.mxu0 %v3546
      %v3596 = vpop.f32.mrf.mxu0
      %v3597 = vadd.f32 0.0, %v3596
      %v3598 = vpop.f32.mrf.mxu0
      %v3599 = vadd.f32 0.0, %v3598
      %3600 = vmatmul.bf16.gmra.mxu0 %v3549
      %v3601 = vpop.f32.mrf.mxu0
      %v3602 = vadd.f32 0.0, %v3601
      %v3603 = vpop.f32.mrf.mxu0
      %v3604 = vadd.f32 0.0, %v3603
      %3605 = vmatmul.bf16.gmra.mxu0 %v3552
      %v3606 = vpop.f32.mrf.mxu0
      %v3607 = vadd.f32 0.0, %v3606
      %v3608 = vpop.f32.mrf.mxu0
      %v3609 = vadd.f32 0.0, %v3608
      %3610 = vmatmul.bf16.gmra.mxu0 %v3555
      %v3611 = vpop.f32.mrf.mxu0
      %v3612 = vadd.f32 0.0, %v3611
      %v3613 = vpop.f32.mrf.mxu0
      %v3614 = vadd.f32 0.0, %v3613
      %3615 = vdwg.mxu0
      %v3616 = vadd.f32 %v3404, %v3567
      %v3617 = vadd.f32 %v3405, %v3569
      %v3618 = vadd.f32 %v3406, %v3572
      %v3619 = vadd.f32 %v3407, %v3574
      %v3620 = vadd.f32 %v3408, %v3577
      %v3621 = vadd.f32 %v3409, %v3579
      %v3622 = vadd.f32 %v3410, %v3582
      %v3623 = vadd.f32 %v3411, %v3584
      %v3624 = vadd.f32 %v3412, %v3587
      %v3625 = vadd.f32 %v3413, %v3589
      %v3626 = vadd.f32 %v3414, %v3592
      %v3627 = vadd.f32 %v3415, %v3594
      %v3628 = vadd.f32 %v3416, %v3597
      %v3629 = vadd.f32 %v3417, %v3599
      %v3630 = vadd.f32 %v3418, %v3602
      %v3631 = vadd.f32 %v3419, %v3604
      %v3632 = vadd.f32 %v3420, %v3607
      %v3633 = vadd.f32 %v3421, %v3609
      %v3634 = vadd.f32 %v3422, %v3612
      %v3635 = vadd.f32 %v3423, %v3614
      %v3636 = vld [vmem:[#allocation2 + $0x20] sm:$0xf]
      %v3637 = vld [vmem:[#allocation2 + $0x24] sm:$0xf]
      %v3638 = vld [vmem:[#allocation2 + $0x28] sm:$0xf]
      %v3639 = vld [vmem:[#allocation2 + $0x2c] sm:$0xf]
      %v3640 = vld [vmem:[#allocation2 + $0x30] sm:$0xf]
      %v3641 = vld [vmem:[#allocation2 + $0x34] sm:$0xf]
      %v3642 = vld [vmem:[#allocation2 + $0x38] sm:$0xf]
      %v3643 = vld [vmem:[#allocation2 + $0x3c] sm:$0xf]
      %v3644 = vld [vmem:[#allocation2 + $0x40] sm:$0xf]
      %v3645 = vld [vmem:[#allocation2 + $0x44] sm:$0xf]
      %v3646 = vld [vmem:[#allocation2 + $0x48] sm:$0xf]
      %v3647 = vld [vmem:[#allocation2 + $0x4c] sm:$0xf]
      %v3648 = vld [vmem:[#allocation2 + $0x50] sm:$0xf]
      %v3649 = vld [vmem:[#allocation2 + $0x54] sm:$0xf]
      %v3650 = vld [vmem:[#allocation2 + $0x58] sm:$0xf]
      %v3651 = vld [vmem:[#allocation2 + $0x5c] sm:$0xf]
      %v3652 = vld [vmem:[#allocation2 + $0x60] sm:$0xf]
      %v3653 = vld [vmem:[#allocation2 + $0x64] sm:$0xf]
      %v3654 = vld [vmem:[#allocation2 + $0x68] sm:$0xf]
      %v3655 = vld [vmem:[#allocation2 + $0x6c] sm:$0xf]
      %s3656 = scalar_lea.vmem %s8, 128
      %v3657 = vld [vmem:[%s3656] sm:$0xf]
      %v3658 = vld [vmem:[%s3656 + $0x4] sm:$0xf]
      %v3659 = vld [vmem:[%s3656 + $0x8] sm:$0xf]
      %v3660 = vld [vmem:[%s3656 + $0xc] sm:$0xf]
      %v3661 = vld [vmem:[%s3656 + $0x10] sm:$0xf]
      %v3662 = vld [vmem:[%s3656 + $0x14] sm:$0xf]
      %v3663 = vld [vmem:[%s3656 + $0x18] sm:$0xf]
      %v3664 = vld [vmem:[%s3656 + $0x1c] sm:$0xf]
      %v3685 = vunpack.c.l.b16 %v3636
      %v3686 = vunpack.c.l.b16 %v3637
      %v3687 = vunpack.c.l.b16 %v3638
      %v3688 = vunpack.c.l.b16 %v3639
      %v3689 = vunpack.c.l.b16 %v3640
      %v3690 = vunpack.c.l.b16 %v3641
      %v3691 = vunpack.c.l.b16 %v3642
      %v3692 = vunpack.c.l.b16 %v3643
      %v3693 = vunpack.c.l.b16 %v3644
      %v3694 = vunpack.c.l.b16 %v3645
      %v3695 = vunpack.c.l.b16 %v3646
      %v3696 = vunpack.c.l.b16 %v3647
      %v3697 = vunpack.c.l.b16 %v3648
      %v3698 = vunpack.c.l.b16 %v3649
      %v3699 = vunpack.c.l.b16 %v3650
      %v3700 = vunpack.c.l.b16 %v3651
      %v3701 = vunpack.c.l.b16 %v3652
      %v3702 = vunpack.c.l.b16 %v3653
      %v3703 = vunpack.c.l.b16 %v3654
      %v3704 = vunpack.c.l.b16 %v3655
      %v3705 = vpack.c.b16 %v3686, %v3685
      %v3706 = vpack.c.b16 %v3688, %v3687
      %v3707 = vpack.c.b16 %v3690, %v3689
      %v3708 = vpack.c.b16 %v3692, %v3691
      %v3709 = vpack.c.b16 %v3694, %v3693
      %v3710 = vpack.c.b16 %v3696, %v3695
      %v3711 = vpack.c.b16 %v3698, %v3697
      %v3712 = vpack.c.b16 %v3700, %v3699
      %v3713 = vpack.c.b16 %v3702, %v3701
      %v3714 = vpack.c.b16 %v3704, %v3703
      %v3723 = vunpack.c.l.b16 %v3657
      %v3724 = vunpack.c.l.b16 %v3658
      %v3725 = vunpack.c.l.b16 %v3659
      %v3726 = vunpack.c.l.b16 %v3660
      %v3727 = vunpack.c.l.b16 %v3661
      %v3728 = vunpack.c.l.b16 %v3662
      %v3729 = vunpack.c.l.b16 %v3663
      %v3730 = vunpack.c.l.b16 %v3664
      %v3731 = vpack.c.b16 %v3724, %v3723
      %v3732 = vpack.c.b16 %v3726, %v3725
      %v3733 = vpack.c.b16 %v3728, %v3727
      %v3734 = vpack.c.b16 %v3730, %v3729
      %v3740 = vsel %vm1407, %v3705, 0
      %v3743 = vsel %vm1407, %v3706, 0
      %v3746 = vsel %vm1407, %v3707, 0
      %v3749 = vsel %vm1407, %v3708, 0
      %v3752 = vsel %vm1407, %v3709, 0
      %v3755 = vsel %vm1407, %v3710, 0
      %v3758 = vsel %vm1407, %v3711, 0
      %v3761 = vsel %vm1407, %v3712, 0
      %v3764 = vsel %vm1407, %v3713, 0
      %v3767 = vsel %vm1407, %v3714, 0
      %3769 = vmatpush.bf16.msra.mxu0 0
      %3770 = vmatpush.bf16.msra.mxu0 0
      %3771 = vmatpush.bf16.msra.mxu0 0
      %3772 = vmatpush.bf16.msra.mxu0 0
      %3773 = vmatpush.bf16.msra.mxu0 %v3734
      %3774 = vmatpush.bf16.msra.mxu0 %v3733
      %3775 = vmatpush.bf16.msra.mxu0 %v3732
      %3776 = vmatpush.bf16.msra.mxu0 %v3731
      %3777 = vmatmul.bf16.gmra.mxu0 %v3740
      %v3778 = vpop.f32.mrf.mxu0
      %v3779 = vadd.f32 0.0, %v3778
      %v3780 = vpop.f32.mrf.mxu0
      %v3781 = vadd.f32 0.0, %v3780
      %3782 = vmatmul.bf16.gmra.mxu0 %v3743
      %v3783 = vpop.f32.mrf.mxu0
      %v3784 = vadd.f32 0.0, %v3783
      %v3785 = vpop.f32.mrf.mxu0
      %v3786 = vadd.f32 0.0, %v3785
      %3787 = vmatmul.bf16.gmra.mxu0 %v3746
      %v3788 = vpop.f32.mrf.mxu0
      %v3789 = vadd.f32 0.0, %v3788
      %v3790 = vpop.f32.mrf.mxu0
      %v3791 = vadd.f32 0.0, %v3790
      %3792 = vmatmul.bf16.gmra.mxu0 %v3749
      %v3793 = vpop.f32.mrf.mxu0
      %v3794 = vadd.f32 0.0, %v3793
      %v3795 = vpop.f32.mrf.mxu0
      %v3796 = vadd.f32 0.0, %v3795
      %3797 = vmatmul.bf16.gmra.mxu0 %v3752
      %v3798 = vpop.f32.mrf.mxu0
      %v3799 = vadd.f32 0.0, %v3798
      %v3800 = vpop.f32.mrf.mxu0
      %v3801 = vadd.f32 0.0, %v3800
      %3802 = vmatmul.bf16.gmra.mxu0 %v3755
      %v3803 = vpop.f32.mrf.mxu0
      %v3804 = vadd.f32 0.0, %v3803
      %v3805 = vpop.f32.mrf.mxu0
      %v3806 = vadd.f32 0.0, %v3805
      %3807 = vmatmul.bf16.gmra.mxu0 %v3758
      %v3808 = vpop.f32.mrf.mxu0
      %v3809 = vadd.f32 0.0, %v3808
      %v3810 = vpop.f32.mrf.mxu0
      %v3811 = vadd.f32 0.0, %v3810
      %3812 = vmatmul.bf16.gmra.mxu0 %v3761
      %v3813 = vpop.f32.mrf.mxu0
      %v3814 = vadd.f32 0.0, %v3813
      %v3815 = vpop.f32.mrf.mxu0
      %v3816 = vadd.f32 0.0, %v3815
      %3817 = vmatmul.bf16.gmra.mxu0 %v3764
      %v3818 = vpop.f32.mrf.mxu0
      %v3819 = vadd.f32 0.0, %v3818
      %v3820 = vpop.f32.mrf.mxu0
      %v3821 = vadd.f32 0.0, %v3820
      %3822 = vmatmul.bf16.gmra.mxu0 %v3767
      %v3823 = vpop.f32.mrf.mxu0
      %v3824 = vadd.f32 0.0, %v3823
      %v3825 = vpop.f32.mrf.mxu0
      %v3826 = vadd.f32 0.0, %v3825
      %3827 = vdwg.mxu0
      %v3828 = vadd.f32 %v3616, %v3779
      %v3829 = vadd.f32 %v3617, %v3781
      %v3830 = vadd.f32 %v3618, %v3784
      %v3831 = vadd.f32 %v3619, %v3786
      %v3832 = vadd.f32 %v3620, %v3789
      %v3833 = vadd.f32 %v3621, %v3791
      %v3834 = vadd.f32 %v3622, %v3794
      %v3835 = vadd.f32 %v3623, %v3796
      %v3836 = vadd.f32 %v3624, %v3799
      %v3837 = vadd.f32 %v3625, %v3801
      %v3838 = vadd.f32 %v3626, %v3804
      %v3839 = vadd.f32 %v3627, %v3806
      %v3840 = vadd.f32 %v3628, %v3809
      %v3841 = vadd.f32 %v3629, %v3811
      %v3842 = vadd.f32 %v3630, %v3814
      %v3843 = vadd.f32 %v3631, %v3816
      %v3844 = vadd.f32 %v3632, %v3819
      %v3845 = vadd.f32 %v3633, %v3821
      %v3846 = vadd.f32 %v3634, %v3824
      %v3847 = vadd.f32 %v3635, %v3826
      %v3848 = vld [vmem:[#allocation2 + $0x28] sm:$0xf]
      %v3849 = vld [vmem:[#allocation2 + $0x2c] sm:$0xf]
      %v3850 = vld [vmem:[#allocation2 + $0x30] sm:$0xf]
      %v3851 = vld [vmem:[#allocation2 + $0x34] sm:$0xf]
      %v3852 = vld [vmem:[#allocation2 + $0x38] sm:$0xf]
      %v3853 = vld [vmem:[#allocation2 + $0x3c] sm:$0xf]
      %v3854 = vld [vmem:[#allocation2 + $0x40] sm:$0xf]
      %v3855 = vld [vmem:[#allocation2 + $0x44] sm:$0xf]
      %v3856 = vld [vmem:[#allocation2 + $0x48] sm:$0xf]
      %v3857 = vld [vmem:[#allocation2 + $0x4c] sm:$0xf]
      %v3858 = vld [vmem:[#allocation2 + $0x50] sm:$0xf]
      %v3859 = vld [vmem:[#allocation2 + $0x54] sm:$0xf]
      %v3860 = vld [vmem:[#allocation2 + $0x58] sm:$0xf]
      %v3861 = vld [vmem:[#allocation2 + $0x5c] sm:$0xf]
      %v3862 = vld [vmem:[#allocation2 + $0x60] sm:$0xf]
      %v3863 = vld [vmem:[#allocation2 + $0x64] sm:$0xf]
      %v3864 = vld [vmem:[#allocation2 + $0x68] sm:$0xf]
      %v3865 = vld [vmem:[#allocation2 + $0x6c] sm:$0xf]
      %v3866 = vld [vmem:[#allocation2 + $0x70] sm:$0xf]
      %v3867 = vld [vmem:[#allocation2 + $0x74] sm:$0xf]
      %s3868 = scalar_lea.vmem %s8, 160
      %v3869 = vld [vmem:[%s3868] sm:$0xf]
      %v3870 = vld [vmem:[%s3868 + $0x4] sm:$0xf]
      %v3871 = vld [vmem:[%s3868 + $0x8] sm:$0xf]
      %v3872 = vld [vmem:[%s3868 + $0xc] sm:$0xf]
      %v3873 = vld [vmem:[%s3868 + $0x10] sm:$0xf]
      %v3874 = vld [vmem:[%s3868 + $0x14] sm:$0xf]
      %v3875 = vld [vmem:[%s3868 + $0x18] sm:$0xf]
      %v3876 = vld [vmem:[%s3868 + $0x1c] sm:$0xf]
      %v3897 = vunpack.c.l.b16 %v3848
      %v3898 = vunpack.c.l.b16 %v3849
      %v3899 = vunpack.c.l.b16 %v3850
      %v3900 = vunpack.c.l.b16 %v3851
      %v3901 = vunpack.c.l.b16 %v3852
      %v3902 = vunpack.c.l.b16 %v3853
      %v3903 = vunpack.c.l.b16 %v3854
      %v3904 = vunpack.c.l.b16 %v3855
      %v3905 = vunpack.c.l.b16 %v3856
      %v3906 = vunpack.c.l.b16 %v3857
      %v3907 = vunpack.c.l.b16 %v3858
      %v3908 = vunpack.c.l.b16 %v3859
      %v3909 = vunpack.c.l.b16 %v3860
      %v3910 = vunpack.c.l.b16 %v3861
      %v3911 = vunpack.c.l.b16 %v3862
      %v3912 = vunpack.c.l.b16 %v3863
      %v3913 = vunpack.c.l.b16 %v3864
      %v3914 = vunpack.c.l.b16 %v3865
      %v3915 = vunpack.c.l.b16 %v3866
      %v3916 = vunpack.c.l.b16 %v3867
      %v3917 = vpack.c.b16 %v3898, %v3897
      %v3918 = vpack.c.b16 %v3900, %v3899
      %v3919 = vpack.c.b16 %v3902, %v3901
      %v3920 = vpack.c.b16 %v3904, %v3903
      %v3921 = vpack.c.b16 %v3906, %v3905
      %v3922 = vpack.c.b16 %v3908, %v3907
      %v3923 = vpack.c.b16 %v3910, %v3909
      %v3924 = vpack.c.b16 %v3912, %v3911
      %v3925 = vpack.c.b16 %v3914, %v3913
      %v3926 = vpack.c.b16 %v3916, %v3915
      %v3935 = vunpack.c.l.b16 %v3869
      %v3936 = vunpack.c.l.b16 %v3870
      %v3937 = vunpack.c.l.b16 %v3871
      %v3938 = vunpack.c.l.b16 %v3872
      %v3939 = vunpack.c.l.b16 %v3873
      %v3940 = vunpack.c.l.b16 %v3874
      %v3941 = vunpack.c.l.b16 %v3875
      %v3942 = vunpack.c.l.b16 %v3876
      %v3943 = vpack.c.b16 %v3936, %v3935
      %v3944 = vpack.c.b16 %v3938, %v3937
      %v3945 = vpack.c.b16 %v3940, %v3939
      %v3946 = vpack.c.b16 %v3942, %v3941
      %v3952 = vsel %vm1407, %v3917, 0
      %v3955 = vsel %vm1407, %v3918, 0
      %v3958 = vsel %vm1407, %v3919, 0
      %v3961 = vsel %vm1407, %v3920, 0
      %v3964 = vsel %vm1407, %v3921, 0
      %v3967 = vsel %vm1407, %v3922, 0
      %v3970 = vsel %vm1407, %v3923, 0
      %v3973 = vsel %vm1407, %v3924, 0
      %v3976 = vsel %vm1407, %v3925, 0
      %v3979 = vsel %vm1407, %v3926, 0
      %3981 = vmatpush.bf16.msra.mxu0 0
      %3982 = vmatpush.bf16.msra.mxu0 0
      %3983 = vmatpush.bf16.msra.mxu0 0
      %3984 = vmatpush.bf16.msra.mxu0 0
      %3985 = vmatpush.bf16.msra.mxu0 %v3946
      %3986 = vmatpush.bf16.msra.mxu0 %v3945
      %3987 = vmatpush.bf16.msra.mxu0 %v3944
      %3988 = vmatpush.bf16.msra.mxu0 %v3943
      %3989 = vmatmul.bf16.gmra.mxu0 %v3952
      %v3990 = vpop.f32.mrf.mxu0
      %v3991 = vadd.f32 0.0, %v3990
      %v3992 = vpop.f32.mrf.mxu0
      %v3993 = vadd.f32 0.0, %v3992
      %3994 = vmatmul.bf16.gmra.mxu0 %v3955
      %v3995 = vpop.f32.mrf.mxu0
      %v3996 = vadd.f32 0.0, %v3995
      %v3997 = vpop.f32.mrf.mxu0
      %v3998 = vadd.f32 0.0, %v3997
      %3999 = vmatmul.bf16.gmra.mxu0 %v3958
      %v4000 = vpop.f32.mrf.mxu0
      %v4001 = vadd.f32 0.0, %v4000
      %v4002 = vpop.f32.mrf.mxu0
      %v4003 = vadd.f32 0.0, %v4002
      %4004 = vmatmul.bf16.gmra.mxu0 %v3961
      %v4005 = vpop.f32.mrf.mxu0
      %v4006 = vadd.f32 0.0, %v4005
      %v4007 = vpop.f32.mrf.mxu0
      %v4008 = vadd.f32 0.0, %v4007
      %4009 = vmatmul.bf16.gmra.mxu0 %v3964
      %v4010 = vpop.f32.mrf.mxu0
      %v4011 = vadd.f32 0.0, %v4010
      %v4012 = vpop.f32.mrf.mxu0
      %v4013 = vadd.f32 0.0, %v4012
      %4014 = vmatmul.bf16.gmra.mxu0 %v3967
      %v4015 = vpop.f32.mrf.mxu0
      %v4016 = vadd.f32 0.0, %v4015
      %v4017 = vpop.f32.mrf.mxu0
      %v4018 = vadd.f32 0.0, %v4017
      %4019 = vmatmul.bf16.gmra.mxu0 %v3970
      %v4020 = vpop.f32.mrf.mxu0
      %v4021 = vadd.f32 0.0, %v4020
      %v4022 = vpop.f32.mrf.mxu0
      %v4023 = vadd.f32 0.0, %v4022
      %4024 = vmatmul.bf16.gmra.mxu0 %v3973
      %v4025 = vpop.f32.mrf.mxu0
      %v4026 = vadd.f32 0.0, %v4025
      %v4027 = vpop.f32.mrf.mxu0
      %v4028 = vadd.f32 0.0, %v4027
      %4029 = vmatmul.bf16.gmra.mxu0 %v3976
      %v4030 = vpop.f32.mrf.mxu0
      %v4031 = vadd.f32 0.0, %v4030
      %v4032 = vpop.f32.mrf.mxu0
      %v4033 = vadd.f32 0.0, %v4032
      %4034 = vmatmul.bf16.gmra.mxu0 %v3979
      %v4035 = vpop.f32.mrf.mxu0
      %v4036 = vadd.f32 0.0, %v4035
      %v4037 = vpop.f32.mrf.mxu0
      %v4038 = vadd.f32 0.0, %v4037
      %4039 = vdwg.mxu0
      %v4040 = vadd.f32 %v3828, %v3991
      %v4041 = vadd.f32 %v3829, %v3993
      %v4042 = vadd.f32 %v3830, %v3996
      %v4043 = vadd.f32 %v3831, %v3998
      %v4044 = vadd.f32 %v3832, %v4001
      %v4045 = vadd.f32 %v3833, %v4003
      %v4046 = vadd.f32 %v3834, %v4006
      %v4047 = vadd.f32 %v3835, %v4008
      %v4048 = vadd.f32 %v3836, %v4011
      %v4049 = vadd.f32 %v3837, %v4013
      %v4050 = vadd.f32 %v3838, %v4016
      %v4051 = vadd.f32 %v3839, %v4018
      %v4052 = vadd.f32 %v3840, %v4021
      %v4053 = vadd.f32 %v3841, %v4023
      %v4054 = vadd.f32 %v3842, %v4026
      %v4055 = vadd.f32 %v3843, %v4028
      %v4056 = vadd.f32 %v3844, %v4031
      %v4057 = vadd.f32 %v3845, %v4033
      %v4058 = vadd.f32 %v3846, %v4036
      %v4059 = vadd.f32 %v3847, %v4038
      %v4060 = vld [vmem:[#allocation2 + $0x30] sm:$0xf]
      %v4061 = vld [vmem:[#allocation2 + $0x34] sm:$0xf]
      %v4062 = vld [vmem:[#allocation2 + $0x38] sm:$0xf]
      %v4063 = vld [vmem:[#allocation2 + $0x3c] sm:$0xf]
      %v4064 = vld [vmem:[#allocation2 + $0x40] sm:$0xf]
      %v4065 = vld [vmem:[#allocation2 + $0x44] sm:$0xf]
      %v4066 = vld [vmem:[#allocation2 + $0x48] sm:$0xf]
      %v4067 = vld [vmem:[#allocation2 + $0x4c] sm:$0xf]
      %v4068 = vld [vmem:[#allocation2 + $0x50] sm:$0xf]
      %v4069 = vld [vmem:[#allocation2 + $0x54] sm:$0xf]
      %v4070 = vld [vmem:[#allocation2 + $0x58] sm:$0xf]
      %v4071 = vld [vmem:[#allocation2 + $0x5c] sm:$0xf]
      %v4072 = vld [vmem:[#allocation2 + $0x60] sm:$0xf]
      %v4073 = vld [vmem:[#allocation2 + $0x64] sm:$0xf]
      %v4074 = vld [vmem:[#allocation2 + $0x68] sm:$0xf]
      %v4075 = vld [vmem:[#allocation2 + $0x6c] sm:$0xf]
      %v4076 = vld [vmem:[#allocation2 + $0x70] sm:$0xf]
      %v4077 = vld [vmem:[#allocation2 + $0x74] sm:$0xf]
      %v4078 = vld [vmem:[#allocation2 + $0x78] sm:$0xf]
      %v4079 = vld [vmem:[#allocation2 + $0x7c] sm:$0xf]
      %s4080 = scalar_lea.vmem %s8, 192
      %v4081 = vld [vmem:[%s4080] sm:$0xf]
      %v4082 = vld [vmem:[%s4080 + $0x4] sm:$0xf]
      %v4083 = vld [vmem:[%s4080 + $0x8] sm:$0xf]
      %v4084 = vld [vmem:[%s4080 + $0xc] sm:$0xf]
      %v4085 = vld [vmem:[%s4080 + $0x10] sm:$0xf]
      %v4086 = vld [vmem:[%s4080 + $0x14] sm:$0xf]
      %v4087 = vld [vmem:[%s4080 + $0x18] sm:$0xf]
      %v4088 = vld [vmem:[%s4080 + $0x1c] sm:$0xf]
      %v4109 = vunpack.c.l.b16 %v4060
      %v4110 = vunpack.c.l.b16 %v4061
      %v4111 = vunpack.c.l.b16 %v4062
      %v4112 = vunpack.c.l.b16 %v4063
      %v4113 = vunpack.c.l.b16 %v4064
      %v4114 = vunpack.c.l.b16 %v4065
      %v4115 = vunpack.c.l.b16 %v4066
      %v4116 = vunpack.c.l.b16 %v4067
      %v4117 = vunpack.c.l.b16 %v4068
      %v4118 = vunpack.c.l.b16 %v4069
      %v4119 = vunpack.c.l.b16 %v4070
      %v4120 = vunpack.c.l.b16 %v4071
      %v4121 = vunpack.c.l.b16 %v4072
      %v4122 = vunpack.c.l.b16 %v4073
      %v4123 = vunpack.c.l.b16 %v4074
      %v4124 = vunpack.c.l.b16 %v4075
      %v4125 = vunpack.c.l.b16 %v4076
      %v4126 = vunpack.c.l.b16 %v4077
      %v4127 = vunpack.c.l.b16 %v4078
      %v4128 = vunpack.c.l.b16 %v4079
      %v4129 = vpack.c.b16 %v4110, %v4109
      %v4130 = vpack.c.b16 %v4112, %v4111
      %v4131 = vpack.c.b16 %v4114, %v4113
      %v4132 = vpack.c.b16 %v4116, %v4115
      %v4133 = vpack.c.b16 %v4118, %v4117
      %v4134 = vpack.c.b16 %v4120, %v4119
      %v4135 = vpack.c.b16 %v4122, %v4121
      %v4136 = vpack.c.b16 %v4124, %v4123
      %v4137 = vpack.c.b16 %v4126, %v4125
      %v4138 = vpack.c.b16 %v4128, %v4127
      %v4147 = vunpack.c.l.b16 %v4081
      %v4148 = vunpack.c.l.b16 %v4082
      %v4149 = vunpack.c.l.b16 %v4083
      %v4150 = vunpack.c.l.b16 %v4084
      %v4151 = vunpack.c.l.b16 %v4085
      %v4152 = vunpack.c.l.b16 %v4086
      %v4153 = vunpack.c.l.b16 %v4087
      %v4154 = vunpack.c.l.b16 %v4088
      %v4155 = vpack.c.b16 %v4148, %v4147
      %v4156 = vpack.c.b16 %v4150, %v4149
      %v4157 = vpack.c.b16 %v4152, %v4151
      %v4158 = vpack.c.b16 %v4154, %v4153
      %v4164 = vsel %vm1407, %v4129, 0
      %v4167 = vsel %vm1407, %v4130, 0
      %v4170 = vsel %vm1407, %v4131, 0
      %v4173 = vsel %vm1407, %v4132, 0
      %v4176 = vsel %vm1407, %v4133, 0
      %v4179 = vsel %vm1407, %v4134, 0
      %v4182 = vsel %vm1407, %v4135, 0
      %v4185 = vsel %vm1407, %v4136, 0
      %v4188 = vsel %vm1407, %v4137, 0
      %v4191 = vsel %vm1407, %v4138, 0
      %4193 = vmatpush.bf16.msra.mxu0 0
      %4194 = vmatpush.bf16.msra.mxu0 0
      %4195 = vmatpush.bf16.msra.mxu0 0
      %4196 = vmatpush.bf16.msra.mxu0 0
      %4197 = vmatpush.bf16.msra.mxu0 %v4158
      %4198 = vmatpush.bf16.msra.mxu0 %v4157
      %4199 = vmatpush.bf16.msra.mxu0 %v4156
      %4200 = vmatpush.bf16.msra.mxu0 %v4155
      %4201 = vmatmul.bf16.gmra.mxu0 %v4164
      %v4202 = vpop.f32.mrf.mxu0
      %v4203 = vadd.f32 0.0, %v4202
      %v4204 = vpop.f32.mrf.mxu0
      %v4205 = vadd.f32 0.0, %v4204
      %4206 = vmatmul.bf16.gmra.mxu0 %v4167
      %v4207 = vpop.f32.mrf.mxu0
      %v4208 = vadd.f32 0.0, %v4207
      %v4209 = vpop.f32.mrf.mxu0
      %v4210 = vadd.f32 0.0, %v4209
      %4211 = vmatmul.bf16.gmra.mxu0 %v4170
      %v4212 = vpop.f32.mrf.mxu0
      %v4213 = vadd.f32 0.0, %v4212
      %v4214 = vpop.f32.mrf.mxu0
      %v4215 = vadd.f32 0.0, %v4214
      %4216 = vmatmul.bf16.gmra.mxu0 %v4173
      %v4217 = vpop.f32.mrf.mxu0
      %v4218 = vadd.f32 0.0, %v4217
      %v4219 = vpop.f32.mrf.mxu0
      %v4220 = vadd.f32 0.0, %v4219
      %4221 = vmatmul.bf16.gmra.mxu0 %v4176
      %v4222 = vpop.f32.mrf.mxu0
      %v4223 = vadd.f32 0.0, %v4222
      %v4224 = vpop.f32.mrf.mxu0
      %v4225 = vadd.f32 0.0, %v4224
      %4226 = vmatmul.bf16.gmra.mxu0 %v4179
      %v4227 = vpop.f32.mrf.mxu0
      %v4228 = vadd.f32 0.0, %v4227
      %v4229 = vpop.f32.mrf.mxu0
      %v4230 = vadd.f32 0.0, %v4229
      %4231 = vmatmul.bf16.gmra.mxu0 %v4182
      %v4232 = vpop.f32.mrf.mxu0
      %v4233 = vadd.f32 0.0, %v4232
      %v4234 = vpop.f32.mrf.mxu0
      %v4235 = vadd.f32 0.0, %v4234
      %4236 = vmatmul.bf16.gmra.mxu0 %v4185
      %v4237 = vpop.f32.mrf.mxu0
      %v4238 = vadd.f32 0.0, %v4237
      %v4239 = vpop.f32.mrf.mxu0
      %v4240 = vadd.f32 0.0, %v4239
      %4241 = vmatmul.bf16.gmra.mxu0 %v4188
      %v4242 = vpop.f32.mrf.mxu0
      %v4243 = vadd.f32 0.0, %v4242
      %v4244 = vpop.f32.mrf.mxu0
      %v4245 = vadd.f32 0.0, %v4244
      %4246 = vmatmul.bf16.gmra.mxu0 %v4191
      %v4247 = vpop.f32.mrf.mxu0
      %v4248 = vadd.f32 0.0, %v4247
      %v4249 = vpop.f32.mrf.mxu0
      %v4250 = vadd.f32 0.0, %v4249
      %4251 = vdwg.mxu0
      %v4252 = vadd.f32 %v4040, %v4203
      %v4253 = vadd.f32 %v4041, %v4205
      %v4254 = vadd.f32 %v4042, %v4208
      %v4255 = vadd.f32 %v4043, %v4210
      %v4256 = vadd.f32 %v4044, %v4213
      %v4257 = vadd.f32 %v4045, %v4215
      %v4258 = vadd.f32 %v4046, %v4218
      %v4259 = vadd.f32 %v4047, %v4220
      %v4260 = vadd.f32 %v4048, %v4223
      %v4261 = vadd.f32 %v4049, %v4225
      %v4262 = vadd.f32 %v4050, %v4228
      %v4263 = vadd.f32 %v4051, %v4230
      %v4264 = vadd.f32 %v4052, %v4233
      %v4265 = vadd.f32 %v4053, %v4235
      %v4266 = vadd.f32 %v4054, %v4238
      %v4267 = vadd.f32 %v4055, %v4240
      %v4268 = vadd.f32 %v4056, %v4243
      %v4269 = vadd.f32 %v4057, %v4245
      %v4270 = vadd.f32 %v4058, %v4248
      %v4271 = vadd.f32 %v4059, %v4250
      %v4272 = vld [vmem:[%s9] sm:$0x1]
      %v4274 = vperm.slane %v4272, 0
      %v4276 = vmul.f32 %v4252, %v4274
      %v4277 = vmul.f32 %v4253, %v4274
      %v4278 = vmul.f32 %v4254, %v4274
      %v4279 = vmul.f32 %v4255, %v4274
      %v4280 = vmul.f32 %v4256, %v4274
      %v4281 = vmul.f32 %v4257, %v4274
      %v4282 = vmul.f32 %v4258, %v4274
      %v4283 = vmul.f32 %v4259, %v4274
      %v4284 = vmul.f32 %v4260, %v4274
      %v4285 = vmul.f32 %v4261, %v4274
      %v4286 = vmul.f32 %v4262, %v4274
      %v4287 = vmul.f32 %v4263, %v4274
      %v4288 = vmul.f32 %v4264, %v4274
      %v4289 = vmul.f32 %v4265, %v4274
      %v4290 = vmul.f32 %v4266, %v4274
      %v4291 = vmul.f32 %v4267, %v4274
      %v4292 = vmul.f32 %v4268, %v4274
      %v4293 = vmul.f32 %v4269, %v4274
      %v4294 = vmul.f32 %v4270, %v4274
      %v4295 = vmul.f32 %v4271, %v4274
      %v4296 = vld [vmem:[%s10] sm:$0x1]
      %v4298 = vperm.slane %v4296, 0
      %v4300 = vadd.f32 %v4276, %v4298
      %v4301 = vadd.f32 %v4277, %v4298
      %v4302 = vadd.f32 %v4278, %v4298
      %v4303 = vadd.f32 %v4279, %v4298
      %v4304 = vadd.f32 %v4280, %v4298
      %v4305 = vadd.f32 %v4281, %v4298
      %v4306 = vadd.f32 %v4282, %v4298
      %v4307 = vadd.f32 %v4283, %v4298
      %v4308 = vadd.f32 %v4284, %v4298
      %v4309 = vadd.f32 %v4285, %v4298
      %v4310 = vadd.f32 %v4286, %v4298
      %v4311 = vadd.f32 %v4287, %v4298
      %v4312 = vadd.f32 %v4288, %v4298
      %v4313 = vadd.f32 %v4289, %v4298
      %v4314 = vadd.f32 %v4290, %v4298
      %v4315 = vadd.f32 %v4291, %v4298
      %v4316 = vadd.f32 %v4292, %v4298
      %v4317 = vadd.f32 %v4293, %v4298
      %v4318 = vadd.f32 %v4294, %v4298
      %v4319 = vadd.f32 %v4295, %v4298
      %v4320 = vmax.f32 %v4300, 0.0
      %v4321 = vmax.f32 %v4301, 0.0
      %v4322 = vmax.f32 %v4302, 0.0
      %v4323 = vmax.f32 %v4303, 0.0
      %v4324 = vmax.f32 %v4304, 0.0
      %v4325 = vmax.f32 %v4305, 0.0
      %v4326 = vmax.f32 %v4306, 0.0
      %v4327 = vmax.f32 %v4307, 0.0
      %v4328 = vmax.f32 %v4308, 0.0
      %v4329 = vmax.f32 %v4309, 0.0
      %v4330 = vmax.f32 %v4310, 0.0
      %v4331 = vmax.f32 %v4311, 0.0
      %v4332 = vmax.f32 %v4312, 0.0
      %v4333 = vmax.f32 %v4313, 0.0
      %v4334 = vmax.f32 %v4314, 0.0
      %v4335 = vmax.f32 %v4315, 0.0
      %v4336 = vmax.f32 %v4316, 0.0
      %v4337 = vmax.f32 %v4317, 0.0
      %v4338 = vmax.f32 %v4318, 0.0
      %v4339 = vmax.f32 %v4319, 0.0
      %v4340 = vpack.c.bf16 %v4320, %v4320
      %v4341 = vpack.c.bf16 %v4321, %v4321
      %v4342 = vpack.c.bf16 %v4322, %v4322
      %v4343 = vpack.c.bf16 %v4323, %v4323
      %v4344 = vpack.c.bf16 %v4324, %v4324
      %v4345 = vpack.c.bf16 %v4325, %v4325
      %v4346 = vpack.c.bf16 %v4326, %v4326
      %v4347 = vpack.c.bf16 %v4327, %v4327
      %v4348 = vpack.c.bf16 %v4328, %v4328
      %v4349 = vpack.c.bf16 %v4329, %v4329
      %v4350 = vpack.c.bf16 %v4330, %v4330
      %v4351 = vpack.c.bf16 %v4331, %v4331
      %v4352 = vpack.c.bf16 %v4332, %v4332
      %v4353 = vpack.c.bf16 %v4333, %v4333
      %v4354 = vpack.c.bf16 %v4334, %v4334
      %v4355 = vpack.c.bf16 %v4335, %v4335
      %v4356 = vpack.c.bf16 %v4336, %v4336
      %v4357 = vpack.c.bf16 %v4337, %v4337
      %v4358 = vpack.c.bf16 %v4338, %v4338
      %v4359 = vpack.c.bf16 %v4339, %v4339
      %v4360 = vld [vmem:[%s11] sm:$0xff]
      %v4361 = vld [vmem:[%s11 + $0x8] sm:$0xff]
      %v4362 = vld [vmem:[%s11 + $0x10] sm:$0xff]
      %v4363 = vld [vmem:[%s11 + $0x18] sm:$0xff]
      %v4364 = vld [vmem:[%s11 + $0x20] sm:$0xff]
      %v4365 = vld [vmem:[%s11 + $0x28] sm:$0xff]
      %v4366 = vld [vmem:[%s11 + $0x30] sm:$0xff]
      %v4367 = vld [vmem:[%s11 + $0x38] sm:$0xff]
      %v4368 = vld [vmem:[%s12] sm:$0xff]
      %v4369 = vld [vmem:[%s12 + $0x8] sm:$0xff]
      %v4370 = vld [vmem:[%s12 + $0x10] sm:$0xff]
      %v4371 = vld [vmem:[%s12 + $0x18] sm:$0xff]
      %v4372 = vld [vmem:[%s12 + $0x20] sm:$0xff]
      %v4373 = vld [vmem:[%s12 + $0x28] sm:$0xff]
      %v4374 = vld [vmem:[%s12 + $0x30] sm:$0xff]
      %v4375 = vld [vmem:[%s12 + $0x38] sm:$0xff]
      %v4392 = vunpack.c.l.b16 %v4340
      %v4393 = vunpack.c.l.b16 %v4341
      %v4394 = vunpack.c.l.b16 %v4342
      %v4395 = vunpack.c.l.b16 %v4343
      %v4396 = vunpack.c.l.b16 %v4344
      %v4397 = vunpack.c.l.b16 %v4345
      %v4398 = vunpack.c.l.b16 %v4346
      %v4399 = vunpack.c.l.b16 %v4347
      %v4400 = vunpack.c.l.b16 %v4348
      %v4401 = vunpack.c.l.b16 %v4349
      %v4402 = vunpack.c.l.b16 %v4350
      %v4403 = vunpack.c.l.b16 %v4351
      %v4404 = vunpack.c.l.b16 %v4352
      %v4405 = vunpack.c.l.b16 %v4353
      %v4406 = vunpack.c.l.b16 %v4354
      %v4407 = vunpack.c.l.b16 %v4355
      %v4408 = vpack.c.b16 %v4393, %v4392
      %v4409 = vpack.c.b16 %v4395, %v4394
      %v4410 = vpack.c.b16 %v4397, %v4396
      %v4411 = vpack.c.b16 %v4399, %v4398
      %v4412 = vpack.c.b16 %v4401, %v4400
      %v4413 = vpack.c.b16 %v4403, %v4402
      %v4414 = vpack.c.b16 %v4405, %v4404
      %v4415 = vpack.c.b16 %v4407, %v4406
      %v4424 = vunpack.c.l.b16 %v4368
      %v4425 = vunpack.c.h.b16 %v4368
      %v4426 = vunpack.c.l.b16 %v4369
      %v4427 = vunpack.c.h.b16 %v4369
      %v4428 = vunpack.c.l.b16 %v4370
      %v4429 = vunpack.c.h.b16 %v4370
      %v4430 = vunpack.c.l.b16 %v4371
      %v4431 = vunpack.c.h.b16 %v4371
      %v4432 = vunpack.c.l.b16 %v4372
      %v4433 = vunpack.c.h.b16 %v4372
      %v4434 = vunpack.c.l.b16 %v4373
      %v4435 = vunpack.c.h.b16 %v4373
      %v4436 = vunpack.c.l.b16 %v4374
      %v4437 = vunpack.c.h.b16 %v4374
      %v4438 = vunpack.c.l.b16 %v4375
      %v4439 = vunpack.c.h.b16 %v4375
      %v4440 = vpack.c.b16 %v4426, %v4424
      %v4441 = vpack.c.b16 %v4427, %v4425
      %v4442 = vpack.c.b16 %v4430, %v4428
      %v4443 = vpack.c.b16 %v4431, %v4429
      %v4444 = vpack.c.b16 %v4434, %v4432
      %v4445 = vpack.c.b16 %v4435, %v4433
      %v4446 = vpack.c.b16 %v4438, %v4436
      %v4447 = vpack.c.b16 %v4439, %v4437
      %v4457 = vsel %vm1407, %v4408, 0
      %v4460 = vsel %vm1407, %v4409, 0
      %v4463 = vsel %vm1407, %v4410, 0
      %v4466 = vsel %vm1407, %v4411, 0
      %v4469 = vsel %vm1407, %v4412, 0
      %v4472 = vsel %vm1407, %v4413, 0
      %v4475 = vsel %vm1407, %v4414, 0
      %v4478 = vsel %vm1407, %v4415, 0
      %4480 = vmatpush.bf16.msra.mxu0 0
      %4481 = vmatpush.bf16.msra.mxu0 0
      %4482 = vmatpush.bf16.msra.mxu0 0
      %4483 = vmatpush.bf16.msra.mxu0 0
      %4484 = vmatpush.bf16.msra.mxu0 %v4446
      %4485 = vmatpush.bf16.msra.mxu0 %v4444
      %4486 = vmatpush.bf16.msra.mxu0 %v4442
      %4487 = vmatpush.bf16.msra.mxu0 %v4440
      %4488 = vmatmul.bf16.gmra.mxu0 %v4457
      %v4489 = vpop.f32.mrf.mxu0
      %v4490 = vadd.f32 0.0, %v4489
      %v4491 = vpop.f32.mrf.mxu0
      %v4492 = vadd.f32 0.0, %v4491
      %4493 = vmatmul.bf16.gmra.mxu0 %v4460
      %v4494 = vpop.f32.mrf.mxu0
      %v4495 = vadd.f32 0.0, %v4494
      %v4496 = vpop.f32.mrf.mxu0
      %v4497 = vadd.f32 0.0, %v4496
      %4498 = vmatmul.bf16.gmra.mxu0 %v4463
      %v4499 = vpop.f32.mrf.mxu0
      %v4500 = vadd.f32 0.0, %v4499
      %v4501 = vpop.f32.mrf.mxu0
      %v4502 = vadd.f32 0.0, %v4501
      %4503 = vmatmul.bf16.gmra.mxu0 %v4466
      %v4504 = vpop.f32.mrf.mxu0
      %v4505 = vadd.f32 0.0, %v4504
      %v4506 = vpop.f32.mrf.mxu0
      %v4507 = vadd.f32 0.0, %v4506
      %4508 = vmatmul.bf16.gmra.mxu0 %v4469
      %v4509 = vpop.f32.mrf.mxu0
      %v4510 = vadd.f32 0.0, %v4509
      %v4511 = vpop.f32.mrf.mxu0
      %v4512 = vadd.f32 0.0, %v4511
      %4513 = vmatmul.bf16.gmra.mxu0 %v4472
      %v4514 = vpop.f32.mrf.mxu0
      %v4515 = vadd.f32 0.0, %v4514
      %v4516 = vpop.f32.mrf.mxu0
      %v4517 = vadd.f32 0.0, %v4516
      %4518 = vmatmul.bf16.gmra.mxu0 %v4475
      %v4519 = vpop.f32.mrf.mxu0
      %v4520 = vadd.f32 0.0, %v4519
      %v4521 = vpop.f32.mrf.mxu0
      %v4522 = vadd.f32 0.0, %v4521
      %4523 = vmatmul.bf16.gmra.mxu0 %v4478
      %v4524 = vpop.f32.mrf.mxu0
      %v4525 = vadd.f32 0.0, %v4524
      %v4526 = vpop.f32.mrf.mxu0
      %v4527 = vadd.f32 0.0, %v4526
      %4528 = vdwg.mxu0
      %4529 = vmatpush.bf16.msra.mxu0 0
      %4530 = vmatpush.bf16.msra.mxu0 0
      %4531 = vmatpush.bf16.msra.mxu0 0
      %4532 = vmatpush.bf16.msra.mxu0 0
      %4533 = vmatpush.bf16.msra.mxu0 %v4447
      %4534 = vmatpush.bf16.msra.mxu0 %v4445
      %4535 = vmatpush.bf16.msra.mxu0 %v4443
      %4536 = vmatpush.bf16.msra.mxu0 %v4441
      %4537 = vmatmul.bf16.gmra.mxu0 %v4457
      %v4538 = vpop.f32.mrf.mxu0
      %v4539 = vadd.f32 0.0, %v4538
      %v4540 = vpop.f32.mrf.mxu0
      %v4541 = vadd.f32 0.0, %v4540
      %4542 = vmatmul.bf16.gmra.mxu0 %v4460
      %v4543 = vpop.f32.mrf.mxu0
      %v4544 = vadd.f32 0.0, %v4543
      %v4545 = vpop.f32.mrf.mxu0
      %v4546 = vadd.f32 0.0, %v4545
      %4547 = vmatmul.bf16.gmra.mxu0 %v4463
      %v4548 = vpop.f32.mrf.mxu0
      %v4549 = vadd.f32 0.0, %v4548
      %v4550 = vpop.f32.mrf.mxu0
      %v4551 = vadd.f32 0.0, %v4550
      %4552 = vmatmul.bf16.gmra.mxu0 %v4466
      %v4553 = vpop.f32.mrf.mxu0
      %v4554 = vadd.f32 0.0, %v4553
      %v4555 = vpop.f32.mrf.mxu0
      %v4556 = vadd.f32 0.0, %v4555
      %4557 = vmatmul.bf16.gmra.mxu0 %v4469
      %v4558 = vpop.f32.mrf.mxu0
      %v4559 = vadd.f32 0.0, %v4558
      %v4560 = vpop.f32.mrf.mxu0
      %v4561 = vadd.f32 0.0, %v4560
      %4562 = vmatmul.bf16.gmra.mxu0 %v4472
      %v4563 = vpop.f32.mrf.mxu0
      %v4564 = vadd.f32 0.0, %v4563
      %v4565 = vpop.f32.mrf.mxu0
      %v4566 = vadd.f32 0.0, %v4565
      %4567 = vmatmul.bf16.gmra.mxu0 %v4475
      %v4568 = vpop.f32.mrf.mxu0
      %v4569 = vadd.f32 0.0, %v4568
      %v4570 = vpop.f32.mrf.mxu0
      %v4571 = vadd.f32 0.0, %v4570
      %4572 = vmatmul.bf16.gmra.mxu0 %v4478
      %v4573 = vpop.f32.mrf.mxu0
      %v4574 = vadd.f32 0.0, %v4573
      %v4575 = vpop.f32.mrf.mxu0
      %v4576 = vadd.f32 0.0, %v4575
      %4577 = vdwg.mxu0
      %v4594 = vunpack.c.l.b16 %v916
      %v4595 = vunpack.c.l.b16 %v917
      %v4596 = vunpack.c.l.b16 %v918
      %v4597 = vunpack.c.l.b16 %v919
      %v4598 = vunpack.c.l.b16 %v920
      %v4599 = vunpack.c.l.b16 %v921
      %v4600 = vunpack.c.l.b16 %v922
      %v4601 = vunpack.c.l.b16 %v923
      %v4602 = vunpack.c.l.b16 %v924
      %v4603 = vunpack.c.l.b16 %v925
      %v4604 = vunpack.c.l.b16 %v926
      %v4605 = vunpack.c.l.b16 %v927
      %v4606 = vunpack.c.l.b16 %v928
      %v4607 = vunpack.c.l.b16 %v929
      %v4608 = vunpack.c.l.b16 %v930
      %v4609 = vunpack.c.l.b16 %v931
      %v4610 = vpack.c.b16 %v4595, %v4594
      %v4611 = vpack.c.b16 %v4597, %v4596
      %v4612 = vpack.c.b16 %v4599, %v4598
      %v4613 = vpack.c.b16 %v4601, %v4600
      %v4614 = vpack.c.b16 %v4603, %v4602
      %v4615 = vpack.c.b16 %v4605, %v4604
      %v4616 = vpack.c.b16 %v4607, %v4606
      %v4617 = vpack.c.b16 %v4609, %v4608
      %v4626 = vunpack.c.l.b16 %v4360
      %v4627 = vunpack.c.h.b16 %v4360
      %v4628 = vunpack.c.l.b16 %v4361
      %v4629 = vunpack.c.h.b16 %v4361
      %v4630 = vunpack.c.l.b16 %v4362
      %v4631 = vunpack.c.h.b16 %v4362
      %v4632 = vunpack.c.l.b16 %v4363
      %v4633 = vunpack.c.h.b16 %v4363
      %v4634 = vunpack.c.l.b16 %v4364
      %v4635 = vunpack.c.h.b16 %v4364
      %v4636 = vunpack.c.l.b16 %v4365
      %v4637 = vunpack.c.h.b16 %v4365
      %v4638 = vunpack.c.l.b16 %v4366
      %v4639 = vunpack.c.h.b16 %v4366
      %v4640 = vunpack.c.l.b16 %v4367
      %v4641 = vunpack.c.h.b16 %v4367
      %v4642 = vpack.c.b16 %v4628, %v4626
      %v4643 = vpack.c.b16 %v4629, %v4627
      %v4644 = vpack.c.b16 %v4632, %v4630
      %v4645 = vpack.c.b16 %v4633, %v4631
      %v4646 = vpack.c.b16 %v4636, %v4634
      %v4647 = vpack.c.b16 %v4637, %v4635
      %v4648 = vpack.c.b16 %v4640, %v4638
      %v4649 = vpack.c.b16 %v4641, %v4639
      %v4659 = vsel %vm1407, %v4610, 0
      %v4662 = vsel %vm1407, %v4611, 0
      %v4665 = vsel %vm1407, %v4612, 0
      %v4668 = vsel %vm1407, %v4613, 0
      %v4671 = vsel %vm1407, %v4614, 0
      %v4674 = vsel %vm1407, %v4615, 0
      %v4677 = vsel %vm1407, %v4616, 0
      %v4680 = vsel %vm1407, %v4617, 0
      %4682 = vmatpush.bf16.msra.mxu0 0
      %4683 = vmatpush.bf16.msra.mxu0 0
      %4684 = vmatpush.bf16.msra.mxu0 0
      %4685 = vmatpush.bf16.msra.mxu0 0
      %4686 = vmatpush.bf16.msra.mxu0 %v4648
      %4687 = vmatpush.bf16.msra.mxu0 %v4646
      %4688 = vmatpush.bf16.msra.mxu0 %v4644
      %4689 = vmatpush.bf16.msra.mxu0 %v4642
      %4690 = vmatmul.bf16.gmra.mxu0 %v4659
      %v4691 = vpop.f32.mrf.mxu0
      %v4692 = vadd.f32 %v4490, %v4691
      %v4693 = vpop.f32.mrf.mxu0
      %v4694 = vadd.f32 %v4492, %v4693
      %4695 = vmatmul.bf16.gmra.mxu0 %v4662
      %v4696 = vpop.f32.mrf.mxu0
      %v4697 = vadd.f32 %v4495, %v4696
      %v4698 = vpop.f32.mrf.mxu0
      %v4699 = vadd.f32 %v4497, %v4698
      %4700 = vmatmul.bf16.gmra.mxu0 %v4665
      %v4701 = vpop.f32.mrf.mxu0
      %v4702 = vadd.f32 %v4500, %v4701
      %v4703 = vpop.f32.mrf.mxu0
      %v4704 = vadd.f32 %v4502, %v4703
      %4705 = vmatmul.bf16.gmra.mxu0 %v4668
      %v4706 = vpop.f32.mrf.mxu0
      %v4707 = vadd.f32 %v4505, %v4706
      %v4708 = vpop.f32.mrf.mxu0
      %v4709 = vadd.f32 %v4507, %v4708
      %4710 = vmatmul.bf16.gmra.mxu0 %v4671
      %v4711 = vpop.f32.mrf.mxu0
      %v4712 = vadd.f32 %v4510, %v4711
      %v4713 = vpop.f32.mrf.mxu0
      %v4714 = vadd.f32 %v4512, %v4713
      %4715 = vmatmul.bf16.gmra.mxu0 %v4674
      %v4716 = vpop.f32.mrf.mxu0
      %v4717 = vadd.f32 %v4515, %v4716
      %v4718 = vpop.f32.mrf.mxu0
      %v4719 = vadd.f32 %v4517, %v4718
      %4720 = vmatmul.bf16.gmra.mxu0 %v4677
      %v4721 = vpop.f32.mrf.mxu0
      %v4722 = vadd.f32 %v4520, %v4721
      %v4723 = vpop.f32.mrf.mxu0
      %v4724 = vadd.f32 %v4522, %v4723
      %4725 = vmatmul.bf16.gmra.mxu0 %v4680
      %v4726 = vpop.f32.mrf.mxu0
      %v4727 = vadd.f32 %v4525, %v4726
      %v4728 = vpop.f32.mrf.mxu0
      %v4729 = vadd.f32 %v4527, %v4728
      %4730 = vdwg.mxu0
      %4731 = vmatpush.bf16.msra.mxu0 0
      %4732 = vmatpush.bf16.msra.mxu0 0
      %4733 = vmatpush.bf16.msra.mxu0 0
      %4734 = vmatpush.bf16.msra.mxu0 0
      %4735 = vmatpush.bf16.msra.mxu0 %v4649
      %4736 = vmatpush.bf16.msra.mxu0 %v4647
      %4737 = vmatpush.bf16.msra.mxu0 %v4645
      %4738 = vmatpush.bf16.msra.mxu0 %v4643
      %4739 = vmatmul.bf16.gmra.mxu0 %v4659
      %v4740 = vpop.f32.mrf.mxu0
      %v4741 = vadd.f32 %v4539, %v4740
      %v4742 = vpop.f32.mrf.mxu0
      %v4743 = vadd.f32 %v4541, %v4742
      %4744 = vmatmul.bf16.gmra.mxu0 %v4662
      %v4745 = vpop.f32.mrf.mxu0
      %v4746 = vadd.f32 %v4544, %v4745
      %v4747 = vpop.f32.mrf.mxu0
      %v4748 = vadd.f32 %v4546, %v4747
      %4749 = vmatmul.bf16.gmra.mxu0 %v4665
      %v4750 = vpop.f32.mrf.mxu0
      %v4751 = vadd.f32 %v4549, %v4750
      %v4752 = vpop.f32.mrf.mxu0
      %v4753 = vadd.f32 %v4551, %v4752
      %4754 = vmatmul.bf16.gmra.mxu0 %v4668
      %v4755 = vpop.f32.mrf.mxu0
      %v4756 = vadd.f32 %v4554, %v4755
      %v4757 = vpop.f32.mrf.mxu0
      %v4758 = vadd.f32 %v4556, %v4757
      %4759 = vmatmul.bf16.gmra.mxu0 %v4671
      %v4760 = vpop.f32.mrf.mxu0
      %v4761 = vadd.f32 %v4559, %v4760
      %v4762 = vpop.f32.mrf.mxu0
      %v4763 = vadd.f32 %v4561, %v4762
      %4764 = vmatmul.bf16.gmra.mxu0 %v4674
      %v4765 = vpop.f32.mrf.mxu0
      %v4766 = vadd.f32 %v4564, %v4765
      %v4767 = vpop.f32.mrf.mxu0
      %v4768 = vadd.f32 %v4566, %v4767
      %4769 = vmatmul.bf16.gmra.mxu0 %v4677
      %v4770 = vpop.f32.mrf.mxu0
      %v4771 = vadd.f32 %v4569, %v4770
      %v4772 = vpop.f32.mrf.mxu0
      %v4773 = vadd.f32 %v4571, %v4772
      %4774 = vmatmul.bf16.gmra.mxu0 %v4680
      %v4775 = vpop.f32.mrf.mxu0
      %v4776 = vadd.f32 %v4574, %v4775
      %v4777 = vpop.f32.mrf.mxu0
      %v4778 = vadd.f32 %v4576, %v4777
      %4779 = vdwg.mxu0
      %s4780 = scalar_lea.vmem %s11, 64
      %v4781 = vld [vmem:[%s4780] sm:$0xff]
      %v4782 = vld [vmem:[%s4780 + $0x8] sm:$0xff]
      %v4783 = vld [vmem:[%s4780 + $0x10] sm:$0xff]
      %v4784 = vld [vmem:[%s4780 + $0x18] sm:$0xff]
      %v4785 = vld [vmem:[%s4780 + $0x20] sm:$0xff]
      %v4786 = vld [vmem:[%s4780 + $0x28] sm:$0xff]
      %v4787 = vld [vmem:[%s4780 + $0x30] sm:$0xff]
      %v4788 = vld [vmem:[%s4780 + $0x38] sm:$0xff]
      %v4789 = vshrl.u32 %v4610, 16
      %v4791 = vshll.u32 %v4610, 16
      %v4793 = vrot.slane %v4791, 1
      %v4794 = vor.u32 %v4789, %v4793
      %v4795 = vshll.u32 %v4611, 16
      %v4797 = vrot.slane %v4795, 1
      %v4798 = vsel %vm1283, %v4794, %v4797
      %v4799 = vshrl.u32 %v4611, 16
      %v4801 = vor.u32 %v4799, %v4797
      %v4802 = vshll.u32 %v4612, 16
      %v4804 = vrot.slane %v4802, 1
      %v4805 = vsel %vm1283, %v4801, %v4804
      %v4806 = vshrl.u32 %v4612, 16
      %v4808 = vor.u32 %v4806, %v4804
      %v4809 = vshll.u32 %v4613, 16
      %v4811 = vrot.slane %v4809, 1
      %v4812 = vsel %vm1283, %v4808, %v4811
      %v4813 = vshrl.u32 %v4613, 16
      %v4815 = vor.u32 %v4813, %v4811
      %v4816 = vshll.u32 %v4614, 16
      %v4818 = vrot.slane %v4816, 1
      %v4819 = vsel %vm1283, %v4815, %v4818
      %v4820 = vshrl.u32 %v4614, 16
      %v4822 = vor.u32 %v4820, %v4818
      %v4823 = vshll.u32 %v4615, 16
      %v4825 = vrot.slane %v4823, 1
      %v4826 = vsel %vm1283, %v4822, %v4825
      %v4827 = vshrl.u32 %v4615, 16
      %v4829 = vor.u32 %v4827, %v4825
      %v4830 = vshll.u32 %v4616, 16
      %v4832 = vrot.slane %v4830, 1
      %v4833 = vsel %vm1283, %v4829, %v4832
      %v4834 = vshrl.u32 %v4616, 16
      %v4836 = vor.u32 %v4834, %v4832
      %v4837 = vshll.u32 %v4617, 16
      %v4839 = vrot.slane %v4837, 1
      %v4840 = vsel %vm1283, %v4836, %v4839
      %v4841 = vshrl.u32 %v4617, 16
      %v4843 = vor.u32 %v4841, %v4839
      %v4852 = vunpack.c.l.b16 %v4781
      %v4853 = vunpack.c.h.b16 %v4781
      %v4854 = vunpack.c.l.b16 %v4782
      %v4855 = vunpack.c.h.b16 %v4782
      %v4856 = vunpack.c.l.b16 %v4783
      %v4857 = vunpack.c.h.b16 %v4783
      %v4858 = vunpack.c.l.b16 %v4784
      %v4859 = vunpack.c.h.b16 %v4784
      %v4860 = vunpack.c.l.b16 %v4785
      %v4861 = vunpack.c.h.b16 %v4785
      %v4862 = vunpack.c.l.b16 %v4786
      %v4863 = vunpack.c.h.b16 %v4786
      %v4864 = vunpack.c.l.b16 %v4787
      %v4865 = vunpack.c.h.b16 %v4787
      %v4866 = vunpack.c.l.b16 %v4788
      %v4867 = vunpack.c.h.b16 %v4788
      %v4868 = vpack.c.b16 %v4854, %v4852
      %v4869 = vpack.c.b16 %v4855, %v4853
      %v4870 = vpack.c.b16 %v4858, %v4856
      %v4871 = vpack.c.b16 %v4859, %v4857
      %v4872 = vpack.c.b16 %v4862, %v4860
      %v4873 = vpack.c.b16 %v4863, %v4861
      %v4874 = vpack.c.b16 %v4866, %v4864
      %v4875 = vpack.c.b16 %v4867, %v4865
      %v4885 = vsel %vm1407, %v4798, 0
      %v4888 = vsel %vm1407, %v4805, 0
      %v4891 = vsel %vm1407, %v4812, 0
      %v4894 = vsel %vm1407, %v4819, 0
      %v4897 = vsel %vm1407, %v4826, 0
      %v4900 = vsel %vm1407, %v4833, 0
      %v4903 = vsel %vm1407, %v4840, 0
      %v4906 = vsel %vm1407, %v4843, 0
      %4908 = vmatpush.bf16.msra.mxu0 0
      %4909 = vmatpush.bf16.msra.mxu0 0
      %4910 = vmatpush.bf16.msra.mxu0 0
      %4911 = vmatpush.bf16.msra.mxu0 0
      %4912 = vmatpush.bf16.msra.mxu0 %v4874
      %4913 = vmatpush.bf16.msra.mxu0 %v4872
      %4914 = vmatpush.bf16.msra.mxu0 %v4870
      %4915 = vmatpush.bf16.msra.mxu0 %v4868
      %4916 = vmatmul.bf16.gmra.mxu0 %v4885
      %v4917 = vpop.f32.mrf.mxu0
      %v4918 = vadd.f32 0.0, %v4917
      %v4919 = vpop.f32.mrf.mxu0
      %v4920 = vadd.f32 0.0, %v4919
      %4921 = vmatmul.bf16.gmra.mxu0 %v4888
      %v4922 = vpop.f32.mrf.mxu0
      %v4923 = vadd.f32 0.0, %v4922
      %v4924 = vpop.f32.mrf.mxu0
      %v4925 = vadd.f32 0.0, %v4924
      %4926 = vmatmul.bf16.gmra.mxu0 %v4891
      %v4927 = vpop.f32.mrf.mxu0
      %v4928 = vadd.f32 0.0, %v4927
      %v4929 = vpop.f32.mrf.mxu0
      %v4930 = vadd.f32 0.0, %v4929
      %4931 = vmatmul.bf16.gmra.mxu0 %v4894
      %v4932 = vpop.f32.mrf.mxu0
      %v4933 = vadd.f32 0.0, %v4932
      %v4934 = vpop.f32.mrf.mxu0
      %v4935 = vadd.f32 0.0, %v4934
      %4936 = vmatmul.bf16.gmra.mxu0 %v4897
      %v4937 = vpop.f32.mrf.mxu0
      %v4938 = vadd.f32 0.0, %v4937
      %v4939 = vpop.f32.mrf.mxu0
      %v4940 = vadd.f32 0.0, %v4939
      %4941 = vmatmul.bf16.gmra.mxu0 %v4900
      %v4942 = vpop.f32.mrf.mxu0
      %v4943 = vadd.f32 0.0, %v4942
      %v4944 = vpop.f32.mrf.mxu0
      %v4945 = vadd.f32 0.0, %v4944
      %4946 = vmatmul.bf16.gmra.mxu0 %v4903
      %v4947 = vpop.f32.mrf.mxu0
      %v4948 = vadd.f32 0.0, %v4947
      %v4949 = vpop.f32.mrf.mxu0
      %v4950 = vadd.f32 0.0, %v4949
      %4951 = vmatmul.bf16.gmra.mxu0 %v4906
      %v4952 = vpop.f32.mrf.mxu0
      %v4953 = vadd.f32 0.0, %v4952
      %v4954 = vpop.f32.mrf.mxu0
      %v4955 = vadd.f32 0.0, %v4954
      %4956 = vdwg.mxu0
      %4957 = vmatpush.bf16.msra.mxu0 0
      %4958 = vmatpush.bf16.msra.mxu0 0
      %4959 = vmatpush.bf16.msra.mxu0 0
      %4960 = vmatpush.bf16.msra.mxu0 0
      %4961 = vmatpush.bf16.msra.mxu0 %v4875
      %4962 = vmatpush.bf16.msra.mxu0 %v4873
      %4963 = vmatpush.bf16.msra.mxu0 %v4871
      %4964 = vmatpush.bf16.msra.mxu0 %v4869
      %4965 = vmatmul.bf16.gmra.mxu0 %v4885
      %v4966 = vpop.f32.mrf.mxu0
      %v4967 = vadd.f32 0.0, %v4966
      %v4968 = vpop.f32.mrf.mxu0
      %v4969 = vadd.f32 0.0, %v4968
      %4970 = vmatmul.bf16.gmra.mxu0 %v4888
      %v4971 = vpop.f32.mrf.mxu0
      %v4972 = vadd.f32 0.0, %v4971
      %v4973 = vpop.f32.mrf.mxu0
      %v4974 = vadd.f32 0.0, %v4973
      %4975 = vmatmul.bf16.gmra.mxu0 %v4891
      %v4976 = vpop.f32.mrf.mxu0
      %v4977 = vadd.f32 0.0, %v4976
      %v4978 = vpop.f32.mrf.mxu0
      %v4979 = vadd.f32 0.0, %v4978
      %4980 = vmatmul.bf16.gmra.mxu0 %v4894
      %v4981 = vpop.f32.mrf.mxu0
      %v4982 = vadd.f32 0.0, %v4981
      %v4983 = vpop.f32.mrf.mxu0
      %v4984 = vadd.f32 0.0, %v4983
      %4985 = vmatmul.bf16.gmra.mxu0 %v4897
      %v4986 = vpop.f32.mrf.mxu0
      %v4987 = vadd.f32 0.0, %v4986
      %v4988 = vpop.f32.mrf.mxu0
      %v4989 = vadd.f32 0.0, %v4988
      %4990 = vmatmul.bf16.gmra.mxu0 %v4900
      %v4991 = vpop.f32.mrf.mxu0
      %v4992 = vadd.f32 0.0, %v4991
      %v4993 = vpop.f32.mrf.mxu0
      %v4994 = vadd.f32 0.0, %v4993
      %4995 = vmatmul.bf16.gmra.mxu0 %v4903
      %v4996 = vpop.f32.mrf.mxu0
      %v4997 = vadd.f32 0.0, %v4996
      %v4998 = vpop.f32.mrf.mxu0
      %v4999 = vadd.f32 0.0, %v4998
      %5000 = vmatmul.bf16.gmra.mxu0 %v4906
      %v5001 = vpop.f32.mrf.mxu0
      %v5002 = vadd.f32 0.0, %v5001
      %v5003 = vpop.f32.mrf.mxu0
      %v5004 = vadd.f32 0.0, %v5003
      %5005 = vdwg.mxu0
      %v5006 = vadd.f32 %v4692, %v4918
      %v5007 = vadd.f32 %v4741, %v4967
      %v5008 = vadd.f32 %v4694, %v4920
      %v5009 = vadd.f32 %v4743, %v4969
      %v5010 = vadd.f32 %v4697, %v4923
      %v5011 = vadd.f32 %v4746, %v4972
      %v5012 = vadd.f32 %v4699, %v4925
      %v5013 = vadd.f32 %v4748, %v4974
      %v5014 = vadd.f32 %v4702, %v4928
      %v5015 = vadd.f32 %v4751, %v4977
      %v5016 = vadd.f32 %v4704, %v4930
      %v5017 = vadd.f32 %v4753, %v4979
      %v5018 = vadd.f32 %v4707, %v4933
      %v5019 = vadd.f32 %v4756, %v4982
      %v5020 = vadd.f32 %v4709, %v4935
      %v5021 = vadd.f32 %v4758, %v4984
      %v5022 = vadd.f32 %v4712, %v4938
      %v5023 = vadd.f32 %v4761, %v4987
      %v5024 = vadd.f32 %v4714, %v4940
      %v5025 = vadd.f32 %v4763, %v4989
      %v5026 = vadd.f32 %v4717, %v4943
      %v5027 = vadd.f32 %v4766, %v4992
      %v5028 = vadd.f32 %v4719, %v4945
      %v5029 = vadd.f32 %v4768, %v4994
      %v5030 = vadd.f32 %v4722, %v4948
      %v5031 = vadd.f32 %v4771, %v4997
      %v5032 = vadd.f32 %v4724, %v4950
      %v5033 = vadd.f32 %v4773, %v4999
      %v5034 = vadd.f32 %v4727, %v4953
      %v5035 = vadd.f32 %v4776, %v5002
      %v5036 = vadd.f32 %v4729, %v4955
      %v5037 = vadd.f32 %v4778, %v5004
      %s5038 = scalar_lea.vmem %s12, 64
      %v5039 = vld [vmem:[%s5038] sm:$0xff]
      %v5040 = vld [vmem:[%s5038 + $0x8] sm:$0xff]
      %v5041 = vld [vmem:[%s5038 + $0x10] sm:$0xff]
      %v5042 = vld [vmem:[%s5038 + $0x18] sm:$0xff]
      %v5043 = vld [vmem:[%s5038 + $0x20] sm:$0xff]
      %v5044 = vld [vmem:[%s5038 + $0x28] sm:$0xff]
      %v5045 = vld [vmem:[%s5038 + $0x30] sm:$0xff]
      %v5046 = vld [vmem:[%s5038 + $0x38] sm:$0xff]
      %v5047 = vshrl.u32 %v4408, 16
      %v5049 = vshll.u32 %v4408, 16
      %v5051 = vrot.slane %v5049, 1
      %v5052 = vor.u32 %v5047, %v5051
      %v5053 = vshll.u32 %v4409, 16
      %v5055 = vrot.slane %v5053, 1
      %v5056 = vsel %vm1283, %v5052, %v5055
      %v5057 = vshrl.u32 %v4409, 16
      %v5059 = vor.u32 %v5057, %v5055
      %v5060 = vshll.u32 %v4410, 16
      %v5062 = vrot.slane %v5060, 1
      %v5063 = vsel %vm1283, %v5059, %v5062
      %v5064 = vshrl.u32 %v4410, 16
      %v5066 = vor.u32 %v5064, %v5062
      %v5067 = vshll.u32 %v4411, 16
      %v5069 = vrot.slane %v5067, 1
      %v5070 = vsel %vm1283, %v5066, %v5069
      %v5071 = vshrl.u32 %v4411, 16
      %v5073 = vor.u32 %v5071, %v5069
      %v5074 = vshll.u32 %v4412, 16
      %v5076 = vrot.slane %v5074, 1
      %v5077 = vsel %vm1283, %v5073, %v5076
      %v5078 = vshrl.u32 %v4412, 16
      %v5080 = vor.u32 %v5078, %v5076
      %v5081 = vshll.u32 %v4413, 16
      %v5083 = vrot.slane %v5081, 1
      %v5084 = vsel %vm1283, %v5080, %v5083
      %v5085 = vshrl.u32 %v4413, 16
      %v5087 = vor.u32 %v5085, %v5083
      %v5088 = vshll.u32 %v4414, 16
      %v5090 = vrot.slane %v5088, 1
      %v5091 = vsel %vm1283, %v5087, %v5090
      %v5092 = vshrl.u32 %v4414, 16
      %v5094 = vor.u32 %v5092, %v5090
      %v5095 = vshll.u32 %v4415, 16
      %v5097 = vrot.slane %v5095, 1
      %v5098 = vsel %vm1283, %v5094, %v5097
      %v5099 = vshrl.u32 %v4415, 16
      %v5101 = vor.u32 %v5099, %v5097
      %v5110 = vunpack.c.l.b16 %v5039
      %v5111 = vunpack.c.h.b16 %v5039
      %v5112 = vunpack.c.l.b16 %v5040
      %v5113 = vunpack.c.h.b16 %v5040
      %v5114 = vunpack.c.l.b16 %v5041
      %v5115 = vunpack.c.h.b16 %v5041
      %v5116 = vunpack.c.l.b16 %v5042
      %v5117 = vunpack.c.h.b16 %v5042
      %v5118 = vunpack.c.l.b16 %v5043
      %v5119 = vunpack.c.h.b16 %v5043
      %v5120 = vunpack.c.l.b16 %v5044
      %v5121 = vunpack.c.h.b16 %v5044
      %v5122 = vunpack.c.l.b16 %v5045
      %v5123 = vunpack.c.h.b16 %v5045
      %v5124 = vunpack.c.l.b16 %v5046
      %v5125 = vunpack.c.h.b16 %v5046
      %v5126 = vpack.c.b16 %v5112, %v5110
      %v5127 = vpack.c.b16 %v5113, %v5111
      %v5128 = vpack.c.b16 %v5116, %v5114
      %v5129 = vpack.c.b16 %v5117, %v5115
      %v5130 = vpack.c.b16 %v5120, %v5118
      %v5131 = vpack.c.b16 %v5121, %v5119
      %v5132 = vpack.c.b16 %v5124, %v5122
      %v5133 = vpack.c.b16 %v5125, %v5123
      %v5143 = vsel %vm1407, %v5056, 0
      %v5146 = vsel %vm1407, %v5063, 0
      %v5149 = vsel %vm1407, %v5070, 0
      %v5152 = vsel %vm1407, %v5077, 0
      %v5155 = vsel %vm1407, %v5084, 0
      %v5158 = vsel %vm1407, %v5091, 0
      %v5161 = vsel %vm1407, %v5098, 0
      %v5164 = vsel %vm1407, %v5101, 0
      %5166 = vmatpush.bf16.msra.mxu0 0
      %5167 = vmatpush.bf16.msra.mxu0 0
      %5168 = vmatpush.bf16.msra.mxu0 0
      %5169 = vmatpush.bf16.msra.mxu0 0
      %5170 = vmatpush.bf16.msra.mxu0 %v5132
      %5171 = vmatpush.bf16.msra.mxu0 %v5130
      %5172 = vmatpush.bf16.msra.mxu0 %v5128
      %5173 = vmatpush.bf16.msra.mxu0 %v5126
      %5174 = vmatmul.bf16.gmra.mxu0 %v5143
      %v5175 = vpop.f32.mrf.mxu0
      %v5176 = vadd.f32 0.0, %v5175
      %v5177 = vpop.f32.mrf.mxu0
      %v5178 = vadd.f32 0.0, %v5177
      %5179 = vmatmul.bf16.gmra.mxu0 %v5146
      %v5180 = vpop.f32.mrf.mxu0
      %v5181 = vadd.f32 0.0, %v5180
      %v5182 = vpop.f32.mrf.mxu0
      %v5183 = vadd.f32 0.0, %v5182
      %5184 = vmatmul.bf16.gmra.mxu0 %v5149
      %v5185 = vpop.f32.mrf.mxu0
      %v5186 = vadd.f32 0.0, %v5185
      %v5187 = vpop.f32.mrf.mxu0
      %v5188 = vadd.f32 0.0, %v5187
      %5189 = vmatmul.bf16.gmra.mxu0 %v5152
      %v5190 = vpop.f32.mrf.mxu0
      %v5191 = vadd.f32 0.0, %v5190
      %v5192 = vpop.f32.mrf.mxu0
      %v5193 = vadd.f32 0.0, %v5192
      %5194 = vmatmul.bf16.gmra.mxu0 %v5155
      %v5195 = vpop.f32.mrf.mxu0
      %v5196 = vadd.f32 0.0, %v5195
      %v5197 = vpop.f32.mrf.mxu0
      %v5198 = vadd.f32 0.0, %v5197
      %5199 = vmatmul.bf16.gmra.mxu0 %v5158
      %v5200 = vpop.f32.mrf.mxu0
      %v5201 = vadd.f32 0.0, %v5200
      %v5202 = vpop.f32.mrf.mxu0
      %v5203 = vadd.f32 0.0, %v5202
      %5204 = vmatmul.bf16.gmra.mxu0 %v5161
      %v5205 = vpop.f32.mrf.mxu0
      %v5206 = vadd.f32 0.0, %v5205
      %v5207 = vpop.f32.mrf.mxu0
      %v5208 = vadd.f32 0.0, %v5207
      %5209 = vmatmul.bf16.gmra.mxu0 %v5164
      %v5210 = vpop.f32.mrf.mxu0
      %v5211 = vadd.f32 0.0, %v5210
      %v5212 = vpop.f32.mrf.mxu0
      %v5213 = vadd.f32 0.0, %v5212
      %5214 = vdwg.mxu0
      %5215 = vmatpush.bf16.msra.mxu0 0
      %5216 = vmatpush.bf16.msra.mxu0 0
      %5217 = vmatpush.bf16.msra.mxu0 0
      %5218 = vmatpush.bf16.msra.mxu0 0
      %5219 = vmatpush.bf16.msra.mxu0 %v5133
      %5220 = vmatpush.bf16.msra.mxu0 %v5131
      %5221 = vmatpush.bf16.msra.mxu0 %v5129
      %5222 = vmatpush.bf16.msra.mxu0 %v5127
      %5223 = vmatmul.bf16.gmra.mxu0 %v5143
      %v5224 = vpop.f32.mrf.mxu0
      %v5225 = vadd.f32 0.0, %v5224
      %v5226 = vpop.f32.mrf.mxu0
      %v5227 = vadd.f32 0.0, %v5226
      %5228 = vmatmul.bf16.gmra.mxu0 %v5146
      %v5229 = vpop.f32.mrf.mxu0
      %v5230 = vadd.f32 0.0, %v5229
      %v5231 = vpop.f32.mrf.mxu0
      %v5232 = vadd.f32 0.0, %v5231
      %5233 = vmatmul.bf16.gmra.mxu0 %v5149
      %v5234 = vpop.f32.mrf.mxu0
      %v5235 = vadd.f32 0.0, %v5234
      %v5236 = vpop.f32.mrf.mxu0
      %v5237 = vadd.f32 0.0, %v5236
      %5238 = vmatmul.bf16.gmra.mxu0 %v5152
      %v5239 = vpop.f32.mrf.mxu0
      %v5240 = vadd.f32 0.0, %v5239
      %v5241 = vpop.f32.mrf.mxu0
      %v5242 = vadd.f32 0.0, %v5241
      %5243 = vmatmul.bf16.gmra.mxu0 %v5155
      %v5244 = vpop.f32.mrf.mxu0
      %v5245 = vadd.f32 0.0, %v5244
      %v5246 = vpop.f32.mrf.mxu0
      %v5247 = vadd.f32 0.0, %v5246
      %5248 = vmatmul.bf16.gmra.mxu0 %v5158
      %v5249 = vpop.f32.mrf.mxu0
      %v5250 = vadd.f32 0.0, %v5249
      %v5251 = vpop.f32.mrf.mxu0
      %v5252 = vadd.f32 0.0, %v5251
      %5253 = vmatmul.bf16.gmra.mxu0 %v5161
      %v5254 = vpop.f32.mrf.mxu0
      %v5255 = vadd.f32 0.0, %v5254
      %v5256 = vpop.f32.mrf.mxu0
      %v5257 = vadd.f32 0.0, %v5256
      %5258 = vmatmul.bf16.gmra.mxu0 %v5164
      %v5259 = vpop.f32.mrf.mxu0
      %v5260 = vadd.f32 0.0, %v5259
      %v5261 = vpop.f32.mrf.mxu0
      %v5262 = vadd.f32 0.0, %v5261
      %5263 = vdwg.mxu0
      %v5264 = vadd.f32 %v5006, %v5176
      %v5265 = vadd.f32 %v5007, %v5225
      %v5266 = vadd.f32 %v5008, %v5178
      %v5267 = vadd.f32 %v5009, %v5227
      %v5268 = vadd.f32 %v5010, %v5181
      %v5269 = vadd.f32 %v5011, %v5230
      %v5270 = vadd.f32 %v5012, %v5183
      %v5271 = vadd.f32 %v5013, %v5232
      %v5272 = vadd.f32 %v5014, %v5186
      %v5273 = vadd.f32 %v5015, %v5235
      %v5274 = vadd.f32 %v5016, %v5188
      %v5275 = vadd.f32 %v5017, %v5237
      %v5276 = vadd.f32 %v5018, %v5191
      %v5277 = vadd.f32 %v5019, %v5240
      %v5278 = vadd.f32 %v5020, %v5193
      %v5279 = vadd.f32 %v5021, %v5242
      %v5280 = vadd.f32 %v5022, %v5196
      %v5281 = vadd.f32 %v5023, %v5245
      %v5282 = vadd.f32 %v5024, %v5198
      %v5283 = vadd.f32 %v5025, %v5247
      %v5284 = vadd.f32 %v5026, %v5201
      %v5285 = vadd.f32 %v5027, %v5250
      %v5286 = vadd.f32 %v5028, %v5203
      %v5287 = vadd.f32 %v5029, %v5252
      %v5288 = vadd.f32 %v5030, %v5206
      %v5289 = vadd.f32 %v5031, %v5255
      %v5290 = vadd.f32 %v5032, %v5208
      %v5291 = vadd.f32 %v5033, %v5257
      %v5292 = vadd.f32 %v5034, %v5211
      %v5293 = vadd.f32 %v5035, %v5260
      %v5294 = vadd.f32 %v5036, %v5213
      %v5295 = vadd.f32 %v5037, %v5262
      %s5296 = scalar_lea.vmem %s11, 128
      %v5297 = vld [vmem:[%s5296] sm:$0xff]
      %v5298 = vld [vmem:[%s5296 + $0x8] sm:$0xff]
      %v5299 = vld [vmem:[%s5296 + $0x10] sm:$0xff]
      %v5300 = vld [vmem:[%s5296 + $0x18] sm:$0xff]
      %v5301 = vld [vmem:[%s5296 + $0x20] sm:$0xff]
      %v5302 = vld [vmem:[%s5296 + $0x28] sm:$0xff]
      %v5303 = vld [vmem:[%s5296 + $0x30] sm:$0xff]
      %v5304 = vld [vmem:[%s5296 + $0x38] sm:$0xff]
      %v5305 = vrot.slane %v4610, 1
      %v5306 = vrot.slane %v4611, 1
      %v5307 = vsel %vm1639, %v5305, %v5306
      %v5308 = vrot.slane %v4612, 1
      %v5309 = vsel %vm1639, %v5306, %v5308
      %v5310 = vrot.slane %v4613, 1
      %v5311 = vsel %vm1639, %v5308, %v5310
      %v5312 = vrot.slane %v4614, 1
      %v5313 = vsel %vm1639, %v5310, %v5312
      %v5314 = vrot.slane %v4615, 1
      %v5315 = vsel %vm1639, %v5312, %v5314
      %v5316 = vrot.slane %v4616, 1
      %v5317 = vsel %vm1639, %v5314, %v5316
      %v5318 = vrot.slane %v4617, 1
      %v5319 = vsel %vm1639, %v5316, %v5318
      %v5328 = vunpack.c.l.b16 %v5297
      %v5329 = vunpack.c.h.b16 %v5297
      %v5330 = vunpack.c.l.b16 %v5298
      %v5331 = vunpack.c.h.b16 %v5298
      %v5332 = vunpack.c.l.b16 %v5299
      %v5333 = vunpack.c.h.b16 %v5299
      %v5334 = vunpack.c.l.b16 %v5300
      %v5335 = vunpack.c.h.b16 %v5300
      %v5336 = vunpack.c.l.b16 %v5301
      %v5337 = vunpack.c.h.b16 %v5301
      %v5338 = vunpack.c.l.b16 %v5302
      %v5339 = vunpack.c.h.b16 %v5302
      %v5340 = vunpack.c.l.b16 %v5303
      %v5341 = vunpack.c.h.b16 %v5303
      %v5342 = vunpack.c.l.b16 %v5304
      %v5343 = vunpack.c.h.b16 %v5304
      %v5344 = vpack.c.b16 %v5330, %v5328
      %v5345 = vpack.c.b16 %v5331, %v5329
      %v5346 = vpack.c.b16 %v5334, %v5332
      %v5347 = vpack.c.b16 %v5335, %v5333
      %v5348 = vpack.c.b16 %v5338, %v5336
      %v5349 = vpack.c.b16 %v5339, %v5337
      %v5350 = vpack.c.b16 %v5342, %v5340
      %v5351 = vpack.c.b16 %v5343, %v5341
      %v5361 = vsel %vm1407, %v5307, 0
      %v5364 = vsel %vm1407, %v5309, 0
      %v5367 = vsel %vm1407, %v5311, 0
      %v5370 = vsel %vm1407, %v5313, 0
      %v5373 = vsel %vm1407, %v5315, 0
      %v5376 = vsel %vm1407, %v5317, 0
      %v5379 = vsel %vm1407, %v5319, 0
      %v5382 = vsel %vm1407, %v5318, 0
      %5384 = vmatpush.bf16.msra.mxu0 0
      %5385 = vmatpush.bf16.msra.mxu0 0
      %5386 = vmatpush.bf16.msra.mxu0 0
      %5387 = vmatpush.bf16.msra.mxu0 0
      %5388 = vmatpush.bf16.msra.mxu0 %v5350
      %5389 = vmatpush.bf16.msra.mxu0 %v5348
      %5390 = vmatpush.bf16.msra.mxu0 %v5346
      %5391 = vmatpush.bf16.msra.mxu0 %v5344
      %5392 = vmatmul.bf16.gmra.mxu0 %v5361
      %v5393 = vpop.f32.mrf.mxu0
      %v5394 = vadd.f32 0.0, %v5393
      %v5395 = vpop.f32.mrf.mxu0
      %v5396 = vadd.f32 0.0, %v5395
      %5397 = vmatmul.bf16.gmra.mxu0 %v5364
      %v5398 = vpop.f32.mrf.mxu0
      %v5399 = vadd.f32 0.0, %v5398
      %v5400 = vpop.f32.mrf.mxu0
      %v5401 = vadd.f32 0.0, %v5400
      %5402 = vmatmul.bf16.gmra.mxu0 %v5367
      %v5403 = vpop.f32.mrf.mxu0
      %v5404 = vadd.f32 0.0, %v5403
      %v5405 = vpop.f32.mrf.mxu0
      %v5406 = vadd.f32 0.0, %v5405
      %5407 = vmatmul.bf16.gmra.mxu0 %v5370
      %v5408 = vpop.f32.mrf.mxu0
      %v5409 = vadd.f32 0.0, %v5408
      %v5410 = vpop.f32.mrf.mxu0
      %v5411 = vadd.f32 0.0, %v5410
      %5412 = vmatmul.bf16.gmra.mxu0 %v5373
      %v5413 = vpop.f32.mrf.mxu0
      %v5414 = vadd.f32 0.0, %v5413
      %v5415 = vpop.f32.mrf.mxu0
      %v5416 = vadd.f32 0.0, %v5415
      %5417 = vmatmul.bf16.gmra.mxu0 %v5376
      %v5418 = vpop.f32.mrf.mxu0
      %v5419 = vadd.f32 0.0, %v5418
      %v5420 = vpop.f32.mrf.mxu0
      %v5421 = vadd.f32 0.0, %v5420
      %5422 = vmatmul.bf16.gmra.mxu0 %v5379
      %v5423 = vpop.f32.mrf.mxu0
      %v5424 = vadd.f32 0.0, %v5423
      %v5425 = vpop.f32.mrf.mxu0
      %v5426 = vadd.f32 0.0, %v5425
      %5427 = vmatmul.bf16.gmra.mxu0 %v5382
      %v5428 = vpop.f32.mrf.mxu0
      %v5429 = vadd.f32 0.0, %v5428
      %v5430 = vpop.f32.mrf.mxu0
      %v5431 = vadd.f32 0.0, %v5430
      %5432 = vdwg.mxu0
      %5433 = vmatpush.bf16.msra.mxu0 0
      %5434 = vmatpush.bf16.msra.mxu0 0
      %5435 = vmatpush.bf16.msra.mxu0 0
      %5436 = vmatpush.bf16.msra.mxu0 0
      %5437 = vmatpush.bf16.msra.mxu0 %v5351
      %5438 = vmatpush.bf16.msra.mxu0 %v5349
      %5439 = vmatpush.bf16.msra.mxu0 %v5347
      %5440 = vmatpush.bf16.msra.mxu0 %v5345
      %5441 = vmatmul.bf16.gmra.mxu0 %v5361
      %v5442 = vpop.f32.mrf.mxu0
      %v5443 = vadd.f32 0.0, %v5442
      %v5444 = vpop.f32.mrf.mxu0
      %v5445 = vadd.f32 0.0, %v5444
      %5446 = vmatmul.bf16.gmra.mxu0 %v5364
      %v5447 = vpop.f32.mrf.mxu0
      %v5448 = vadd.f32 0.0, %v5447
      %v5449 = vpop.f32.mrf.mxu0
      %v5450 = vadd.f32 0.0, %v5449
      %5451 = vmatmul.bf16.gmra.mxu0 %v5367
      %v5452 = vpop.f32.mrf.mxu0
      %v5453 = vadd.f32 0.0, %v5452
      %v5454 = vpop.f32.mrf.mxu0
      %v5455 = vadd.f32 0.0, %v5454
      %5456 = vmatmul.bf16.gmra.mxu0 %v5370
      %v5457 = vpop.f32.mrf.mxu0
      %v5458 = vadd.f32 0.0, %v5457
      %v5459 = vpop.f32.mrf.mxu0
      %v5460 = vadd.f32 0.0, %v5459
      %5461 = vmatmul.bf16.gmra.mxu0 %v5373
      %v5462 = vpop.f32.mrf.mxu0
      %v5463 = vadd.f32 0.0, %v5462
      %v5464 = vpop.f32.mrf.mxu0
      %v5465 = vadd.f32 0.0, %v5464
      %5466 = vmatmul.bf16.gmra.mxu0 %v5376
      %v5467 = vpop.f32.mrf.mxu0
      %v5468 = vadd.f32 0.0, %v5467
      %v5469 = vpop.f32.mrf.mxu0
      %v5470 = vadd.f32 0.0, %v5469
      %5471 = vmatmul.bf16.gmra.mxu0 %v5379
      %v5472 = vpop.f32.mrf.mxu0
      %v5473 = vadd.f32 0.0, %v5472
      %v5474 = vpop.f32.mrf.mxu0
      %v5475 = vadd.f32 0.0, %v5474
      %5476 = vmatmul.bf16.gmra.mxu0 %v5382
      %v5477 = vpop.f32.mrf.mxu0
      %v5478 = vadd.f32 0.0, %v5477
      %v5479 = vpop.f32.mrf.mxu0
      %v5480 = vadd.f32 0.0, %v5479
      %5481 = vdwg.mxu0
      %v5482 = vadd.f32 %v5264, %v5394
      %v5483 = vadd.f32 %v5265, %v5443
      %v5484 = vadd.f32 %v5266, %v5396
      %v5485 = vadd.f32 %v5267, %v5445
      %v5486 = vadd.f32 %v5268, %v5399
      %v5487 = vadd.f32 %v5269, %v5448
      %v5488 = vadd.f32 %v5270, %v5401
      %v5489 = vadd.f32 %v5271, %v5450
      %v5490 = vadd.f32 %v5272, %v5404
      %v5491 = vadd.f32 %v5273, %v5453
      %v5492 = vadd.f32 %v5274, %v5406
      %v5493 = vadd.f32 %v5275, %v5455
      %v5494 = vadd.f32 %v5276, %v5409
      %v5495 = vadd.f32 %v5277, %v5458
      %v5496 = vadd.f32 %v5278, %v5411
      %v5497 = vadd.f32 %v5279, %v5460
      %v5498 = vadd.f32 %v5280, %v5414
      %v5499 = vadd.f32 %v5281, %v5463
      %v5500 = vadd.f32 %v5282, %v5416
      %v5501 = vadd.f32 %v5283, %v5465
      %v5502 = vadd.f32 %v5284, %v5419
      %v5503 = vadd.f32 %v5285, %v5468
      %v5504 = vadd.f32 %v5286, %v5421
      %v5505 = vadd.f32 %v5287, %v5470
      %v5506 = vadd.f32 %v5288, %v5424
      %v5507 = vadd.f32 %v5289, %v5473
      %v5508 = vadd.f32 %v5290, %v5426
      %v5509 = vadd.f32 %v5291, %v5475
      %v5510 = vadd.f32 %v5292, %v5429
      %v5511 = vadd.f32 %v5293, %v5478
      %v5512 = vadd.f32 %v5294, %v5431
      %v5513 = vadd.f32 %v5295, %v5480
      %s5514 = scalar_lea.vmem %s12, 128
      %v5515 = vld [vmem:[%s5514] sm:$0xff]
      %v5516 = vld [vmem:[%s5514 + $0x8] sm:$0xff]
      %v5517 = vld [vmem:[%s5514 + $0x10] sm:$0xff]
      %v5518 = vld [vmem:[%s5514 + $0x18] sm:$0xff]
      %v5519 = vld [vmem:[%s5514 + $0x20] sm:$0xff]
      %v5520 = vld [vmem:[%s5514 + $0x28] sm:$0xff]
      %v5521 = vld [vmem:[%s5514 + $0x30] sm:$0xff]
      %v5522 = vld [vmem:[%s5514 + $0x38] sm:$0xff]
      %v5523 = vrot.slane %v4408, 1
      %v5524 = vrot.slane %v4409, 1
      %v5525 = vsel %vm1639, %v5523, %v5524
      %v5526 = vrot.slane %v4410, 1
      %v5527 = vsel %vm1639, %v5524, %v5526
      %v5528 = vrot.slane %v4411, 1
      %v5529 = vsel %vm1639, %v5526, %v5528
      %v5530 = vrot.slane %v4412, 1
      %v5531 = vsel %vm1639, %v5528, %v5530
      %v5532 = vrot.slane %v4413, 1
      %v5533 = vsel %vm1639, %v5530, %v5532
      %v5534 = vrot.slane %v4414, 1
      %v5535 = vsel %vm1639, %v5532, %v5534
      %v5536 = vrot.slane %v4415, 1
      %v5537 = vsel %vm1639, %v5534, %v5536
      %v5546 = vunpack.c.l.b16 %v5515
      %v5547 = vunpack.c.h.b16 %v5515
      %v5548 = vunpack.c.l.b16 %v5516
      %v5549 = vunpack.c.h.b16 %v5516
      %v5550 = vunpack.c.l.b16 %v5517
      %v5551 = vunpack.c.h.b16 %v5517
      %v5552 = vunpack.c.l.b16 %v5518
      %v5553 = vunpack.c.h.b16 %v5518
      %v5554 = vunpack.c.l.b16 %v5519
      %v5555 = vunpack.c.h.b16 %v5519
      %v5556 = vunpack.c.l.b16 %v5520
      %v5557 = vunpack.c.h.b16 %v5520
      %v5558 = vunpack.c.l.b16 %v5521
      %v5559 = vunpack.c.h.b16 %v5521
      %v5560 = vunpack.c.l.b16 %v5522
      %v5561 = vunpack.c.h.b16 %v5522
      %v5562 = vpack.c.b16 %v5548, %v5546
      %v5563 = vpack.c.b16 %v5549, %v5547
      %v5564 = vpack.c.b16 %v5552, %v5550
      %v5565 = vpack.c.b16 %v5553, %v5551
      %v5566 = vpack.c.b16 %v5556, %v5554
      %v5567 = vpack.c.b16 %v5557, %v5555
      %v5568 = vpack.c.b16 %v5560, %v5558
      %v5569 = vpack.c.b16 %v5561, %v5559
      %v5579 = vsel %vm1407, %v5525, 0
      %v5582 = vsel %vm1407, %v5527, 0
      %v5585 = vsel %vm1407, %v5529, 0
      %v5588 = vsel %vm1407, %v5531, 0
      %v5591 = vsel %vm1407, %v5533, 0
      %v5594 = vsel %vm1407, %v5535, 0
      %v5597 = vsel %vm1407, %v5537, 0
      %v5600 = vsel %vm1407, %v5536, 0
      %5602 = vmatpush.bf16.msra.mxu0 0
      %5603 = vmatpush.bf16.msra.mxu0 0
      %5604 = vmatpush.bf16.msra.mxu0 0
      %5605 = vmatpush.bf16.msra.mxu0 0
      %5606 = vmatpush.bf16.msra.mxu0 %v5568
      %5607 = vmatpush.bf16.msra.mxu0 %v5566
      %5608 = vmatpush.bf16.msra.mxu0 %v5564
      %5609 = vmatpush.bf16.msra.mxu0 %v5562
      %5610 = vmatmul.bf16.gmra.mxu0 %v5579
      %v5611 = vpop.f32.mrf.mxu0
      %v5612 = vadd.f32 0.0, %v5611
      %v5613 = vpop.f32.mrf.mxu0
      %v5614 = vadd.f32 0.0, %v5613
      %5615 = vmatmul.bf16.gmra.mxu0 %v5582
      %v5616 = vpop.f32.mrf.mxu0
      %v5617 = vadd.f32 0.0, %v5616
      %v5618 = vpop.f32.mrf.mxu0
      %v5619 = vadd.f32 0.0, %v5618
      %5620 = vmatmul.bf16.gmra.mxu0 %v5585
      %v5621 = vpop.f32.mrf.mxu0
      %v5622 = vadd.f32 0.0, %v5621
      %v5623 = vpop.f32.mrf.mxu0
      %v5624 = vadd.f32 0.0, %v5623
      %5625 = vmatmul.bf16.gmra.mxu0 %v5588
      %v5626 = vpop.f32.mrf.mxu0
      %v5627 = vadd.f32 0.0, %v5626
      %v5628 = vpop.f32.mrf.mxu0
      %v5629 = vadd.f32 0.0, %v5628
      %5630 = vmatmul.bf16.gmra.mxu0 %v5591
      %v5631 = vpop.f32.mrf.mxu0
      %v5632 = vadd.f32 0.0, %v5631
      %v5633 = vpop.f32.mrf.mxu0
      %v5634 = vadd.f32 0.0, %v5633
      %5635 = vmatmul.bf16.gmra.mxu0 %v5594
      %v5636 = vpop.f32.mrf.mxu0
      %v5637 = vadd.f32 0.0, %v5636
      %v5638 = vpop.f32.mrf.mxu0
      %v5639 = vadd.f32 0.0, %v5638
      %5640 = vmatmul.bf16.gmra.mxu0 %v5597
      %v5641 = vpop.f32.mrf.mxu0
      %v5642 = vadd.f32 0.0, %v5641
      %v5643 = vpop.f32.mrf.mxu0
      %v5644 = vadd.f32 0.0, %v5643
      %5645 = vmatmul.bf16.gmra.mxu0 %v5600
      %v5646 = vpop.f32.mrf.mxu0
      %v5647 = vadd.f32 0.0, %v5646
      %v5648 = vpop.f32.mrf.mxu0
      %v5649 = vadd.f32 0.0, %v5648
      %5650 = vdwg.mxu0
      %5651 = vmatpush.bf16.msra.mxu0 0
      %5652 = vmatpush.bf16.msra.mxu0 0
      %5653 = vmatpush.bf16.msra.mxu0 0
      %5654 = vmatpush.bf16.msra.mxu0 0
      %5655 = vmatpush.bf16.msra.mxu0 %v5569
      %5656 = vmatpush.bf16.msra.mxu0 %v5567
      %5657 = vmatpush.bf16.msra.mxu0 %v5565
      %5658 = vmatpush.bf16.msra.mxu0 %v5563
      %5659 = vmatmul.bf16.gmra.mxu0 %v5579
      %v5660 = vpop.f32.mrf.mxu0
      %v5661 = vadd.f32 0.0, %v5660
      %v5662 = vpop.f32.mrf.mxu0
      %v5663 = vadd.f32 0.0, %v5662
      %5664 = vmatmul.bf16.gmra.mxu0 %v5582
      %v5665 = vpop.f32.mrf.mxu0
      %v5666 = vadd.f32 0.0, %v5665
      %v5667 = vpop.f32.mrf.mxu0
      %v5668 = vadd.f32 0.0, %v5667
      %5669 = vmatmul.bf16.gmra.mxu0 %v5585
      %v5670 = vpop.f32.mrf.mxu0
      %v5671 = vadd.f32 0.0, %v5670
      %v5672 = vpop.f32.mrf.mxu0
      %v5673 = vadd.f32 0.0, %v5672
      %5674 = vmatmul.bf16.gmra.mxu0 %v5588
      %v5675 = vpop.f32.mrf.mxu0
      %v5676 = vadd.f32 0.0, %v5675
      %v5677 = vpop.f32.mrf.mxu0
      %v5678 = vadd.f32 0.0, %v5677
      %5679 = vmatmul.bf16.gmra.mxu0 %v5591
      %v5680 = vpop.f32.mrf.mxu0
      %v5681 = vadd.f32 0.0, %v5680
      %v5682 = vpop.f32.mrf.mxu0
      %v5683 = vadd.f32 0.0, %v5682
      %5684 = vmatmul.bf16.gmra.mxu0 %v5594
      %v5685 = vpop.f32.mrf.mxu0
      %v5686 = vadd.f32 0.0, %v5685
      %v5687 = vpop.f32.mrf.mxu0
      %v5688 = vadd.f32 0.0, %v5687
      %5689 = vmatmul.bf16.gmra.mxu0 %v5597
      %v5690 = vpop.f32.mrf.mxu0
      %v5691 = vadd.f32 0.0, %v5690
      %v5692 = vpop.f32.mrf.mxu0
      %v5693 = vadd.f32 0.0, %v5692
      %5694 = vmatmul.bf16.gmra.mxu0 %v5600
      %v5695 = vpop.f32.mrf.mxu0
      %v5696 = vadd.f32 0.0, %v5695
      %v5697 = vpop.f32.mrf.mxu0
      %v5698 = vadd.f32 0.0, %v5697
      %5699 = vdwg.mxu0
      %v5700 = vadd.f32 %v5482, %v5612
      %v5701 = vadd.f32 %v5483, %v5661
      %v5702 = vadd.f32 %v5484, %v5614
      %v5703 = vadd.f32 %v5485, %v5663
      %v5704 = vadd.f32 %v5486, %v5617
      %v5705 = vadd.f32 %v5487, %v5666
      %v5706 = vadd.f32 %v5488, %v5619
      %v5707 = vadd.f32 %v5489, %v5668
      %v5708 = vadd.f32 %v5490, %v5622
      %v5709 = vadd.f32 %v5491, %v5671
      %v5710 = vadd.f32 %v5492, %v5624
      %v5711 = vadd.f32 %v5493, %v5673
      %v5712 = vadd.f32 %v5494, %v5627
      %v5713 = vadd.f32 %v5495, %v5676
      %v5714 = vadd.f32 %v5496, %v5629
      %v5715 = vadd.f32 %v5497, %v5678
      %v5716 = vadd.f32 %v5498, %v5632
      %v5717 = vadd.f32 %v5499, %v5681
      %v5718 = vadd.f32 %v5500, %v5634
      %v5719 = vadd.f32 %v5501, %v5683
      %v5720 = vadd.f32 %v5502, %v5637
      %v5721 = vadd.f32 %v5503, %v5686
      %v5722 = vadd.f32 %v5504, %v5639
      %v5723 = vadd.f32 %v5505, %v5688
      %v5724 = vadd.f32 %v5506, %v5642
      %v5725 = vadd.f32 %v5507, %v5691
      %v5726 = vadd.f32 %v5508, %v5644
      %v5727 = vadd.f32 %v5509, %v5693
      %v5728 = vadd.f32 %v5510, %v5647
      %v5729 = vadd.f32 %v5511, %v5696
      %v5730 = vadd.f32 %v5512, %v5649
      %v5731 = vadd.f32 %v5513, %v5698
      %s5732 = scalar_lea.vmem %s11, 192
      %v5733 = vld [vmem:[%s5732] sm:$0xff]
      %v5734 = vld [vmem:[%s5732 + $0x8] sm:$0xff]
      %v5735 = vld [vmem:[%s5732 + $0x10] sm:$0xff]
      %v5736 = vld [vmem:[%s5732 + $0x18] sm:$0xff]
      %v5737 = vld [vmem:[%s5732 + $0x20] sm:$0xff]
      %v5738 = vld [vmem:[%s5732 + $0x28] sm:$0xff]
      %v5739 = vld [vmem:[%s5732 + $0x30] sm:$0xff]
      %v5740 = vld [vmem:[%s5732 + $0x38] sm:$0xff]
      %v5743 = vunpack.c.l.b16 %v932
      %v5744 = vunpack.c.l.b16 %v933
      %v5745 = vpack.c.b16 %v5744, %v5743
      %v5754 = vunpack.c.l.b16 %v5733
      %v5755 = vunpack.c.h.b16 %v5733
      %v5756 = vunpack.c.l.b16 %v5734
      %v5757 = vunpack.c.h.b16 %v5734
      %v5758 = vunpack.c.l.b16 %v5735
      %v5759 = vunpack.c.h.b16 %v5735
      %v5760 = vunpack.c.l.b16 %v5736
      %v5761 = vunpack.c.h.b16 %v5736
      %v5762 = vunpack.c.l.b16 %v5737
      %v5763 = vunpack.c.h.b16 %v5737
      %v5764 = vunpack.c.l.b16 %v5738
      %v5765 = vunpack.c.h.b16 %v5738
      %v5766 = vunpack.c.l.b16 %v5739
      %v5767 = vunpack.c.h.b16 %v5739
      %v5768 = vunpack.c.l.b16 %v5740
      %v5769 = vunpack.c.h.b16 %v5740
      %v5770 = vpack.c.b16 %v5756, %v5754
      %v5771 = vpack.c.b16 %v5757, %v5755
      %v5772 = vpack.c.b16 %v5760, %v5758
      %v5773 = vpack.c.b16 %v5761, %v5759
      %v5774 = vpack.c.b16 %v5764, %v5762
      %v5775 = vpack.c.b16 %v5765, %v5763
      %v5776 = vpack.c.b16 %v5768, %v5766
      %v5777 = vpack.c.b16 %v5769, %v5767
      %v5787 = vsel %vm1407, %v5745, 0
      %5789 = vmatpush.bf16.msra.mxu0 0
      %5790 = vmatpush.bf16.msra.mxu0 0
      %5791 = vmatpush.bf16.msra.mxu0 0
      %5792 = vmatpush.bf16.msra.mxu0 0
      %5793 = vmatpush.bf16.msra.mxu0 %v5776
      %5794 = vmatpush.bf16.msra.mxu0 %v5774
      %5795 = vmatpush.bf16.msra.mxu0 %v5772
      %5796 = vmatpush.bf16.msra.mxu0 %v5770
      %5797 = vmatmul.bf16.gmra.mxu0 %v4662
      %v5798 = vpop.f32.mrf.mxu0
      %v5799 = vadd.f32 0.0, %v5798
      %v5800 = vpop.f32.mrf.mxu0
      %v5801 = vadd.f32 0.0, %v5800
      %5802 = vmatmul.bf16.gmra.mxu0 %v4665
      %v5803 = vpop.f32.mrf.mxu0
      %v5804 = vadd.f32 0.0, %v5803
      %v5805 = vpop.f32.mrf.mxu0
      %v5806 = vadd.f32 0.0, %v5805
      %5807 = vmatmul.bf16.gmra.mxu0 %v4668
      %v5808 = vpop.f32.mrf.mxu0
      %v5809 = vadd.f32 0.0, %v5808
      %v5810 = vpop.f32.mrf.mxu0
      %v5811 = vadd.f32 0.0, %v5810
      %5812 = vmatmul.bf16.gmra.mxu0 %v4671
      %v5813 = vpop.f32.mrf.mxu0
      %v5814 = vadd.f32 0.0, %v5813
      %v5815 = vpop.f32.mrf.mxu0
      %v5816 = vadd.f32 0.0, %v5815
      %5817 = vmatmul.bf16.gmra.mxu0 %v4674
      %v5818 = vpop.f32.mrf.mxu0
      %v5819 = vadd.f32 0.0, %v5818
      %v5820 = vpop.f32.mrf.mxu0
      %v5821 = vadd.f32 0.0, %v5820
      %5822 = vmatmul.bf16.gmra.mxu0 %v4677
      %v5823 = vpop.f32.mrf.mxu0
      %v5824 = vadd.f32 0.0, %v5823
      %v5825 = vpop.f32.mrf.mxu0
      %v5826 = vadd.f32 0.0, %v5825
      %5827 = vmatmul.bf16.gmra.mxu0 %v4680
      %v5828 = vpop.f32.mrf.mxu0
      %v5829 = vadd.f32 0.0, %v5828
      %v5830 = vpop.f32.mrf.mxu0
      %v5831 = vadd.f32 0.0, %v5830
      %5832 = vmatmul.bf16.gmra.mxu0 %v5787
      %v5833 = vpop.f32.mrf.mxu0
      %v5834 = vadd.f32 0.0, %v5833
      %v5835 = vpop.f32.mrf.mxu0
      %v5836 = vadd.f32 0.0, %v5835
      %5837 = vdwg.mxu0
      %5838 = vmatpush.bf16.msra.mxu0 0
      %5839 = vmatpush.bf16.msra.mxu0 0
      %5840 = vmatpush.bf16.msra.mxu0 0
      %5841 = vmatpush.bf16.msra.mxu0 0
      %5842 = vmatpush.bf16.msra.mxu0 %v5777
      %5843 = vmatpush.bf16.msra.mxu0 %v5775
      %5844 = vmatpush.bf16.msra.mxu0 %v5773
      %5845 = vmatpush.bf16.msra.mxu0 %v5771
      %5846 = vmatmul.bf16.gmra.mxu0 %v4662
      %v5847 = vpop.f32.mrf.mxu0
      %v5848 = vadd.f32 0.0, %v5847
      %v5849 = vpop.f32.mrf.mxu0
      %v5850 = vadd.f32 0.0, %v5849
      %5851 = vmatmul.bf16.gmra.mxu0 %v4665
      %v5852 = vpop.f32.mrf.mxu0
      %v5853 = vadd.f32 0.0, %v5852
      %v5854 = vpop.f32.mrf.mxu0
      %v5855 = vadd.f32 0.0, %v5854
      %5856 = vmatmul.bf16.gmra.mxu0 %v4668
      %v5857 = vpop.f32.mrf.mxu0
      %v5858 = vadd.f32 0.0, %v5857
      %v5859 = vpop.f32.mrf.mxu0
      %v5860 = vadd.f32 0.0, %v5859
      %5861 = vmatmul.bf16.gmra.mxu0 %v4671
      %v5862 = vpop.f32.mrf.mxu0
      %v5863 = vadd.f32 0.0, %v5862
      %v5864 = vpop.f32.mrf.mxu0
      %v5865 = vadd.f32 0.0, %v5864
      %5866 = vmatmul.bf16.gmra.mxu0 %v4674
      %v5867 = vpop.f32.mrf.mxu0
      %v5868 = vadd.f32 0.0, %v5867
      %v5869 = vpop.f32.mrf.mxu0
      %v5870 = vadd.f32 0.0, %v5869
      %5871 = vmatmul.bf16.gmra.mxu0 %v4677
      %v5872 = vpop.f32.mrf.mxu0
      %v5873 = vadd.f32 0.0, %v5872
      %v5874 = vpop.f32.mrf.mxu0
      %v5875 = vadd.f32 0.0, %v5874
      %5876 = vmatmul.bf16.gmra.mxu0 %v4680
      %v5877 = vpop.f32.mrf.mxu0
      %v5878 = vadd.f32 0.0, %v5877
      %v5879 = vpop.f32.mrf.mxu0
      %v5880 = vadd.f32 0.0, %v5879
      %5881 = vmatmul.bf16.gmra.mxu0 %v5787
      %v5882 = vpop.f32.mrf.mxu0
      %v5883 = vadd.f32 0.0, %v5882
      %v5884 = vpop.f32.mrf.mxu0
      %v5885 = vadd.f32 0.0, %v5884
      %5886 = vdwg.mxu0
      %v5887 = vadd.f32 %v5700, %v5799
      %v5888 = vadd.f32 %v5701, %v5848
      %v5889 = vadd.f32 %v5702, %v5801
      %v5890 = vadd.f32 %v5703, %v5850
      %v5891 = vadd.f32 %v5704, %v5804
      %v5892 = vadd.f32 %v5705, %v5853
      %v5893 = vadd.f32 %v5706, %v5806
      %v5894 = vadd.f32 %v5707, %v5855
      %v5895 = vadd.f32 %v5708, %v5809
      %v5896 = vadd.f32 %v5709, %v5858
      %v5897 = vadd.f32 %v5710, %v5811
      %v5898 = vadd.f32 %v5711, %v5860
      %v5899 = vadd.f32 %v5712, %v5814
      %v5900 = vadd.f32 %v5713, %v5863
      %v5901 = vadd.f32 %v5714, %v5816
      %v5902 = vadd.f32 %v5715, %v5865
      %v5903 = vadd.f32 %v5716, %v5819
      %v5904 = vadd.f32 %v5717, %v5868
      %v5905 = vadd.f32 %v5718, %v5821
      %v5906 = vadd.f32 %v5719, %v5870
      %v5907 = vadd.f32 %v5720, %v5824
      %v5908 = vadd.f32 %v5721, %v5873
      %v5909 = vadd.f32 %v5722, %v5826
      %v5910 = vadd.f32 %v5723, %v5875
      %v5911 = vadd.f32 %v5724, %v5829
      %v5912 = vadd.f32 %v5725, %v5878
      %v5913 = vadd.f32 %v5726, %v5831
      %v5914 = vadd.f32 %v5727, %v5880
      %v5915 = vadd.f32 %v5728, %v5834
      %v5916 = vadd.f32 %v5729, %v5883
      %v5917 = vadd.f32 %v5730, %v5836
      %v5918 = vadd.f32 %v5731, %v5885
      %s5919 = scalar_lea.vmem %s12, 192
      %v5920 = vld [vmem:[%s5919] sm:$0xff]
      %v5921 = vld [vmem:[%s5919 + $0x8] sm:$0xff]
      %v5922 = vld [vmem:[%s5919 + $0x10] sm:$0xff]
      %v5923 = vld [vmem:[%s5919 + $0x18] sm:$0xff]
      %v5924 = vld [vmem:[%s5919 + $0x20] sm:$0xff]
      %v5925 = vld [vmem:[%s5919 + $0x28] sm:$0xff]
      %v5926 = vld [vmem:[%s5919 + $0x30] sm:$0xff]
      %v5927 = vld [vmem:[%s5919 + $0x38] sm:$0xff]
      %v5930 = vunpack.c.l.b16 %v4356
      %v5931 = vunpack.c.l.b16 %v4357
      %v5932 = vpack.c.b16 %v5931, %v5930
      %v5941 = vunpack.c.l.b16 %v5920
      %v5942 = vunpack.c.h.b16 %v5920
      %v5943 = vunpack.c.l.b16 %v5921
      %v5944 = vunpack.c.h.b16 %v5921
      %v5945 = vunpack.c.l.b16 %v5922
      %v5946 = vunpack.c.h.b16 %v5922
      %v5947 = vunpack.c.l.b16 %v5923
      %v5948 = vunpack.c.h.b16 %v5923
      %v5949 = vunpack.c.l.b16 %v5924
      %v5950 = vunpack.c.h.b16 %v5924
      %v5951 = vunpack.c.l.b16 %v5925
      %v5952 = vunpack.c.h.b16 %v5925
      %v5953 = vunpack.c.l.b16 %v5926
      %v5954 = vunpack.c.h.b16 %v5926
      %v5955 = vunpack.c.l.b16 %v5927
      %v5956 = vunpack.c.h.b16 %v5927
      %v5957 = vpack.c.b16 %v5943, %v5941
      %v5958 = vpack.c.b16 %v5944, %v5942
      %v5959 = vpack.c.b16 %v5947, %v5945
      %v5960 = vpack.c.b16 %v5948, %v5946
      %v5961 = vpack.c.b16 %v5951, %v5949
      %v5962 = vpack.c.b16 %v5952, %v5950
      %v5963 = vpack.c.b16 %v5955, %v5953
      %v5964 = vpack.c.b16 %v5956, %v5954
      %v5974 = vsel %vm1407, %v5932, 0
      %5976 = vmatpush.bf16.msra.mxu0 0
      %5977 = vmatpush.bf16.msra.mxu0 0
      %5978 = vmatpush.bf16.msra.mxu0 0
      %5979 = vmatpush.bf16.msra.mxu0 0
      %5980 = vmatpush.bf16.msra.mxu0 %v5963
      %5981 = vmatpush.bf16.msra.mxu0 %v5961
      %5982 = vmatpush.bf16.msra.mxu0 %v5959
      %5983 = vmatpush.bf16.msra.mxu0 %v5957
      %5984 = vmatmul.bf16.gmra.mxu0 %v4460
      %v5985 = vpop.f32.mrf.mxu0
      %v5986 = vadd.f32 0.0, %v5985
      %v5987 = vpop.f32.mrf.mxu0
      %v5988 = vadd.f32 0.0, %v5987
      %5989 = vmatmul.bf16.gmra.mxu0 %v4463
      %v5990 = vpop.f32.mrf.mxu0
      %v5991 = vadd.f32 0.0, %v5990
      %v5992 = vpop.f32.mrf.mxu0
      %v5993 = vadd.f32 0.0, %v5992
      %5994 = vmatmul.bf16.gmra.mxu0 %v4466
      %v5995 = vpop.f32.mrf.mxu0
      %v5996 = vadd.f32 0.0, %v5995
      %v5997 = vpop.f32.mrf.mxu0
      %v5998 = vadd.f32 0.0, %v5997
      %5999 = vmatmul.bf16.gmra.mxu0 %v4469
      %v6000 = vpop.f32.mrf.mxu0
      %v6001 = vadd.f32 0.0, %v6000
      %v6002 = vpop.f32.mrf.mxu0
      %v6003 = vadd.f32 0.0, %v6002
      %6004 = vmatmul.bf16.gmra.mxu0 %v4472
      %v6005 = vpop.f32.mrf.mxu0
      %v6006 = vadd.f32 0.0, %v6005
      %v6007 = vpop.f32.mrf.mxu0
      %v6008 = vadd.f32 0.0, %v6007
      %6009 = vmatmul.bf16.gmra.mxu0 %v4475
      %v6010 = vpop.f32.mrf.mxu0
      %v6011 = vadd.f32 0.0, %v6010
      %v6012 = vpop.f32.mrf.mxu0
      %v6013 = vadd.f32 0.0, %v6012
      %6014 = vmatmul.bf16.gmra.mxu0 %v4478
      %v6015 = vpop.f32.mrf.mxu0
      %v6016 = vadd.f32 0.0, %v6015
      %v6017 = vpop.f32.mrf.mxu0
      %v6018 = vadd.f32 0.0, %v6017
      %6019 = vmatmul.bf16.gmra.mxu0 %v5974
      %v6020 = vpop.f32.mrf.mxu0
      %v6021 = vadd.f32 0.0, %v6020
      %v6022 = vpop.f32.mrf.mxu0
      %v6023 = vadd.f32 0.0, %v6022
      %6024 = vdwg.mxu0
      %6025 = vmatpush.bf16.msra.mxu0 0
      %6026 = vmatpush.bf16.msra.mxu0 0
      %6027 = vmatpush.bf16.msra.mxu0 0
      %6028 = vmatpush.bf16.msra.mxu0 0
      %6029 = vmatpush.bf16.msra.mxu0 %v5964
      %6030 = vmatpush.bf16.msra.mxu0 %v5962
      %6031 = vmatpush.bf16.msra.mxu0 %v5960
      %6032 = vmatpush.bf16.msra.mxu0 %v5958
      %6033 = vmatmul.bf16.gmra.mxu0 %v4460
      %v6034 = vpop.f32.mrf.mxu0
      %v6035 = vadd.f32 0.0, %v6034
      %v6036 = vpop.f32.mrf.mxu0
      %v6037 = vadd.f32 0.0, %v6036
      %6038 = vmatmul.bf16.gmra.mxu0 %v4463
      %v6039 = vpop.f32.mrf.mxu0
      %v6040 = vadd.f32 0.0, %v6039
      %v6041 = vpop.f32.mrf.mxu0
      %v6042 = vadd.f32 0.0, %v6041
      %6043 = vmatmul.bf16.gmra.mxu0 %v4466
      %v6044 = vpop.f32.mrf.mxu0
      %v6045 = vadd.f32 0.0, %v6044
      %v6046 = vpop.f32.mrf.mxu0
      %v6047 = vadd.f32 0.0, %v6046
      %6048 = vmatmul.bf16.gmra.mxu0 %v4469
      %v6049 = vpop.f32.mrf.mxu0
      %v6050 = vadd.f32 0.0, %v6049
      %v6051 = vpop.f32.mrf.mxu0
      %v6052 = vadd.f32 0.0, %v6051
      %6053 = vmatmul.bf16.gmra.mxu0 %v4472
      %v6054 = vpop.f32.mrf.mxu0
      %v6055 = vadd.f32 0.0, %v6054
      %v6056 = vpop.f32.mrf.mxu0
      %v6057 = vadd.f32 0.0, %v6056
      %6058 = vmatmul.bf16.gmra.mxu0 %v4475
      %v6059 = vpop.f32.mrf.mxu0
      %v6060 = vadd.f32 0.0, %v6059
      %v6061 = vpop.f32.mrf.mxu0
      %v6062 = vadd.f32 0.0, %v6061
      %6063 = vmatmul.bf16.gmra.mxu0 %v4478
      %v6064 = vpop.f32.mrf.mxu0
      %v6065 = vadd.f32 0.0, %v6064
      %v6066 = vpop.f32.mrf.mxu0
      %v6067 = vadd.f32 0.0, %v6066
      %6068 = vmatmul.bf16.gmra.mxu0 %v5974
      %v6069 = vpop.f32.mrf.mxu0
      %v6070 = vadd.f32 0.0, %v6069
      %v6071 = vpop.f32.mrf.mxu0
      %v6072 = vadd.f32 0.0, %v6071
      %6073 = vdwg.mxu0
      %v6074 = vadd.f32 %v5887, %v5986
      %v6075 = vadd.f32 %v5888, %v6035
      %v6076 = vadd.f32 %v5889, %v5988
      %v6077 = vadd.f32 %v5890, %v6037
      %v6078 = vadd.f32 %v5891, %v5991
      %v6079 = vadd.f32 %v5892, %v6040
      %v6080 = vadd.f32 %v5893, %v5993
      %v6081 = vadd.f32 %v5894, %v6042
      %v6082 = vadd.f32 %v5895, %v5996
      %v6083 = vadd.f32 %v5896, %v6045
      %v6084 = vadd.f32 %v5897, %v5998
      %v6085 = vadd.f32 %v5898, %v6047
      %v6086 = vadd.f32 %v5899, %v6001
      %v6087 = vadd.f32 %v5900, %v6050
      %v6088 = vadd.f32 %v5901, %v6003
      %v6089 = vadd.f32 %v5902, %v6052
      %v6090 = vadd.f32 %v5903, %v6006
      %v6091 = vadd.f32 %v5904, %v6055
      %v6092 = vadd.f32 %v5905, %v6008
      %v6093 = vadd.f32 %v5906, %v6057
      %v6094 = vadd.f32 %v5907, %v6011
      %v6095 = vadd.f32 %v5908, %v6060
      %v6096 = vadd.f32 %v5909, %v6013
      %v6097 = vadd.f32 %v5910, %v6062
      %v6098 = vadd.f32 %v5911, %v6016
      %v6099 = vadd.f32 %v5912, %v6065
      %v6100 = vadd.f32 %v5913, %v6018
      %v6101 = vadd.f32 %v5914, %v6067
      %v6102 = vadd.f32 %v5915, %v6021
      %v6103 = vadd.f32 %v5916, %v6070
      %v6104 = vadd.f32 %v5917, %v6023
      %v6105 = vadd.f32 %v5918, %v6072
      %s6106 = scalar_lea.vmem %s11, 256
      %v6107 = vld [vmem:[%s6106] sm:$0xff]
      %v6108 = vld [vmem:[%s6106 + $0x8] sm:$0xff]
      %v6109 = vld [vmem:[%s6106 + $0x10] sm:$0xff]
      %v6110 = vld [vmem:[%s6106 + $0x18] sm:$0xff]
      %v6111 = vld [vmem:[%s6106 + $0x20] sm:$0xff]
      %v6112 = vld [vmem:[%s6106 + $0x28] sm:$0xff]
      %v6113 = vld [vmem:[%s6106 + $0x30] sm:$0xff]
      %v6114 = vld [vmem:[%s6106 + $0x38] sm:$0xff]
      %v6115 = vshll.u32 %v5745, 16
      %v6117 = vrot.slane %v6115, 1
      %v6118 = vsel %vm1283, %v4843, %v6117
      %v6119 = vshrl.u32 %v5745, 16
      %v6121 = vor.u32 %v6119, %v6117
      %v6130 = vunpack.c.l.b16 %v6107
      %v6131 = vunpack.c.h.b16 %v6107
      %v6132 = vunpack.c.l.b16 %v6108
      %v6133 = vunpack.c.h.b16 %v6108
      %v6134 = vunpack.c.l.b16 %v6109
      %v6135 = vunpack.c.h.b16 %v6109
      %v6136 = vunpack.c.l.b16 %v6110
      %v6137 = vunpack.c.h.b16 %v6110
      %v6138 = vunpack.c.l.b16 %v6111
      %v6139 = vunpack.c.h.b16 %v6111
      %v6140 = vunpack.c.l.b16 %v6112
      %v6141 = vunpack.c.h.b16 %v6112
      %v6142 = vunpack.c.l.b16 %v6113
      %v6143 = vunpack.c.h.b16 %v6113
      %v6144 = vunpack.c.l.b16 %v6114
      %v6145 = vunpack.c.h.b16 %v6114
      %v6146 = vpack.c.b16 %v6132, %v6130
      %v6147 = vpack.c.b16 %v6133, %v6131
      %v6148 = vpack.c.b16 %v6136, %v6134
      %v6149 = vpack.c.b16 %v6137, %v6135
      %v6150 = vpack.c.b16 %v6140, %v6138
      %v6151 = vpack.c.b16 %v6141, %v6139
      %v6152 = vpack.c.b16 %v6144, %v6142
      %v6153 = vpack.c.b16 %v6145, %v6143
      %v6163 = vsel %vm1407, %v6118, 0
      %v6166 = vsel %vm1407, %v6121, 0
      %6168 = vmatpush.bf16.msra.mxu0 0
      %6169 = vmatpush.bf16.msra.mxu0 0
      %6170 = vmatpush.bf16.msra.mxu0 0
      %6171 = vmatpush.bf16.msra.mxu0 0
      %6172 = vmatpush.bf16.msra.mxu0 %v6152
      %6173 = vmatpush.bf16.msra.mxu0 %v6150
      %6174 = vmatpush.bf16.msra.mxu0 %v6148
      %6175 = vmatpush.bf16.msra.mxu0 %v6146
      %6176 = vmatmul.bf16.gmra.mxu0 %v4888
      %v6177 = vpop.f32.mrf.mxu0
      %v6178 = vadd.f32 0.0, %v6177
      %v6179 = vpop.f32.mrf.mxu0
      %v6180 = vadd.f32 0.0, %v6179
      %6181 = vmatmul.bf16.gmra.mxu0 %v4891
      %v6182 = vpop.f32.mrf.mxu0
      %v6183 = vadd.f32 0.0, %v6182
      %v6184 = vpop.f32.mrf.mxu0
      %v6185 = vadd.f32 0.0, %v6184
      %6186 = vmatmul.bf16.gmra.mxu0 %v4894
      %v6187 = vpop.f32.mrf.mxu0
      %v6188 = vadd.f32 0.0, %v6187
      %v6189 = vpop.f32.mrf.mxu0
      %v6190 = vadd.f32 0.0, %v6189
      %6191 = vmatmul.bf16.gmra.mxu0 %v4897
      %v6192 = vpop.f32.mrf.mxu0
      %v6193 = vadd.f32 0.0, %v6192
      %v6194 = vpop.f32.mrf.mxu0
      %v6195 = vadd.f32 0.0, %v6194
      %6196 = vmatmul.bf16.gmra.mxu0 %v4900
      %v6197 = vpop.f32.mrf.mxu0
      %v6198 = vadd.f32 0.0, %v6197
      %v6199 = vpop.f32.mrf.mxu0
      %v6200 = vadd.f32 0.0, %v6199
      %6201 = vmatmul.bf16.gmra.mxu0 %v4903
      %v6202 = vpop.f32.mrf.mxu0
      %v6203 = vadd.f32 0.0, %v6202
      %v6204 = vpop.f32.mrf.mxu0
      %v6205 = vadd.f32 0.0, %v6204
      %6206 = vmatmul.bf16.gmra.mxu0 %v6163
      %v6207 = vpop.f32.mrf.mxu0
      %v6208 = vadd.f32 0.0, %v6207
      %v6209 = vpop.f32.mrf.mxu0
      %v6210 = vadd.f32 0.0, %v6209
      %6211 = vmatmul.bf16.gmra.mxu0 %v6166
      %v6212 = vpop.f32.mrf.mxu0
      %v6213 = vadd.f32 0.0, %v6212
      %v6214 = vpop.f32.mrf.mxu0
      %v6215 = vadd.f32 0.0, %v6214
      %6216 = vdwg.mxu0
      %6217 = vmatpush.bf16.msra.mxu0 0
      %6218 = vmatpush.bf16.msra.mxu0 0
      %6219 = vmatpush.bf16.msra.mxu0 0
      %6220 = vmatpush.bf16.msra.mxu0 0
      %6221 = vmatpush.bf16.msra.mxu0 %v6153
      %6222 = vmatpush.bf16.msra.mxu0 %v6151
      %6223 = vmatpush.bf16.msra.mxu0 %v6149
      %6224 = vmatpush.bf16.msra.mxu0 %v6147
      %6225 = vmatmul.bf16.gmra.mxu0 %v4888
      %v6226 = vpop.f32.mrf.mxu0
      %v6227 = vadd.f32 0.0, %v6226
      %v6228 = vpop.f32.mrf.mxu0
      %v6229 = vadd.f32 0.0, %v6228
      %6230 = vmatmul.bf16.gmra.mxu0 %v4891
      %v6231 = vpop.f32.mrf.mxu0
      %v6232 = vadd.f32 0.0, %v6231
      %v6233 = vpop.f32.mrf.mxu0
      %v6234 = vadd.f32 0.0, %v6233
      %6235 = vmatmul.bf16.gmra.mxu0 %v4894
      %v6236 = vpop.f32.mrf.mxu0
      %v6237 = vadd.f32 0.0, %v6236
      %v6238 = vpop.f32.mrf.mxu0
      %v6239 = vadd.f32 0.0, %v6238
      %6240 = vmatmul.bf16.gmra.mxu0 %v4897
      %v6241 = vpop.f32.mrf.mxu0
      %v6242 = vadd.f32 0.0, %v6241
      %v6243 = vpop.f32.mrf.mxu0
      %v6244 = vadd.f32 0.0, %v6243
      %6245 = vmatmul.bf16.gmra.mxu0 %v4900
      %v6246 = vpop.f32.mrf.mxu0
      %v6247 = vadd.f32 0.0, %v6246
      %v6248 = vpop.f32.mrf.mxu0
      %v6249 = vadd.f32 0.0, %v6248
      %6250 = vmatmul.bf16.gmra.mxu0 %v4903
      %v6251 = vpop.f32.mrf.mxu0
      %v6252 = vadd.f32 0.0, %v6251
      %v6253 = vpop.f32.mrf.mxu0
      %v6254 = vadd.f32 0.0, %v6253
      %6255 = vmatmul.bf16.gmra.mxu0 %v6163
      %v6256 = vpop.f32.mrf.mxu0
      %v6257 = vadd.f32 0.0, %v6256
      %v6258 = vpop.f32.mrf.mxu0
      %v6259 = vadd.f32 0.0, %v6258
      %6260 = vmatmul.bf16.gmra.mxu0 %v6166
      %v6261 = vpop.f32.mrf.mxu0
      %v6262 = vadd.f32 0.0, %v6261
      %v6263 = vpop.f32.mrf.mxu0
      %v6264 = vadd.f32 0.0, %v6263
      %6265 = vdwg.mxu0
      %v6266 = vadd.f32 %v6074, %v6178
      %v6267 = vadd.f32 %v6075, %v6227
      %v6268 = vadd.f32 %v6076, %v6180
      %v6269 = vadd.f32 %v6077, %v6229
      %v6270 = vadd.f32 %v6078, %v6183
      %v6271 = vadd.f32 %v6079, %v6232
      %v6272 = vadd.f32 %v6080, %v6185
      %v6273 = vadd.f32 %v6081, %v6234
      %v6274 = vadd.f32 %v6082, %v6188
      %v6275 = vadd.f32 %v6083, %v6237
      %v6276 = vadd.f32 %v6084, %v6190
      %v6277 = vadd.f32 %v6085, %v6239
      %v6278 = vadd.f32 %v6086, %v6193
      %v6279 = vadd.f32 %v6087, %v6242
      %v6280 = vadd.f32 %v6088, %v6195
      %v6281 = vadd.f32 %v6089, %v6244
      %v6282 = vadd.f32 %v6090, %v6198
      %v6283 = vadd.f32 %v6091, %v6247
      %v6284 = vadd.f32 %v6092, %v6200
      %v6285 = vadd.f32 %v6093, %v6249
      %v6286 = vadd.f32 %v6094, %v6203
      %v6287 = vadd.f32 %v6095, %v6252
      %v6288 = vadd.f32 %v6096, %v6205
      %v6289 = vadd.f32 %v6097, %v6254
      %v6290 = vadd.f32 %v6098, %v6208
      %v6291 = vadd.f32 %v6099, %v6257
      %v6292 = vadd.f32 %v6100, %v6210
      %v6293 = vadd.f32 %v6101, %v6259
      %v6294 = vadd.f32 %v6102, %v6213
      %v6295 = vadd.f32 %v6103, %v6262
      %v6296 = vadd.f32 %v6104, %v6215
      %v6297 = vadd.f32 %v6105, %v6264
      %s6298 = scalar_lea.vmem %s12, 256
      %v6299 = vld [vmem:[%s6298] sm:$0xff]
      %v6300 = vld [vmem:[%s6298 + $0x8] sm:$0xff]
      %v6301 = vld [vmem:[%s6298 + $0x10] sm:$0xff]
      %v6302 = vld [vmem:[%s6298 + $0x18] sm:$0xff]
      %v6303 = vld [vmem:[%s6298 + $0x20] sm:$0xff]
      %v6304 = vld [vmem:[%s6298 + $0x28] sm:$0xff]
      %v6305 = vld [vmem:[%s6298 + $0x30] sm:$0xff]
      %v6306 = vld [vmem:[%s6298 + $0x38] sm:$0xff]
      %v6307 = vshll.u32 %v5932, 16
      %v6309 = vrot.slane %v6307, 1
      %v6310 = vsel %vm1283, %v5101, %v6309
      %v6311 = vshrl.u32 %v5932, 16
      %v6313 = vor.u32 %v6311, %v6309
      %v6322 = vunpack.c.l.b16 %v6299
      %v6323 = vunpack.c.h.b16 %v6299
      %v6324 = vunpack.c.l.b16 %v6300
      %v6325 = vunpack.c.h.b16 %v6300
      %v6326 = vunpack.c.l.b16 %v6301
      %v6327 = vunpack.c.h.b16 %v6301
      %v6328 = vunpack.c.l.b16 %v6302
      %v6329 = vunpack.c.h.b16 %v6302
      %v6330 = vunpack.c.l.b16 %v6303
      %v6331 = vunpack.c.h.b16 %v6303
      %v6332 = vunpack.c.l.b16 %v6304
      %v6333 = vunpack.c.h.b16 %v6304
      %v6334 = vunpack.c.l.b16 %v6305
      %v6335 = vunpack.c.h.b16 %v6305
      %v6336 = vunpack.c.l.b16 %v6306
      %v6337 = vunpack.c.h.b16 %v6306
      %v6338 = vpack.c.b16 %v6324, %v6322
      %v6339 = vpack.c.b16 %v6325, %v6323
      %v6340 = vpack.c.b16 %v6328, %v6326
      %v6341 = vpack.c.b16 %v6329, %v6327
      %v6342 = vpack.c.b16 %v6332, %v6330
      %v6343 = vpack.c.b16 %v6333, %v6331
      %v6344 = vpack.c.b16 %v6336, %v6334
      %v6345 = vpack.c.b16 %v6337, %v6335
      %v6355 = vsel %vm1407, %v6310, 0
      %v6358 = vsel %vm1407, %v6313, 0
      %6360 = vmatpush.bf16.msra.mxu0 0
      %6361 = vmatpush.bf16.msra.mxu0 0
      %6362 = vmatpush.bf16.msra.mxu0 0
      %6363 = vmatpush.bf16.msra.mxu0 0
      %6364 = vmatpush.bf16.msra.mxu0 %v6344
      %6365 = vmatpush.bf16.msra.mxu0 %v6342
      %6366 = vmatpush.bf16.msra.mxu0 %v6340
      %6367 = vmatpush.bf16.msra.mxu0 %v6338
      %6368 = vmatmul.bf16.gmra.mxu0 %v5146
      %v6369 = vpop.f32.mrf.mxu0
      %v6370 = vadd.f32 0.0, %v6369
      %v6371 = vpop.f32.mrf.mxu0
      %v6372 = vadd.f32 0.0, %v6371
      %6373 = vmatmul.bf16.gmra.mxu0 %v5149
      %v6374 = vpop.f32.mrf.mxu0
      %v6375 = vadd.f32 0.0, %v6374
      %v6376 = vpop.f32.mrf.mxu0
      %v6377 = vadd.f32 0.0, %v6376
      %6378 = vmatmul.bf16.gmra.mxu0 %v5152
      %v6379 = vpop.f32.mrf.mxu0
      %v6380 = vadd.f32 0.0, %v6379
      %v6381 = vpop.f32.mrf.mxu0
      %v6382 = vadd.f32 0.0, %v6381
      %6383 = vmatmul.bf16.gmra.mxu0 %v5155
      %v6384 = vpop.f32.mrf.mxu0
      %v6385 = vadd.f32 0.0, %v6384
      %v6386 = vpop.f32.mrf.mxu0
      %v6387 = vadd.f32 0.0, %v6386
      %6388 = vmatmul.bf16.gmra.mxu0 %v5158
      %v6389 = vpop.f32.mrf.mxu0
      %v6390 = vadd.f32 0.0, %v6389
      %v6391 = vpop.f32.mrf.mxu0
      %v6392 = vadd.f32 0.0, %v6391
      %6393 = vmatmul.bf16.gmra.mxu0 %v5161
      %v6394 = vpop.f32.mrf.mxu0
      %v6395 = vadd.f32 0.0, %v6394
      %v6396 = vpop.f32.mrf.mxu0
      %v6397 = vadd.f32 0.0, %v6396
      %6398 = vmatmul.bf16.gmra.mxu0 %v6355
      %v6399 = vpop.f32.mrf.mxu0
      %v6400 = vadd.f32 0.0, %v6399
      %v6401 = vpop.f32.mrf.mxu0
      %v6402 = vadd.f32 0.0, %v6401
      %6403 = vmatmul.bf16.gmra.mxu0 %v6358
      %v6404 = vpop.f32.mrf.mxu0
      %v6405 = vadd.f32 0.0, %v6404
      %v6406 = vpop.f32.mrf.mxu0
      %v6407 = vadd.f32 0.0, %v6406
      %6408 = vdwg.mxu0
      %6409 = vmatpush.bf16.msra.mxu0 0
      %6410 = vmatpush.bf16.msra.mxu0 0
      %6411 = vmatpush.bf16.msra.mxu0 0
      %6412 = vmatpush.bf16.msra.mxu0 0
      %6413 = vmatpush.bf16.msra.mxu0 %v6345
      %6414 = vmatpush.bf16.msra.mxu0 %v6343
      %6415 = vmatpush.bf16.msra.mxu0 %v6341
      %6416 = vmatpush.bf16.msra.mxu0 %v6339
      %6417 = vmatmul.bf16.gmra.mxu0 %v5146
      %v6418 = vpop.f32.mrf.mxu0
      %v6419 = vadd.f32 0.0, %v6418
      %v6420 = vpop.f32.mrf.mxu0
      %v6421 = vadd.f32 0.0, %v6420
      %6422 = vmatmul.bf16.gmra.mxu0 %v5149
      %v6423 = vpop.f32.mrf.mxu0
      %v6424 = vadd.f32 0.0, %v6423
      %v6425 = vpop.f32.mrf.mxu0
      %v6426 = vadd.f32 0.0, %v6425
      %6427 = vmatmul.bf16.gmra.mxu0 %v5152
      %v6428 = vpop.f32.mrf.mxu0
      %v6429 = vadd.f32 0.0, %v6428
      %v6430 = vpop.f32.mrf.mxu0
      %v6431 = vadd.f32 0.0, %v6430
      %6432 = vmatmul.bf16.gmra.mxu0 %v5155
      %v6433 = vpop.f32.mrf.mxu0
      %v6434 = vadd.f32 0.0, %v6433
      %v6435 = vpop.f32.mrf.mxu0
      %v6436 = vadd.f32 0.0, %v6435
      %6437 = vmatmul.bf16.gmra.mxu0 %v5158
      %v6438 = vpop.f32.mrf.mxu0
      %v6439 = vadd.f32 0.0, %v6438
      %v6440 = vpop.f32.mrf.mxu0
      %v6441 = vadd.f32 0.0, %v6440
      %6442 = vmatmul.bf16.gmra.mxu0 %v5161
      %v6443 = vpop.f32.mrf.mxu0
      %v6444 = vadd.f32 0.0, %v6443
      %v6445 = vpop.f32.mrf.mxu0
      %v6446 = vadd.f32 0.0, %v6445
      %6447 = vmatmul.bf16.gmra.mxu0 %v6355
      %v6448 = vpop.f32.mrf.mxu0
      %v6449 = vadd.f32 0.0, %v6448
      %v6450 = vpop.f32.mrf.mxu0
      %v6451 = vadd.f32 0.0, %v6450
      %6452 = vmatmul.bf16.gmra.mxu0 %v6358
      %v6453 = vpop.f32.mrf.mxu0
      %v6454 = vadd.f32 0.0, %v6453
      %v6455 = vpop.f32.mrf.mxu0
      %v6456 = vadd.f32 0.0, %v6455
      %6457 = vdwg.mxu0
      %v6458 = vadd.f32 %v6266, %v6370
      %v6459 = vadd.f32 %v6267, %v6419
      %v6460 = vadd.f32 %v6268, %v6372
      %v6461 = vadd.f32 %v6269, %v6421
      %v6462 = vadd.f32 %v6270, %v6375
      %v6463 = vadd.f32 %v6271, %v6424
      %v6464 = vadd.f32 %v6272, %v6377
      %v6465 = vadd.f32 %v6273, %v6426
      %v6466 = vadd.f32 %v6274, %v6380
      %v6467 = vadd.f32 %v6275, %v6429
      %v6468 = vadd.f32 %v6276, %v6382
      %v6469 = vadd.f32 %v6277, %v6431
      %v6470 = vadd.f32 %v6278, %v6385
      %v6471 = vadd.f32 %v6279, %v6434
      %v6472 = vadd.f32 %v6280, %v6387
      %v6473 = vadd.f32 %v6281, %v6436
      %v6474 = vadd.f32 %v6282, %v6390
      %v6475 = vadd.f32 %v6283, %v6439
      %v6476 = vadd.f32 %v6284, %v6392
      %v6477 = vadd.f32 %v6285, %v6441
      %v6478 = vadd.f32 %v6286, %v6395
      %v6479 = vadd.f32 %v6287, %v6444
      %v6480 = vadd.f32 %v6288, %v6397
      %v6481 = vadd.f32 %v6289, %v6446
      %v6482 = vadd.f32 %v6290, %v6400
      %v6483 = vadd.f32 %v6291, %v6449
      %v6484 = vadd.f32 %v6292, %v6402
      %v6485 = vadd.f32 %v6293, %v6451
      %v6486 = vadd.f32 %v6294, %v6405
      %v6487 = vadd.f32 %v6295, %v6454
      %v6488 = vadd.f32 %v6296, %v6407
      %v6489 = vadd.f32 %v6297, %v6456
      %s6490 = scalar_lea.vmem %s11, 320
      %v6491 = vld [vmem:[%s6490] sm:$0xff]
      %v6492 = vld [vmem:[%s6490 + $0x8] sm:$0xff]
      %v6493 = vld [vmem:[%s6490 + $0x10] sm:$0xff]
      %v6494 = vld [vmem:[%s6490 + $0x18] sm:$0xff]
      %v6495 = vld [vmem:[%s6490 + $0x20] sm:$0xff]
      %v6496 = vld [vmem:[%s6490 + $0x28] sm:$0xff]
      %v6497 = vld [vmem:[%s6490 + $0x30] sm:$0xff]
      %v6498 = vld [vmem:[%s6490 + $0x38] sm:$0xff]
      %v6499 = vrot.slane %v5745, 1
      %v6500 = vsel %vm1639, %v5318, %v6499
      %v6509 = vunpack.c.l.b16 %v6491
      %v6510 = vunpack.c.h.b16 %v6491
      %v6511 = vunpack.c.l.b16 %v6492
      %v6512 = vunpack.c.h.b16 %v6492
      %v6513 = vunpack.c.l.b16 %v6493
      %v6514 = vunpack.c.h.b16 %v6493
      %v6515 = vunpack.c.l.b16 %v6494
      %v6516 = vunpack.c.h.b16 %v6494
      %v6517 = vunpack.c.l.b16 %v6495
      %v6518 = vunpack.c.h.b16 %v6495
      %v6519 = vunpack.c.l.b16 %v6496
      %v6520 = vunpack.c.h.b16 %v6496
      %v6521 = vunpack.c.l.b16 %v6497
      %v6522 = vunpack.c.h.b16 %v6497
      %v6523 = vunpack.c.l.b16 %v6498
      %v6524 = vunpack.c.h.b16 %v6498
      %v6525 = vpack.c.b16 %v6511, %v6509
      %v6526 = vpack.c.b16 %v6512, %v6510
      %v6527 = vpack.c.b16 %v6515, %v6513
      %v6528 = vpack.c.b16 %v6516, %v6514
      %v6529 = vpack.c.b16 %v6519, %v6517
      %v6530 = vpack.c.b16 %v6520, %v6518
      %v6531 = vpack.c.b16 %v6523, %v6521
      %v6532 = vpack.c.b16 %v6524, %v6522
      %v6542 = vsel %vm1407, %v6500, 0
      %v6545 = vsel %vm1407, %v6499, 0
      %6547 = vmatpush.bf16.msra.mxu0 0
      %6548 = vmatpush.bf16.msra.mxu0 0
      %6549 = vmatpush.bf16.msra.mxu0 0
      %6550 = vmatpush.bf16.msra.mxu0 0
      %6551 = vmatpush.bf16.msra.mxu0 %v6531
      %6552 = vmatpush.bf16.msra.mxu0 %v6529
      %6553 = vmatpush.bf16.msra.mxu0 %v6527
      %6554 = vmatpush.bf16.msra.mxu0 %v6525
      %6555 = vmatmul.bf16.gmra.mxu0 %v5364
      %v6556 = vpop.f32.mrf.mxu0
      %v6557 = vadd.f32 0.0, %v6556
      %v6558 = vpop.f32.mrf.mxu0
      %v6559 = vadd.f32 0.0, %v6558
      %6560 = vmatmul.bf16.gmra.mxu0 %v5367
      %v6561 = vpop.f32.mrf.mxu0
      %v6562 = vadd.f32 0.0, %v6561
      %v6563 = vpop.f32.mrf.mxu0
      %v6564 = vadd.f32 0.0, %v6563
      %6565 = vmatmul.bf16.gmra.mxu0 %v5370
      %v6566 = vpop.f32.mrf.mxu0
      %v6567 = vadd.f32 0.0, %v6566
      %v6568 = vpop.f32.mrf.mxu0
      %v6569 = vadd.f32 0.0, %v6568
      %6570 = vmatmul.bf16.gmra.mxu0 %v5373
      %v6571 = vpop.f32.mrf.mxu0
      %v6572 = vadd.f32 0.0, %v6571
      %v6573 = vpop.f32.mrf.mxu0
      %v6574 = vadd.f32 0.0, %v6573
      %6575 = vmatmul.bf16.gmra.mxu0 %v5376
      %v6576 = vpop.f32.mrf.mxu0
      %v6577 = vadd.f32 0.0, %v6576
      %v6578 = vpop.f32.mrf.mxu0
      %v6579 = vadd.f32 0.0, %v6578
      %6580 = vmatmul.bf16.gmra.mxu0 %v5379
      %v6581 = vpop.f32.mrf.mxu0
      %v6582 = vadd.f32 0.0, %v6581
      %v6583 = vpop.f32.mrf.mxu0
      %v6584 = vadd.f32 0.0, %v6583
      %6585 = vmatmul.bf16.gmra.mxu0 %v6542
      %v6586 = vpop.f32.mrf.mxu0
      %v6587 = vadd.f32 0.0, %v6586
      %v6588 = vpop.f32.mrf.mxu0
      %v6589 = vadd.f32 0.0, %v6588
      %6590 = vmatmul.bf16.gmra.mxu0 %v6545
      %v6591 = vpop.f32.mrf.mxu0
      %v6592 = vadd.f32 0.0, %v6591
      %v6593 = vpop.f32.mrf.mxu0
      %v6594 = vadd.f32 0.0, %v6593
      %6595 = vdwg.mxu0
      %6596 = vmatpush.bf16.msra.mxu0 0
      %6597 = vmatpush.bf16.msra.mxu0 0
      %6598 = vmatpush.bf16.msra.mxu0 0
      %6599 = vmatpush.bf16.msra.mxu0 0
      %6600 = vmatpush.bf16.msra.mxu0 %v6532
      %6601 = vmatpush.bf16.msra.mxu0 %v6530
      %6602 = vmatpush.bf16.msra.mxu0 %v6528
      %6603 = vmatpush.bf16.msra.mxu0 %v6526
      %6604 = vmatmul.bf16.gmra.mxu0 %v5364
      %v6605 = vpop.f32.mrf.mxu0
      %v6606 = vadd.f32 0.0, %v6605
      %v6607 = vpop.f32.mrf.mxu0
      %v6608 = vadd.f32 0.0, %v6607
      %6609 = vmatmul.bf16.gmra.mxu0 %v5367
      %v6610 = vpop.f32.mrf.mxu0
      %v6611 = vadd.f32 0.0, %v6610
      %v6612 = vpop.f32.mrf.mxu0
      %v6613 = vadd.f32 0.0, %v6612
      %6614 = vmatmul.bf16.gmra.mxu0 %v5370
      %v6615 = vpop.f32.mrf.mxu0
      %v6616 = vadd.f32 0.0, %v6615
      %v6617 = vpop.f32.mrf.mxu0
      %v6618 = vadd.f32 0.0, %v6617
      %6619 = vmatmul.bf16.gmra.mxu0 %v5373
      %v6620 = vpop.f32.mrf.mxu0
      %v6621 = vadd.f32 0.0, %v6620
      %v6622 = vpop.f32.mrf.mxu0
      %v6623 = vadd.f32 0.0, %v6622
      %6624 = vmatmul.bf16.gmra.mxu0 %v5376
      %v6625 = vpop.f32.mrf.mxu0
      %v6626 = vadd.f32 0.0, %v6625
      %v6627 = vpop.f32.mrf.mxu0
      %v6628 = vadd.f32 0.0, %v6627
      %6629 = vmatmul.bf16.gmra.mxu0 %v5379
      %v6630 = vpop.f32.mrf.mxu0
      %v6631 = vadd.f32 0.0, %v6630
      %v6632 = vpop.f32.mrf.mxu0
      %v6633 = vadd.f32 0.0, %v6632
      %6634 = vmatmul.bf16.gmra.mxu0 %v6542
      %v6635 = vpop.f32.mrf.mxu0
      %v6636 = vadd.f32 0.0, %v6635
      %v6637 = vpop.f32.mrf.mxu0
      %v6638 = vadd.f32 0.0, %v6637
      %6639 = vmatmul.bf16.gmra.mxu0 %v6545
      %v6640 = vpop.f32.mrf.mxu0
      %v6641 = vadd.f32 0.0, %v6640
      %v6642 = vpop.f32.mrf.mxu0
      %v6643 = vadd.f32 0.0, %v6642
      %6644 = vdwg.mxu0
      %v6645 = vadd.f32 %v6458, %v6557
      %v6646 = vadd.f32 %v6459, %v6606
      %v6647 = vadd.f32 %v6460, %v6559
      %v6648 = vadd.f32 %v6461, %v6608
      %v6649 = vadd.f32 %v6462, %v6562
      %v6650 = vadd.f32 %v6463, %v6611
      %v6651 = vadd.f32 %v6464, %v6564
      %v6652 = vadd.f32 %v6465, %v6613
      %v6653 = vadd.f32 %v6466, %v6567
      %v6654 = vadd.f32 %v6467, %v6616
      %v6655 = vadd.f32 %v6468, %v6569
      %v6656 = vadd.f32 %v6469, %v6618
      %v6657 = vadd.f32 %v6470, %v6572
      %v6658 = vadd.f32 %v6471, %v6621
      %v6659 = vadd.f32 %v6472, %v6574
      %v6660 = vadd.f32 %v6473, %v6623
      %v6661 = vadd.f32 %v6474, %v6577
      %v6662 = vadd.f32 %v6475, %v6626
      %v6663 = vadd.f32 %v6476, %v6579
      %v6664 = vadd.f32 %v6477, %v6628
      %v6665 = vadd.f32 %v6478, %v6582
      %v6666 = vadd.f32 %v6479, %v6631
      %v6667 = vadd.f32 %v6480, %v6584
      %v6668 = vadd.f32 %v6481, %v6633
      %v6669 = vadd.f32 %v6482, %v6587
      %v6670 = vadd.f32 %v6483, %v6636
      %v6671 = vadd.f32 %v6484, %v6589
      %v6672 = vadd.f32 %v6485, %v6638
      %v6673 = vadd.f32 %v6486, %v6592
      %v6674 = vadd.f32 %v6487, %v6641
      %v6675 = vadd.f32 %v6488, %v6594
      %v6676 = vadd.f32 %v6489, %v6643
      %s6677 = scalar_lea.vmem %s12, 320
      %v6678 = vld [vmem:[%s6677] sm:$0xff]
      %v6679 = vld [vmem:[%s6677 + $0x8] sm:$0xff]
      %v6680 = vld [vmem:[%s6677 + $0x10] sm:$0xff]
      %v6681 = vld [vmem:[%s6677 + $0x18] sm:$0xff]
      %v6682 = vld [vmem:[%s6677 + $0x20] sm:$0xff]
      %v6683 = vld [vmem:[%s6677 + $0x28] sm:$0xff]
      %v6684 = vld [vmem:[%s6677 + $0x30] sm:$0xff]
      %v6685 = vld [vmem:[%s6677 + $0x38] sm:$0xff]
      %v6686 = vrot.slane %v5932, 1
      %v6687 = vsel %vm1639, %v5536, %v6686
      %v6696 = vunpack.c.l.b16 %v6678
      %v6697 = vunpack.c.h.b16 %v6678
      %v6698 = vunpack.c.l.b16 %v6679
      %v6699 = vunpack.c.h.b16 %v6679
      %v6700 = vunpack.c.l.b16 %v6680
      %v6701 = vunpack.c.h.b16 %v6680
      %v6702 = vunpack.c.l.b16 %v6681
      %v6703 = vunpack.c.h.b16 %v6681
      %v6704 = vunpack.c.l.b16 %v6682
      %v6705 = vunpack.c.h.b16 %v6682
      %v6706 = vunpack.c.l.b16 %v6683
      %v6707 = vunpack.c.h.b16 %v6683
      %v6708 = vunpack.c.l.b16 %v6684
      %v6709 = vunpack.c.h.b16 %v6684
      %v6710 = vunpack.c.l.b16 %v6685
      %v6711 = vunpack.c.h.b16 %v6685
      %v6712 = vpack.c.b16 %v6698, %v6696
      %v6713 = vpack.c.b16 %v6699, %v6697
      %v6714 = vpack.c.b16 %v6702, %v6700
      %v6715 = vpack.c.b16 %v6703, %v6701
      %v6716 = vpack.c.b16 %v6706, %v6704
      %v6717 = vpack.c.b16 %v6707, %v6705
      %v6718 = vpack.c.b16 %v6710, %v6708
      %v6719 = vpack.c.b16 %v6711, %v6709
      %v6729 = vsel %vm1407, %v6687, 0
      %v6732 = vsel %vm1407, %v6686, 0
      %6734 = vmatpush.bf16.msra.mxu0 0
      %6735 = vmatpush.bf16.msra.mxu0 0
      %6736 = vmatpush.bf16.msra.mxu0 0
      %6737 = vmatpush.bf16.msra.mxu0 0
      %6738 = vmatpush.bf16.msra.mxu0 %v6718
      %6739 = vmatpush.bf16.msra.mxu0 %v6716
      %6740 = vmatpush.bf16.msra.mxu0 %v6714
      %6741 = vmatpush.bf16.msra.mxu0 %v6712
      %6742 = vmatmul.bf16.gmra.mxu0 %v5582
      %v6743 = vpop.f32.mrf.mxu0
      %v6744 = vadd.f32 0.0, %v6743
      %v6745 = vpop.f32.mrf.mxu0
      %v6746 = vadd.f32 0.0, %v6745
      %6747 = vmatmul.bf16.gmra.mxu0 %v5585
      %v6748 = vpop.f32.mrf.mxu0
      %v6749 = vadd.f32 0.0, %v6748
      %v6750 = vpop.f32.mrf.mxu0
      %v6751 = vadd.f32 0.0, %v6750
      %6752 = vmatmul.bf16.gmra.mxu0 %v5588
      %v6753 = vpop.f32.mrf.mxu0
      %v6754 = vadd.f32 0.0, %v6753
      %v6755 = vpop.f32.mrf.mxu0
      %v6756 = vadd.f32 0.0, %v6755
      %6757 = vmatmul.bf16.gmra.mxu0 %v5591
      %v6758 = vpop.f32.mrf.mxu0
      %v6759 = vadd.f32 0.0, %v6758
      %v6760 = vpop.f32.mrf.mxu0
      %v6761 = vadd.f32 0.0, %v6760
      %6762 = vmatmul.bf16.gmra.mxu0 %v5594
      %v6763 = vpop.f32.mrf.mxu0
      %v6764 = vadd.f32 0.0, %v6763
      %v6765 = vpop.f32.mrf.mxu0
      %v6766 = vadd.f32 0.0, %v6765
      %6767 = vmatmul.bf16.gmra.mxu0 %v5597
      %v6768 = vpop.f32.mrf.mxu0
      %v6769 = vadd.f32 0.0, %v6768
      %v6770 = vpop.f32.mrf.mxu0
      %v6771 = vadd.f32 0.0, %v6770
      %6772 = vmatmul.bf16.gmra.mxu0 %v6729
      %v6773 = vpop.f32.mrf.mxu0
      %v6774 = vadd.f32 0.0, %v6773
      %v6775 = vpop.f32.mrf.mxu0
      %v6776 = vadd.f32 0.0, %v6775
      %6777 = vmatmul.bf16.gmra.mxu0 %v6732
      %v6778 = vpop.f32.mrf.mxu0
      %v6779 = vadd.f32 0.0, %v6778
      %v6780 = vpop.f32.mrf.mxu0
      %v6781 = vadd.f32 0.0, %v6780
      %6782 = vdwg.mxu0
      %6783 = vmatpush.bf16.msra.mxu0 0
      %6784 = vmatpush.bf16.msra.mxu0 0
      %6785 = vmatpush.bf16.msra.mxu0 0
      %6786 = vmatpush.bf16.msra.mxu0 0
      %6787 = vmatpush.bf16.msra.mxu0 %v6719
      %6788 = vmatpush.bf16.msra.mxu0 %v6717
      %6789 = vmatpush.bf16.msra.mxu0 %v6715
      %6790 = vmatpush.bf16.msra.mxu0 %v6713
      %6791 = vmatmul.bf16.gmra.mxu0 %v5582
      %v6792 = vpop.f32.mrf.mxu0
      %v6793 = vadd.f32 0.0, %v6792
      %v6794 = vpop.f32.mrf.mxu0
      %v6795 = vadd.f32 0.0, %v6794
      %6796 = vmatmul.bf16.gmra.mxu0 %v5585
      %v6797 = vpop.f32.mrf.mxu0
      %v6798 = vadd.f32 0.0, %v6797
      %v6799 = vpop.f32.mrf.mxu0
      %v6800 = vadd.f32 0.0, %v6799
      %6801 = vmatmul.bf16.gmra.mxu0 %v5588
      %v6802 = vpop.f32.mrf.mxu0
      %v6803 = vadd.f32 0.0, %v6802
      %v6804 = vpop.f32.mrf.mxu0
      %v6805 = vadd.f32 0.0, %v6804
      %6806 = vmatmul.bf16.gmra.mxu0 %v5591
      %v6807 = vpop.f32.mrf.mxu0
      %v6808 = vadd.f32 0.0, %v6807
      %v6809 = vpop.f32.mrf.mxu0
      %v6810 = vadd.f32 0.0, %v6809
      %6811 = vmatmul.bf16.gmra.mxu0 %v5594
      %v6812 = vpop.f32.mrf.mxu0
      %v6813 = vadd.f32 0.0, %v6812
      %v6814 = vpop.f32.mrf.mxu0
      %v6815 = vadd.f32 0.0, %v6814
      %6816 = vmatmul.bf16.gmra.mxu0 %v5597
      %v6817 = vpop.f32.mrf.mxu0
      %v6818 = vadd.f32 0.0, %v6817
      %v6819 = vpop.f32.mrf.mxu0
      %v6820 = vadd.f32 0.0, %v6819
      %6821 = vmatmul.bf16.gmra.mxu0 %v6729
      %v6822 = vpop.f32.mrf.mxu0
      %v6823 = vadd.f32 0.0, %v6822
      %v6824 = vpop.f32.mrf.mxu0
      %v6825 = vadd.f32 0.0, %v6824
      %6826 = vmatmul.bf16.gmra.mxu0 %v6732
      %v6827 = vpop.f32.mrf.mxu0
      %v6828 = vadd.f32 0.0, %v6827
      %v6829 = vpop.f32.mrf.mxu0
      %v6830 = vadd.f32 0.0, %v6829
      %6831 = vdwg.mxu0
      %v6832 = vadd.f32 %v6645, %v6744
      %v6833 = vadd.f32 %v6646, %v6793
      %v6834 = vadd.f32 %v6647, %v6746
      %v6835 = vadd.f32 %v6648, %v6795
      %v6836 = vadd.f32 %v6649, %v6749
      %v6837 = vadd.f32 %v6650, %v6798
      %v6838 = vadd.f32 %v6651, %v6751
      %v6839 = vadd.f32 %v6652, %v6800
      %v6840 = vadd.f32 %v6653, %v6754
      %v6841 = vadd.f32 %v6654, %v6803
      %v6842 = vadd.f32 %v6655, %v6756
      %v6843 = vadd.f32 %v6656, %v6805
      %v6844 = vadd.f32 %v6657, %v6759
      %v6845 = vadd.f32 %v6658, %v6808
      %v6846 = vadd.f32 %v6659, %v6761
      %v6847 = vadd.f32 %v6660, %v6810
      %v6848 = vadd.f32 %v6661, %v6764
      %v6849 = vadd.f32 %v6662, %v6813
      %v6850 = vadd.f32 %v6663, %v6766
      %v6851 = vadd.f32 %v6664, %v6815
      %v6852 = vadd.f32 %v6665, %v6769
      %v6853 = vadd.f32 %v6666, %v6818
      %v6854 = vadd.f32 %v6667, %v6771
      %v6855 = vadd.f32 %v6668, %v6820
      %v6856 = vadd.f32 %v6669, %v6774
      %v6857 = vadd.f32 %v6670, %v6823
      %v6858 = vadd.f32 %v6671, %v6776
      %v6859 = vadd.f32 %v6672, %v6825
      %v6860 = vadd.f32 %v6673, %v6779
      %v6861 = vadd.f32 %v6674, %v6828
      %v6862 = vadd.f32 %v6675, %v6781
      %v6863 = vadd.f32 %v6676, %v6830
      %s6864 = scalar_lea.vmem %s11, 384
      %v6865 = vld [vmem:[%s6864] sm:$0xff]
      %v6866 = vld [vmem:[%s6864 + $0x8] sm:$0xff]
      %v6867 = vld [vmem:[%s6864 + $0x10] sm:$0xff]
      %v6868 = vld [vmem:[%s6864 + $0x18] sm:$0xff]
      %v6869 = vld [vmem:[%s6864 + $0x20] sm:$0xff]
      %v6870 = vld [vmem:[%s6864 + $0x28] sm:$0xff]
      %v6871 = vld [vmem:[%s6864 + $0x30] sm:$0xff]
      %v6872 = vld [vmem:[%s6864 + $0x38] sm:$0xff]
      %v6875 = vunpack.c.l.b16 %v934
      %v6876 = vunpack.c.l.b16 %v935
      %v6877 = vpack.c.b16 %v6876, %v6875
      %v6886 = vunpack.c.l.b16 %v6865
      %v6887 = vunpack.c.h.b16 %v6865
      %v6888 = vunpack.c.l.b16 %v6866
      %v6889 = vunpack.c.h.b16 %v6866
      %v6890 = vunpack.c.l.b16 %v6867
      %v6891 = vunpack.c.h.b16 %v6867
      %v6892 = vunpack.c.l.b16 %v6868
      %v6893 = vunpack.c.h.b16 %v6868
      %v6894 = vunpack.c.l.b16 %v6869
      %v6895 = vunpack.c.h.b16 %v6869
      %v6896 = vunpack.c.l.b16 %v6870
      %v6897 = vunpack.c.h.b16 %v6870
      %v6898 = vunpack.c.l.b16 %v6871
      %v6899 = vunpack.c.h.b16 %v6871
      %v6900 = vunpack.c.l.b16 %v6872
      %v6901 = vunpack.c.h.b16 %v6872
      %v6902 = vpack.c.b16 %v6888, %v6886
      %v6903 = vpack.c.b16 %v6889, %v6887
      %v6904 = vpack.c.b16 %v6892, %v6890
      %v6905 = vpack.c.b16 %v6893, %v6891
      %v6906 = vpack.c.b16 %v6896, %v6894
      %v6907 = vpack.c.b16 %v6897, %v6895
      %v6908 = vpack.c.b16 %v6900, %v6898
      %v6909 = vpack.c.b16 %v6901, %v6899
      %v6919 = vsel %vm1407, %v6877, 0
      %6921 = vmatpush.bf16.msra.mxu0 0
      %6922 = vmatpush.bf16.msra.mxu0 0
      %6923 = vmatpush.bf16.msra.mxu0 0
      %6924 = vmatpush.bf16.msra.mxu0 0
      %6925 = vmatpush.bf16.msra.mxu0 %v6908
      %6926 = vmatpush.bf16.msra.mxu0 %v6906
      %6927 = vmatpush.bf16.msra.mxu0 %v6904
      %6928 = vmatpush.bf16.msra.mxu0 %v6902
      %6929 = vmatmul.bf16.gmra.mxu0 %v4665
      %v6930 = vpop.f32.mrf.mxu0
      %v6931 = vadd.f32 0.0, %v6930
      %v6932 = vpop.f32.mrf.mxu0
      %v6933 = vadd.f32 0.0, %v6932
      %6934 = vmatmul.bf16.gmra.mxu0 %v4668
      %v6935 = vpop.f32.mrf.mxu0
      %v6936 = vadd.f32 0.0, %v6935
      %v6937 = vpop.f32.mrf.mxu0
      %v6938 = vadd.f32 0.0, %v6937
      %6939 = vmatmul.bf16.gmra.mxu0 %v4671
      %v6940 = vpop.f32.mrf.mxu0
      %v6941 = vadd.f32 0.0, %v6940
      %v6942 = vpop.f32.mrf.mxu0
      %v6943 = vadd.f32 0.0, %v6942
      %6944 = vmatmul.bf16.gmra.mxu0 %v4674
      %v6945 = vpop.f32.mrf.mxu0
      %v6946 = vadd.f32 0.0, %v6945
      %v6947 = vpop.f32.mrf.mxu0
      %v6948 = vadd.f32 0.0, %v6947
      %6949 = vmatmul.bf16.gmra.mxu0 %v4677
      %v6950 = vpop.f32.mrf.mxu0
      %v6951 = vadd.f32 0.0, %v6950
      %v6952 = vpop.f32.mrf.mxu0
      %v6953 = vadd.f32 0.0, %v6952
      %6954 = vmatmul.bf16.gmra.mxu0 %v4680
      %v6955 = vpop.f32.mrf.mxu0
      %v6956 = vadd.f32 0.0, %v6955
      %v6957 = vpop.f32.mrf.mxu0
      %v6958 = vadd.f32 0.0, %v6957
      %6959 = vmatmul.bf16.gmra.mxu0 %v5787
      %v6960 = vpop.f32.mrf.mxu0
      %v6961 = vadd.f32 0.0, %v6960
      %v6962 = vpop.f32.mrf.mxu0
      %v6963 = vadd.f32 0.0, %v6962
      %6964 = vmatmul.bf16.gmra.mxu0 %v6919
      %v6965 = vpop.f32.mrf.mxu0
      %v6966 = vadd.f32 0.0, %v6965
      %v6967 = vpop.f32.mrf.mxu0
      %v6968 = vadd.f32 0.0, %v6967
      %6969 = vdwg.mxu0
      %6970 = vmatpush.bf16.msra.mxu0 0
      %6971 = vmatpush.bf16.msra.mxu0 0
      %6972 = vmatpush.bf16.msra.mxu0 0
      %6973 = vmatpush.bf16.msra.mxu0 0
      %6974 = vmatpush.bf16.msra.mxu0 %v6909
      %6975 = vmatpush.bf16.msra.mxu0 %v6907
      %6976 = vmatpush.bf16.msra.mxu0 %v6905
      %6977 = vmatpush.bf16.msra.mxu0 %v6903
      %6978 = vmatmul.bf16.gmra.mxu0 %v4665
      %v6979 = vpop.f32.mrf.mxu0
      %v6980 = vadd.f32 0.0, %v6979
      %v6981 = vpop.f32.mrf.mxu0
      %v6982 = vadd.f32 0.0, %v6981
      %6983 = vmatmul.bf16.gmra.mxu0 %v4668
      %v6984 = vpop.f32.mrf.mxu0
      %v6985 = vadd.f32 0.0, %v6984
      %v6986 = vpop.f32.mrf.mxu0
      %v6987 = vadd.f32 0.0, %v6986
      %6988 = vmatmul.bf16.gmra.mxu0 %v4671
      %v6989 = vpop.f32.mrf.mxu0
      %v6990 = vadd.f32 0.0, %v6989
      %v6991 = vpop.f32.mrf.mxu0
      %v6992 = vadd.f32 0.0, %v6991
      %6993 = vmatmul.bf16.gmra.mxu0 %v4674
      %v6994 = vpop.f32.mrf.mxu0
      %v6995 = vadd.f32 0.0, %v6994
      %v6996 = vpop.f32.mrf.mxu0
      %v6997 = vadd.f32 0.0, %v6996
      %6998 = vmatmul.bf16.gmra.mxu0 %v4677
      %v6999 = vpop.f32.mrf.mxu0
      %v7000 = vadd.f32 0.0, %v6999
      %v7001 = vpop.f32.mrf.mxu0
      %v7002 = vadd.f32 0.0, %v7001
      %7003 = vmatmul.bf16.gmra.mxu0 %v4680
      %v7004 = vpop.f32.mrf.mxu0
      %v7005 = vadd.f32 0.0, %v7004
      %v7006 = vpop.f32.mrf.mxu0
      %v7007 = vadd.f32 0.0, %v7006
      %7008 = vmatmul.bf16.gmra.mxu0 %v5787
      %v7009 = vpop.f32.mrf.mxu0
      %v7010 = vadd.f32 0.0, %v7009
      %v7011 = vpop.f32.mrf.mxu0
      %v7012 = vadd.f32 0.0, %v7011
      %7013 = vmatmul.bf16.gmra.mxu0 %v6919
      %v7014 = vpop.f32.mrf.mxu0
      %v7015 = vadd.f32 0.0, %v7014
      %v7016 = vpop.f32.mrf.mxu0
      %v7017 = vadd.f32 0.0, %v7016
      %7018 = vdwg.mxu0
      %v7019 = vadd.f32 %v6832, %v6931
      %v7020 = vadd.f32 %v6833, %v6980
      %v7021 = vadd.f32 %v6834, %v6933
      %v7022 = vadd.f32 %v6835, %v6982
      %v7023 = vadd.f32 %v6836, %v6936
      %v7024 = vadd.f32 %v6837, %v6985
      %v7025 = vadd.f32 %v6838, %v6938
      %v7026 = vadd.f32 %v6839, %v6987
      %v7027 = vadd.f32 %v6840, %v6941
      %v7028 = vadd.f32 %v6841, %v6990
      %v7029 = vadd.f32 %v6842, %v6943
      %v7030 = vadd.f32 %v6843, %v6992
      %v7031 = vadd.f32 %v6844, %v6946
      %v7032 = vadd.f32 %v6845, %v6995
      %v7033 = vadd.f32 %v6846, %v6948
      %v7034 = vadd.f32 %v6847, %v6997
      %v7035 = vadd.f32 %v6848, %v6951
      %v7036 = vadd.f32 %v6849, %v7000
      %v7037 = vadd.f32 %v6850, %v6953
      %v7038 = vadd.f32 %v6851, %v7002
      %v7039 = vadd.f32 %v6852, %v6956
      %v7040 = vadd.f32 %v6853, %v7005
      %v7041 = vadd.f32 %v6854, %v6958
      %v7042 = vadd.f32 %v6855, %v7007
      %v7043 = vadd.f32 %v6856, %v6961
      %v7044 = vadd.f32 %v6857, %v7010
      %v7045 = vadd.f32 %v6858, %v6963
      %v7046 = vadd.f32 %v6859, %v7012
      %v7047 = vadd.f32 %v6860, %v6966
      %v7048 = vadd.f32 %v6861, %v7015
      %v7049 = vadd.f32 %v6862, %v6968
      %v7050 = vadd.f32 %v6863, %v7017
      %s7051 = scalar_lea.vmem %s12, 384
      %v7052 = vld [vmem:[%s7051] sm:$0xff]
      %v7053 = vld [vmem:[%s7051 + $0x8] sm:$0xff]
      %v7054 = vld [vmem:[%s7051 + $0x10] sm:$0xff]
      %v7055 = vld [vmem:[%s7051 + $0x18] sm:$0xff]
      %v7056 = vld [vmem:[%s7051 + $0x20] sm:$0xff]
      %v7057 = vld [vmem:[%s7051 + $0x28] sm:$0xff]
      %v7058 = vld [vmem:[%s7051 + $0x30] sm:$0xff]
      %v7059 = vld [vmem:[%s7051 + $0x38] sm:$0xff]
      %v7062 = vunpack.c.l.b16 %v4358
      %v7063 = vunpack.c.l.b16 %v4359
      %v7064 = vpack.c.b16 %v7063, %v7062
      %v7073 = vunpack.c.l.b16 %v7052
      %v7074 = vunpack.c.h.b16 %v7052
      %v7075 = vunpack.c.l.b16 %v7053
      %v7076 = vunpack.c.h.b16 %v7053
      %v7077 = vunpack.c.l.b16 %v7054
      %v7078 = vunpack.c.h.b16 %v7054
      %v7079 = vunpack.c.l.b16 %v7055
      %v7080 = vunpack.c.h.b16 %v7055
      %v7081 = vunpack.c.l.b16 %v7056
      %v7082 = vunpack.c.h.b16 %v7056
      %v7083 = vunpack.c.l.b16 %v7057
      %v7084 = vunpack.c.h.b16 %v7057
      %v7085 = vunpack.c.l.b16 %v7058
      %v7086 = vunpack.c.h.b16 %v7058
      %v7087 = vunpack.c.l.b16 %v7059
      %v7088 = vunpack.c.h.b16 %v7059
      %v7089 = vpack.c.b16 %v7075, %v7073
      %v7090 = vpack.c.b16 %v7076, %v7074
      %v7091 = vpack.c.b16 %v7079, %v7077
      %v7092 = vpack.c.b16 %v7080, %v7078
      %v7093 = vpack.c.b16 %v7083, %v7081
      %v7094 = vpack.c.b16 %v7084, %v7082
      %v7095 = vpack.c.b16 %v7087, %v7085
      %v7096 = vpack.c.b16 %v7088, %v7086
      %v7106 = vsel %vm1407, %v7064, 0
      %7108 = vmatpush.bf16.msra.mxu0 0
      %7109 = vmatpush.bf16.msra.mxu0 0
      %7110 = vmatpush.bf16.msra.mxu0 0
      %7111 = vmatpush.bf16.msra.mxu0 0
      %7112 = vmatpush.bf16.msra.mxu0 %v7095
      %7113 = vmatpush.bf16.msra.mxu0 %v7093
      %7114 = vmatpush.bf16.msra.mxu0 %v7091
      %7115 = vmatpush.bf16.msra.mxu0 %v7089
      %7116 = vmatmul.bf16.gmra.mxu0 %v4463
      %v7117 = vpop.f32.mrf.mxu0
      %v7118 = vadd.f32 0.0, %v7117
      %v7119 = vpop.f32.mrf.mxu0
      %v7120 = vadd.f32 0.0, %v7119
      %7121 = vmatmul.bf16.gmra.mxu0 %v4466
      %v7122 = vpop.f32.mrf.mxu0
      %v7123 = vadd.f32 0.0, %v7122
      %v7124 = vpop.f32.mrf.mxu0
      %v7125 = vadd.f32 0.0, %v7124
      %7126 = vmatmul.bf16.gmra.mxu0 %v4469
      %v7127 = vpop.f32.mrf.mxu0
      %v7128 = vadd.f32 0.0, %v7127
      %v7129 = vpop.f32.mrf.mxu0
      %v7130 = vadd.f32 0.0, %v7129
      %7131 = vmatmul.bf16.gmra.mxu0 %v4472
      %v7132 = vpop.f32.mrf.mxu0
      %v7133 = vadd.f32 0.0, %v7132
      %v7134 = vpop.f32.mrf.mxu0
      %v7135 = vadd.f32 0.0, %v7134
      %7136 = vmatmul.bf16.gmra.mxu0 %v4475
      %v7137 = vpop.f32.mrf.mxu0
      %v7138 = vadd.f32 0.0, %v7137
      %v7139 = vpop.f32.mrf.mxu0
      %v7140 = vadd.f32 0.0, %v7139
      %7141 = vmatmul.bf16.gmra.mxu0 %v4478
      %v7142 = vpop.f32.mrf.mxu0
      %v7143 = vadd.f32 0.0, %v7142
      %v7144 = vpop.f32.mrf.mxu0
      %v7145 = vadd.f32 0.0, %v7144
      %7146 = vmatmul.bf16.gmra.mxu0 %v5974
      %v7147 = vpop.f32.mrf.mxu0
      %v7148 = vadd.f32 0.0, %v7147
      %v7149 = vpop.f32.mrf.mxu0
      %v7150 = vadd.f32 0.0, %v7149
      %7151 = vmatmul.bf16.gmra.mxu0 %v7106
      %v7152 = vpop.f32.mrf.mxu0
      %v7153 = vadd.f32 0.0, %v7152
      %v7154 = vpop.f32.mrf.mxu0
      %v7155 = vadd.f32 0.0, %v7154
      %7156 = vdwg.mxu0
      %7157 = vmatpush.bf16.msra.mxu0 0
      %7158 = vmatpush.bf16.msra.mxu0 0
      %7159 = vmatpush.bf16.msra.mxu0 0
      %7160 = vmatpush.bf16.msra.mxu0 0
      %7161 = vmatpush.bf16.msra.mxu0 %v7096
      %7162 = vmatpush.bf16.msra.mxu0 %v7094
      %7163 = vmatpush.bf16.msra.mxu0 %v7092
      %7164 = vmatpush.bf16.msra.mxu0 %v7090
      %7165 = vmatmul.bf16.gmra.mxu0 %v4463
      %v7166 = vpop.f32.mrf.mxu0
      %v7167 = vadd.f32 0.0, %v7166
      %v7168 = vpop.f32.mrf.mxu0
      %v7169 = vadd.f32 0.0, %v7168
      %7170 = vmatmul.bf16.gmra.mxu0 %v4466
      %v7171 = vpop.f32.mrf.mxu0
      %v7172 = vadd.f32 0.0, %v7171
      %v7173 = vpop.f32.mrf.mxu0
      %v7174 = vadd.f32 0.0, %v7173
      %7175 = vmatmul.bf16.gmra.mxu0 %v4469
      %v7176 = vpop.f32.mrf.mxu0
      %v7177 = vadd.f32 0.0, %v7176
      %v7178 = vpop.f32.mrf.mxu0
      %v7179 = vadd.f32 0.0, %v7178
      %7180 = vmatmul.bf16.gmra.mxu0 %v4472
      %v7181 = vpop.f32.mrf.mxu0
      %v7182 = vadd.f32 0.0, %v7181
      %v7183 = vpop.f32.mrf.mxu0
      %v7184 = vadd.f32 0.0, %v7183
      %7185 = vmatmul.bf16.gmra.mxu0 %v4475
      %v7186 = vpop.f32.mrf.mxu0
      %v7187 = vadd.f32 0.0, %v7186
      %v7188 = vpop.f32.mrf.mxu0
      %v7189 = vadd.f32 0.0, %v7188
      %7190 = vmatmul.bf16.gmra.mxu0 %v4478
      %v7191 = vpop.f32.mrf.mxu0
      %v7192 = vadd.f32 0.0, %v7191
      %v7193 = vpop.f32.mrf.mxu0
      %v7194 = vadd.f32 0.0, %v7193
      %7195 = vmatmul.bf16.gmra.mxu0 %v5974
      %v7196 = vpop.f32.mrf.mxu0
      %v7197 = vadd.f32 0.0, %v7196
      %v7198 = vpop.f32.mrf.mxu0
      %v7199 = vadd.f32 0.0, %v7198
      %7200 = vmatmul.bf16.gmra.mxu0 %v7106
      %v7201 = vpop.f32.mrf.mxu0
      %v7202 = vadd.f32 0.0, %v7201
      %v7203 = vpop.f32.mrf.mxu0
      %v7204 = vadd.f32 0.0, %v7203
      %7205 = vdwg.mxu0
      %v7206 = vadd.f32 %v7019, %v7118
      %v7207 = vadd.f32 %v7020, %v7167
      %v7208 = vadd.f32 %v7021, %v7120
      %v7209 = vadd.f32 %v7022, %v7169
      %v7210 = vadd.f32 %v7023, %v7123
      %v7211 = vadd.f32 %v7024, %v7172
      %v7212 = vadd.f32 %v7025, %v7125
      %v7213 = vadd.f32 %v7026, %v7174
      %v7214 = vadd.f32 %v7027, %v7128
      %v7215 = vadd.f32 %v7028, %v7177
      %v7216 = vadd.f32 %v7029, %v7130
      %v7217 = vadd.f32 %v7030, %v7179
      %v7218 = vadd.f32 %v7031, %v7133
      %v7219 = vadd.f32 %v7032, %v7182
      %v7220 = vadd.f32 %v7033, %v7135
      %v7221 = vadd.f32 %v7034, %v7184
      %v7222 = vadd.f32 %v7035, %v7138
      %v7223 = vadd.f32 %v7036, %v7187
      %v7224 = vadd.f32 %v7037, %v7140
      %v7225 = vadd.f32 %v7038, %v7189
      %v7226 = vadd.f32 %v7039, %v7143
      %v7227 = vadd.f32 %v7040, %v7192
      %v7228 = vadd.f32 %v7041, %v7145
      %v7229 = vadd.f32 %v7042, %v7194
      %v7230 = vadd.f32 %v7043, %v7148
      %v7231 = vadd.f32 %v7044, %v7197
      %v7232 = vadd.f32 %v7045, %v7150
      %v7233 = vadd.f32 %v7046, %v7199
      %v7234 = vadd.f32 %v7047, %v7153
      %v7235 = vadd.f32 %v7048, %v7202
      %v7236 = vadd.f32 %v7049, %v7155
      %v7237 = vadd.f32 %v7050, %v7204
      %s7238 = scalar_lea.vmem %s11, 448
      %v7239 = vld [vmem:[%s7238] sm:$0xff]
      %v7240 = vld [vmem:[%s7238 + $0x8] sm:$0xff]
      %v7241 = vld [vmem:[%s7238 + $0x10] sm:$0xff]
      %v7242 = vld [vmem:[%s7238 + $0x18] sm:$0xff]
      %v7243 = vld [vmem:[%s7238 + $0x20] sm:$0xff]
      %v7244 = vld [vmem:[%s7238 + $0x28] sm:$0xff]
      %v7245 = vld [vmem:[%s7238 + $0x30] sm:$0xff]
      %v7246 = vld [vmem:[%s7238 + $0x38] sm:$0xff]
      %v7247 = vshll.u32 %v6877, 16
      %v7249 = vrot.slane %v7247, 1
      %v7250 = vsel %vm1283, %v6121, %v7249
      %v7251 = vshrl.u32 %v6877, 16
      %v7253 = vor.u32 %v7251, %v7249
      %v7262 = vunpack.c.l.b16 %v7239
      %v7263 = vunpack.c.h.b16 %v7239
      %v7264 = vunpack.c.l.b16 %v7240
      %v7265 = vunpack.c.h.b16 %v7240
      %v7266 = vunpack.c.l.b16 %v7241
      %v7267 = vunpack.c.h.b16 %v7241
      %v7268 = vunpack.c.l.b16 %v7242
      %v7269 = vunpack.c.h.b16 %v7242
      %v7270 = vunpack.c.l.b16 %v7243
      %v7271 = vunpack.c.h.b16 %v7243
      %v7272 = vunpack.c.l.b16 %v7244
      %v7273 = vunpack.c.h.b16 %v7244
      %v7274 = vunpack.c.l.b16 %v7245
      %v7275 = vunpack.c.h.b16 %v7245
      %v7276 = vunpack.c.l.b16 %v7246
      %v7277 = vunpack.c.h.b16 %v7246
      %v7278 = vpack.c.b16 %v7264, %v7262
      %v7279 = vpack.c.b16 %v7265, %v7263
      %v7280 = vpack.c.b16 %v7268, %v7266
      %v7281 = vpack.c.b16 %v7269, %v7267
      %v7282 = vpack.c.b16 %v7272, %v7270
      %v7283 = vpack.c.b16 %v7273, %v7271
      %v7284 = vpack.c.b16 %v7276, %v7274
      %v7285 = vpack.c.b16 %v7277, %v7275
      %v7295 = vsel %vm1407, %v7250, 0
      %v7298 = vsel %vm1407, %v7253, 0
      %7300 = vmatpush.bf16.msra.mxu0 0
      %7301 = vmatpush.bf16.msra.mxu0 0
      %7302 = vmatpush.bf16.msra.mxu0 0
      %7303 = vmatpush.bf16.msra.mxu0 0
      %7304 = vmatpush.bf16.msra.mxu0 %v7284
      %7305 = vmatpush.bf16.msra.mxu0 %v7282
      %7306 = vmatpush.bf16.msra.mxu0 %v7280
      %7307 = vmatpush.bf16.msra.mxu0 %v7278
      %7308 = vmatmul.bf16.gmra.mxu0 %v4891
      %v7309 = vpop.f32.mrf.mxu0
      %v7310 = vadd.f32 0.0, %v7309
      %v7311 = vpop.f32.mrf.mxu0
      %v7312 = vadd.f32 0.0, %v7311
      %7313 = vmatmul.bf16.gmra.mxu0 %v4894
      %v7314 = vpop.f32.mrf.mxu0
      %v7315 = vadd.f32 0.0, %v7314
      %v7316 = vpop.f32.mrf.mxu0
      %v7317 = vadd.f32 0.0, %v7316
      %7318 = vmatmul.bf16.gmra.mxu0 %v4897
      %v7319 = vpop.f32.mrf.mxu0
      %v7320 = vadd.f32 0.0, %v7319
      %v7321 = vpop.f32.mrf.mxu0
      %v7322 = vadd.f32 0.0, %v7321
      %7323 = vmatmul.bf16.gmra.mxu0 %v4900
      %v7324 = vpop.f32.mrf.mxu0
      %v7325 = vadd.f32 0.0, %v7324
      %v7326 = vpop.f32.mrf.mxu0
      %v7327 = vadd.f32 0.0, %v7326
      %7328 = vmatmul.bf16.gmra.mxu0 %v4903
      %v7329 = vpop.f32.mrf.mxu0
      %v7330 = vadd.f32 0.0, %v7329
      %v7331 = vpop.f32.mrf.mxu0
      %v7332 = vadd.f32 0.0, %v7331
      %7333 = vmatmul.bf16.gmra.mxu0 %v6163
      %v7334 = vpop.f32.mrf.mxu0
      %v7335 = vadd.f32 0.0, %v7334
      %v7336 = vpop.f32.mrf.mxu0
      %v7337 = vadd.f32 0.0, %v7336
      %7338 = vmatmul.bf16.gmra.mxu0 %v7295
      %v7339 = vpop.f32.mrf.mxu0
      %v7340 = vadd.f32 0.0, %v7339
      %v7341 = vpop.f32.mrf.mxu0
      %v7342 = vadd.f32 0.0, %v7341
      %7343 = vmatmul.bf16.gmra.mxu0 %v7298
      %v7344 = vpop.f32.mrf.mxu0
      %v7345 = vadd.f32 0.0, %v7344
      %v7346 = vpop.f32.mrf.mxu0
      %v7347 = vadd.f32 0.0, %v7346
      %7348 = vdwg.mxu0
      %7349 = vmatpush.bf16.msra.mxu0 0
      %7350 = vmatpush.bf16.msra.mxu0 0
      %7351 = vmatpush.bf16.msra.mxu0 0
      %7352 = vmatpush.bf16.msra.mxu0 0
      %7353 = vmatpush.bf16.msra.mxu0 %v7285
      %7354 = vmatpush.bf16.msra.mxu0 %v7283
      %7355 = vmatpush.bf16.msra.mxu0 %v7281
      %7356 = vmatpush.bf16.msra.mxu0 %v7279
      %7357 = vmatmul.bf16.gmra.mxu0 %v4891
      %v7358 = vpop.f32.mrf.mxu0
      %v7359 = vadd.f32 0.0, %v7358
      %v7360 = vpop.f32.mrf.mxu0
      %v7361 = vadd.f32 0.0, %v7360
      %7362 = vmatmul.bf16.gmra.mxu0 %v4894
      %v7363 = vpop.f32.mrf.mxu0
      %v7364 = vadd.f32 0.0, %v7363
      %v7365 = vpop.f32.mrf.mxu0
      %v7366 = vadd.f32 0.0, %v7365
      %7367 = vmatmul.bf16.gmra.mxu0 %v4897
      %v7368 = vpop.f32.mrf.mxu0
      %v7369 = vadd.f32 0.0, %v7368
      %v7370 = vpop.f32.mrf.mxu0
      %v7371 = vadd.f32 0.0, %v7370
      %7372 = vmatmul.bf16.gmra.mxu0 %v4900
      %v7373 = vpop.f32.mrf.mxu0
      %v7374 = vadd.f32 0.0, %v7373
      %v7375 = vpop.f32.mrf.mxu0
      %v7376 = vadd.f32 0.0, %v7375
      %7377 = vmatmul.bf16.gmra.mxu0 %v4903
      %v7378 = vpop.f32.mrf.mxu0
      %v7379 = vadd.f32 0.0, %v7378
      %v7380 = vpop.f32.mrf.mxu0
      %v7381 = vadd.f32 0.0, %v7380
      %7382 = vmatmul.bf16.gmra.mxu0 %v6163
      %v7383 = vpop.f32.mrf.mxu0
      %v7384 = vadd.f32 0.0, %v7383
      %v7385 = vpop.f32.mrf.mxu0
      %v7386 = vadd.f32 0.0, %v7385
      %7387 = vmatmul.bf16.gmra.mxu0 %v7295
      %v7388 = vpop.f32.mrf.mxu0
      %v7389 = vadd.f32 0.0, %v7388
      %v7390 = vpop.f32.mrf.mxu0
      %v7391 = vadd.f32 0.0, %v7390
      %7392 = vmatmul.bf16.gmra.mxu0 %v7298
      %v7393 = vpop.f32.mrf.mxu0
      %v7394 = vadd.f32 0.0, %v7393
      %v7395 = vpop.f32.mrf.mxu0
      %v7396 = vadd.f32 0.0, %v7395
      %7397 = vdwg.mxu0
      %v7398 = vadd.f32 %v7206, %v7310
      %v7399 = vadd.f32 %v7207, %v7359
      %v7400 = vadd.f32 %v7208, %v7312
      %v7401 = vadd.f32 %v7209, %v7361
      %v7402 = vadd.f32 %v7210, %v7315
      %v7403 = vadd.f32 %v7211, %v7364
      %v7404 = vadd.f32 %v7212, %v7317
      %v7405 = vadd.f32 %v7213, %v7366
      %v7406 = vadd.f32 %v7214, %v7320
      %v7407 = vadd.f32 %v7215, %v7369
      %v7408 = vadd.f32 %v7216, %v7322
      %v7409 = vadd.f32 %v7217, %v7371
      %v7410 = vadd.f32 %v7218, %v7325
      %v7411 = vadd.f32 %v7219, %v7374
      %v7412 = vadd.f32 %v7220, %v7327
      %v7413 = vadd.f32 %v7221, %v7376
      %v7414 = vadd.f32 %v7222, %v7330
      %v7415 = vadd.f32 %v7223, %v7379
      %v7416 = vadd.f32 %v7224, %v7332
      %v7417 = vadd.f32 %v7225, %v7381
      %v7418 = vadd.f32 %v7226, %v7335
      %v7419 = vadd.f32 %v7227, %v7384
      %v7420 = vadd.f32 %v7228, %v7337
      %v7421 = vadd.f32 %v7229, %v7386
      %v7422 = vadd.f32 %v7230, %v7340
      %v7423 = vadd.f32 %v7231, %v7389
      %v7424 = vadd.f32 %v7232, %v7342
      %v7425 = vadd.f32 %v7233, %v7391
      %v7426 = vadd.f32 %v7234, %v7345
      %v7427 = vadd.f32 %v7235, %v7394
      %v7428 = vadd.f32 %v7236, %v7347
      %v7429 = vadd.f32 %v7237, %v7396
      %s7430 = scalar_lea.vmem %s12, 448
      %v7431 = vld [vmem:[%s7430] sm:$0xff]
      %v7432 = vld [vmem:[%s7430 + $0x8] sm:$0xff]
      %v7433 = vld [vmem:[%s7430 + $0x10] sm:$0xff]
      %v7434 = vld [vmem:[%s7430 + $0x18] sm:$0xff]
      %v7435 = vld [vmem:[%s7430 + $0x20] sm:$0xff]
      %v7436 = vld [vmem:[%s7430 + $0x28] sm:$0xff]
      %v7437 = vld [vmem:[%s7430 + $0x30] sm:$0xff]
      %v7438 = vld [vmem:[%s7430 + $0x38] sm:$0xff]
      %v7439 = vshll.u32 %v7064, 16
      %v7441 = vrot.slane %v7439, 1
      %v7442 = vsel %vm1283, %v6313, %v7441
      %v7443 = vshrl.u32 %v7064, 16
      %v7445 = vor.u32 %v7443, %v7441
      %v7454 = vunpack.c.l.b16 %v7431
      %v7455 = vunpack.c.h.b16 %v7431
      %v7456 = vunpack.c.l.b16 %v7432
      %v7457 = vunpack.c.h.b16 %v7432
      %v7458 = vunpack.c.l.b16 %v7433
      %v7459 = vunpack.c.h.b16 %v7433
      %v7460 = vunpack.c.l.b16 %v7434
      %v7461 = vunpack.c.h.b16 %v7434
      %v7462 = vunpack.c.l.b16 %v7435
      %v7463 = vunpack.c.h.b16 %v7435
      %v7464 = vunpack.c.l.b16 %v7436
      %v7465 = vunpack.c.h.b16 %v7436
      %v7466 = vunpack.c.l.b16 %v7437
      %v7467 = vunpack.c.h.b16 %v7437
      %v7468 = vunpack.c.l.b16 %v7438
      %v7469 = vunpack.c.h.b16 %v7438
      %v7470 = vpack.c.b16 %v7456, %v7454
      %v7471 = vpack.c.b16 %v7457, %v7455
      %v7472 = vpack.c.b16 %v7460, %v7458
      %v7473 = vpack.c.b16 %v7461, %v7459
      %v7474 = vpack.c.b16 %v7464, %v7462
      %v7475 = vpack.c.b16 %v7465, %v7463
      %v7476 = vpack.c.b16 %v7468, %v7466
      %v7477 = vpack.c.b16 %v7469, %v7467
      %v7487 = vsel %vm1407, %v7442, 0
      %v7490 = vsel %vm1407, %v7445, 0
      %7492 = vmatpush.bf16.msra.mxu0 0
      %7493 = vmatpush.bf16.msra.mxu0 0
      %7494 = vmatpush.bf16.msra.mxu0 0
      %7495 = vmatpush.bf16.msra.mxu0 0
      %7496 = vmatpush.bf16.msra.mxu0 %v7476
      %7497 = vmatpush.bf16.msra.mxu0 %v7474
      %7498 = vmatpush.bf16.msra.mxu0 %v7472
      %7499 = vmatpush.bf16.msra.mxu0 %v7470
      %7500 = vmatmul.bf16.gmra.mxu0 %v5149
      %v7501 = vpop.f32.mrf.mxu0
      %v7502 = vadd.f32 0.0, %v7501
      %v7503 = vpop.f32.mrf.mxu0
      %v7504 = vadd.f32 0.0, %v7503
      %7505 = vmatmul.bf16.gmra.mxu0 %v5152
      %v7506 = vpop.f32.mrf.mxu0
      %v7507 = vadd.f32 0.0, %v7506
      %v7508 = vpop.f32.mrf.mxu0
      %v7509 = vadd.f32 0.0, %v7508
      %7510 = vmatmul.bf16.gmra.mxu0 %v5155
      %v7511 = vpop.f32.mrf.mxu0
      %v7512 = vadd.f32 0.0, %v7511
      %v7513 = vpop.f32.mrf.mxu0
      %v7514 = vadd.f32 0.0, %v7513
      %7515 = vmatmul.bf16.gmra.mxu0 %v5158
      %v7516 = vpop.f32.mrf.mxu0
      %v7517 = vadd.f32 0.0, %v7516
      %v7518 = vpop.f32.mrf.mxu0
      %v7519 = vadd.f32 0.0, %v7518
      %7520 = vmatmul.bf16.gmra.mxu0 %v5161
      %v7521 = vpop.f32.mrf.mxu0
      %v7522 = vadd.f32 0.0, %v7521
      %v7523 = vpop.f32.mrf.mxu0
      %v7524 = vadd.f32 0.0, %v7523
      %7525 = vmatmul.bf16.gmra.mxu0 %v6355
      %v7526 = vpop.f32.mrf.mxu0
      %v7527 = vadd.f32 0.0, %v7526
      %v7528 = vpop.f32.mrf.mxu0
      %v7529 = vadd.f32 0.0, %v7528
      %7530 = vmatmul.bf16.gmra.mxu0 %v7487
      %v7531 = vpop.f32.mrf.mxu0
      %v7532 = vadd.f32 0.0, %v7531
      %v7533 = vpop.f32.mrf.mxu0
      %v7534 = vadd.f32 0.0, %v7533
      %7535 = vmatmul.bf16.gmra.mxu0 %v7490
      %v7536 = vpop.f32.mrf.mxu0
      %v7537 = vadd.f32 0.0, %v7536
      %v7538 = vpop.f32.mrf.mxu0
      %v7539 = vadd.f32 0.0, %v7538
      %7540 = vdwg.mxu0
      %7541 = vmatpush.bf16.msra.mxu0 0
      %7542 = vmatpush.bf16.msra.mxu0 0
      %7543 = vmatpush.bf16.msra.mxu0 0
      %7544 = vmatpush.bf16.msra.mxu0 0
      %7545 = vmatpush.bf16.msra.mxu0 %v7477
      %7546 = vmatpush.bf16.msra.mxu0 %v7475
      %7547 = vmatpush.bf16.msra.mxu0 %v7473
      %7548 = vmatpush.bf16.msra.mxu0 %v7471
      %7549 = vmatmul.bf16.gmra.mxu0 %v5149
      %v7550 = vpop.f32.mrf.mxu0
      %v7551 = vadd.f32 0.0, %v7550
      %v7552 = vpop.f32.mrf.mxu0
      %v7553 = vadd.f32 0.0, %v7552
      %7554 = vmatmul.bf16.gmra.mxu0 %v5152
      %v7555 = vpop.f32.mrf.mxu0
      %v7556 = vadd.f32 0.0, %v7555
      %v7557 = vpop.f32.mrf.mxu0
      %v7558 = vadd.f32 0.0, %v7557
      %7559 = vmatmul.bf16.gmra.mxu0 %v5155
      %v7560 = vpop.f32.mrf.mxu0
      %v7561 = vadd.f32 0.0, %v7560
      %v7562 = vpop.f32.mrf.mxu0
      %v7563 = vadd.f32 0.0, %v7562
      %7564 = vmatmul.bf16.gmra.mxu0 %v5158
      %v7565 = vpop.f32.mrf.mxu0
      %v7566 = vadd.f32 0.0, %v7565
      %v7567 = vpop.f32.mrf.mxu0
      %v7568 = vadd.f32 0.0, %v7567
      %7569 = vmatmul.bf16.gmra.mxu0 %v5161
      %v7570 = vpop.f32.mrf.mxu0
      %v7571 = vadd.f32 0.0, %v7570
      %v7572 = vpop.f32.mrf.mxu0
      %v7573 = vadd.f32 0.0, %v7572
      %7574 = vmatmul.bf16.gmra.mxu0 %v6355
      %v7575 = vpop.f32.mrf.mxu0
      %v7576 = vadd.f32 0.0, %v7575
      %v7577 = vpop.f32.mrf.mxu0
      %v7578 = vadd.f32 0.0, %v7577
      %7579 = vmatmul.bf16.gmra.mxu0 %v7487
      %v7580 = vpop.f32.mrf.mxu0
      %v7581 = vadd.f32 0.0, %v7580
      %v7582 = vpop.f32.mrf.mxu0
      %v7583 = vadd.f32 0.0, %v7582
      %7584 = vmatmul.bf16.gmra.mxu0 %v7490
      %v7585 = vpop.f32.mrf.mxu0
      %v7586 = vadd.f32 0.0, %v7585
      %v7587 = vpop.f32.mrf.mxu0
      %v7588 = vadd.f32 0.0, %v7587
      %7589 = vdwg.mxu0
      %v7590 = vadd.f32 %v7398, %v7502
      %v7591 = vadd.f32 %v7399, %v7551
      %v7592 = vadd.f32 %v7400, %v7504
      %v7593 = vadd.f32 %v7401, %v7553
      %v7594 = vadd.f32 %v7402, %v7507
      %v7595 = vadd.f32 %v7403, %v7556
      %v7596 = vadd.f32 %v7404, %v7509
      %v7597 = vadd.f32 %v7405, %v7558
      %v7598 = vadd.f32 %v7406, %v7512
      %v7599 = vadd.f32 %v7407, %v7561
      %v7600 = vadd.f32 %v7408, %v7514
      %v7601 = vadd.f32 %v7409, %v7563
      %v7602 = vadd.f32 %v7410, %v7517
      %v7603 = vadd.f32 %v7411, %v7566
      %v7604 = vadd.f32 %v7412, %v7519
      %v7605 = vadd.f32 %v7413, %v7568
      %v7606 = vadd.f32 %v7414, %v7522
      %v7607 = vadd.f32 %v7415, %v7571
      %v7608 = vadd.f32 %v7416, %v7524
      %v7609 = vadd.f32 %v7417, %v7573
      %v7610 = vadd.f32 %v7418, %v7527
      %v7611 = vadd.f32 %v7419, %v7576
      %v7612 = vadd.f32 %v7420, %v7529
      %v7613 = vadd.f32 %v7421, %v7578
      %v7614 = vadd.f32 %v7422, %v7532
      %v7615 = vadd.f32 %v7423, %v7581
      %v7616 = vadd.f32 %v7424, %v7534
      %v7617 = vadd.f32 %v7425, %v7583
      %v7618 = vadd.f32 %v7426, %v7537
      %v7619 = vadd.f32 %v7427, %v7586
      %v7620 = vadd.f32 %v7428, %v7539
      %v7621 = vadd.f32 %v7429, %v7588
      %s7622 = scalar_lea.vmem %s11, 512
      %v7623 = vld [vmem:[%s7622] sm:$0xff]
      %v7624 = vld [vmem:[%s7622 + $0x8] sm:$0xff]
      %v7625 = vld [vmem:[%s7622 + $0x10] sm:$0xff]
      %v7626 = vld [vmem:[%s7622 + $0x18] sm:$0xff]
      %v7627 = vld [vmem:[%s7622 + $0x20] sm:$0xff]
      %v7628 = vld [vmem:[%s7622 + $0x28] sm:$0xff]
      %v7629 = vld [vmem:[%s7622 + $0x30] sm:$0xff]
      %v7630 = vld [vmem:[%s7622 + $0x38] sm:$0xff]
      %v7631 = vrot.slane %v6877, 1
      %v7632 = vsel %vm1639, %v6499, %v7631
      %v7641 = vunpack.c.l.b16 %v7623
      %v7642 = vunpack.c.h.b16 %v7623
      %v7643 = vunpack.c.l.b16 %v7624
      %v7644 = vunpack.c.h.b16 %v7624
      %v7645 = vunpack.c.l.b16 %v7625
      %v7646 = vunpack.c.h.b16 %v7625
      %v7647 = vunpack.c.l.b16 %v7626
      %v7648 = vunpack.c.h.b16 %v7626
      %v7649 = vunpack.c.l.b16 %v7627
      %v7650 = vunpack.c.h.b16 %v7627
      %v7651 = vunpack.c.l.b16 %v7628
      %v7652 = vunpack.c.h.b16 %v7628
      %v7653 = vunpack.c.l.b16 %v7629
      %v7654 = vunpack.c.h.b16 %v7629
      %v7655 = vunpack.c.l.b16 %v7630
      %v7656 = vunpack.c.h.b16 %v7630
      %v7657 = vpack.c.b16 %v7643, %v7641
      %v7658 = vpack.c.b16 %v7644, %v7642
      %v7659 = vpack.c.b16 %v7647, %v7645
      %v7660 = vpack.c.b16 %v7648, %v7646
      %v7661 = vpack.c.b16 %v7651, %v7649
      %v7662 = vpack.c.b16 %v7652, %v7650
      %v7663 = vpack.c.b16 %v7655, %v7653
      %v7664 = vpack.c.b16 %v7656, %v7654
      %v7674 = vsel %vm1407, %v7632, 0
      %v7677 = vsel %vm1407, %v7631, 0
      %7679 = vmatpush.bf16.msra.mxu0 0
      %7680 = vmatpush.bf16.msra.mxu0 0
      %7681 = vmatpush.bf16.msra.mxu0 0
      %7682 = vmatpush.bf16.msra.mxu0 0
      %7683 = vmatpush.bf16.msra.mxu0 %v7663
      %7684 = vmatpush.bf16.msra.mxu0 %v7661
      %7685 = vmatpush.bf16.msra.mxu0 %v7659
      %7686 = vmatpush.bf16.msra.mxu0 %v7657
      %7687 = vmatmul.bf16.gmra.mxu0 %v5367
      %v7688 = vpop.f32.mrf.mxu0
      %v7689 = vadd.f32 0.0, %v7688
      %v7690 = vpop.f32.mrf.mxu0
      %v7691 = vadd.f32 0.0, %v7690
      %7692 = vmatmul.bf16.gmra.mxu0 %v5370
      %v7693 = vpop.f32.mrf.mxu0
      %v7694 = vadd.f32 0.0, %v7693
      %v7695 = vpop.f32.mrf.mxu0
      %v7696 = vadd.f32 0.0, %v7695
      %7697 = vmatmul.bf16.gmra.mxu0 %v5373
      %v7698 = vpop.f32.mrf.mxu0
      %v7699 = vadd.f32 0.0, %v7698
      %v7700 = vpop.f32.mrf.mxu0
      %v7701 = vadd.f32 0.0, %v7700
      %7702 = vmatmul.bf16.gmra.mxu0 %v5376
      %v7703 = vpop.f32.mrf.mxu0
      %v7704 = vadd.f32 0.0, %v7703
      %v7705 = vpop.f32.mrf.mxu0
      %v7706 = vadd.f32 0.0, %v7705
      %7707 = vmatmul.bf16.gmra.mxu0 %v5379
      %v7708 = vpop.f32.mrf.mxu0
      %v7709 = vadd.f32 0.0, %v7708
      %v7710 = vpop.f32.mrf.mxu0
      %v7711 = vadd.f32 0.0, %v7710
      %7712 = vmatmul.bf16.gmra.mxu0 %v6542
      %v7713 = vpop.f32.mrf.mxu0
      %v7714 = vadd.f32 0.0, %v7713
      %v7715 = vpop.f32.mrf.mxu0
      %v7716 = vadd.f32 0.0, %v7715
      %7717 = vmatmul.bf16.gmra.mxu0 %v7674
      %v7718 = vpop.f32.mrf.mxu0
      %v7719 = vadd.f32 0.0, %v7718
      %v7720 = vpop.f32.mrf.mxu0
      %v7721 = vadd.f32 0.0, %v7720
      %7722 = vmatmul.bf16.gmra.mxu0 %v7677
      %v7723 = vpop.f32.mrf.mxu0
      %v7724 = vadd.f32 0.0, %v7723
      %v7725 = vpop.f32.mrf.mxu0
      %v7726 = vadd.f32 0.0, %v7725
      %7727 = vdwg.mxu0
      %7728 = vmatpush.bf16.msra.mxu0 0
      %7729 = vmatpush.bf16.msra.mxu0 0
      %7730 = vmatpush.bf16.msra.mxu0 0
      %7731 = vmatpush.bf16.msra.mxu0 0
      %7732 = vmatpush.bf16.msra.mxu0 %v7664
      %7733 = vmatpush.bf16.msra.mxu0 %v7662
      %7734 = vmatpush.bf16.msra.mxu0 %v7660
      %7735 = vmatpush.bf16.msra.mxu0 %v7658
      %7736 = vmatmul.bf16.gmra.mxu0 %v5367
      %v7737 = vpop.f32.mrf.mxu0
      %v7738 = vadd.f32 0.0, %v7737
      %v7739 = vpop.f32.mrf.mxu0
      %v7740 = vadd.f32 0.0, %v7739
      %7741 = vmatmul.bf16.gmra.mxu0 %v5370
      %v7742 = vpop.f32.mrf.mxu0
      %v7743 = vadd.f32 0.0, %v7742
      %v7744 = vpop.f32.mrf.mxu0
      %v7745 = vadd.f32 0.0, %v7744
      %7746 = vmatmul.bf16.gmra.mxu0 %v5373
      %v7747 = vpop.f32.mrf.mxu0
      %v7748 = vadd.f32 0.0, %v7747
      %v7749 = vpop.f32.mrf.mxu0
      %v7750 = vadd.f32 0.0, %v7749
      %7751 = vmatmul.bf16.gmra.mxu0 %v5376
      %v7752 = vpop.f32.mrf.mxu0
      %v7753 = vadd.f32 0.0, %v7752
      %v7754 = vpop.f32.mrf.mxu0
      %v7755 = vadd.f32 0.0, %v7754
      %7756 = vmatmul.bf16.gmra.mxu0 %v5379
      %v7757 = vpop.f32.mrf.mxu0
      %v7758 = vadd.f32 0.0, %v7757
      %v7759 = vpop.f32.mrf.mxu0
      %v7760 = vadd.f32 0.0, %v7759
      %7761 = vmatmul.bf16.gmra.mxu0 %v6542
      %v7762 = vpop.f32.mrf.mxu0
      %v7763 = vadd.f32 0.0, %v7762
      %v7764 = vpop.f32.mrf.mxu0
      %v7765 = vadd.f32 0.0, %v7764
      %7766 = vmatmul.bf16.gmra.mxu0 %v7674
      %v7767 = vpop.f32.mrf.mxu0
      %v7768 = vadd.f32 0.0, %v7767
      %v7769 = vpop.f32.mrf.mxu0
      %v7770 = vadd.f32 0.0, %v7769
      %7771 = vmatmul.bf16.gmra.mxu0 %v7677
      %v7772 = vpop.f32.mrf.mxu0
      %v7773 = vadd.f32 0.0, %v7772
      %v7774 = vpop.f32.mrf.mxu0
      %v7775 = vadd.f32 0.0, %v7774
      %7776 = vdwg.mxu0
      %v7777 = vadd.f32 %v7590, %v7689
      %v7778 = vadd.f32 %v7591, %v7738
      %v7779 = vadd.f32 %v7592, %v7691
      %v7780 = vadd.f32 %v7593, %v7740
      %v7781 = vadd.f32 %v7594, %v7694
      %v7782 = vadd.f32 %v7595, %v7743
      %v7783 = vadd.f32 %v7596, %v7696
      %v7784 = vadd.f32 %v7597, %v7745
      %v7785 = vadd.f32 %v7598, %v7699
      %v7786 = vadd.f32 %v7599, %v7748
      %v7787 = vadd.f32 %v7600, %v7701
      %v7788 = vadd.f32 %v7601, %v7750
      %v7789 = vadd.f32 %v7602, %v7704
      %v7790 = vadd.f32 %v7603, %v7753
      %v7791 = vadd.f32 %v7604, %v7706
      %v7792 = vadd.f32 %v7605, %v7755
      %v7793 = vadd.f32 %v7606, %v7709
      %v7794 = vadd.f32 %v7607, %v7758
      %v7795 = vadd.f32 %v7608, %v7711
      %v7796 = vadd.f32 %v7609, %v7760
      %v7797 = vadd.f32 %v7610, %v7714
      %v7798 = vadd.f32 %v7611, %v7763
      %v7799 = vadd.f32 %v7612, %v7716
      %v7800 = vadd.f32 %v7613, %v7765
      %v7801 = vadd.f32 %v7614, %v7719
      %v7802 = vadd.f32 %v7615, %v7768
      %v7803 = vadd.f32 %v7616, %v7721
      %v7804 = vadd.f32 %v7617, %v7770
      %v7805 = vadd.f32 %v7618, %v7724
      %v7806 = vadd.f32 %v7619, %v7773
      %v7807 = vadd.f32 %v7620, %v7726
      %v7808 = vadd.f32 %v7621, %v7775
      %s7809 = scalar_lea.vmem %s12, 512
      %v7810 = vld [vmem:[%s7809] sm:$0xff]
      %v7811 = vld [vmem:[%s7809 + $0x8] sm:$0xff]
      %v7812 = vld [vmem:[%s7809 + $0x10] sm:$0xff]
      %v7813 = vld [vmem:[%s7809 + $0x18] sm:$0xff]
      %v7814 = vld [vmem:[%s7809 + $0x20] sm:$0xff]
      %v7815 = vld [vmem:[%s7809 + $0x28] sm:$0xff]
      %v7816 = vld [vmem:[%s7809 + $0x30] sm:$0xff]
      %v7817 = vld [vmem:[%s7809 + $0x38] sm:$0xff]
      %v7818 = vrot.slane %v7064, 1
      %v7819 = vsel %vm1639, %v6686, %v7818
      %v7828 = vunpack.c.l.b16 %v7810
      %v7829 = vunpack.c.h.b16 %v7810
      %v7830 = vunpack.c.l.b16 %v7811
      %v7831 = vunpack.c.h.b16 %v7811
      %v7832 = vunpack.c.l.b16 %v7812
      %v7833 = vunpack.c.h.b16 %v7812
      %v7834 = vunpack.c.l.b16 %v7813
      %v7835 = vunpack.c.h.b16 %v7813
      %v7836 = vunpack.c.l.b16 %v7814
      %v7837 = vunpack.c.h.b16 %v7814
      %v7838 = vunpack.c.l.b16 %v7815
      %v7839 = vunpack.c.h.b16 %v7815
      %v7840 = vunpack.c.l.b16 %v7816
      %v7841 = vunpack.c.h.b16 %v7816
      %v7842 = vunpack.c.l.b16 %v7817
      %v7843 = vunpack.c.h.b16 %v7817
      %v7844 = vpack.c.b16 %v7830, %v7828
      %v7845 = vpack.c.b16 %v7831, %v7829
      %v7846 = vpack.c.b16 %v7834, %v7832
      %v7847 = vpack.c.b16 %v7835, %v7833
      %v7848 = vpack.c.b16 %v7838, %v7836
      %v7849 = vpack.c.b16 %v7839, %v7837
      %v7850 = vpack.c.b16 %v7842, %v7840
      %v7851 = vpack.c.b16 %v7843, %v7841
      %v7861 = vsel %vm1407, %v7819, 0
      %v7864 = vsel %vm1407, %v7818, 0
      %7866 = vmatpush.bf16.msra.mxu0 0
      %7867 = vmatpush.bf16.msra.mxu0 0
      %7868 = vmatpush.bf16.msra.mxu0 0
      %7869 = vmatpush.bf16.msra.mxu0 0
      %7870 = vmatpush.bf16.msra.mxu0 %v7850
      %7871 = vmatpush.bf16.msra.mxu0 %v7848
      %7872 = vmatpush.bf16.msra.mxu0 %v7846
      %7873 = vmatpush.bf16.msra.mxu0 %v7844
      %7874 = vmatmul.bf16.gmra.mxu0 %v5585
      %v7875 = vpop.f32.mrf.mxu0
      %v7876 = vadd.f32 0.0, %v7875
      %v7877 = vpop.f32.mrf.mxu0
      %v7878 = vadd.f32 0.0, %v7877
      %7879 = vmatmul.bf16.gmra.mxu0 %v5588
      %v7880 = vpop.f32.mrf.mxu0
      %v7881 = vadd.f32 0.0, %v7880
      %v7882 = vpop.f32.mrf.mxu0
      %v7883 = vadd.f32 0.0, %v7882
      %7884 = vmatmul.bf16.gmra.mxu0 %v5591
      %v7885 = vpop.f32.mrf.mxu0
      %v7886 = vadd.f32 0.0, %v7885
      %v7887 = vpop.f32.mrf.mxu0
      %v7888 = vadd.f32 0.0, %v7887
      %7889 = vmatmul.bf16.gmra.mxu0 %v5594
      %v7890 = vpop.f32.mrf.mxu0
      %v7891 = vadd.f32 0.0, %v7890
      %v7892 = vpop.f32.mrf.mxu0
      %v7893 = vadd.f32 0.0, %v7892
      %7894 = vmatmul.bf16.gmra.mxu0 %v5597
      %v7895 = vpop.f32.mrf.mxu0
      %v7896 = vadd.f32 0.0, %v7895
      %v7897 = vpop.f32.mrf.mxu0
      %v7898 = vadd.f32 0.0, %v7897
      %7899 = vmatmul.bf16.gmra.mxu0 %v6729
      %v7900 = vpop.f32.mrf.mxu0
      %v7901 = vadd.f32 0.0, %v7900
      %v7902 = vpop.f32.mrf.mxu0
      %v7903 = vadd.f32 0.0, %v7902
      %7904 = vmatmul.bf16.gmra.mxu0 %v7861
      %v7905 = vpop.f32.mrf.mxu0
      %v7906 = vadd.f32 0.0, %v7905
      %v7907 = vpop.f32.mrf.mxu0
      %v7908 = vadd.f32 0.0, %v7907
      %7909 = vmatmul.bf16.gmra.mxu0 %v7864
      %v7910 = vpop.f32.mrf.mxu0
      %v7911 = vadd.f32 0.0, %v7910
      %v7912 = vpop.f32.mrf.mxu0
      %v7913 = vadd.f32 0.0, %v7912
      %7914 = vdwg.mxu0
      %7915 = vmatpush.bf16.msra.mxu0 0
      %7916 = vmatpush.bf16.msra.mxu0 0
      %7917 = vmatpush.bf16.msra.mxu0 0
      %7918 = vmatpush.bf16.msra.mxu0 0
      %7919 = vmatpush.bf16.msra.mxu0 %v7851
      %7920 = vmatpush.bf16.msra.mxu0 %v7849
      %7921 = vmatpush.bf16.msra.mxu0 %v7847
      %7922 = vmatpush.bf16.msra.mxu0 %v7845
      %7923 = vmatmul.bf16.gmra.mxu0 %v5585
      %v7924 = vpop.f32.mrf.mxu0
      %v7925 = vadd.f32 0.0, %v7924
      %v7926 = vpop.f32.mrf.mxu0
      %v7927 = vadd.f32 0.0, %v7926
      %7928 = vmatmul.bf16.gmra.mxu0 %v5588
      %v7929 = vpop.f32.mrf.mxu0
      %v7930 = vadd.f32 0.0, %v7929
      %v7931 = vpop.f32.mrf.mxu0
      %v7932 = vadd.f32 0.0, %v7931
      %7933 = vmatmul.bf16.gmra.mxu0 %v5591
      %v7934 = vpop.f32.mrf.mxu0
      %v7935 = vadd.f32 0.0, %v7934
      %v7936 = vpop.f32.mrf.mxu0
      %v7937 = vadd.f32 0.0, %v7936
      %7938 = vmatmul.bf16.gmra.mxu0 %v5594
      %v7939 = vpop.f32.mrf.mxu0
      %v7940 = vadd.f32 0.0, %v7939
      %v7941 = vpop.f32.mrf.mxu0
      %v7942 = vadd.f32 0.0, %v7941
      %7943 = vmatmul.bf16.gmra.mxu0 %v5597
      %v7944 = vpop.f32.mrf.mxu0
      %v7945 = vadd.f32 0.0, %v7944
      %v7946 = vpop.f32.mrf.mxu0
      %v7947 = vadd.f32 0.0, %v7946
      %7948 = vmatmul.bf16.gmra.mxu0 %v6729
      %v7949 = vpop.f32.mrf.mxu0
      %v7950 = vadd.f32 0.0, %v7949
      %v7951 = vpop.f32.mrf.mxu0
      %v7952 = vadd.f32 0.0, %v7951
      %7953 = vmatmul.bf16.gmra.mxu0 %v7861
      %v7954 = vpop.f32.mrf.mxu0
      %v7955 = vadd.f32 0.0, %v7954
      %v7956 = vpop.f32.mrf.mxu0
      %v7957 = vadd.f32 0.0, %v7956
      %7958 = vmatmul.bf16.gmra.mxu0 %v7864
      %v7959 = vpop.f32.mrf.mxu0
      %v7960 = vadd.f32 0.0, %v7959
      %v7961 = vpop.f32.mrf.mxu0
      %v7962 = vadd.f32 0.0, %v7961
      %7963 = vdwg.mxu0
      %v7964 = vadd.f32 %v7777, %v7876
      %v7965 = vadd.f32 %v7778, %v7925
      %v7966 = vadd.f32 %v7779, %v7878
      %v7967 = vadd.f32 %v7780, %v7927
      %v7968 = vadd.f32 %v7781, %v7881
      %v7969 = vadd.f32 %v7782, %v7930
      %v7970 = vadd.f32 %v7783, %v7883
      %v7971 = vadd.f32 %v7784, %v7932
      %v7972 = vadd.f32 %v7785, %v7886
      %v7973 = vadd.f32 %v7786, %v7935
      %v7974 = vadd.f32 %v7787, %v7888
      %v7975 = vadd.f32 %v7788, %v7937
      %v7976 = vadd.f32 %v7789, %v7891
      %v7977 = vadd.f32 %v7790, %v7940
      %v7978 = vadd.f32 %v7791, %v7893
      %v7979 = vadd.f32 %v7792, %v7942
      %v7980 = vadd.f32 %v7793, %v7896
      %v7981 = vadd.f32 %v7794, %v7945
      %v7982 = vadd.f32 %v7795, %v7898
      %v7983 = vadd.f32 %v7796, %v7947
      %v7984 = vadd.f32 %v7797, %v7901
      %v7985 = vadd.f32 %v7798, %v7950
      %v7986 = vadd.f32 %v7799, %v7903
      %v7987 = vadd.f32 %v7800, %v7952
      %v7988 = vadd.f32 %v7801, %v7906
      %v7989 = vadd.f32 %v7802, %v7955
      %v7990 = vadd.f32 %v7803, %v7908
      %v7991 = vadd.f32 %v7804, %v7957
      %v7992 = vadd.f32 %v7805, %v7911
      %v7993 = vadd.f32 %v7806, %v7960
      %v7994 = vadd.f32 %v7807, %v7913
      %v7995 = vadd.f32 %v7808, %v7962
      %v7996 = vld [vmem:[%s13] sm:$0x3]
      %v7998 = vperm.slane %v7996, 0
      %v7999 = vperm.slane %v7996, 1
      %v8002 = vmul.f32 %v7964, %v7998
      %v8003 = vmul.f32 %v7965, %v7999
      %v8004 = vmul.f32 %v7966, %v7998
      %v8005 = vmul.f32 %v7967, %v7999
      %v8006 = vmul.f32 %v7968, %v7998
      %v8007 = vmul.f32 %v7969, %v7999
      %v8008 = vmul.f32 %v7970, %v7998
      %v8009 = vmul.f32 %v7971, %v7999
      %v8010 = vmul.f32 %v7972, %v7998
      %v8011 = vmul.f32 %v7973, %v7999
      %v8012 = vmul.f32 %v7974, %v7998
      %v8013 = vmul.f32 %v7975, %v7999
      %v8014 = vmul.f32 %v7976, %v7998
      %v8015 = vmul.f32 %v7977, %v7999
      %v8016 = vmul.f32 %v7978, %v7998
      %v8017 = vmul.f32 %v7979, %v7999
      %v8018 = vmul.f32 %v7980, %v7998
      %v8019 = vmul.f32 %v7981, %v7999
      %v8020 = vmul.f32 %v7982, %v7998
      %v8021 = vmul.f32 %v7983, %v7999
      %v8022 = vmul.f32 %v7984, %v7998
      %v8023 = vmul.f32 %v7985, %v7999
      %v8024 = vmul.f32 %v7986, %v7998
      %v8025 = vmul.f32 %v7987, %v7999
      %v8026 = vmul.f32 %v7988, %v7998
      %v8027 = vmul.f32 %v7989, %v7999
      %v8028 = vmul.f32 %v7990, %v7998
      %v8029 = vmul.f32 %v7991, %v7999
      %v8030 = vmul.f32 %v7992, %v7998
      %v8031 = vmul.f32 %v7993, %v7999
      %v8032 = vmul.f32 %v7994, %v7998
      %v8033 = vmul.f32 %v7995, %v7999
      %v8034 = vld [vmem:[%s14] sm:$0x3]
      %v8036 = vperm.slane %v8034, 0
      %v8037 = vperm.slane %v8034, 1
      %v8040 = vadd.f32 %v8002, %v8036
      %v8041 = vadd.f32 %v8003, %v8037
      %v8042 = vadd.f32 %v8004, %v8036
      %v8043 = vadd.f32 %v8005, %v8037
      %v8044 = vadd.f32 %v8006, %v8036
      %v8045 = vadd.f32 %v8007, %v8037
      %v8046 = vadd.f32 %v8008, %v8036
      %v8047 = vadd.f32 %v8009, %v8037
      %v8048 = vadd.f32 %v8010, %v8036
      %v8049 = vadd.f32 %v8011, %v8037
      %v8050 = vadd.f32 %v8012, %v8036
      %v8051 = vadd.f32 %v8013, %v8037
      %v8052 = vadd.f32 %v8014, %v8036
      %v8053 = vadd.f32 %v8015, %v8037
      %v8054 = vadd.f32 %v8016, %v8036
      %v8055 = vadd.f32 %v8017, %v8037
      %v8056 = vadd.f32 %v8018, %v8036
      %v8057 = vadd.f32 %v8019, %v8037
      %v8058 = vadd.f32 %v8020, %v8036
      %v8059 = vadd.f32 %v8021, %v8037
      %v8060 = vadd.f32 %v8022, %v8036
      %v8061 = vadd.f32 %v8023, %v8037
      %v8062 = vadd.f32 %v8024, %v8036
      %v8063 = vadd.f32 %v8025, %v8037
      %v8064 = vadd.f32 %v8026, %v8036
      %v8065 = vadd.f32 %v8027, %v8037
      %v8066 = vadd.f32 %v8028, %v8036
      %v8067 = vadd.f32 %v8029, %v8037
      %v8068 = vadd.f32 %v8030, %v8036
      %v8069 = vadd.f32 %v8031, %v8037
      %v8070 = vadd.f32 %v8032, %v8036
      %v8071 = vadd.f32 %v8033, %v8037
      %v8072 = vmax.f32 %v8040, 0.0
      %v8073 = vmax.f32 %v8041, 0.0
      %v8074 = vmax.f32 %v8042, 0.0
      %v8075 = vmax.f32 %v8043, 0.0
      %v8076 = vmax.f32 %v8044, 0.0
      %v8077 = vmax.f32 %v8045, 0.0
      %v8078 = vmax.f32 %v8046, 0.0
      %v8079 = vmax.f32 %v8047, 0.0
      %v8080 = vmax.f32 %v8048, 0.0
      %v8081 = vmax.f32 %v8049, 0.0
      %v8082 = vmax.f32 %v8050, 0.0
      %v8083 = vmax.f32 %v8051, 0.0
      %v8084 = vmax.f32 %v8052, 0.0
      %v8085 = vmax.f32 %v8053, 0.0
      %v8086 = vmax.f32 %v8054, 0.0
      %v8087 = vmax.f32 %v8055, 0.0
      %v8088 = vmax.f32 %v8056, 0.0
      %v8089 = vmax.f32 %v8057, 0.0
      %v8090 = vmax.f32 %v8058, 0.0
      %v8091 = vmax.f32 %v8059, 0.0
      %v8092 = vmax.f32 %v8060, 0.0
      %v8093 = vmax.f32 %v8061, 0.0
      %v8094 = vmax.f32 %v8062, 0.0
      %v8095 = vmax.f32 %v8063, 0.0
      %v8096 = vmax.f32 %v8064, 0.0
      %v8097 = vmax.f32 %v8065, 0.0
      %v8098 = vmax.f32 %v8066, 0.0
      %v8099 = vmax.f32 %v8067, 0.0
      %v8100 = vmax.f32 %v8068, 0.0
      %v8101 = vmax.f32 %v8069, 0.0
      %v8102 = vmax.f32 %v8070, 0.0
      %v8103 = vmax.f32 %v8071, 0.0
      %8104 = vst [vmem:[%s494] sm:$0xff] %v8072
      %8105 = vst.msk [vmem:[%s494 + $0x8] sm:$0xff] %vm1407, %v8073
      %8106 = vst [vmem:[%s494 + $0x10] sm:$0xff] %v8074
      %8107 = vst.msk [vmem:[%s494 + $0x18] sm:$0xff] %vm1407, %v8075
      %8108 = vst [vmem:[%s494 + $0x20] sm:$0xff] %v8076
      %8109 = vst.msk [vmem:[%s494 + $0x28] sm:$0xff] %vm1407, %v8077
      %8110 = vst [vmem:[%s494 + $0x30] sm:$0xff] %v8078
      %8111 = vst.msk [vmem:[%s494 + $0x38] sm:$0xff] %vm1407, %v8079
      %8112 = vst [vmem:[%s494 + $0x40] sm:$0xff] %v8080
      %8113 = vst.msk [vmem:[%s494 + $0x48] sm:$0xff] %vm1407, %v8081
      %8114 = vst [vmem:[%s494 + $0x50] sm:$0xff] %v8082
      %8115 = vst.msk [vmem:[%s494 + $0x58] sm:$0xff] %vm1407, %v8083
      %8116 = vst [vmem:[%s494 + $0x60] sm:$0xff] %v8084
      %8117 = vst.msk [vmem:[%s494 + $0x68] sm:$0xff] %vm1407, %v8085
      %8118 = vst [vmem:[%s494 + $0x70] sm:$0xff] %v8086
      %8119 = vst.msk [vmem:[%s494 + $0x78] sm:$0xff] %vm1407, %v8087
      %8120 = vst [vmem:[%s494 + $0x80] sm:$0xff] %v8088
      %8121 = vst.msk [vmem:[%s494 + $0x88] sm:$0xff] %vm1407, %v8089
      %8122 = vst [vmem:[%s494 + $0x90] sm:$0xff] %v8090
      %8123 = vst.msk [vmem:[%s494 + $0x98] sm:$0xff] %vm1407, %v8091
      %8124 = vst [vmem:[%s494 + $0xa0] sm:$0xff] %v8092
      %8125 = vst.msk [vmem:[%s494 + $0xa8] sm:$0xff] %vm1407, %v8093
      %8126 = vst [vmem:[%s494 + $0xb0] sm:$0xff] %v8094
      %8127 = vst.msk [vmem:[%s494 + $0xb8] sm:$0xff] %vm1407, %v8095
      %8128 = vst [vmem:[%s494 + $0xc0] sm:$0xff] %v8096
      %8129 = vst.msk [vmem:[%s494 + $0xc8] sm:$0xff] %vm1407, %v8097
      %8130 = vst [vmem:[%s494 + $0xd0] sm:$0xff] %v8098
      %8131 = vst.msk [vmem:[%s494 + $0xd8] sm:$0xff] %vm1407, %v8099
      %8132 = vst [vmem:[%s494 + $0xe0] sm:$0xff] %v8100
      %8133 = vst.msk [vmem:[%s494 + $0xe8] sm:$0xff] %vm1407, %v8101
      %8134 = vst [vmem:[%s494 + $0xf0] sm:$0x7] %v8102
      %vm8135 = vcmask 518144
      %8136 = vst.msk [vmem:[%s494 + $0xf8] sm:$0x7] %vm8135, %v8103
      %8137 = vst [vmem:[%s494 + $0xf0] sm:$0xf8] 0.0
      %vm8138 = vcmask 523267
      %8139 = vst.msk [vmem:[%s494 + $0xf8] sm:$0xf8] %vm8138, 0.0
      %p8140 = scmp.lt.s32.totalorder %s26, 1
      %s8141 = scalar_select %p8140, %s26, 1
      %s8142 = smul.addr %s8141, 32
      %s8143 = smul.addr %s8142, 8
      %s8144 = scalar_lea.vmem %s15, %s8143
      // Predicated region
      $region81: #{mixed_4a_forward.1} parent=79 // pred_check
        %p8145 = pneg %p364
      $region82: #{mixed_4a_forward.1} parent=79 // pred_check_branch
        %8147 = sbr.rel (%p8145) target = $region84
      $region83: #{mixed_4a_forward.1} parent=79 // pred_region
        _
      $region84: #{mixed_4a_forward.1} parent=79 // pred_fallthru
        _
    $region80: #{mixed_4a_forward.1} parent=5 // pred_fallthru
      _
    %p8148 = scmp.le.s32.totalorder 2, %s21
    // Predicated region
    $region85: #{mixed_4a_forward.1} parent=5 // pred_check
      %p8149 = pneg %p8148
    $region86: #{mixed_4a_forward.1} parent=5 // pred_check_branch
      %8151 = sbr.rel (%p8149) target = $region88
    $region87: #{mixed_4a_forward.1} parent=5 // pred_region
      %s8152 = ssub.s32 %s21, 2
      // Predicated region
      $region89: #{mixed_4a_forward.1} parent=87 // pred_check
        %p8153 = pneg %p370
      $region90: #{mixed_4a_forward.1} parent=87 // pred_check_branch
        %8155 = sbr.rel (%p8153) target = $region92
      $region91: #{mixed_4a_forward.1} parent=87 // pred_region
        %p8156 = scmp.lt.s32.totalorder %s27, 1
        %s8157 = scalar_select %p8156, %s27, 1
        %s8158 = smul.addr %s8157, 32
        %s8159 = smul.addr %s8158, 8
        %s8160 = scalar_lea.vmem %s15, %s8159
      $region92: #{mixed_4a_forward.1} parent=87 // pred_fallthru
        _
    $region88: #{mixed_4a_forward.1} parent=5 // pred_fallthru
      _
  $region6: #{mixed_4a_forward.1} parent=0 // loop_footer
    %s25 = sadd.s32 1, %s21
  $region7: #{mixed_4a_forward.1} parent=0 // loop_footer_branch
    %20 = sbr.rel target = $region3
  $region8: #{mixed_4a_forward.1} parent=0 // loop_exit
    _

</llo_original>
